<compile_context>
chip_gen: v5e
topology: v5e:2x2
jax: 0.10.0
libtpu: 0.0.40
codegen_flags: <defaults>
</compile_context>

<pallas_src>
from functools import partial

import jax
import jax.numpy as jnp
from jax import lax
from jax.experimental import pallas as pl
from jax.experimental.pallas import tpu as pltpu


# Phase decomposition of the stride-2 / k=4 / pad=1 transposed conv.
# For output row (col) phase a: tuple of (input offset dh, kernel row index kh).
_TAPS = {0: ((-1, 3), (0, 1)),
         1: ((0, 2), (1, 0))}


# ---------------------------------------------------------------------------
# Pass 1: transposed-conv phases (MXU) + per-tile BatchNorm partial stats
# ---------------------------------------------------------------------------
def _deconv_stats_kernel(x_ref, xh_ref, w_ref, y_ref, stat_ref, *, TH, W, coutp):
    """One (batch, TH-row) tile.

    x_ref  : (1, TH, W+2, Cin)   bf16   main rows of the padded input
    xh_ref : (1, 2,  W+2, Cin)   bf16   2-row halo below the tile
    w_ref  : (4, 4*Cin, coutp)   bf16   per-phase weights (tap-major rows)
    y_ref  : (1, TH, 4, W, coutp) bf16  phase outputs
    stat_ref:(1, 1, 2, coutp)    f32    per-tile [sum, sum_sq]
    """
    ysum = jnp.zeros((1, coutp), jnp.float32)
    ysq = jnp.zeros((1, coutp), jnp.float32)

    for rr in range(TH):                     # output row of the phase grid
        for a in (0, 1):                     # row phase
            rows = []
            for (dh, _kh) in _TAPS[a]:
                local = rr + dh + 1          # row inside the padded window
                if local < TH:
                    rows.append(x_ref[0, local])          # (W+2, Cin)
                else:
                    rows.append(xh_ref[0, local - TH])    # halo row
            for b in (0, 1):                 # column phase
                p = 2 * a + b
                pieces = []
                for row in rows:                          # tap-row major
                    for (dw, _kw) in _TAPS[b]:            # tap-col minor
                        c0 = dw + 1
                        pieces.append(row[c0:c0 + W, :])  # (W, Cin)
                lhs = jnp.concatenate(pieces, axis=-1)    # (W, 4*Cin) bf16
                acc = jnp.dot(lhs, w_ref[p],
                              preferred_element_type=jnp.float32)  # (W, coutp)
                ysum = ysum + jnp.sum(acc, axis=0, keepdims=True)
                ysq = ysq + jnp.sum(acc * acc, axis=0, keepdims=True)
                y_ref[0, rr, p, :, :] = acc.astype(y_ref.dtype)

    stat_ref[0, 0] = jnp.concatenate([ysum, ysq], axis=0)          # (2, coutp)


# ---------------------------------------------------------------------------
# Pass 2: BatchNorm affine (+ ReLU) + sub-pixel scatter into the final layout
# ---------------------------------------------------------------------------
def _bn_relu_scatter_kernel(y_ref, p_ref, o_ref, *, TH, cout, with_relu):
    """y_ref: (1, TH, 4, W, coutp) bf16, p_ref: (2, coutp) f32 [scale; shift],
    o_ref: (1, 2*TH, W, 2*cout) f32 — interleaved (row-major) output slab."""
    scale = p_ref[0:1, :]                    # (1, coutp)
    shift = p_ref[1:2, :]
    for rr in range(TH):
        for a in (0, 1):
            pieces = []
            for b in (0, 1):
                v = y_ref[0, rr, 2 * a + b].astype(jnp.float32)   # (W, coutp)
                v = v * scale + shift
                if with_relu:
                    v = jnp.maximum(v, 0.0)
                pieces.append(v[:, :cout])
            # (W, 2*cout): columns [0:cout] = phase b=0, [cout:2*cout] = b=1,
            # which is exactly the row-major (2*W, cout) interleaving.
            o_ref[0, 2 * rr + a] = jnp.concatenate(pieces, axis=-1)


# ---------------------------------------------------------------------------
# Wrapper
# ---------------------------------------------------------------------------
def deconv_bn_relu(x_nchw, weight, gamma, beta, *, with_relu=False, eps=1e-5):
    """ConvTranspose2d(k=4, s=2, p=1, bias=False) -> BatchNorm2d(train) -> ReLU?.

    x_nchw : [N, Cin, H, W]      (float32)
    weight : [Cin, Cout, 4, 4]   (PyTorch ConvTranspose2d weight layout)
    gamma, beta : [Cout]
    returns: [N, Cout, 2H, 2W]
    """
    N, Cin, H, W = x_nchw.shape
    Cin_w, Cout, K, Kw = weight.shape
    assert Cin == Cin_w and K == 4 and Kw == 4
    Ho, Wo = 2 * H, 2 * W

    # Row-tile height: must be even (2-row halo block) and divide H.
    TH = 0
    for cand in (8, 4, 2):
        if H % cand == 0:
            TH = cand
            break
    # TODO(synk): support odd H (needs bottom padding + masking of the BN stats).
    assert TH >= 2, "H must be even"
    Ht = H // TH

    coutp = ((Cout + 127) // 128) * 128      # lane-dense channel padding
    Wp2 = W + 2

    # Padded NHWC input in bf16 (MXU input dtype, halves the x DMA bytes).
    x_nhwc = jnp.transpose(x_nchw, (0, 2, 3, 1)).astype(jnp.bfloat16)
    x_pad = jnp.pad(x_nhwc, ((0, 0), (1, 1), (1, 1), (0, 0)))

    # Per-phase weights: [4, 4*Cin, coutp], rows ordered (tap_row, tap_col, Cin).
    w_list = []
    for a in (0, 1):
        for b in (0, 1):
            kh_idx = [kh for (_dh, kh) in _TAPS[a]]
            kw_idx = [kw for (_dw, kw) in _TAPS[b]]
            wsub = weight[:, :, kh_idx, :][:, :, :, kw_idx]       # (Cin,Cout,2,2)
            w_list.append(jnp.transpose(wsub, (2, 3, 0, 1)).reshape(4 * Cin, Cout))
    w_all = jnp.stack(w_list, axis=0)                             # (4, 4Cin, Cout)
    w_all = jnp.pad(w_all, ((0, 0), (0, 0), (0, coutp - Cout))).astype(jnp.bfloat16)

    flops = 2 * N * H * W * 4 * (4 * Cin) * Cout
    bytes_accessed = int(x_pad.size * 2 + w_all.size * 2
                         + N * H * 4 * W * coutp * 2
                         + N * Ht * 2 * coutp * 4)
    vmem_lim = 64 * 1024 * 1024              # fits v7x (64 MiB phys) tile budget

    # ---------------- pass 1: conv phases + partial BN stats ----------------
    y, stats = pl.pallas_call(
        partial(_deconv_stats_kernel, TH=TH, W=W, coutp=coutp),
        out_shape=(jax.ShapeDtypeStruct((N, H, 4, W, coutp), jnp.bfloat16),
                   jax.ShapeDtypeStruct((N, Ht, 2, coutp), jnp.float32)),
        grid=(N, Ht),
        in_specs=[
            pl.BlockSpec((1, TH, Wp2, Cin), lambda n, t: (n, t, 0, 0)),
            # 2-row halo directly below the main block (TH even => block aligned)
            pl.BlockSpec((1, 2, Wp2, Cin),
                         lambda n, t: (n, (t + 1) * (TH // 2), 0, 0)),
            pl.BlockSpec((4, 4 * Cin, coutp), lambda n, t: (0, 0, 0)),
        ],
        out_specs=(
            pl.BlockSpec((1, TH, 4, W, coutp), lambda n, t: (n, t, 0, 0, 0)),
            pl.BlockSpec((1, 1, 2, coutp), lambda n, t: (n, t, 0, 0)),
        ),
        compiler_params=pltpu.CompilerParams(
            dimension_semantics=("parallel", "parallel"),
            vmem_limit_bytes=vmem_lim),
        cost_estimate=pl.CostEstimate(flops=flops, transcendentals=0,
                                      bytes_accessed=bytes_accessed),
    )(x_pad, x_pad, w_all)

    # Tiny per-channel scalar math stays in JAX glue (reduces per-tile partials).
    st = jnp.sum(stats, axis=(0, 1))                       # (2, coutp) f32
    count = float(4 * N * H * W)                           # = N * Ho * Wo
    mean = st[0] / count
    # NOTE: E[y^2]-E[y]^2 in f32 — fine at current tolerances; guard tiny negatives.
    var = jnp.maximum(st[1] / count - mean * mean, 0.0)
    gamma_p = jnp.pad(gamma.astype(jnp.float32), (0, coutp - Cout))
    beta_p = jnp.pad(beta.astype(jnp.float32), (0, coutp - Cout))
    scale = gamma_p / jnp.sqrt(var + eps)
    shift = beta_p - mean * scale
    bn_p = jnp.stack([scale, shift], axis=0)               # (2, coutp)

    # ---------------- pass 2: BN affine + ReLU + fused phase scatter ---------
    out_packed = pl.pallas_call(
        partial(_bn_relu_scatter_kernel, TH=TH, cout=Cout, with_relu=with_relu),
        out_shape=jax.ShapeDtypeStruct((N, Ho, W, 2 * Cout), jnp.float32),
        grid=(N, Ht),
        in_specs=[
            # (optionally pipeline_mode=pl.Buffered(3) to deepen the y pipeline)
            pl.BlockSpec((1, TH, 4, W, coutp), lambda n, t: (n, t, 0, 0, 0)),
            pl.BlockSpec((2, coutp), lambda n, t: (0, 0)),
        ],
        out_specs=pl.BlockSpec((1, 2 * TH, W, 2 * Cout),
                               lambda n, t: (n, t, 0, 0)),
        compiler_params=pltpu.CompilerParams(
            dimension_semantics=("parallel", "parallel"),
            vmem_limit_bytes=vmem_lim),
    )(y, bn_p)

    out_nhwc = out_packed.reshape(N, Ho, Wo, Cout)         # free row-major reshape
    return jnp.transpose(out_nhwc, (0, 3, 1, 2))           # NCHW (PyTorch layout)


# ---------------------------------------------------------------------------
# Pure-JAX reference (mirrors the PyTorch module exactly, in float32)
# ---------------------------------------------------------------------------
def reference(x, weight, gamma, beta, with_relu, eps=1e-5):
    K = weight.shape[2]
    w_conv = jnp.transpose(jnp.flip(weight, axis=(2, 3)), (1, 0, 2, 3))  # OIHW
    pad = K - 1 - 1
    y = lax.conv_general_dilated(
        x, w_conv, window_strides=(1, 1),
        padding=[(pad, pad), (pad, pad)], lhs_dilation=(2, 2),
        dimension_numbers=("NCHW", "OIHW", "NCHW"))
    mean = y.mean(axis=(0, 2, 3), keepdims=True)
    var = y.var(axis=(0, 2, 3), keepdims=True)
    y = (y - mean) / jnp.sqrt(var + eps)
    y = y * gamma[None, :, None, None] + beta[None, :, None, None]
    if with_relu:
        y = jnp.maximum(y, 0.0)
    return y


# ---------------------------------------------------------------------------
if __name__ == "__main__":
    key = jax.random.PRNGKey(0)
    k_x, k_w = jax.random.split(key)

    N, Cin, Cout, H, W = 2, 4, 8, 16, 16
    with_relu = True

    x = jax.random.normal(k_x, (N, Cin, H, W), dtype=jnp.float32)
    # ConvTranspose2d weight: [in_channels, out_channels, kH, kW]
    weight = jax.random.normal(k_w, (Cin, Cout, 4, 4), dtype=jnp.float32) * 0.1
    gamma = jnp.ones((Cout,), dtype=jnp.float32)
    beta = jnp.zeros((Cout,), dtype=jnp.float32)

    fn = jax.jit(partial(deconv_bn_relu, with_relu=with_relu))
    out = jax.block_until_ready(fn(x, weight, gamma, beta))

    ref = reference(x, weight, gamma, beta, with_relu)
    assert out.shape == (N, Cout, 2 * H, 2 * W), out.shape
    # Tolerance reflects bf16 MXU inputs + bf16 phase intermediate (f32 accum).
    assert jnp.allclose(out, ref, atol=3e-2, rtol=2e-2), float(
        jnp.max(jnp.abs(out - ref)))

    print("KERNEL_OK")
</pallas_src>

<mosaic_0001>
module attributes {stable_mosaic.version = 11 : i64} {
  func.func @_deconv_stats_kernel(%arg0: i32, %arg1: i32, %arg2: memref<1x8x18x4xbf16, #tpu.memory_space<vmem>>, %arg3: memref<1x2x18x4xbf16, #tpu.memory_space<vmem>>, %arg4: memref<4x16x128xbf16, #tpu.memory_space<vmem>>, %arg5: memref<1x8x4x16x128xbf16, #tpu.memory_space<vmem>>, %arg6: memref<1x1x2x128xf32, #tpu.memory_space<vmem>>) attributes {dimension_semantics = [#tpu.dimension_semantics<parallel>, #tpu.dimension_semantics<parallel>], iteration_bounds = array<i64: 2, 2>, scalar_prefetch = 0 : i64, scratch_operands = 0 : i64, tpu.core_type = #tpu.core_type<tc>, window_params = [{transform_indices = @transform_0, window_bounds = array<i64: 1, 8, 18, 4>}, {transform_indices = @transform_1, window_bounds = array<i64: 1, 2, 18, 4>}, {pipeline_mode = #tpu.pipeline_mode<synchronous>, transform_indices = @transform_2, window_bounds = array<i64: 4, 16, 128>}, {transform_indices = @transform_3, window_bounds = array<i64: 1, 8, 4, 16, 128>}, {transform_indices = @transform_4, window_bounds = array<i64: 1, 1, 2, 128>}]} {
    %cst = arith.constant 0.000000e+00 : f32
    %0 = vector.broadcast %cst : f32 to vector<1x128xf32>
    %cst_0 = arith.constant 0.000000e+00 : f32
    %1 = vector.broadcast %cst_0 : f32 to vector<1x128xf32>
    %c0 = arith.constant 0 : index
    %c0_1 = arith.constant 0 : index
    %c0_2 = arith.constant 0 : index
    %c0_3 = arith.constant 0 : index
    %2 = vector.load %arg2[%c0, %c0_1, %c0_2, %c0_3] : memref<1x8x18x4xbf16, #tpu.memory_space<vmem>>, vector<1x1x18x4xbf16>
    %3 = vector.shape_cast %2 : vector<1x1x18x4xbf16> to vector<18x4xbf16>
    %c0_4 = arith.constant 0 : index
    %c1 = arith.constant 1 : index
    %c0_5 = arith.constant 0 : index
    %c0_6 = arith.constant 0 : index
    %4 = vector.load %arg2[%c0_4, %c1, %c0_5, %c0_6] : memref<1x8x18x4xbf16, #tpu.memory_space<vmem>>, vector<1x1x18x4xbf16>
    %5 = vector.shape_cast %4 : vector<1x1x18x4xbf16> to vector<18x4xbf16>
    %6 = vector.extract_strided_slice %3 {offsets = [0, 0], sizes = [16, 4], strides = [1, 1]} : vector<18x4xbf16> to vector<16x4xbf16>
    %7 = vector.extract_strided_slice %3 {offsets = [1, 0], sizes = [16, 4], strides = [1, 1]} : vector<18x4xbf16> to vector<16x4xbf16>
    %8 = vector.extract_strided_slice %5 {offsets = [0, 0], sizes = [16, 4], strides = [1, 1]} : vector<18x4xbf16> to vector<16x4xbf16>
    %9 = vector.extract_strided_slice %5 {offsets = [1, 0], sizes = [16, 4], strides = [1, 1]} : vector<18x4xbf16> to vector<16x4xbf16>
    %10 = tpu.concatenate %6, %7, %8, %9 in 1 : vector<16x4xbf16>, vector<16x4xbf16>, vector<16x4xbf16>, vector<16x4xbf16> -> vector<16x16xbf16>
    %c0_7 = arith.constant 0 : index
    %c0_8 = arith.constant 0 : index
    %c0_9 = arith.constant 0 : index
    %11 = vector.load %arg4[%c0_7, %c0_8, %c0_9] : memref<4x16x128xbf16, #tpu.memory_space<vmem>>, vector<1x16x128xbf16>
    %12 = vector.shape_cast %11 : vector<1x16x128xbf16> to vector<16x128xbf16>
    %cst_10 = arith.constant dense<0.000000e+00> : vector<16x128xf32>
    %13 = tpu.matmul %10, %12, %cst_10 {dimension_numbers = #tpu.dot_dimension_numbers<[1], [0], [0], [1], [0, 0, 1, 1], [], []>} : vector<16x16xbf16>, vector<16x128xbf16>, vector<16x128xf32> -> vector<16x128xf32>
    %cst_11 = arith.constant dense<0.000000e+00> : vector<128xf32>
    %14 = vector.multi_reduction <add>, %13, %cst_11 [0] : vector<16x128xf32> to vector<128xf32>
    %15 = vector.shape_cast %14 : vector<128xf32> to vector<1x128xf32>
    %16 = arith.addf %0, %15 : vector<1x128xf32>
    %17 = arith.mulf %13, %13 : vector<16x128xf32>
    %cst_12 = arith.constant dense<0.000000e+00> : vector<128xf32>
    %18 = vector.multi_reduction <add>, %17, %cst_12 [0] : vector<16x128xf32> to vector<128xf32>
    %19 = vector.shape_cast %18 : vector<128xf32> to vector<1x128xf32>
    %20 = arith.addf %1, %19 : vector<1x128xf32>
    %21 = arith.truncf %13 : vector<16x128xf32> to vector<16x128xbf16>
    %c0_13 = arith.constant 0 : index
    %c0_14 = arith.constant 0 : index
    %c0_15 = arith.constant 0 : index
    %c0_16 = arith.constant 0 : index
    %c0_17 = arith.constant 0 : index
    %22 = vector.load %arg5[%c0_13, %c0_14, %c0_15, %c0_16, %c0_17] : memref<1x8x4x16x128xbf16, #tpu.memory_space<vmem>>, vector<1x1x1x16x128xbf16>
    %23 = vector.shape_cast %22 : vector<1x1x1x16x128xbf16> to vector<16x128xbf16>
    %24 = vector.shape_cast %21 : vector<16x128xbf16> to vector<1x1x1x16x128xbf16>
    tpu.vector_store %arg5[%c0_13, %c0_14, %c0_15, %c0_16, %c0_17], %24 {strides = array<i32>} : memref<1x8x4x16x128xbf16, #tpu.memory_space<vmem>>, vector<1x1x1x16x128xbf16>,
    %25 = vector.extract_strided_slice %3 {offsets = [1, 0], sizes = [16, 4], strides = [1, 1]} : vector<18x4xbf16> to vector<16x4xbf16>
    %26 = vector.extract_strided_slice %3 {offsets = [2, 0], sizes = [16, 4], strides = [1, 1]} : vector<18x4xbf16> to vector<16x4xbf16>
    %27 = vector.extract_strided_slice %5 {offsets = [1, 0], sizes = [16, 4], strides = [1, 1]} : vector<18x4xbf16> to vector<16x4xbf16>
    %28 = vector.extract_strided_slice %5 {offsets = [2, 0], sizes = [16, 4], strides = [1, 1]} : vector<18x4xbf16> to vector<16x4xbf16>
    %29 = tpu.concatenate %25, %26, %27, %28 in 1 : vector<16x4xbf16>, vector<16x4xbf16>, vector<16x4xbf16>, vector<16x4xbf16> -> vector<16x16xbf16>
    %c1_18 = arith.constant 1 : index
    %c0_19 = arith.constant 0 : index
    %c0_20 = arith.constant 0 : index
    %30 = vector.load %arg4[%c1_18, %c0_19, %c0_20] : memref<4x16x128xbf16, #tpu.memory_space<vmem>>, vector<1x16x128xbf16>
    %31 = vector.shape_cast %30 : vector<1x16x128xbf16> to vector<16x128xbf16>
    %cst_21 = arith.constant dense<0.000000e+00> : vector<16x128xf32>
    %32 = tpu.matmul %29, %31, %cst_21 {dimension_numbers = #tpu.dot_dimension_numbers<[1], [0], [0], [1], [0, 0, 1, 1], [], []>} : vector<16x16xbf16>, vector<16x128xbf16>, vector<16x128xf32> -> vector<16x128xf32>
    %cst_22 = arith.constant dense<0.000000e+00> : vector<128xf32>
    %33 = vector.multi_reduction <add>, %32, %cst_22 [0] : vector<16x128xf32> to vector<128xf32>
    %34 = vector.shape_cast %33 : vector<128xf32> to vector<1x128xf32>
    %35 = arith.addf %16, %34 : vector<1x128xf32>
    %36 = arith.mulf %32, %32 : vector<16x128xf32>
    %cst_23 = arith.constant dense<0.000000e+00> : vector<128xf32>
    %37 = vector.multi_reduction <add>, %36, %cst_23 [0] : vector<16x128xf32> to vector<128xf32>
    %38 = vector.shape_cast %37 : vector<128xf32> to vector<1x128xf32>
    %39 = arith.addf %20, %38 : vector<1x128xf32>
    %40 = arith.truncf %32 : vector<16x128xf32> to vector<16x128xbf16>
    %c0_24 = arith.constant 0 : index
    %c0_25 = arith.constant 0 : index
    %c1_26 = arith.constant 1 : index
    %c0_27 = arith.constant 0 : index
    %c0_28 = arith.constant 0 : index
    %41 = vector.load %arg5[%c0_24, %c0_25, %c1_26, %c0_27, %c0_28] : memref<1x8x4x16x128xbf16, #tpu.memory_space<vmem>>, vector<1x1x1x16x128xbf16>
    %42 = vector.shape_cast %41 : vector<1x1x1x16x128xbf16> to vector<16x128xbf16>
    %43 = vector.shape_cast %40 : vector<16x128xbf16> to vector<1x1x1x16x128xbf16>
    tpu.vector_store %arg5[%c0_24, %c0_25, %c1_26, %c0_27, %c0_28], %43 {strides = array<i32>} : memref<1x8x4x16x128xbf16, #tpu.memory_space<vmem>>, vector<1x1x1x16x128xbf16>,
    %c0_29 = arith.constant 0 : index
    %c1_30 = arith.constant 1 : index
    %c0_31 = arith.constant 0 : index
    %c0_32 = arith.constant 0 : index
    %44 = vector.load %arg2[%c0_29, %c1_30, %c0_31, %c0_32] : memref<1x8x18x4xbf16, #tpu.memory_space<vmem>>, vector<1x1x18x4xbf16>
    %45 = vector.shape_cast %44 : vector<1x1x18x4xbf16> to vector<18x4xbf16>
    %c0_33 = arith.constant 0 : index
    %c2 = arith.constant 2 : index
    %c0_34 = arith.constant 0 : index
    %c0_35 = arith.constant 0 : index
    %46 = vector.load %arg2[%c0_33, %c2, %c0_34, %c0_35] : memref<1x8x18x4xbf16, #tpu.memory_space<vmem>>, vector<1x1x18x4xbf16>
    %47 = vector.shape_cast %46 : vector<1x1x18x4xbf16> to vector<18x4xbf16>
    %48 = vector.extract_strided_slice %45 {offsets = [0, 0], sizes = [16, 4], strides = [1, 1]} : vector<18x4xbf16> to vector<16x4xbf16>
    %49 = vector.extract_strided_slice %45 {offsets = [1, 0], sizes = [16, 4], strides = [1, 1]} : vector<18x4xbf16> to vector<16x4xbf16>
    %50 = vector.extract_strided_slice %47 {offsets = [0, 0], sizes = [16, 4], strides = [1, 1]} : vector<18x4xbf16> to vector<16x4xbf16>
    %51 = vector.extract_strided_slice %47 {offsets = [1, 0], sizes = [16, 4], strides = [1, 1]} : vector<18x4xbf16> to vector<16x4xbf16>
    %52 = tpu.concatenate %48, %49, %50, %51 in 1 : vector<16x4xbf16>, vector<16x4xbf16>, vector<16x4xbf16>, vector<16x4xbf16> -> vector<16x16xbf16>
    %c2_36 = arith.constant 2 : index
    %c0_37 = arith.constant 0 : index
    %c0_38 = arith.constant 0 : index
    %53 = vector.load %arg4[%c2_36, %c0_37, %c0_38] : memref<4x16x128xbf16, #tpu.memory_space<vmem>>, vector<1x16x128xbf16>
    %54 = vector.shape_cast %53 : vector<1x16x128xbf16> to vector<16x128xbf16>
    %cst_39 = arith.constant dense<0.000000e+00> : vector<16x128xf32>
    %55 = tpu.matmul %52, %54, %cst_39 {dimension_numbers = #tpu.dot_dimension_numbers<[1], [0], [0], [1], [0, 0, 1, 1], [], []>} : vector<16x16xbf16>, vector<16x128xbf16>, vector<16x128xf32> -> vector<16x128xf32>
    %cst_40 = arith.constant dense<0.000000e+00> : vector<128xf32>
    %56 = vector.multi_reduction <add>, %55, %cst_40 [0] : vector<16x128xf32> to vector<128xf32>
    %57 = vector.shape_cast %56 : vector<128xf32> to vector<1x128xf32>
    %58 = arith.addf %35, %57 : vector<1x128xf32>
    %59 = arith.mulf %55, %55 : vector<16x128xf32>
    %cst_41 = arith.constant dense<0.000000e+00> : vector<128xf32>
    %60 = vector.multi_reduction <add>, %59, %cst_41 [0] : vector<16x128xf32> to vector<128xf32>
    %61 = vector.shape_cast %60 : vector<128xf32> to vector<1x128xf32>
    %62 = arith.addf %39, %61 : vector<1x128xf32>
    %63 = arith.truncf %55 : vector<16x128xf32> to vector<16x128xbf16>
    %c0_42 = arith.constant 0 : index
    %c0_43 = arith.constant 0 : index
    %c2_44 = arith.constant 2 : index
    %c0_45 = arith.constant 0 : index
    %c0_46 = arith.constant 0 : index
    %64 = vector.load %arg5[%c0_42, %c0_43, %c2_44, %c0_45, %c0_46] : memref<1x8x4x16x128xbf16, #tpu.memory_space<vmem>>, vector<1x1x1x16x128xbf16>
    %65 = vector.shape_cast %64 : vector<1x1x1x16x128xbf16> to vector<16x128xbf16>
    %66 = vector.shape_cast %63 : vector<16x128xbf16> to vector<1x1x1x16x128xbf16>
    tpu.vector_store %arg5[%c0_42, %c0_43, %c2_44, %c0_45, %c0_46], %66 {strides = array<i32>} : memref<1x8x4x16x128xbf16, #tpu.memory_space<vmem>>, vector<1x1x1x16x128xbf16>,
    %67 = vector.extract_strided_slice %45 {offsets = [1, 0], sizes = [16, 4], strides = [1, 1]} : vector<18x4xbf16> to vector<16x4xbf16>
    %68 = vector.extract_strided_slice %45 {offsets = [2, 0], sizes = [16, 4], strides = [1, 1]} : vector<18x4xbf16> to vector<16x4xbf16>
    %69 = vector.extract_strided_slice %47 {offsets = [1, 0], sizes = [16, 4], strides = [1, 1]} : vector<18x4xbf16> to vector<16x4xbf16>
    %70 = vector.extract_strided_slice %47 {offsets = [2, 0], sizes = [16, 4], strides = [1, 1]} : vector<18x4xbf16> to vector<16x4xbf16>
    %71 = tpu.concatenate %67, %68, %69, %70 in 1 : vector<16x4xbf16>, vector<16x4xbf16>, vector<16x4xbf16>, vector<16x4xbf16> -> vector<16x16xbf16>
    %c3 = arith.constant 3 : index
    %c0_47 = arith.constant 0 : index
    %c0_48 = arith.constant 0 : index
    %72 = vector.load %arg4[%c3, %c0_47, %c0_48] : memref<4x16x128xbf16, #tpu.memory_space<vmem>>, vector<1x16x128xbf16>
    %73 = vector.shape_cast %72 : vector<1x16x128xbf16> to vector<16x128xbf16>
    %cst_49 = arith.constant dense<0.000000e+00> : vector<16x128xf32>
    %74 = tpu.matmul %71, %73, %cst_49 {dimension_numbers = #tpu.dot_dimension_numbers<[1], [0], [0], [1], [0, 0, 1, 1], [], []>} : vector<16x16xbf16>, vector<16x128xbf16>, vector<16x128xf32> -> vector<16x128xf32>
    %cst_50 = arith.constant dense<0.000000e+00> : vector<128xf32>
    %75 = vector.multi_reduction <add>, %74, %cst_50 [0] : vector<16x128xf32> to vector<128xf32>
    %76 = vector.shape_cast %75 : vector<128xf32> to vector<1x128xf32>
    %77 = arith.addf %58, %76 : vector<1x128xf32>
    %78 = arith.mulf %74, %74 : vector<16x128xf32>
    %cst_51 = arith.constant dense<0.000000e+00> : vector<128xf32>
    %79 = vector.multi_reduction <add>, %78, %cst_51 [0] : vector<16x128xf32> to vector<128xf32>
    %80 = vector.shape_cast %79 : vector<128xf32> to vector<1x128xf32>
    %81 = arith.addf %62, %80 : vector<1x128xf32>
    %82 = arith.truncf %74 : vector<16x128xf32> to vector<16x128xbf16>
    %c0_52 = arith.constant 0 : index
    %c0_53 = arith.constant 0 : index
    %c3_54 = arith.constant 3 : index
    %c0_55 = arith.constant 0 : index
    %c0_56 = arith.constant 0 : index
    %83 = vector.load %arg5[%c0_52, %c0_53, %c3_54, %c0_55, %c0_56] : memref<1x8x4x16x128xbf16, #tpu.memory_space<vmem>>, vector<1x1x1x16x128xbf16>
    %84 = vector.shape_cast %83 : vector<1x1x1x16x128xbf16> to vector<16x128xbf16>
    %85 = vector.shape_cast %82 : vector<16x128xbf16> to vector<1x1x1x16x128xbf16>
    tpu.vector_store %arg5[%c0_52, %c0_53, %c3_54, %c0_55, %c0_56], %85 {strides = array<i32>} : memref<1x8x4x16x128xbf16, #tpu.memory_space<vmem>>, vector<1x1x1x16x128xbf16>,
    %c0_57 = arith.constant 0 : index
    %c1_58 = arith.constant 1 : index
    %c0_59 = arith.constant 0 : index
    %c0_60 = arith.constant 0 : index
    %86 = vector.load %arg2[%c0_57, %c1_58, %c0_59, %c0_60] : memref<1x8x18x4xbf16, #tpu.memory_space<vmem>>, vector<1x1x18x4xbf16>
    %87 = vector.shape_cast %86 : vector<1x1x18x4xbf16> to vector<18x4xbf16>
    %c0_61 = arith.constant 0 : index
    %c2_62 = arith.constant 2 : index
    %c0_63 = arith.constant 0 : index
    %c0_64 = arith.constant 0 : index
    %88 = vector.load %arg2[%c0_61, %c2_62, %c0_63, %c0_64] : memref<1x8x18x4xbf16, #tpu.memory_space<vmem>>, vector<1x1x18x4xbf16>
    %89 = vector.shape_cast %88 : vector<1x1x18x4xbf16> to vector<18x4xbf16>
    %90 = vector.extract_strided_slice %87 {offsets = [0, 0], sizes = [16, 4], strides = [1, 1]} : vector<18x4xbf16> to vector<16x4xbf16>
    %91 = vector.extract_strided_slice %87 {offsets = [1, 0], sizes = [16, 4], strides = [1, 1]} : vector<18x4xbf16> to vector<16x4xbf16>
    %92 = vector.extract_strided_slice %89 {offsets = [0, 0], sizes = [16, 4], strides = [1, 1]} : vector<18x4xbf16> to vector<16x4xbf16>
    %93 = vector.extract_strided_slice %89 {offsets = [1, 0], sizes = [16, 4], strides = [1, 1]} : vector<18x4xbf16> to vector<16x4xbf16>
    %94 = tpu.concatenate %90, %91, %92, %93 in 1 : vector<16x4xbf16>, vector<16x4xbf16>, vector<16x4xbf16>, vector<16x4xbf16> -> vector<16x16xbf16>
    %c0_65 = arith.constant 0 : index
    %c0_66 = arith.constant 0 : index
    %c0_67 = arith.constant 0 : index
    %95 = vector.load %arg4[%c0_65, %c0_66, %c0_67] : memref<4x16x128xbf16, #tpu.memory_space<vmem>>, vector<1x16x128xbf16>
    %96 = vector.shape_cast %95 : vector<1x16x128xbf16> to vector<16x128xbf16>
    %cst_68 = arith.constant dense<0.000000e+00> : vector<16x128xf32>
    %97 = tpu.matmul %94, %96, %cst_68 {dimension_numbers = #tpu.dot_dimension_numbers<[1], [0], [0], [1], [0, 0, 1, 1], [], []>} : vector<16x16xbf16>, vector<16x128xbf16>, vector<16x128xf32> -> vector<16x128xf32>
    %cst_69 = arith.constant dense<0.000000e+00> : vector<128xf32>
    %98 = vector.multi_reduction <add>, %97, %cst_69 [0] : vector<16x128xf32> to vector<128xf32>
    %99 = vector.shape_cast %98 : vector<128xf32> to vector<1x128xf32>
    %100 = arith.addf %77, %99 : vector<1x128xf32>
    %101 = arith.mulf %97, %97 : vector<16x128xf32>
    %cst_70 = arith.constant dense<0.000000e+00> : vector<128xf32>
    %102 = vector.multi_reduction <add>, %101, %cst_70 [0] : vector<16x128xf32> to vector<128xf32>
    %103 = vector.shape_cast %102 : vector<128xf32> to vector<1x128xf32>
    %104 = arith.addf %81, %103 : vector<1x128xf32>
    %105 = arith.truncf %97 : vector<16x128xf32> to vector<16x128xbf16>
    %c0_71 = arith.constant 0 : index
    %c1_72 = arith.constant 1 : index
    %c0_73 = arith.constant 0 : index
    %c0_74 = arith.constant 0 : index
    %c0_75 = arith.constant 0 : index
    %106 = vector.load %arg5[%c0_71, %c1_72, %c0_73, %c0_74, %c0_75] : memref<1x8x4x16x128xbf16, #tpu.memory_space<vmem>>, vector<1x1x1x16x128xbf16>
    %107 = vector.shape_cast %106 : vector<1x1x1x16x128xbf16> to vector<16x128xbf16>
    %108 = vector.shape_cast %105 : vector<16x128xbf16> to vector<1x1x1x16x128xbf16>
    tpu.vector_store %arg5[%c0_71, %c1_72, %c0_73, %c0_74, %c0_75], %108 {strides = array<i32>} : memref<1x8x4x16x128xbf16, #tpu.memory_space<vmem>>, vector<1x1x1x16x128xbf16>,
    %109 = vector.extract_strided_slice %87 {offsets = [1, 0], sizes = [16, 4], strides = [1, 1]} : vector<18x4xbf16> to vector<16x4xbf16>
    %110 = vector.extract_strided_slice %87 {offsets = [2, 0], sizes = [16, 4], strides = [1, 1]} : vector<18x4xbf16> to vector<16x4xbf16>
    %111 = vector.extract_strided_slice %89 {offsets = [1, 0], sizes = [16, 4], strides = [1, 1]} : vector<18x4xbf16> to vector<16x4xbf16>
    %112 = vector.extract_strided_slice %89 {offsets = [2, 0], sizes = [16, 4], strides = [1, 1]} : vector<18x4xbf16> to vector<16x4xbf16>
    %113 = tpu.concatenate %109, %110, %111, %112 in 1 : vector<16x4xbf16>, vector<16x4xbf16>, vector<16x4xbf16>, vector<16x4xbf16> -> vector<16x16xbf16>
    %c1_76 = arith.constant 1 : index
    %c0_77 = arith.constant 0 : index
    %c0_78 = arith.constant 0 : index
    %114 = vector.load %arg4[%c1_76, %c0_77, %c0_78] : memref<4x16x128xbf16, #tpu.memory_space<vmem>>, vector<1x16x128xbf16>
    %115 = vector.shape_cast %114 : vector<1x16x128xbf16> to vector<16x128xbf16>
    %cst_79 = arith.constant dense<0.000000e+00> : vector<16x128xf32>
    %116 = tpu.matmul %113, %115, %cst_79 {dimension_numbers = #tpu.dot_dimension_numbers<[1], [0], [0], [1], [0, 0, 1, 1], [], []>} : vector<16x16xbf16>, vector<16x128xbf16>, vector<16x128xf32> -> vector<16x128xf32>
    %cst_80 = arith.constant dense<0.000000e+00> : vector<128xf32>
    %117 = vector.multi_reduction <add>, %116, %cst_80 [0] : vector<16x128xf32> to vector<128xf32>
    %118 = vector.shape_cast %117 : vector<128xf32> to vector<1x128xf32>
    %119 = arith.addf %100, %118 : vector<1x128xf32>
    %120 = arith.mulf %116, %116 : vector<16x128xf32>
    %cst_81 = arith.constant dense<0.000000e+00> : vector<128xf32>
    %121 = vector.multi_reduction <add>, %120, %cst_81 [0] : vector<16x128xf32> to vector<128xf32>
    %122 = vector.shape_cast %121 : vector<128xf32> to vector<1x128xf32>
    %123 = arith.addf %104, %122 : vector<1x128xf32>
    %124 = arith.truncf %116 : vector<16x128xf32> to vector<16x128xbf16>
    %c0_82 = arith.constant 0 : index
    %c1_83 = arith.constant 1 : index
    %c1_84 = arith.constant 1 : index
    %c0_85 = arith.constant 0 : index
    %c0_86 = arith.constant 0 : index
    %125 = vector.load %arg5[%c0_82, %c1_83, %c1_84, %c0_85, %c0_86] : memref<1x8x4x16x128xbf16, #tpu.memory_space<vmem>>, vector<1x1x1x16x128xbf16>
    %126 = vector.shape_cast %125 : vector<1x1x1x16x128xbf16> to vector<16x128xbf16>
    %127 = vector.shape_cast %124 : vector<16x128xbf16> to vector<1x1x1x16x128xbf16>
    tpu.vector_store %arg5[%c0_82, %c1_83, %c1_84, %c0_85, %c0_86], %127 {strides = array<i32>} : memref<1x8x4x16x128xbf16, #tpu.memory_space<vmem>>, vector<1x1x1x16x128xbf16>,
    %c0_87 = arith.constant 0 : index
    %c2_88 = arith.constant 2 : index
    %c0_89 = arith.constant 0 : index
    %c0_90 = arith.constant 0 : index
    %128 = vector.load %arg2[%c0_87, %c2_88, %c0_89, %c0_90] : memref<1x8x18x4xbf16, #tpu.memory_space<vmem>>, vector<1x1x18x4xbf16>
    %129 = vector.shape_cast %128 : vector<1x1x18x4xbf16> to vector<18x4xbf16>
    %c0_91 = arith.constant 0 : index
    %c3_92 = arith.constant 3 : index
    %c0_93 = arith.constant 0 : index
    %c0_94 = arith.constant 0 : index
    %130 = vector.load %arg2[%c0_91, %c3_92, %c0_93, %c0_94] : memref<1x8x18x4xbf16, #tpu.memory_space<vmem>>, vector<1x1x18x4xbf16>
    %131 = vector.shape_cast %130 : vector<1x1x18x4xbf16> to vector<18x4xbf16>
    %132 = vector.extract_strided_slice %129 {offsets = [0, 0], sizes = [16, 4], strides = [1, 1]} : vector<18x4xbf16> to vector<16x4xbf16>
    %133 = vector.extract_strided_slice %129 {offsets = [1, 0], sizes = [16, 4], strides = [1, 1]} : vector<18x4xbf16> to vector<16x4xbf16>
    %134 = vector.extract_strided_slice %131 {offsets = [0, 0], sizes = [16, 4], strides = [1, 1]} : vector<18x4xbf16> to vector<16x4xbf16>
    %135 = vector.extract_strided_slice %131 {offsets = [1, 0], sizes = [16, 4], strides = [1, 1]} : vector<18x4xbf16> to vector<16x4xbf16>
    %136 = tpu.concatenate %132, %133, %134, %135 in 1 : vector<16x4xbf16>, vector<16x4xbf16>, vector<16x4xbf16>, vector<16x4xbf16> -> vector<16x16xbf16>
    %c2_95 = arith.constant 2 : index
    %c0_96 = arith.constant 0 : index
    %c0_97 = arith.constant 0 : index
    %137 = vector.load %arg4[%c2_95, %c0_96, %c0_97] : memref<4x16x128xbf16, #tpu.memory_space<vmem>>, vector<1x16x128xbf16>
    %138 = vector.shape_cast %137 : vector<1x16x128xbf16> to vector<16x128xbf16>
    %cst_98 = arith.constant dense<0.000000e+00> : vector<16x128xf32>
    %139 = tpu.matmul %136, %138, %cst_98 {dimension_numbers = #tpu.dot_dimension_numbers<[1], [0], [0], [1], [0, 0, 1, 1], [], []>} : vector<16x16xbf16>, vector<16x128xbf16>, vector<16x128xf32> -> vector<16x128xf32>
    %cst_99 = arith.constant dense<0.000000e+00> : vector<128xf32>
    %140 = vector.multi_reduction <add>, %139, %cst_99 [0] : vector<16x128xf32> to vector<128xf32>
    %141 = vector.shape_cast %140 : vector<128xf32> to vector<1x128xf32>
    %142 = arith.addf %119, %141 : vector<1x128xf32>
    %143 = arith.mulf %139, %139 : vector<16x128xf32>
    %cst_100 = arith.constant dense<0.000000e+00> : vector<128xf32>
    %144 = vector.multi_reduction <add>, %143, %cst_100 [0] : vector<16x128xf32> to vector<128xf32>
    %145 = vector.shape_cast %144 : vector<128xf32> to vector<1x128xf32>
    %146 = arith.addf %123, %145 : vector<1x128xf32>
    %147 = arith.truncf %139 : vector<16x128xf32> to vector<16x128xbf16>
    %c0_101 = arith.constant 0 : index
    %c1_102 = arith.constant 1 : index
    %c2_103 = arith.constant 2 : index
    %c0_104 = arith.constant 0 : index
    %c0_105 = arith.constant 0 : index
    %148 = vector.load %arg5[%c0_101, %c1_102, %c2_103, %c0_104, %c0_105] : memref<1x8x4x16x128xbf16, #tpu.memory_space<vmem>>, vector<1x1x1x16x128xbf16>
    %149 = vector.shape_cast %148 : vector<1x1x1x16x128xbf16> to vector<16x128xbf16>
    %150 = vector.shape_cast %147 : vector<16x128xbf16> to vector<1x1x1x16x128xbf16>
    tpu.vector_store %arg5[%c0_101, %c1_102, %c2_103, %c0_104, %c0_105], %150 {strides = array<i32>} : memref<1x8x4x16x128xbf16, #tpu.memory_space<vmem>>, vector<1x1x1x16x128xbf16>,
    %151 = vector.extract_strided_slice %129 {offsets = [1, 0], sizes = [16, 4], strides = [1, 1]} : vector<18x4xbf16> to vector<16x4xbf16>
    %152 = vector.extract_strided_slice %129 {offsets = [2, 0], sizes = [16, 4], strides = [1, 1]} : vector<18x4xbf16> to vector<16x4xbf16>
    %153 = vector.extract_strided_slice %131 {offsets = [1, 0], sizes = [16, 4], strides = [1, 1]} : vector<18x4xbf16> to vector<16x4xbf16>
    %154 = vector.extract_strided_slice %131 {offsets = [2, 0], sizes = [16, 4], strides = [1, 1]} : vector<18x4xbf16> to vector<16x4xbf16>
    %155 = tpu.concatenate %151, %152, %153, %154 in 1 : vector<16x4xbf16>, vector<16x4xbf16>, vector<16x4xbf16>, vector<16x4xbf16> -> vector<16x16xbf16>
    %c3_106 = arith.constant 3 : index
    %c0_107 = arith.constant 0 : index
    %c0_108 = arith.constant 0 : index
    %156 = vector.load %arg4[%c3_106, %c0_107, %c0_108] : memref<4x16x128xbf16, #tpu.memory_space<vmem>>, vector<1x16x128xbf16>
    %157 = vector.shape_cast %156 : vector<1x16x128xbf16> to vector<16x128xbf16>
    %cst_109 = arith.constant dense<0.000000e+00> : vector<16x128xf32>
    %158 = tpu.matmul %155, %157, %cst_109 {dimension_numbers = #tpu.dot_dimension_numbers<[1], [0], [0], [1], [0, 0, 1, 1], [], []>} : vector<16x16xbf16>, vector<16x128xbf16>, vector<16x128xf32> -> vector<16x128xf32>
    %cst_110 = arith.constant dense<0.000000e+00> : vector<128xf32>
    %159 = vector.multi_reduction <add>, %158, %cst_110 [0] : vector<16x128xf32> to vector<128xf32>
    %160 = vector.shape_cast %159 : vector<128xf32> to vector<1x128xf32>
    %161 = arith.addf %142, %160 : vector<1x128xf32>
    %162 = arith.mulf %158, %158 : vector<16x128xf32>
    %cst_111 = arith.constant dense<0.000000e+00> : vector<128xf32>
    %163 = vector.multi_reduction <add>, %162, %cst_111 [0] : vector<16x128xf32> to vector<128xf32>
    %164 = vector.shape_cast %163 : vector<128xf32> to vector<1x128xf32>
    %165 = arith.addf %146, %164 : vector<1x128xf32>
    %166 = arith.truncf %158 : vector<16x128xf32> to vector<16x128xbf16>
    %c0_112 = arith.constant 0 : index
    %c1_113 = arith.constant 1 : index
    %c3_114 = arith.constant 3 : index
    %c0_115 = arith.constant 0 : index
    %c0_116 = arith.constant 0 : index
    %167 = vector.load %arg5[%c0_112, %c1_113, %c3_114, %c0_115, %c0_116] : memref<1x8x4x16x128xbf16, #tpu.memory_space<vmem>>, vector<1x1x1x16x128xbf16>
    %168 = vector.shape_cast %167 : vector<1x1x1x16x128xbf16> to vector<16x128xbf16>
    %169 = vector.shape_cast %166 : vector<16x128xbf16> to vector<1x1x1x16x128xbf16>
    tpu.vector_store %arg5[%c0_112, %c1_113, %c3_114, %c0_115, %c0_116], %169 {strides = array<i32>} : memref<1x8x4x16x128xbf16, #tpu.memory_space<vmem>>, vector<1x1x1x16x128xbf16>,
    %c0_117 = arith.constant 0 : index
    %c2_118 = arith.constant 2 : index
    %c0_119 = arith.constant 0 : index
    %c0_120 = arith.constant 0 : index
    %170 = vector.load %arg2[%c0_117, %c2_118, %c0_119, %c0_120] : memref<1x8x18x4xbf16, #tpu.memory_space<vmem>>, vector<1x1x18x4xbf16>
    %171 = vector.shape_cast %170 : vector<1x1x18x4xbf16> to vector<18x4xbf16>
    %c0_121 = arith.constant 0 : index
    %c3_122 = arith.constant 3 : index
    %c0_123 = arith.constant 0 : index
    %c0_124 = arith.constant 0 : index
    %172 = vector.load %arg2[%c0_121, %c3_122, %c0_123, %c0_124] : memref<1x8x18x4xbf16, #tpu.memory_space<vmem>>, vector<1x1x18x4xbf16>
    %173 = vector.shape_cast %172 : vector<1x1x18x4xbf16> to vector<18x4xbf16>
    %174 = vector.extract_strided_slice %171 {offsets = [0, 0], sizes = [16, 4], strides = [1, 1]} : vector<18x4xbf16> to vector<16x4xbf16>
    %175 = vector.extract_strided_slice %171 {offsets = [1, 0], sizes = [16, 4], strides = [1, 1]} : vector<18x4xbf16> to vector<16x4xbf16>
    %176 = vector.extract_strided_slice %173 {offsets = [0, 0], sizes = [16, 4], strides = [1, 1]} : vector<18x4xbf16> to vector<16x4xbf16>
    %177 = vector.extract_strided_slice %173 {offsets = [1, 0], sizes = [16, 4], strides = [1, 1]} : vector<18x4xbf16> to vector<16x4xbf16>
    %178 = tpu.concatenate %174, %175, %176, %177 in 1 : vector<16x4xbf16>, vector<16x4xbf16>, vector<16x4xbf16>, vector<16x4xbf16> -> vector<16x16xbf16>
    %c0_125 = arith.constant 0 : index
    %c0_126 = arith.constant 0 : index
    %c0_127 = arith.constant 0 : index
    %179 = vector.load %arg4[%c0_125, %c0_126, %c0_127] : memref<4x16x128xbf16, #tpu.memory_space<vmem>>, vector<1x16x128xbf16>
    %180 = vector.shape_cast %179 : vector<1x16x128xbf16> to vector<16x128xbf16>
    %cst_128 = arith.constant dense<0.000000e+00> : vector<16x128xf32>
    %181 = tpu.matmul %178, %180, %cst_128 {dimension_numbers = #tpu.dot_dimension_numbers<[1], [0], [0], [1], [0, 0, 1, 1], [], []>} : vector<16x16xbf16>, vector<16x128xbf16>, vector<16x128xf32> -> vector<16x128xf32>
    %cst_129 = arith.constant dense<0.000000e+00> : vector<128xf32>
    %182 = vector.multi_reduction <add>, %181, %cst_129 [0] : vector<16x128xf32> to vector<128xf32>
    %183 = vector.shape_cast %182 : vector<128xf32> to vector<1x128xf32>
    %184 = arith.addf %161, %183 : vector<1x128xf32>
    %185 = arith.mulf %181, %181 : vector<16x128xf32>
    %cst_130 = arith.constant dense<0.000000e+00> : vector<128xf32>
    %186 = vector.multi_reduction <add>, %185, %cst_130 [0] : vector<16x128xf32> to vector<128xf32>
    %187 = vector.shape_cast %186 : vector<128xf32> to vector<1x128xf32>
    %188 = arith.addf %165, %187 : vector<1x128xf32>
    %189 = arith.truncf %181 : vector<16x128xf32> to vector<16x128xbf16>
    %c0_131 = arith.constant 0 : index
    %c2_132 = arith.constant 2 : index
    %c0_133 = arith.constant 0 : index
    %c0_134 = arith.constant 0 : index
    %c0_135 = arith.constant 0 : index
    %190 = vector.load %arg5[%c0_131, %c2_132, %c0_133, %c0_134, %c0_135] : memref<1x8x4x16x128xbf16, #tpu.memory_space<vmem>>, vector<1x1x1x16x128xbf16>
    %191 = vector.shape_cast %190 : vector<1x1x1x16x128xbf16> to vector<16x128xbf16>
    %192 = vector.shape_cast %189 : vector<16x128xbf16> to vector<1x1x1x16x128xbf16>
    tpu.vector_store %arg5[%c0_131, %c2_132, %c0_133, %c0_134, %c0_135], %192 {strides = array<i32>} : memref<1x8x4x16x128xbf16, #tpu.memory_space<vmem>>, vector<1x1x1x16x128xbf16>,
    %193 = vector.extract_strided_slice %171 {offsets = [1, 0], sizes = [16, 4], strides = [1, 1]} : vector<18x4xbf16> to vector<16x4xbf16>
    %194 = vector.extract_strided_slice %171 {offsets = [2, 0], sizes = [16, 4], strides = [1, 1]} : vector<18x4xbf16> to vector<16x4xbf16>
    %195 = vector.extract_strided_slice %173 {offsets = [1, 0], sizes = [16, 4], strides = [1, 1]} : vector<18x4xbf16> to vector<16x4xbf16>
    %196 = vector.extract_strided_slice %173 {offsets = [2, 0], sizes = [16, 4], strides = [1, 1]} : vector<18x4xbf16> to vector<16x4xbf16>
    %197 = tpu.concatenate %193, %194, %195, %196 in 1 : vector<16x4xbf16>, vector<16x4xbf16>, vector<16x4xbf16>, vector<16x4xbf16> -> vector<16x16xbf16>
    %c1_136 = arith.constant 1 : index
    %c0_137 = arith.constant 0 : index
    %c0_138 = arith.constant 0 : index
    %198 = vector.load %arg4[%c1_136, %c0_137, %c0_138] : memref<4x16x128xbf16, #tpu.memory_space<vmem>>, vector<1x16x128xbf16>
    %199 = vector.shape_cast %198 : vector<1x16x128xbf16> to vector<16x128xbf16>
    %cst_139 = arith.constant dense<0.000000e+00> : vector<16x128xf32>
    %200 = tpu.matmul %197, %199, %cst_139 {dimension_numbers = #tpu.dot_dimension_numbers<[1], [0], [0], [1], [0, 0, 1, 1], [], []>} : vector<16x16xbf16>, vector<16x128xbf16>, vector<16x128xf32> -> vector<16x128xf32>
    %cst_140 = arith.constant dense<0.000000e+00> : vector<128xf32>
    %201 = vector.multi_reduction <add>, %200, %cst_140 [0] : vector<16x128xf32> to vector<128xf32>
    %202 = vector.shape_cast %201 : vector<128xf32> to vector<1x128xf32>
    %203 = arith.addf %184, %202 : vector<1x128xf32>
    %204 = arith.mulf %200, %200 : vector<16x128xf32>
    %cst_141 = arith.constant dense<0.000000e+00> : vector<128xf32>
    %205 = vector.multi_reduction <add>, %204, %cst_141 [0] : vector<16x128xf32> to vector<128xf32>
    %206 = vector.shape_cast %205 : vector<128xf32> to vector<1x128xf32>
    %207 = arith.addf %188, %206 : vector<1x128xf32>
    %208 = arith.truncf %200 : vector<16x128xf32> to vector<16x128xbf16>
    %c0_142 = arith.constant 0 : index
    %c2_143 = arith.constant 2 : index
    %c1_144 = arith.constant 1 : index
    %c0_145 = arith.constant 0 : index
    %c0_146 = arith.constant 0 : index
    %209 = vector.load %arg5[%c0_142, %c2_143, %c1_144, %c0_145, %c0_146] : memref<1x8x4x16x128xbf16, #tpu.memory_space<vmem>>, vector<1x1x1x16x128xbf16>
    %210 = vector.shape_cast %209 : vector<1x1x1x16x128xbf16> to vector<16x128xbf16>
    %211 = vector.shape_cast %208 : vector<16x128xbf16> to vector<1x1x1x16x128xbf16>
    tpu.vector_store %arg5[%c0_142, %c2_143, %c1_144, %c0_145, %c0_146], %211 {strides = array<i32>} : memref<1x8x4x16x128xbf16, #tpu.memory_space<vmem>>, vector<1x1x1x16x128xbf16>,
    %c0_147 = arith.constant 0 : index
    %c3_148 = arith.constant 3 : index
    %c0_149 = arith.constant 0 : index
    %c0_150 = arith.constant 0 : index
    %212 = vector.load %arg2[%c0_147, %c3_148, %c0_149, %c0_150] : memref<1x8x18x4xbf16, #tpu.memory_space<vmem>>, vector<1x1x18x4xbf16>
    %213 = vector.shape_cast %212 : vector<1x1x18x4xbf16> to vector<18x4xbf16>
    %c0_151 = arith.constant 0 : index
    %c4 = arith.constant 4 : index
    %c0_152 = arith.constant 0 : index
    %c0_153 = arith.constant 0 : index
    %214 = vector.load %arg2[%c0_151, %c4, %c0_152, %c0_153] : memref<1x8x18x4xbf16, #tpu.memory_space<vmem>>, vector<1x1x18x4xbf16>
    %215 = vector.shape_cast %214 : vector<1x1x18x4xbf16> to vector<18x4xbf16>
    %216 = vector.extract_strided_slice %213 {offsets = [0, 0], sizes = [16, 4], strides = [1, 1]} : vector<18x4xbf16> to vector<16x4xbf16>
    %217 = vector.extract_strided_slice %213 {offsets = [1, 0], sizes = [16, 4], strides = [1, 1]} : vector<18x4xbf16> to vector<16x4xbf16>
    %218 = vector.extract_strided_slice %215 {offsets = [0, 0], sizes = [16, 4], strides = [1, 1]} : vector<18x4xbf16> to vector<16x4xbf16>
    %219 = vector.extract_strided_slice %215 {offsets = [1, 0], sizes = [16, 4], strides = [1, 1]} : vector<18x4xbf16> to vector<16x4xbf16>
    %220 = tpu.concatenate %216, %217, %218, %219 in 1 : vector<16x4xbf16>, vector<16x4xbf16>, vector<16x4xbf16>, vector<16x4xbf16> -> vector<16x16xbf16>
    %c2_154 = arith.constant 2 : index
    %c0_155 = arith.constant 0 : index
    %c0_156 = arith.constant 0 : index
    %221 = vector.load %arg4[%c2_154, %c0_155, %c0_156] : memref<4x16x128xbf16, #tpu.memory_space<vmem>>, vector<1x16x128xbf16>
    %222 = vector.shape_cast %221 : vector<1x16x128xbf16> to vector<16x128xbf16>
    %cst_157 = arith.constant dense<0.000000e+00> : vector<16x128xf32>
    %223 = tpu.matmul %220, %222, %cst_157 {dimension_numbers = #tpu.dot_dimension_numbers<[1], [0], [0], [1], [0, 0, 1, 1], [], []>} : vector<16x16xbf16>, vector<16x128xbf16>, vector<16x128xf32> -> vector<16x128xf32>
    %cst_158 = arith.constant dense<0.000000e+00> : vector<128xf32>
    %224 = vector.multi_reduction <add>, %223, %cst_158 [0] : vector<16x128xf32> to vector<128xf32>
    %225 = vector.shape_cast %224 : vector<128xf32> to vector<1x128xf32>
    %226 = arith.addf %203, %225 : vector<1x128xf32>
    %227 = arith.mulf %223, %223 : vector<16x128xf32>
    %cst_159 = arith.constant dense<0.000000e+00> : vector<128xf32>
    %228 = vector.multi_reduction <add>, %227, %cst_159 [0] : vector<16x128xf32> to vector<128xf32>
    %229 = vector.shape_cast %228 : vector<128xf32> to vector<1x128xf32>
    %230 = arith.addf %207, %229 : vector<1x128xf32>
    %231 = arith.truncf %223 : vector<16x128xf32> to vector<16x128xbf16>
    %c0_160 = arith.constant 0 : index
    %c2_161 = arith.constant 2 : index
    %c2_162 = arith.constant 2 : index
    %c0_163 = arith.constant 0 : index
    %c0_164 = arith.constant 0 : index
    %232 = vector.load %arg5[%c0_160, %c2_161, %c2_162, %c0_163, %c0_164] : memref<1x8x4x16x128xbf16, #tpu.memory_space<vmem>>, vector<1x1x1x16x128xbf16>
    %233 = vector.shape_cast %232 : vector<1x1x1x16x128xbf16> to vector<16x128xbf16>
    %234 = vector.shape_cast %231 : vector<16x128xbf16> to vector<1x1x1x16x128xbf16>
    tpu.vector_store %arg5[%c0_160, %c2_161, %c2_162, %c0_163, %c0_164], %234 {strides = array<i32>} : memref<1x8x4x16x128xbf16, #tpu.memory_space<vmem>>, vector<1x1x1x16x128xbf16>,
    %235 = vector.extract_strided_slice %213 {offsets = [1, 0], sizes = [16, 4], strides = [1, 1]} : vector<18x4xbf16> to vector<16x4xbf16>
    %236 = vector.extract_strided_slice %213 {offsets = [2, 0], sizes = [16, 4], strides = [1, 1]} : vector<18x4xbf16> to vector<16x4xbf16>
    %237 = vector.extract_strided_slice %215 {offsets = [1, 0], sizes = [16, 4], strides = [1, 1]} : vector<18x4xbf16> to vector<16x4xbf16>
    %238 = vector.extract_strided_slice %215 {offsets = [2, 0], sizes = [16, 4], strides = [1, 1]} : vector<18x4xbf16> to vector<16x4xbf16>
    %239 = tpu.concatenate %235, %236, %237, %238 in 1 : vector<16x4xbf16>, vector<16x4xbf16>, vector<16x4xbf16>, vector<16x4xbf16> -> vector<16x16xbf16>
    %c3_165 = arith.constant 3 : index
    %c0_166 = arith.constant 0 : index
    %c0_167 = arith.constant 0 : index
    %240 = vector.load %arg4[%c3_165, %c0_166, %c0_167] : memref<4x16x128xbf16, #tpu.memory_space<vmem>>, vector<1x16x128xbf16>
    %241 = vector.shape_cast %240 : vector<1x16x128xbf16> to vector<16x128xbf16>
    %cst_168 = arith.constant dense<0.000000e+00> : vector<16x128xf32>
    %242 = tpu.matmul %239, %241, %cst_168 {dimension_numbers = #tpu.dot_dimension_numbers<[1], [0], [0], [1], [0, 0, 1, 1], [], []>} : vector<16x16xbf16>, vector<16x128xbf16>, vector<16x128xf32> -> vector<16x128xf32>
    %cst_169 = arith.constant dense<0.000000e+00> : vector<128xf32>
    %243 = vector.multi_reduction <add>, %242, %cst_169 [0] : vector<16x128xf32> to vector<128xf32>
    %244 = vector.shape_cast %243 : vector<128xf32> to vector<1x128xf32>
    %245 = arith.addf %226, %244 : vector<1x128xf32>
    %246 = arith.mulf %242, %242 : vector<16x128xf32>
    %cst_170 = arith.constant dense<0.000000e+00> : vector<128xf32>
    %247 = vector.multi_reduction <add>, %246, %cst_170 [0] : vector<16x128xf32> to vector<128xf32>
    %248 = vector.shape_cast %247 : vector<128xf32> to vector<1x128xf32>
    %249 = arith.addf %230, %248 : vector<1x128xf32>
    %250 = arith.truncf %242 : vector<16x128xf32> to vector<16x128xbf16>
    %c0_171 = arith.constant 0 : index
    %c2_172 = arith.constant 2 : index
    %c3_173 = arith.constant 3 : index
    %c0_174 = arith.constant 0 : index
    %c0_175 = arith.constant 0 : index
    %251 = vector.load %arg5[%c0_171, %c2_172, %c3_173, %c0_174, %c0_175] : memref<1x8x4x16x128xbf16, #tpu.memory_space<vmem>>, vector<1x1x1x16x128xbf16>
    %252 = vector.shape_cast %251 : vector<1x1x1x16x128xbf16> to vector<16x128xbf16>
    %253 = vector.shape_cast %250 : vector<16x128xbf16> to vector<1x1x1x16x128xbf16>
    tpu.vector_store %arg5[%c0_171, %c2_172, %c3_173, %c0_174, %c0_175], %253 {strides = array<i32>} : memref<1x8x4x16x128xbf16, #tpu.memory_space<vmem>>, vector<1x1x1x16x128xbf16>,
    %c0_176 = arith.constant 0 : index
    %c3_177 = arith.constant 3 : index
    %c0_178 = arith.constant 0 : index
    %c0_179 = arith.constant 0 : index
    %254 = vector.load %arg2[%c0_176, %c3_177, %c0_178, %c0_179] : memref<1x8x18x4xbf16, #tpu.memory_space<vmem>>, vector<1x1x18x4xbf16>
    %255 = vector.shape_cast %254 : vector<1x1x18x4xbf16> to vector<18x4xbf16>
    %c0_180 = arith.constant 0 : index
    %c4_181 = arith.constant 4 : index
    %c0_182 = arith.constant 0 : index
    %c0_183 = arith.constant 0 : index
    %256 = vector.load %arg2[%c0_180, %c4_181, %c0_182, %c0_183] : memref<1x8x18x4xbf16, #tpu.memory_space<vmem>>, vector<1x1x18x4xbf16>
    %257 = vector.shape_cast %256 : vector<1x1x18x4xbf16> to vector<18x4xbf16>
    %258 = vector.extract_strided_slice %255 {offsets = [0, 0], sizes = [16, 4], strides = [1, 1]} : vector<18x4xbf16> to vector<16x4xbf16>
    %259 = vector.extract_strided_slice %255 {offsets = [1, 0], sizes = [16, 4], strides = [1, 1]} : vector<18x4xbf16> to vector<16x4xbf16>
    %260 = vector.extract_strided_slice %257 {offsets = [0, 0], sizes = [16, 4], strides = [1, 1]} : vector<18x4xbf16> to vector<16x4xbf16>
    %261 = vector.extract_strided_slice %257 {offsets = [1, 0], sizes = [16, 4], strides = [1, 1]} : vector<18x4xbf16> to vector<16x4xbf16>
    %262 = tpu.concatenate %258, %259, %260, %261 in 1 : vector<16x4xbf16>, vector<16x4xbf16>, vector<16x4xbf16>, vector<16x4xbf16> -> vector<16x16xbf16>
    %c0_184 = arith.constant 0 : index
    %c0_185 = arith.constant 0 : index
    %c0_186 = arith.constant 0 : index
    %263 = vector.load %arg4[%c0_184, %c0_185, %c0_186] : memref<4x16x128xbf16, #tpu.memory_space<vmem>>, vector<1x16x128xbf16>
    %264 = vector.shape_cast %263 : vector<1x16x128xbf16> to vector<16x128xbf16>
    %cst_187 = arith.constant dense<0.000000e+00> : vector<16x128xf32>
    %265 = tpu.matmul %262, %264, %cst_187 {dimension_numbers = #tpu.dot_dimension_numbers<[1], [0], [0], [1], [0, 0, 1, 1], [], []>} : vector<16x16xbf16>, vector<16x128xbf16>, vector<16x128xf32> -> vector<16x128xf32>
    %cst_188 = arith.constant dense<0.000000e+00> : vector<128xf32>
    %266 = vector.multi_reduction <add>, %265, %cst_188 [0] : vector<16x128xf32> to vector<128xf32>
    %267 = vector.shape_cast %266 : vector<128xf32> to vector<1x128xf32>
    %268 = arith.addf %245, %267 : vector<1x128xf32>
    %269 = arith.mulf %265, %265 : vector<16x128xf32>
    %cst_189 = arith.constant dense<0.000000e+00> : vector<128xf32>
    %270 = vector.multi_reduction <add>, %269, %cst_189 [0] : vector<16x128xf32> to vector<128xf32>
    %271 = vector.shape_cast %270 : vector<128xf32> to vector<1x128xf32>
    %272 = arith.addf %249, %271 : vector<1x128xf32>
    %273 = arith.truncf %265 : vector<16x128xf32> to vector<16x128xbf16>
    %c0_190 = arith.constant 0 : index
    %c3_191 = arith.constant 3 : index
    %c0_192 = arith.constant 0 : index
    %c0_193 = arith.constant 0 : index
    %c0_194 = arith.constant 0 : index
    %274 = vector.load %arg5[%c0_190, %c3_191, %c0_192, %c0_193, %c0_194] : memref<1x8x4x16x128xbf16, #tpu.memory_space<vmem>>, vector<1x1x1x16x128xbf16>
    %275 = vector.shape_cast %274 : vector<1x1x1x16x128xbf16> to vector<16x128xbf16>
    %276 = vector.shape_cast %273 : vector<16x128xbf16> to vector<1x1x1x16x128xbf16>
    tpu.vector_store %arg5[%c0_190, %c3_191, %c0_192, %c0_193, %c0_194], %276 {strides = array<i32>} : memref<1x8x4x16x128xbf16, #tpu.memory_space<vmem>>, vector<1x1x1x16x128xbf16>,
    %277 = vector.extract_strided_slice %255 {offsets = [1, 0], sizes = [16, 4], strides = [1, 1]} : vector<18x4xbf16> to vector<16x4xbf16>
    %278 = vector.extract_strided_slice %255 {offsets = [2, 0], sizes = [16, 4], strides = [1, 1]} : vector<18x4xbf16> to vector<16x4xbf16>
    %279 = vector.extract_strided_slice %257 {offsets = [1, 0], sizes = [16, 4], strides = [1, 1]} : vector<18x4xbf16> to vector<16x4xbf16>
    %280 = vector.extract_strided_slice %257 {offsets = [2, 0], sizes = [16, 4], strides = [1, 1]} : vector<18x4xbf16> to vector<16x4xbf16>
    %281 = tpu.concatenate %277, %278, %279, %280 in 1 : vector<16x4xbf16>, vector<16x4xbf16>, vector<16x4xbf16>, vector<16x4xbf16> -> vector<16x16xbf16>
    %c1_195 = arith.constant 1 : index
    %c0_196 = arith.constant 0 : index
    %c0_197 = arith.constant 0 : index
    %282 = vector.load %arg4[%c1_195, %c0_196, %c0_197] : memref<4x16x128xbf16, #tpu.memory_space<vmem>>, vector<1x16x128xbf16>
    %283 = vector.shape_cast %282 : vector<1x16x128xbf16> to vector<16x128xbf16>
    %cst_198 = arith.constant dense<0.000000e+00> : vector<16x128xf32>
    %284 = tpu.matmul %281, %283, %cst_198 {dimension_numbers = #tpu.dot_dimension_numbers<[1], [0], [0], [1], [0, 0, 1, 1], [], []>} : vector<16x16xbf16>, vector<16x128xbf16>, vector<16x128xf32> -> vector<16x128xf32>
    %cst_199 = arith.constant dense<0.000000e+00> : vector<128xf32>
    %285 = vector.multi_reduction <add>, %284, %cst_199 [0] : vector<16x128xf32> to vector<128xf32>
    %286 = vector.shape_cast %285 : vector<128xf32> to vector<1x128xf32>
    %287 = arith.addf %268, %286 : vector<1x128xf32>
    %288 = arith.mulf %284, %284 : vector<16x128xf32>
    %cst_200 = arith.constant dense<0.000000e+00> : vector<128xf32>
    %289 = vector.multi_reduction <add>, %288, %cst_200 [0] : vector<16x128xf32> to vector<128xf32>
    %290 = vector.shape_cast %289 : vector<128xf32> to vector<1x128xf32>
    %291 = arith.addf %272, %290 : vector<1x128xf32>
    %292 = arith.truncf %284 : vector<16x128xf32> to vector<16x128xbf16>
    %c0_201 = arith.constant 0 : index
    %c3_202 = arith.constant 3 : index
    %c1_203 = arith.constant 1 : index
    %c0_204 = arith.constant 0 : index
    %c0_205 = arith.constant 0 : index
    %293 = vector.load %arg5[%c0_201, %c3_202, %c1_203, %c0_204, %c0_205] : memref<1x8x4x16x128xbf16, #tpu.memory_space<vmem>>, vector<1x1x1x16x128xbf16>
    %294 = vector.shape_cast %293 : vector<1x1x1x16x128xbf16> to vector<16x128xbf16>
    %295 = vector.shape_cast %292 : vector<16x128xbf16> to vector<1x1x1x16x128xbf16>
    tpu.vector_store %arg5[%c0_201, %c3_202, %c1_203, %c0_204, %c0_205], %295 {strides = array<i32>} : memref<1x8x4x16x128xbf16, #tpu.memory_space<vmem>>, vector<1x1x1x16x128xbf16>,
    %c0_206 = arith.constant 0 : index
    %c4_207 = arith.constant 4 : index
    %c0_208 = arith.constant 0 : index
    %c0_209 = arith.constant 0 : index
    %296 = vector.load %arg2[%c0_206, %c4_207, %c0_208, %c0_209] : memref<1x8x18x4xbf16, #tpu.memory_space<vmem>>, vector<1x1x18x4xbf16>
    %297 = vector.shape_cast %296 : vector<1x1x18x4xbf16> to vector<18x4xbf16>
    %c0_210 = arith.constant 0 : index
    %c5 = arith.constant 5 : index
    %c0_211 = arith.constant 0 : index
    %c0_212 = arith.constant 0 : index
    %298 = vector.load %arg2[%c0_210, %c5, %c0_211, %c0_212] : memref<1x8x18x4xbf16, #tpu.memory_space<vmem>>, vector<1x1x18x4xbf16>
    %299 = vector.shape_cast %298 : vector<1x1x18x4xbf16> to vector<18x4xbf16>
    %300 = vector.extract_strided_slice %297 {offsets = [0, 0], sizes = [16, 4], strides = [1, 1]} : vector<18x4xbf16> to vector<16x4xbf16>
    %301 = vector.extract_strided_slice %297 {offsets = [1, 0], sizes = [16, 4], strides = [1, 1]} : vector<18x4xbf16> to vector<16x4xbf16>
    %302 = vector.extract_strided_slice %299 {offsets = [0, 0], sizes = [16, 4], strides = [1, 1]} : vector<18x4xbf16> to vector<16x4xbf16>
    %303 = vector.extract_strided_slice %299 {offsets = [1, 0], sizes = [16, 4], strides = [1, 1]} : vector<18x4xbf16> to vector<16x4xbf16>
    %304 = tpu.concatenate %300, %301, %302, %303 in 1 : vector<16x4xbf16>, vector<16x4xbf16>, vector<16x4xbf16>, vector<16x4xbf16> -> vector<16x16xbf16>
    %c2_213 = arith.constant 2 : index
    %c0_214 = arith.constant 0 : index
    %c0_215 = arith.constant 0 : index
    %305 = vector.load %arg4[%c2_213, %c0_214, %c0_215] : memref<4x16x128xbf16, #tpu.memory_space<vmem>>, vector<1x16x128xbf16>
    %306 = vector.shape_cast %305 : vector<1x16x128xbf16> to vector<16x128xbf16>
    %cst_216 = arith.constant dense<0.000000e+00> : vector<16x128xf32>
    %307 = tpu.matmul %304, %306, %cst_216 {dimension_numbers = #tpu.dot_dimension_numbers<[1], [0], [0], [1], [0, 0, 1, 1], [], []>} : vector<16x16xbf16>, vector<16x128xbf16>, vector<16x128xf32> -> vector<16x128xf32>
    %cst_217 = arith.constant dense<0.000000e+00> : vector<128xf32>
    %308 = vector.multi_reduction <add>, %307, %cst_217 [0] : vector<16x128xf32> to vector<128xf32>
    %309 = vector.shape_cast %308 : vector<128xf32> to vector<1x128xf32>
    %310 = arith.addf %287, %309 : vector<1x128xf32>
    %311 = arith.mulf %307, %307 : vector<16x128xf32>
    %cst_218 = arith.constant dense<0.000000e+00> : vector<128xf32>
    %312 = vector.multi_reduction <add>, %311, %cst_218 [0] : vector<16x128xf32> to vector<128xf32>
    %313 = vector.shape_cast %312 : vector<128xf32> to vector<1x128xf32>
    %314 = arith.addf %291, %313 : vector<1x128xf32>
    %315 = arith.truncf %307 : vector<16x128xf32> to vector<16x128xbf16>
    %c0_219 = arith.constant 0 : index
    %c3_220 = arith.constant 3 : index
    %c2_221 = arith.constant 2 : index
    %c0_222 = arith.constant 0 : index
    %c0_223 = arith.constant 0 : index
    %316 = vector.load %arg5[%c0_219, %c3_220, %c2_221, %c0_222, %c0_223] : memref<1x8x4x16x128xbf16, #tpu.memory_space<vmem>>, vector<1x1x1x16x128xbf16>
    %317 = vector.shape_cast %316 : vector<1x1x1x16x128xbf16> to vector<16x128xbf16>
    %318 = vector.shape_cast %315 : vector<16x128xbf16> to vector<1x1x1x16x128xbf16>
    tpu.vector_store %arg5[%c0_219, %c3_220, %c2_221, %c0_222, %c0_223], %318 {strides = array<i32>} : memref<1x8x4x16x128xbf16, #tpu.memory_space<vmem>>, vector<1x1x1x16x128xbf16>,
    %319 = vector.extract_strided_slice %297 {offsets = [1, 0], sizes = [16, 4], strides = [1, 1]} : vector<18x4xbf16> to vector<16x4xbf16>
    %320 = vector.extract_strided_slice %297 {offsets = [2, 0], sizes = [16, 4], strides = [1, 1]} : vector<18x4xbf16> to vector<16x4xbf16>
    %321 = vector.extract_strided_slice %299 {offsets = [1, 0], sizes = [16, 4], strides = [1, 1]} : vector<18x4xbf16> to vector<16x4xbf16>
    %322 = vector.extract_strided_slice %299 {offsets = [2, 0], sizes = [16, 4], strides = [1, 1]} : vector<18x4xbf16> to vector<16x4xbf16>
    %323 = tpu.concatenate %319, %320, %321, %322 in 1 : vector<16x4xbf16>, vector<16x4xbf16>, vector<16x4xbf16>, vector<16x4xbf16> -> vector<16x16xbf16>
    %c3_224 = arith.constant 3 : index
    %c0_225 = arith.constant 0 : index
    %c0_226 = arith.constant 0 : index
    %324 = vector.load %arg4[%c3_224, %c0_225, %c0_226] : memref<4x16x128xbf16, #tpu.memory_space<vmem>>, vector<1x16x128xbf16>
    %325 = vector.shape_cast %324 : vector<1x16x128xbf16> to vector<16x128xbf16>
    %cst_227 = arith.constant dense<0.000000e+00> : vector<16x128xf32>
    %326 = tpu.matmul %323, %325, %cst_227 {dimension_numbers = #tpu.dot_dimension_numbers<[1], [0], [0], [1], [0, 0, 1, 1], [], []>} : vector<16x16xbf16>, vector<16x128xbf16>, vector<16x128xf32> -> vector<16x128xf32>
    %cst_228 = arith.constant dense<0.000000e+00> : vector<128xf32>
    %327 = vector.multi_reduction <add>, %326, %cst_228 [0] : vector<16x128xf32> to vector<128xf32>
    %328 = vector.shape_cast %327 : vector<128xf32> to vector<1x128xf32>
    %329 = arith.addf %310, %328 : vector<1x128xf32>
    %330 = arith.mulf %326, %326 : vector<16x128xf32>
    %cst_229 = arith.constant dense<0.000000e+00> : vector<128xf32>
    %331 = vector.multi_reduction <add>, %330, %cst_229 [0] : vector<16x128xf32> to vector<128xf32>
    %332 = vector.shape_cast %331 : vector<128xf32> to vector<1x128xf32>
    %333 = arith.addf %314, %332 : vector<1x128xf32>
    %334 = arith.truncf %326 : vector<16x128xf32> to vector<16x128xbf16>
    %c0_230 = arith.constant 0 : index
    %c3_231 = arith.constant 3 : index
    %c3_232 = arith.constant 3 : index
    %c0_233 = arith.constant 0 : index
    %c0_234 = arith.constant 0 : index
    %335 = vector.load %arg5[%c0_230, %c3_231, %c3_232, %c0_233, %c0_234] : memref<1x8x4x16x128xbf16, #tpu.memory_space<vmem>>, vector<1x1x1x16x128xbf16>
    %336 = vector.shape_cast %335 : vector<1x1x1x16x128xbf16> to vector<16x128xbf16>
    %337 = vector.shape_cast %334 : vector<16x128xbf16> to vector<1x1x1x16x128xbf16>
    tpu.vector_store %arg5[%c0_230, %c3_231, %c3_232, %c0_233, %c0_234], %337 {strides = array<i32>} : memref<1x8x4x16x128xbf16, #tpu.memory_space<vmem>>, vector<1x1x1x16x128xbf16>,
    %c0_235 = arith.constant 0 : index
    %c4_236 = arith.constant 4 : index
    %c0_237 = arith.constant 0 : index
    %c0_238 = arith.constant 0 : index
    %338 = vector.load %arg2[%c0_235, %c4_236, %c0_237, %c0_238] : memref<1x8x18x4xbf16, #tpu.memory_space<vmem>>, vector<1x1x18x4xbf16>
    %339 = vector.shape_cast %338 : vector<1x1x18x4xbf16> to vector<18x4xbf16>
    %c0_239 = arith.constant 0 : index
    %c5_240 = arith.constant 5 : index
    %c0_241 = arith.constant 0 : index
    %c0_242 = arith.constant 0 : index
    %340 = vector.load %arg2[%c0_239, %c5_240, %c0_241, %c0_242] : memref<1x8x18x4xbf16, #tpu.memory_space<vmem>>, vector<1x1x18x4xbf16>
    %341 = vector.shape_cast %340 : vector<1x1x18x4xbf16> to vector<18x4xbf16>
    %342 = vector.extract_strided_slice %339 {offsets = [0, 0], sizes = [16, 4], strides = [1, 1]} : vector<18x4xbf16> to vector<16x4xbf16>
    %343 = vector.extract_strided_slice %339 {offsets = [1, 0], sizes = [16, 4], strides = [1, 1]} : vector<18x4xbf16> to vector<16x4xbf16>
    %344 = vector.extract_strided_slice %341 {offsets = [0, 0], sizes = [16, 4], strides = [1, 1]} : vector<18x4xbf16> to vector<16x4xbf16>
    %345 = vector.extract_strided_slice %341 {offsets = [1, 0], sizes = [16, 4], strides = [1, 1]} : vector<18x4xbf16> to vector<16x4xbf16>
    %346 = tpu.concatenate %342, %343, %344, %345 in 1 : vector<16x4xbf16>, vector<16x4xbf16>, vector<16x4xbf16>, vector<16x4xbf16> -> vector<16x16xbf16>
    %c0_243 = arith.constant 0 : index
    %c0_244 = arith.constant 0 : index
    %c0_245 = arith.constant 0 : index
    %347 = vector.load %arg4[%c0_243, %c0_244, %c0_245] : memref<4x16x128xbf16, #tpu.memory_space<vmem>>, vector<1x16x128xbf16>
    %348 = vector.shape_cast %347 : vector<1x16x128xbf16> to vector<16x128xbf16>
    %cst_246 = arith.constant dense<0.000000e+00> : vector<16x128xf32>
    %349 = tpu.matmul %346, %348, %cst_246 {dimension_numbers = #tpu.dot_dimension_numbers<[1], [0], [0], [1], [0, 0, 1, 1], [], []>} : vector<16x16xbf16>, vector<16x128xbf16>, vector<16x128xf32> -> vector<16x128xf32>
    %cst_247 = arith.constant dense<0.000000e+00> : vector<128xf32>
    %350 = vector.multi_reduction <add>, %349, %cst_247 [0] : vector<16x128xf32> to vector<128xf32>
    %351 = vector.shape_cast %350 : vector<128xf32> to vector<1x128xf32>
    %352 = arith.addf %329, %351 : vector<1x128xf32>
    %353 = arith.mulf %349, %349 : vector<16x128xf32>
    %cst_248 = arith.constant dense<0.000000e+00> : vector<128xf32>
    %354 = vector.multi_reduction <add>, %353, %cst_248 [0] : vector<16x128xf32> to vector<128xf32>
    %355 = vector.shape_cast %354 : vector<128xf32> to vector<1x128xf32>
    %356 = arith.addf %333, %355 : vector<1x128xf32>
    %357 = arith.truncf %349 : vector<16x128xf32> to vector<16x128xbf16>
    %c0_249 = arith.constant 0 : index
    %c4_250 = arith.constant 4 : index
    %c0_251 = arith.constant 0 : index
    %c0_252 = arith.constant 0 : index
    %c0_253 = arith.constant 0 : index
    %358 = vector.load %arg5[%c0_249, %c4_250, %c0_251, %c0_252, %c0_253] : memref<1x8x4x16x128xbf16, #tpu.memory_space<vmem>>, vector<1x1x1x16x128xbf16>
    %359 = vector.shape_cast %358 : vector<1x1x1x16x128xbf16> to vector<16x128xbf16>
    %360 = vector.shape_cast %357 : vector<16x128xbf16> to vector<1x1x1x16x128xbf16>
    tpu.vector_store %arg5[%c0_249, %c4_250, %c0_251, %c0_252, %c0_253], %360 {strides = array<i32>} : memref<1x8x4x16x128xbf16, #tpu.memory_space<vmem>>, vector<1x1x1x16x128xbf16>,
    %361 = vector.extract_strided_slice %339 {offsets = [1, 0], sizes = [16, 4], strides = [1, 1]} : vector<18x4xbf16> to vector<16x4xbf16>
    %362 = vector.extract_strided_slice %339 {offsets = [2, 0], sizes = [16, 4], strides = [1, 1]} : vector<18x4xbf16> to vector<16x4xbf16>
    %363 = vector.extract_strided_slice %341 {offsets = [1, 0], sizes = [16, 4], strides = [1, 1]} : vector<18x4xbf16> to vector<16x4xbf16>
    %364 = vector.extract_strided_slice %341 {offsets = [2, 0], sizes = [16, 4], strides = [1, 1]} : vector<18x4xbf16> to vector<16x4xbf16>
    %365 = tpu.concatenate %361, %362, %363, %364 in 1 : vector<16x4xbf16>, vector<16x4xbf16>, vector<16x4xbf16>, vector<16x4xbf16> -> vector<16x16xbf16>
    %c1_254 = arith.constant 1 : index
    %c0_255 = arith.constant 0 : index
    %c0_256 = arith.constant 0 : index
    %366 = vector.load %arg4[%c1_254, %c0_255, %c0_256] : memref<4x16x128xbf16, #tpu.memory_space<vmem>>, vector<1x16x128xbf16>
    %367 = vector.shape_cast %366 : vector<1x16x128xbf16> to vector<16x128xbf16>
    %cst_257 = arith.constant dense<0.000000e+00> : vector<16x128xf32>
    %368 = tpu.matmul %365, %367, %cst_257 {dimension_numbers = #tpu.dot_dimension_numbers<[1], [0], [0], [1], [0, 0, 1, 1], [], []>} : vector<16x16xbf16>, vector<16x128xbf16>, vector<16x128xf32> -> vector<16x128xf32>
    %cst_258 = arith.constant dense<0.000000e+00> : vector<128xf32>
    %369 = vector.multi_reduction <add>, %368, %cst_258 [0] : vector<16x128xf32> to vector<128xf32>
    %370 = vector.shape_cast %369 : vector<128xf32> to vector<1x128xf32>
    %371 = arith.addf %352, %370 : vector<1x128xf32>
    %372 = arith.mulf %368, %368 : vector<16x128xf32>
    %cst_259 = arith.constant dense<0.000000e+00> : vector<128xf32>
    %373 = vector.multi_reduction <add>, %372, %cst_259 [0] : vector<16x128xf32> to vector<128xf32>
    %374 = vector.shape_cast %373 : vector<128xf32> to vector<1x128xf32>
    %375 = arith.addf %356, %374 : vector<1x128xf32>
    %376 = arith.truncf %368 : vector<16x128xf32> to vector<16x128xbf16>
    %c0_260 = arith.constant 0 : index
    %c4_261 = arith.constant 4 : index
    %c1_262 = arith.constant 1 : index
    %c0_263 = arith.constant 0 : index
    %c0_264 = arith.constant 0 : index
    %377 = vector.load %arg5[%c0_260, %c4_261, %c1_262, %c0_263, %c0_264] : memref<1x8x4x16x128xbf16, #tpu.memory_space<vmem>>, vector<1x1x1x16x128xbf16>
    %378 = vector.shape_cast %377 : vector<1x1x1x16x128xbf16> to vector<16x128xbf16>
    %379 = vector.shape_cast %376 : vector<16x128xbf16> to vector<1x1x1x16x128xbf16>
    tpu.vector_store %arg5[%c0_260, %c4_261, %c1_262, %c0_263, %c0_264], %379 {strides = array<i32>} : memref<1x8x4x16x128xbf16, #tpu.memory_space<vmem>>, vector<1x1x1x16x128xbf16>,
    %c0_265 = arith.constant 0 : index
    %c5_266 = arith.constant 5 : index
    %c0_267 = arith.constant 0 : index
    %c0_268 = arith.constant 0 : index
    %380 = vector.load %arg2[%c0_265, %c5_266, %c0_267, %c0_268] : memref<1x8x18x4xbf16, #tpu.memory_space<vmem>>, vector<1x1x18x4xbf16>
    %381 = vector.shape_cast %380 : vector<1x1x18x4xbf16> to vector<18x4xbf16>
    %c0_269 = arith.constant 0 : index
    %c6 = arith.constant 6 : index
    %c0_270 = arith.constant 0 : index
    %c0_271 = arith.constant 0 : index
    %382 = vector.load %arg2[%c0_269, %c6, %c0_270, %c0_271] : memref<1x8x18x4xbf16, #tpu.memory_space<vmem>>, vector<1x1x18x4xbf16>
    %383 = vector.shape_cast %382 : vector<1x1x18x4xbf16> to vector<18x4xbf16>
    %384 = vector.extract_strided_slice %381 {offsets = [0, 0], sizes = [16, 4], strides = [1, 1]} : vector<18x4xbf16> to vector<16x4xbf16>
    %385 = vector.extract_strided_slice %381 {offsets = [1, 0], sizes = [16, 4], strides = [1, 1]} : vector<18x4xbf16> to vector<16x4xbf16>
    %386 = vector.extract_strided_slice %383 {offsets = [0, 0], sizes = [16, 4], strides = [1, 1]} : vector<18x4xbf16> to vector<16x4xbf16>
    %387 = vector.extract_strided_slice %383 {offsets = [1, 0], sizes = [16, 4], strides = [1, 1]} : vector<18x4xbf16> to vector<16x4xbf16>
    %388 = tpu.concatenate %384, %385, %386, %387 in 1 : vector<16x4xbf16>, vector<16x4xbf16>, vector<16x4xbf16>, vector<16x4xbf16> -> vector<16x16xbf16>
    %c2_272 = arith.constant 2 : index
    %c0_273 = arith.constant 0 : index
    %c0_274 = arith.constant 0 : index
    %389 = vector.load %arg4[%c2_272, %c0_273, %c0_274] : memref<4x16x128xbf16, #tpu.memory_space<vmem>>, vector<1x16x128xbf16>
    %390 = vector.shape_cast %389 : vector<1x16x128xbf16> to vector<16x128xbf16>
    %cst_275 = arith.constant dense<0.000000e+00> : vector<16x128xf32>
    %391 = tpu.matmul %388, %390, %cst_275 {dimension_numbers = #tpu.dot_dimension_numbers<[1], [0], [0], [1], [0, 0, 1, 1], [], []>} : vector<16x16xbf16>, vector<16x128xbf16>, vector<16x128xf32> -> vector<16x128xf32>
    %cst_276 = arith.constant dense<0.000000e+00> : vector<128xf32>
    %392 = vector.multi_reduction <add>, %391, %cst_276 [0] : vector<16x128xf32> to vector<128xf32>
    %393 = vector.shape_cast %392 : vector<128xf32> to vector<1x128xf32>
    %394 = arith.addf %371, %393 : vector<1x128xf32>
    %395 = arith.mulf %391, %391 : vector<16x128xf32>
    %cst_277 = arith.constant dense<0.000000e+00> : vector<128xf32>
    %396 = vector.multi_reduction <add>, %395, %cst_277 [0] : vector<16x128xf32> to vector<128xf32>
    %397 = vector.shape_cast %396 : vector<128xf32> to vector<1x128xf32>
    %398 = arith.addf %375, %397 : vector<1x128xf32>
    %399 = arith.truncf %391 : vector<16x128xf32> to vector<16x128xbf16>
    %c0_278 = arith.constant 0 : index
    %c4_279 = arith.constant 4 : index
    %c2_280 = arith.constant 2 : index
    %c0_281 = arith.constant 0 : index
    %c0_282 = arith.constant 0 : index
    %400 = vector.load %arg5[%c0_278, %c4_279, %c2_280, %c0_281, %c0_282] : memref<1x8x4x16x128xbf16, #tpu.memory_space<vmem>>, vector<1x1x1x16x128xbf16>
    %401 = vector.shape_cast %400 : vector<1x1x1x16x128xbf16> to vector<16x128xbf16>
    %402 = vector.shape_cast %399 : vector<16x128xbf16> to vector<1x1x1x16x128xbf16>
    tpu.vector_store %arg5[%c0_278, %c4_279, %c2_280, %c0_281, %c0_282], %402 {strides = array<i32>} : memref<1x8x4x16x128xbf16, #tpu.memory_space<vmem>>, vector<1x1x1x16x128xbf16>,
    %403 = vector.extract_strided_slice %381 {offsets = [1, 0], sizes = [16, 4], strides = [1, 1]} : vector<18x4xbf16> to vector<16x4xbf16>
    %404 = vector.extract_strided_slice %381 {offsets = [2, 0], sizes = [16, 4], strides = [1, 1]} : vector<18x4xbf16> to vector<16x4xbf16>
    %405 = vector.extract_strided_slice %383 {offsets = [1, 0], sizes = [16, 4], strides = [1, 1]} : vector<18x4xbf16> to vector<16x4xbf16>
    %406 = vector.extract_strided_slice %383 {offsets = [2, 0], sizes = [16, 4], strides = [1, 1]} : vector<18x4xbf16> to vector<16x4xbf16>
    %407 = tpu.concatenate %403, %404, %405, %406 in 1 : vector<16x4xbf16>, vector<16x4xbf16>, vector<16x4xbf16>, vector<16x4xbf16> -> vector<16x16xbf16>
    %c3_283 = arith.constant 3 : index
    %c0_284 = arith.constant 0 : index
    %c0_285 = arith.constant 0 : index
    %408 = vector.load %arg4[%c3_283, %c0_284, %c0_285] : memref<4x16x128xbf16, #tpu.memory_space<vmem>>, vector<1x16x128xbf16>
    %409 = vector.shape_cast %408 : vector<1x16x128xbf16> to vector<16x128xbf16>
    %cst_286 = arith.constant dense<0.000000e+00> : vector<16x128xf32>
    %410 = tpu.matmul %407, %409, %cst_286 {dimension_numbers = #tpu.dot_dimension_numbers<[1], [0], [0], [1], [0, 0, 1, 1], [], []>} : vector<16x16xbf16>, vector<16x128xbf16>, vector<16x128xf32> -> vector<16x128xf32>
    %cst_287 = arith.constant dense<0.000000e+00> : vector<128xf32>
    %411 = vector.multi_reduction <add>, %410, %cst_287 [0] : vector<16x128xf32> to vector<128xf32>
    %412 = vector.shape_cast %411 : vector<128xf32> to vector<1x128xf32>
    %413 = arith.addf %394, %412 : vector<1x128xf32>
    %414 = arith.mulf %410, %410 : vector<16x128xf32>
    %cst_288 = arith.constant dense<0.000000e+00> : vector<128xf32>
    %415 = vector.multi_reduction <add>, %414, %cst_288 [0] : vector<16x128xf32> to vector<128xf32>
    %416 = vector.shape_cast %415 : vector<128xf32> to vector<1x128xf32>
    %417 = arith.addf %398, %416 : vector<1x128xf32>
    %418 = arith.truncf %410 : vector<16x128xf32> to vector<16x128xbf16>
    %c0_289 = arith.constant 0 : index
    %c4_290 = arith.constant 4 : index
    %c3_291 = arith.constant 3 : index
    %c0_292 = arith.constant 0 : index
    %c0_293 = arith.constant 0 : index
    %419 = vector.load %arg5[%c0_289, %c4_290, %c3_291, %c0_292, %c0_293] : memref<1x8x4x16x128xbf16, #tpu.memory_space<vmem>>, vector<1x1x1x16x128xbf16>
    %420 = vector.shape_cast %419 : vector<1x1x1x16x128xbf16> to vector<16x128xbf16>
    %421 = vector.shape_cast %418 : vector<16x128xbf16> to vector<1x1x1x16x128xbf16>
    tpu.vector_store %arg5[%c0_289, %c4_290, %c3_291, %c0_292, %c0_293], %421 {strides = array<i32>} : memref<1x8x4x16x128xbf16, #tpu.memory_space<vmem>>, vector<1x1x1x16x128xbf16>,
    %c0_294 = arith.constant 0 : index
    %c5_295 = arith.constant 5 : index
    %c0_296 = arith.constant 0 : index
    %c0_297 = arith.constant 0 : index
    %422 = vector.load %arg2[%c0_294, %c5_295, %c0_296, %c0_297] : memref<1x8x18x4xbf16, #tpu.memory_space<vmem>>, vector<1x1x18x4xbf16>
    %423 = vector.shape_cast %422 : vector<1x1x18x4xbf16> to vector<18x4xbf16>
    %c0_298 = arith.constant 0 : index
    %c6_299 = arith.constant 6 : index
    %c0_300 = arith.constant 0 : index
    %c0_301 = arith.constant 0 : index
    %424 = vector.load %arg2[%c0_298, %c6_299, %c0_300, %c0_301] : memref<1x8x18x4xbf16, #tpu.memory_space<vmem>>, vector<1x1x18x4xbf16>
    %425 = vector.shape_cast %424 : vector<1x1x18x4xbf16> to vector<18x4xbf16>
    %426 = vector.extract_strided_slice %423 {offsets = [0, 0], sizes = [16, 4], strides = [1, 1]} : vector<18x4xbf16> to vector<16x4xbf16>
    %427 = vector.extract_strided_slice %423 {offsets = [1, 0], sizes = [16, 4], strides = [1, 1]} : vector<18x4xbf16> to vector<16x4xbf16>
    %428 = vector.extract_strided_slice %425 {offsets = [0, 0], sizes = [16, 4], strides = [1, 1]} : vector<18x4xbf16> to vector<16x4xbf16>
    %429 = vector.extract_strided_slice %425 {offsets = [1, 0], sizes = [16, 4], strides = [1, 1]} : vector<18x4xbf16> to vector<16x4xbf16>
    %430 = tpu.concatenate %426, %427, %428, %429 in 1 : vector<16x4xbf16>, vector<16x4xbf16>, vector<16x4xbf16>, vector<16x4xbf16> -> vector<16x16xbf16>
    %c0_302 = arith.constant 0 : index
    %c0_303 = arith.constant 0 : index
    %c0_304 = arith.constant 0 : index
    %431 = vector.load %arg4[%c0_302, %c0_303, %c0_304] : memref<4x16x128xbf16, #tpu.memory_space<vmem>>, vector<1x16x128xbf16>
    %432 = vector.shape_cast %431 : vector<1x16x128xbf16> to vector<16x128xbf16>
    %cst_305 = arith.constant dense<0.000000e+00> : vector<16x128xf32>
    %433 = tpu.matmul %430, %432, %cst_305 {dimension_numbers = #tpu.dot_dimension_numbers<[1], [0], [0], [1], [0, 0, 1, 1], [], []>} : vector<16x16xbf16>, vector<16x128xbf16>, vector<16x128xf32> -> vector<16x128xf32>
    %cst_306 = arith.constant dense<0.000000e+00> : vector<128xf32>
    %434 = vector.multi_reduction <add>, %433, %cst_306 [0] : vector<16x128xf32> to vector<128xf32>
    %435 = vector.shape_cast %434 : vector<128xf32> to vector<1x128xf32>
    %436 = arith.addf %413, %435 : vector<1x128xf32>
    %437 = arith.mulf %433, %433 : vector<16x128xf32>
    %cst_307 = arith.constant dense<0.000000e+00> : vector<128xf32>
    %438 = vector.multi_reduction <add>, %437, %cst_307 [0] : vector<16x128xf32> to vector<128xf32>
    %439 = vector.shape_cast %438 : vector<128xf32> to vector<1x128xf32>
    %440 = arith.addf %417, %439 : vector<1x128xf32>
    %441 = arith.truncf %433 : vector<16x128xf32> to vector<16x128xbf16>
    %c0_308 = arith.constant 0 : index
    %c5_309 = arith.constant 5 : index
    %c0_310 = arith.constant 0 : index
    %c0_311 = arith.constant 0 : index
    %c0_312 = arith.constant 0 : index
    %442 = vector.load %arg5[%c0_308, %c5_309, %c0_310, %c0_311, %c0_312] : memref<1x8x4x16x128xbf16, #tpu.memory_space<vmem>>, vector<1x1x1x16x128xbf16>
    %443 = vector.shape_cast %442 : vector<1x1x1x16x128xbf16> to vector<16x128xbf16>
    %444 = vector.shape_cast %441 : vector<16x128xbf16> to vector<1x1x1x16x128xbf16>
    tpu.vector_store %arg5[%c0_308, %c5_309, %c0_310, %c0_311, %c0_312], %444 {strides = array<i32>} : memref<1x8x4x16x128xbf16, #tpu.memory_space<vmem>>, vector<1x1x1x16x128xbf16>,
    %445 = vector.extract_strided_slice %423 {offsets = [1, 0], sizes = [16, 4], strides = [1, 1]} : vector<18x4xbf16> to vector<16x4xbf16>
    %446 = vector.extract_strided_slice %423 {offsets = [2, 0], sizes = [16, 4], strides = [1, 1]} : vector<18x4xbf16> to vector<16x4xbf16>
    %447 = vector.extract_strided_slice %425 {offsets = [1, 0], sizes = [16, 4], strides = [1, 1]} : vector<18x4xbf16> to vector<16x4xbf16>
    %448 = vector.extract_strided_slice %425 {offsets = [2, 0], sizes = [16, 4], strides = [1, 1]} : vector<18x4xbf16> to vector<16x4xbf16>
    %449 = tpu.concatenate %445, %446, %447, %448 in 1 : vector<16x4xbf16>, vector<16x4xbf16>, vector<16x4xbf16>, vector<16x4xbf16> -> vector<16x16xbf16>
    %c1_313 = arith.constant 1 : index
    %c0_314 = arith.constant 0 : index
    %c0_315 = arith.constant 0 : index
    %450 = vector.load %arg4[%c1_313, %c0_314, %c0_315] : memref<4x16x128xbf16, #tpu.memory_space<vmem>>, vector<1x16x128xbf16>
    %451 = vector.shape_cast %450 : vector<1x16x128xbf16> to vector<16x128xbf16>
    %cst_316 = arith.constant dense<0.000000e+00> : vector<16x128xf32>
    %452 = tpu.matmul %449, %451, %cst_316 {dimension_numbers = #tpu.dot_dimension_numbers<[1], [0], [0], [1], [0, 0, 1, 1], [], []>} : vector<16x16xbf16>, vector<16x128xbf16>, vector<16x128xf32> -> vector<16x128xf32>
    %cst_317 = arith.constant dense<0.000000e+00> : vector<128xf32>
    %453 = vector.multi_reduction <add>, %452, %cst_317 [0] : vector<16x128xf32> to vector<128xf32>
    %454 = vector.shape_cast %453 : vector<128xf32> to vector<1x128xf32>
    %455 = arith.addf %436, %454 : vector<1x128xf32>
    %456 = arith.mulf %452, %452 : vector<16x128xf32>
    %cst_318 = arith.constant dense<0.000000e+00> : vector<128xf32>
    %457 = vector.multi_reduction <add>, %456, %cst_318 [0] : vector<16x128xf32> to vector<128xf32>
    %458 = vector.shape_cast %457 : vector<128xf32> to vector<1x128xf32>
    %459 = arith.addf %440, %458 : vector<1x128xf32>
    %460 = arith.truncf %452 : vector<16x128xf32> to vector<16x128xbf16>
    %c0_319 = arith.constant 0 : index
    %c5_320 = arith.constant 5 : index
    %c1_321 = arith.constant 1 : index
    %c0_322 = arith.constant 0 : index
    %c0_323 = arith.constant 0 : index
    %461 = vector.load %arg5[%c0_319, %c5_320, %c1_321, %c0_322, %c0_323] : memref<1x8x4x16x128xbf16, #tpu.memory_space<vmem>>, vector<1x1x1x16x128xbf16>
    %462 = vector.shape_cast %461 : vector<1x1x1x16x128xbf16> to vector<16x128xbf16>
    %463 = vector.shape_cast %460 : vector<16x128xbf16> to vector<1x1x1x16x128xbf16>
    tpu.vector_store %arg5[%c0_319, %c5_320, %c1_321, %c0_322, %c0_323], %463 {strides = array<i32>} : memref<1x8x4x16x128xbf16, #tpu.memory_space<vmem>>, vector<1x1x1x16x128xbf16>,
    %c0_324 = arith.constant 0 : index
    %c6_325 = arith.constant 6 : index
    %c0_326 = arith.constant 0 : index
    %c0_327 = arith.constant 0 : index
    %464 = vector.load %arg2[%c0_324, %c6_325, %c0_326, %c0_327] : memref<1x8x18x4xbf16, #tpu.memory_space<vmem>>, vector<1x1x18x4xbf16>
    %465 = vector.shape_cast %464 : vector<1x1x18x4xbf16> to vector<18x4xbf16>
    %c0_328 = arith.constant 0 : index
    %c7 = arith.constant 7 : index
    %c0_329 = arith.constant 0 : index
    %c0_330 = arith.constant 0 : index
    %466 = vector.load %arg2[%c0_328, %c7, %c0_329, %c0_330] : memref<1x8x18x4xbf16, #tpu.memory_space<vmem>>, vector<1x1x18x4xbf16>
    %467 = vector.shape_cast %466 : vector<1x1x18x4xbf16> to vector<18x4xbf16>
    %468 = vector.extract_strided_slice %465 {offsets = [0, 0], sizes = [16, 4], strides = [1, 1]} : vector<18x4xbf16> to vector<16x4xbf16>
    %469 = vector.extract_strided_slice %465 {offsets = [1, 0], sizes = [16, 4], strides = [1, 1]} : vector<18x4xbf16> to vector<16x4xbf16>
    %470 = vector.extract_strided_slice %467 {offsets = [0, 0], sizes = [16, 4], strides = [1, 1]} : vector<18x4xbf16> to vector<16x4xbf16>
    %471 = vector.extract_strided_slice %467 {offsets = [1, 0], sizes = [16, 4], strides = [1, 1]} : vector<18x4xbf16> to vector<16x4xbf16>
    %472 = tpu.concatenate %468, %469, %470, %471 in 1 : vector<16x4xbf16>, vector<16x4xbf16>, vector<16x4xbf16>, vector<16x4xbf16> -> vector<16x16xbf16>
    %c2_331 = arith.constant 2 : index
    %c0_332 = arith.constant 0 : index
    %c0_333 = arith.constant 0 : index
    %473 = vector.load %arg4[%c2_331, %c0_332, %c0_333] : memref<4x16x128xbf16, #tpu.memory_space<vmem>>, vector<1x16x128xbf16>
    %474 = vector.shape_cast %473 : vector<1x16x128xbf16> to vector<16x128xbf16>
    %cst_334 = arith.constant dense<0.000000e+00> : vector<16x128xf32>
    %475 = tpu.matmul %472, %474, %cst_334 {dimension_numbers = #tpu.dot_dimension_numbers<[1], [0], [0], [1], [0, 0, 1, 1], [], []>} : vector<16x16xbf16>, vector<16x128xbf16>, vector<16x128xf32> -> vector<16x128xf32>
    %cst_335 = arith.constant dense<0.000000e+00> : vector<128xf32>
    %476 = vector.multi_reduction <add>, %475, %cst_335 [0] : vector<16x128xf32> to vector<128xf32>
    %477 = vector.shape_cast %476 : vector<128xf32> to vector<1x128xf32>
    %478 = arith.addf %455, %477 : vector<1x128xf32>
    %479 = arith.mulf %475, %475 : vector<16x128xf32>
    %cst_336 = arith.constant dense<0.000000e+00> : vector<128xf32>
    %480 = vector.multi_reduction <add>, %479, %cst_336 [0] : vector<16x128xf32> to vector<128xf32>
    %481 = vector.shape_cast %480 : vector<128xf32> to vector<1x128xf32>
    %482 = arith.addf %459, %481 : vector<1x128xf32>
    %483 = arith.truncf %475 : vector<16x128xf32> to vector<16x128xbf16>
    %c0_337 = arith.constant 0 : index
    %c5_338 = arith.constant 5 : index
    %c2_339 = arith.constant 2 : index
    %c0_340 = arith.constant 0 : index
    %c0_341 = arith.constant 0 : index
    %484 = vector.load %arg5[%c0_337, %c5_338, %c2_339, %c0_340, %c0_341] : memref<1x8x4x16x128xbf16, #tpu.memory_space<vmem>>, vector<1x1x1x16x128xbf16>
    %485 = vector.shape_cast %484 : vector<1x1x1x16x128xbf16> to vector<16x128xbf16>
    %486 = vector.shape_cast %483 : vector<16x128xbf16> to vector<1x1x1x16x128xbf16>
    tpu.vector_store %arg5[%c0_337, %c5_338, %c2_339, %c0_340, %c0_341], %486 {strides = array<i32>} : memref<1x8x4x16x128xbf16, #tpu.memory_space<vmem>>, vector<1x1x1x16x128xbf16>,
    %487 = vector.extract_strided_slice %465 {offsets = [1, 0], sizes = [16, 4], strides = [1, 1]} : vector<18x4xbf16> to vector<16x4xbf16>
    %488 = vector.extract_strided_slice %465 {offsets = [2, 0], sizes = [16, 4], strides = [1, 1]} : vector<18x4xbf16> to vector<16x4xbf16>
    %489 = vector.extract_strided_slice %467 {offsets = [1, 0], sizes = [16, 4], strides = [1, 1]} : vector<18x4xbf16> to vector<16x4xbf16>
    %490 = vector.extract_strided_slice %467 {offsets = [2, 0], sizes = [16, 4], strides = [1, 1]} : vector<18x4xbf16> to vector<16x4xbf16>
    %491 = tpu.concatenate %487, %488, %489, %490 in 1 : vector<16x4xbf16>, vector<16x4xbf16>, vector<16x4xbf16>, vector<16x4xbf16> -> vector<16x16xbf16>
    %c3_342 = arith.constant 3 : index
    %c0_343 = arith.constant 0 : index
    %c0_344 = arith.constant 0 : index
    %492 = vector.load %arg4[%c3_342, %c0_343, %c0_344] : memref<4x16x128xbf16, #tpu.memory_space<vmem>>, vector<1x16x128xbf16>
    %493 = vector.shape_cast %492 : vector<1x16x128xbf16> to vector<16x128xbf16>
    %cst_345 = arith.constant dense<0.000000e+00> : vector<16x128xf32>
    %494 = tpu.matmul %491, %493, %cst_345 {dimension_numbers = #tpu.dot_dimension_numbers<[1], [0], [0], [1], [0, 0, 1, 1], [], []>} : vector<16x16xbf16>, vector<16x128xbf16>, vector<16x128xf32> -> vector<16x128xf32>
    %cst_346 = arith.constant dense<0.000000e+00> : vector<128xf32>
    %495 = vector.multi_reduction <add>, %494, %cst_346 [0] : vector<16x128xf32> to vector<128xf32>
    %496 = vector.shape_cast %495 : vector<128xf32> to vector<1x128xf32>
    %497 = arith.addf %478, %496 : vector<1x128xf32>
    %498 = arith.mulf %494, %494 : vector<16x128xf32>
    %cst_347 = arith.constant dense<0.000000e+00> : vector<128xf32>
    %499 = vector.multi_reduction <add>, %498, %cst_347 [0] : vector<16x128xf32> to vector<128xf32>
    %500 = vector.shape_cast %499 : vector<128xf32> to vector<1x128xf32>
    %501 = arith.addf %482, %500 : vector<1x128xf32>
    %502 = arith.truncf %494 : vector<16x128xf32> to vector<16x128xbf16>
    %c0_348 = arith.constant 0 : index
    %c5_349 = arith.constant 5 : index
    %c3_350 = arith.constant 3 : index
    %c0_351 = arith.constant 0 : index
    %c0_352 = arith.constant 0 : index
    %503 = vector.load %arg5[%c0_348, %c5_349, %c3_350, %c0_351, %c0_352] : memref<1x8x4x16x128xbf16, #tpu.memory_space<vmem>>, vector<1x1x1x16x128xbf16>
    %504 = vector.shape_cast %503 : vector<1x1x1x16x128xbf16> to vector<16x128xbf16>
    %505 = vector.shape_cast %502 : vector<16x128xbf16> to vector<1x1x1x16x128xbf16>
    tpu.vector_store %arg5[%c0_348, %c5_349, %c3_350, %c0_351, %c0_352], %505 {strides = array<i32>} : memref<1x8x4x16x128xbf16, #tpu.memory_space<vmem>>, vector<1x1x1x16x128xbf16>,
    %c0_353 = arith.constant 0 : index
    %c6_354 = arith.constant 6 : index
    %c0_355 = arith.constant 0 : index
    %c0_356 = arith.constant 0 : index
    %506 = vector.load %arg2[%c0_353, %c6_354, %c0_355, %c0_356] : memref<1x8x18x4xbf16, #tpu.memory_space<vmem>>, vector<1x1x18x4xbf16>
    %507 = vector.shape_cast %506 : vector<1x1x18x4xbf16> to vector<18x4xbf16>
    %c0_357 = arith.constant 0 : index
    %c7_358 = arith.constant 7 : index
    %c0_359 = arith.constant 0 : index
    %c0_360 = arith.constant 0 : index
    %508 = vector.load %arg2[%c0_357, %c7_358, %c0_359, %c0_360] : memref<1x8x18x4xbf16, #tpu.memory_space<vmem>>, vector<1x1x18x4xbf16>
    %509 = vector.shape_cast %508 : vector<1x1x18x4xbf16> to vector<18x4xbf16>
    %510 = vector.extract_strided_slice %507 {offsets = [0, 0], sizes = [16, 4], strides = [1, 1]} : vector<18x4xbf16> to vector<16x4xbf16>
    %511 = vector.extract_strided_slice %507 {offsets = [1, 0], sizes = [16, 4], strides = [1, 1]} : vector<18x4xbf16> to vector<16x4xbf16>
    %512 = vector.extract_strided_slice %509 {offsets = [0, 0], sizes = [16, 4], strides = [1, 1]} : vector<18x4xbf16> to vector<16x4xbf16>
    %513 = vector.extract_strided_slice %509 {offsets = [1, 0], sizes = [16, 4], strides = [1, 1]} : vector<18x4xbf16> to vector<16x4xbf16>
    %514 = tpu.concatenate %510, %511, %512, %513 in 1 : vector<16x4xbf16>, vector<16x4xbf16>, vector<16x4xbf16>, vector<16x4xbf16> -> vector<16x16xbf16>
    %c0_361 = arith.constant 0 : index
    %c0_362 = arith.constant 0 : index
    %c0_363 = arith.constant 0 : index
    %515 = vector.load %arg4[%c0_361, %c0_362, %c0_363] : memref<4x16x128xbf16, #tpu.memory_space<vmem>>, vector<1x16x128xbf16>
    %516 = vector.shape_cast %515 : vector<1x16x128xbf16> to vector<16x128xbf16>
    %cst_364 = arith.constant dense<0.000000e+00> : vector<16x128xf32>
    %517 = tpu.matmul %514, %516, %cst_364 {dimension_numbers = #tpu.dot_dimension_numbers<[1], [0], [0], [1], [0, 0, 1, 1], [], []>} : vector<16x16xbf16>, vector<16x128xbf16>, vector<16x128xf32> -> vector<16x128xf32>
    %cst_365 = arith.constant dense<0.000000e+00> : vector<128xf32>
    %518 = vector.multi_reduction <add>, %517, %cst_365 [0] : vector<16x128xf32> to vector<128xf32>
    %519 = vector.shape_cast %518 : vector<128xf32> to vector<1x128xf32>
    %520 = arith.addf %497, %519 : vector<1x128xf32>
    %521 = arith.mulf %517, %517 : vector<16x128xf32>
    %cst_366 = arith.constant dense<0.000000e+00> : vector<128xf32>
    %522 = vector.multi_reduction <add>, %521, %cst_366 [0] : vector<16x128xf32> to vector<128xf32>
    %523 = vector.shape_cast %522 : vector<128xf32> to vector<1x128xf32>
    %524 = arith.addf %501, %523 : vector<1x128xf32>
    %525 = arith.truncf %517 : vector<16x128xf32> to vector<16x128xbf16>
    %c0_367 = arith.constant 0 : index
    %c6_368 = arith.constant 6 : index
    %c0_369 = arith.constant 0 : index
    %c0_370 = arith.constant 0 : index
    %c0_371 = arith.constant 0 : index
    %526 = vector.load %arg5[%c0_367, %c6_368, %c0_369, %c0_370, %c0_371] : memref<1x8x4x16x128xbf16, #tpu.memory_space<vmem>>, vector<1x1x1x16x128xbf16>
    %527 = vector.shape_cast %526 : vector<1x1x1x16x128xbf16> to vector<16x128xbf16>
    %528 = vector.shape_cast %525 : vector<16x128xbf16> to vector<1x1x1x16x128xbf16>
    tpu.vector_store %arg5[%c0_367, %c6_368, %c0_369, %c0_370, %c0_371], %528 {strides = array<i32>} : memref<1x8x4x16x128xbf16, #tpu.memory_space<vmem>>, vector<1x1x1x16x128xbf16>,
    %529 = vector.extract_strided_slice %507 {offsets = [1, 0], sizes = [16, 4], strides = [1, 1]} : vector<18x4xbf16> to vector<16x4xbf16>
    %530 = vector.extract_strided_slice %507 {offsets = [2, 0], sizes = [16, 4], strides = [1, 1]} : vector<18x4xbf16> to vector<16x4xbf16>
    %531 = vector.extract_strided_slice %509 {offsets = [1, 0], sizes = [16, 4], strides = [1, 1]} : vector<18x4xbf16> to vector<16x4xbf16>
    %532 = vector.extract_strided_slice %509 {offsets = [2, 0], sizes = [16, 4], strides = [1, 1]} : vector<18x4xbf16> to vector<16x4xbf16>
    %533 = tpu.concatenate %529, %530, %531, %532 in 1 : vector<16x4xbf16>, vector<16x4xbf16>, vector<16x4xbf16>, vector<16x4xbf16> -> vector<16x16xbf16>
    %c1_372 = arith.constant 1 : index
    %c0_373 = arith.constant 0 : index
    %c0_374 = arith.constant 0 : index
    %534 = vector.load %arg4[%c1_372, %c0_373, %c0_374] : memref<4x16x128xbf16, #tpu.memory_space<vmem>>, vector<1x16x128xbf16>
    %535 = vector.shape_cast %534 : vector<1x16x128xbf16> to vector<16x128xbf16>
    %cst_375 = arith.constant dense<0.000000e+00> : vector<16x128xf32>
    %536 = tpu.matmul %533, %535, %cst_375 {dimension_numbers = #tpu.dot_dimension_numbers<[1], [0], [0], [1], [0, 0, 1, 1], [], []>} : vector<16x16xbf16>, vector<16x128xbf16>, vector<16x128xf32> -> vector<16x128xf32>
    %cst_376 = arith.constant dense<0.000000e+00> : vector<128xf32>
    %537 = vector.multi_reduction <add>, %536, %cst_376 [0] : vector<16x128xf32> to vector<128xf32>
    %538 = vector.shape_cast %537 : vector<128xf32> to vector<1x128xf32>
    %539 = arith.addf %520, %538 : vector<1x128xf32>
    %540 = arith.mulf %536, %536 : vector<16x128xf32>
    %cst_377 = arith.constant dense<0.000000e+00> : vector<128xf32>
    %541 = vector.multi_reduction <add>, %540, %cst_377 [0] : vector<16x128xf32> to vector<128xf32>
    %542 = vector.shape_cast %541 : vector<128xf32> to vector<1x128xf32>
    %543 = arith.addf %524, %542 : vector<1x128xf32>
    %544 = arith.truncf %536 : vector<16x128xf32> to vector<16x128xbf16>
    %c0_378 = arith.constant 0 : index
    %c6_379 = arith.constant 6 : index
    %c1_380 = arith.constant 1 : index
    %c0_381 = arith.constant 0 : index
    %c0_382 = arith.constant 0 : index
    %545 = vector.load %arg5[%c0_378, %c6_379, %c1_380, %c0_381, %c0_382] : memref<1x8x4x16x128xbf16, #tpu.memory_space<vmem>>, vector<1x1x1x16x128xbf16>
    %546 = vector.shape_cast %545 : vector<1x1x1x16x128xbf16> to vector<16x128xbf16>
    %547 = vector.shape_cast %544 : vector<16x128xbf16> to vector<1x1x1x16x128xbf16>
    tpu.vector_store %arg5[%c0_378, %c6_379, %c1_380, %c0_381, %c0_382], %547 {strides = array<i32>} : memref<1x8x4x16x128xbf16, #tpu.memory_space<vmem>>, vector<1x1x1x16x128xbf16>,
    %c0_383 = arith.constant 0 : index
    %c7_384 = arith.constant 7 : index
    %c0_385 = arith.constant 0 : index
    %c0_386 = arith.constant 0 : index
    %548 = vector.load %arg2[%c0_383, %c7_384, %c0_385, %c0_386] : memref<1x8x18x4xbf16, #tpu.memory_space<vmem>>, vector<1x1x18x4xbf16>
    %549 = vector.shape_cast %548 : vector<1x1x18x4xbf16> to vector<18x4xbf16>
    %c0_387 = arith.constant 0 : index
    %c0_388 = arith.constant 0 : index
    %c0_389 = arith.constant 0 : index
    %c0_390 = arith.constant 0 : index
    %550 = vector.load %arg3[%c0_387, %c0_388, %c0_389, %c0_390] : memref<1x2x18x4xbf16, #tpu.memory_space<vmem>>, vector<1x1x18x4xbf16>
    %551 = vector.shape_cast %550 : vector<1x1x18x4xbf16> to vector<18x4xbf16>
    %552 = vector.extract_strided_slice %549 {offsets = [0, 0], sizes = [16, 4], strides = [1, 1]} : vector<18x4xbf16> to vector<16x4xbf16>
    %553 = vector.extract_strided_slice %549 {offsets = [1, 0], sizes = [16, 4], strides = [1, 1]} : vector<18x4xbf16> to vector<16x4xbf16>
    %554 = vector.extract_strided_slice %551 {offsets = [0, 0], sizes = [16, 4], strides = [1, 1]} : vector<18x4xbf16> to vector<16x4xbf16>
    %555 = vector.extract_strided_slice %551 {offsets = [1, 0], sizes = [16, 4], strides = [1, 1]} : vector<18x4xbf16> to vector<16x4xbf16>
    %556 = tpu.concatenate %552, %553, %554, %555 in 1 : vector<16x4xbf16>, vector<16x4xbf16>, vector<16x4xbf16>, vector<16x4xbf16> -> vector<16x16xbf16>
    %c2_391 = arith.constant 2 : index
    %c0_392 = arith.constant 0 : index
    %c0_393 = arith.constant 0 : index
    %557 = vector.load %arg4[%c2_391, %c0_392, %c0_393] : memref<4x16x128xbf16, #tpu.memory_space<vmem>>, vector<1x16x128xbf16>
    %558 = vector.shape_cast %557 : vector<1x16x128xbf16> to vector<16x128xbf16>
    %cst_394 = arith.constant dense<0.000000e+00> : vector<16x128xf32>
    %559 = tpu.matmul %556, %558, %cst_394 {dimension_numbers = #tpu.dot_dimension_numbers<[1], [0], [0], [1], [0, 0, 1, 1], [], []>} : vector<16x16xbf16>, vector<16x128xbf16>, vector<16x128xf32> -> vector<16x128xf32>
    %cst_395 = arith.constant dense<0.000000e+00> : vector<128xf32>
    %560 = vector.multi_reduction <add>, %559, %cst_395 [0] : vector<16x128xf32> to vector<128xf32>
    %561 = vector.shape_cast %560 : vector<128xf32> to vector<1x128xf32>
    %562 = arith.addf %539, %561 : vector<1x128xf32>
    %563 = arith.mulf %559, %559 : vector<16x128xf32>
    %cst_396 = arith.constant dense<0.000000e+00> : vector<128xf32>
    %564 = vector.multi_reduction <add>, %563, %cst_396 [0] : vector<16x128xf32> to vector<128xf32>
    %565 = vector.shape_cast %564 : vector<128xf32> to vector<1x128xf32>
    %566 = arith.addf %543, %565 : vector<1x128xf32>
    %567 = arith.truncf %559 : vector<16x128xf32> to vector<16x128xbf16>
    %c0_397 = arith.constant 0 : index
    %c6_398 = arith.constant 6 : index
    %c2_399 = arith.constant 2 : index
    %c0_400 = arith.constant 0 : index
    %c0_401 = arith.constant 0 : index
    %568 = vector.load %arg5[%c0_397, %c6_398, %c2_399, %c0_400, %c0_401] : memref<1x8x4x16x128xbf16, #tpu.memory_space<vmem>>, vector<1x1x1x16x128xbf16>
    %569 = vector.shape_cast %568 : vector<1x1x1x16x128xbf16> to vector<16x128xbf16>
    %570 = vector.shape_cast %567 : vector<16x128xbf16> to vector<1x1x1x16x128xbf16>
    tpu.vector_store %arg5[%c0_397, %c6_398, %c2_399, %c0_400, %c0_401], %570 {strides = array<i32>} : memref<1x8x4x16x128xbf16, #tpu.memory_space<vmem>>, vector<1x1x1x16x128xbf16>,
    %571 = vector.extract_strided_slice %549 {offsets = [1, 0], sizes = [16, 4], strides = [1, 1]} : vector<18x4xbf16> to vector<16x4xbf16>
    %572 = vector.extract_strided_slice %549 {offsets = [2, 0], sizes = [16, 4], strides = [1, 1]} : vector<18x4xbf16> to vector<16x4xbf16>
    %573 = vector.extract_strided_slice %551 {offsets = [1, 0], sizes = [16, 4], strides = [1, 1]} : vector<18x4xbf16> to vector<16x4xbf16>
    %574 = vector.extract_strided_slice %551 {offsets = [2, 0], sizes = [16, 4], strides = [1, 1]} : vector<18x4xbf16> to vector<16x4xbf16>
    %575 = tpu.concatenate %571, %572, %573, %574 in 1 : vector<16x4xbf16>, vector<16x4xbf16>, vector<16x4xbf16>, vector<16x4xbf16> -> vector<16x16xbf16>
    %c3_402 = arith.constant 3 : index
    %c0_403 = arith.constant 0 : index
    %c0_404 = arith.constant 0 : index
    %576 = vector.load %arg4[%c3_402, %c0_403, %c0_404] : memref<4x16x128xbf16, #tpu.memory_space<vmem>>, vector<1x16x128xbf16>
    %577 = vector.shape_cast %576 : vector<1x16x128xbf16> to vector<16x128xbf16>
    %cst_405 = arith.constant dense<0.000000e+00> : vector<16x128xf32>
    %578 = tpu.matmul %575, %577, %cst_405 {dimension_numbers = #tpu.dot_dimension_numbers<[1], [0], [0], [1], [0, 0, 1, 1], [], []>} : vector<16x16xbf16>, vector<16x128xbf16>, vector<16x128xf32> -> vector<16x128xf32>
    %cst_406 = arith.constant dense<0.000000e+00> : vector<128xf32>
    %579 = vector.multi_reduction <add>, %578, %cst_406 [0] : vector<16x128xf32> to vector<128xf32>
    %580 = vector.shape_cast %579 : vector<128xf32> to vector<1x128xf32>
    %581 = arith.addf %562, %580 : vector<1x128xf32>
    %582 = arith.mulf %578, %578 : vector<16x128xf32>
    %cst_407 = arith.constant dense<0.000000e+00> : vector<128xf32>
    %583 = vector.multi_reduction <add>, %582, %cst_407 [0] : vector<16x128xf32> to vector<128xf32>
    %584 = vector.shape_cast %583 : vector<128xf32> to vector<1x128xf32>
    %585 = arith.addf %566, %584 : vector<1x128xf32>
    %586 = arith.truncf %578 : vector<16x128xf32> to vector<16x128xbf16>
    %c0_408 = arith.constant 0 : index
    %c6_409 = arith.constant 6 : index
    %c3_410 = arith.constant 3 : index
    %c0_411 = arith.constant 0 : index
    %c0_412 = arith.constant 0 : index
    %587 = vector.load %arg5[%c0_408, %c6_409, %c3_410, %c0_411, %c0_412] : memref<1x8x4x16x128xbf16, #tpu.memory_space<vmem>>, vector<1x1x1x16x128xbf16>
    %588 = vector.shape_cast %587 : vector<1x1x1x16x128xbf16> to vector<16x128xbf16>
    %589 = vector.shape_cast %586 : vector<16x128xbf16> to vector<1x1x1x16x128xbf16>
    tpu.vector_store %arg5[%c0_408, %c6_409, %c3_410, %c0_411, %c0_412], %589 {strides = array<i32>} : memref<1x8x4x16x128xbf16, #tpu.memory_space<vmem>>, vector<1x1x1x16x128xbf16>,
    %c0_413 = arith.constant 0 : index
    %c7_414 = arith.constant 7 : index
    %c0_415 = arith.constant 0 : index
    %c0_416 = arith.constant 0 : index
    %590 = vector.load %arg2[%c0_413, %c7_414, %c0_415, %c0_416] : memref<1x8x18x4xbf16, #tpu.memory_space<vmem>>, vector<1x1x18x4xbf16>
    %591 = vector.shape_cast %590 : vector<1x1x18x4xbf16> to vector<18x4xbf16>
    %c0_417 = arith.constant 0 : index
    %c0_418 = arith.constant 0 : index
    %c0_419 = arith.constant 0 : index
    %c0_420 = arith.constant 0 : index
    %592 = vector.load %arg3[%c0_417, %c0_418, %c0_419, %c0_420] : memref<1x2x18x4xbf16, #tpu.memory_space<vmem>>, vector<1x1x18x4xbf16>
    %593 = vector.shape_cast %592 : vector<1x1x18x4xbf16> to vector<18x4xbf16>
    %594 = vector.extract_strided_slice %591 {offsets = [0, 0], sizes = [16, 4], strides = [1, 1]} : vector<18x4xbf16> to vector<16x4xbf16>
    %595 = vector.extract_strided_slice %591 {offsets = [1, 0], sizes = [16, 4], strides = [1, 1]} : vector<18x4xbf16> to vector<16x4xbf16>
    %596 = vector.extract_strided_slice %593 {offsets = [0, 0], sizes = [16, 4], strides = [1, 1]} : vector<18x4xbf16> to vector<16x4xbf16>
    %597 = vector.extract_strided_slice %593 {offsets = [1, 0], sizes = [16, 4], strides = [1, 1]} : vector<18x4xbf16> to vector<16x4xbf16>
    %598 = tpu.concatenate %594, %595, %596, %597 in 1 : vector<16x4xbf16>, vector<16x4xbf16>, vector<16x4xbf16>, vector<16x4xbf16> -> vector<16x16xbf16>
    %c0_421 = arith.constant 0 : index
    %c0_422 = arith.constant 0 : index
    %c0_423 = arith.constant 0 : index
    %599 = vector.load %arg4[%c0_421, %c0_422, %c0_423] : memref<4x16x128xbf16, #tpu.memory_space<vmem>>, vector<1x16x128xbf16>
    %600 = vector.shape_cast %599 : vector<1x16x128xbf16> to vector<16x128xbf16>
    %cst_424 = arith.constant dense<0.000000e+00> : vector<16x128xf32>
    %601 = tpu.matmul %598, %600, %cst_424 {dimension_numbers = #tpu.dot_dimension_numbers<[1], [0], [0], [1], [0, 0, 1, 1], [], []>} : vector<16x16xbf16>, vector<16x128xbf16>, vector<16x128xf32> -> vector<16x128xf32>
    %cst_425 = arith.constant dense<0.000000e+00> : vector<128xf32>
    %602 = vector.multi_reduction <add>, %601, %cst_425 [0] : vector<16x128xf32> to vector<128xf32>
    %603 = vector.shape_cast %602 : vector<128xf32> to vector<1x128xf32>
    %604 = arith.addf %581, %603 : vector<1x128xf32>
    %605 = arith.mulf %601, %601 : vector<16x128xf32>
    %cst_426 = arith.constant dense<0.000000e+00> : vector<128xf32>
    %606 = vector.multi_reduction <add>, %605, %cst_426 [0] : vector<16x128xf32> to vector<128xf32>
    %607 = vector.shape_cast %606 : vector<128xf32> to vector<1x128xf32>
    %608 = arith.addf %585, %607 : vector<1x128xf32>
    %609 = arith.truncf %601 : vector<16x128xf32> to vector<16x128xbf16>
    %c0_427 = arith.constant 0 : index
    %c7_428 = arith.constant 7 : index
    %c0_429 = arith.constant 0 : index
    %c0_430 = arith.constant 0 : index
    %c0_431 = arith.constant 0 : index
    %610 = vector.load %arg5[%c0_427, %c7_428, %c0_429, %c0_430, %c0_431] : memref<1x8x4x16x128xbf16, #tpu.memory_space<vmem>>, vector<1x1x1x16x128xbf16>
    %611 = vector.shape_cast %610 : vector<1x1x1x16x128xbf16> to vector<16x128xbf16>
    %612 = vector.shape_cast %609 : vector<16x128xbf16> to vector<1x1x1x16x128xbf16>
    tpu.vector_store %arg5[%c0_427, %c7_428, %c0_429, %c0_430, %c0_431], %612 {strides = array<i32>} : memref<1x8x4x16x128xbf16, #tpu.memory_space<vmem>>, vector<1x1x1x16x128xbf16>,
    %613 = vector.extract_strided_slice %591 {offsets = [1, 0], sizes = [16, 4], strides = [1, 1]} : vector<18x4xbf16> to vector<16x4xbf16>
    %614 = vector.extract_strided_slice %591 {offsets = [2, 0], sizes = [16, 4], strides = [1, 1]} : vector<18x4xbf16> to vector<16x4xbf16>
    %615 = vector.extract_strided_slice %593 {offsets = [1, 0], sizes = [16, 4], strides = [1, 1]} : vector<18x4xbf16> to vector<16x4xbf16>
    %616 = vector.extract_strided_slice %593 {offsets = [2, 0], sizes = [16, 4], strides = [1, 1]} : vector<18x4xbf16> to vector<16x4xbf16>
    %617 = tpu.concatenate %613, %614, %615, %616 in 1 : vector<16x4xbf16>, vector<16x4xbf16>, vector<16x4xbf16>, vector<16x4xbf16> -> vector<16x16xbf16>
    %c1_432 = arith.constant 1 : index
    %c0_433 = arith.constant 0 : index
    %c0_434 = arith.constant 0 : index
    %618 = vector.load %arg4[%c1_432, %c0_433, %c0_434] : memref<4x16x128xbf16, #tpu.memory_space<vmem>>, vector<1x16x128xbf16>
    %619 = vector.shape_cast %618 : vector<1x16x128xbf16> to vector<16x128xbf16>
    %cst_435 = arith.constant dense<0.000000e+00> : vector<16x128xf32>
    %620 = tpu.matmul %617, %619, %cst_435 {dimension_numbers = #tpu.dot_dimension_numbers<[1], [0], [0], [1], [0, 0, 1, 1], [], []>} : vector<16x16xbf16>, vector<16x128xbf16>, vector<16x128xf32> -> vector<16x128xf32>
    %cst_436 = arith.constant dense<0.000000e+00> : vector<128xf32>
    %621 = vector.multi_reduction <add>, %620, %cst_436 [0] : vector<16x128xf32> to vector<128xf32>
    %622 = vector.shape_cast %621 : vector<128xf32> to vector<1x128xf32>
    %623 = arith.addf %604, %622 : vector<1x128xf32>
    %624 = arith.mulf %620, %620 : vector<16x128xf32>
    %cst_437 = arith.constant dense<0.000000e+00> : vector<128xf32>
    %625 = vector.multi_reduction <add>, %624, %cst_437 [0] : vector<16x128xf32> to vector<128xf32>
    %626 = vector.shape_cast %625 : vector<128xf32> to vector<1x128xf32>
    %627 = arith.addf %608, %626 : vector<1x128xf32>
    %628 = arith.truncf %620 : vector<16x128xf32> to vector<16x128xbf16>
    %c0_438 = arith.constant 0 : index
    %c7_439 = arith.constant 7 : index
    %c1_440 = arith.constant 1 : index
    %c0_441 = arith.constant 0 : index
    %c0_442 = arith.constant 0 : index
    %629 = vector.load %arg5[%c0_438, %c7_439, %c1_440, %c0_441, %c0_442] : memref<1x8x4x16x128xbf16, #tpu.memory_space<vmem>>, vector<1x1x1x16x128xbf16>
    %630 = vector.shape_cast %629 : vector<1x1x1x16x128xbf16> to vector<16x128xbf16>
    %631 = vector.shape_cast %628 : vector<16x128xbf16> to vector<1x1x1x16x128xbf16>
    tpu.vector_store %arg5[%c0_438, %c7_439, %c1_440, %c0_441, %c0_442], %631 {strides = array<i32>} : memref<1x8x4x16x128xbf16, #tpu.memory_space<vmem>>, vector<1x1x1x16x128xbf16>,
    %c0_443 = arith.constant 0 : index
    %c0_444 = arith.constant 0 : index
    %c0_445 = arith.constant 0 : index
    %c0_446 = arith.constant 0 : index
    %632 = vector.load %arg3[%c0_443, %c0_444, %c0_445, %c0_446] : memref<1x2x18x4xbf16, #tpu.memory_space<vmem>>, vector<1x1x18x4xbf16>
    %633 = vector.shape_cast %632 : vector<1x1x18x4xbf16> to vector<18x4xbf16>
    %c0_447 = arith.constant 0 : index
    %c1_448 = arith.constant 1 : index
    %c0_449 = arith.constant 0 : index
    %c0_450 = arith.constant 0 : index
    %634 = vector.load %arg3[%c0_447, %c1_448, %c0_449, %c0_450] : memref<1x2x18x4xbf16, #tpu.memory_space<vmem>>, vector<1x1x18x4xbf16>
    %635 = vector.shape_cast %634 : vector<1x1x18x4xbf16> to vector<18x4xbf16>
    %636 = vector.extract_strided_slice %633 {offsets = [0, 0], sizes = [16, 4], strides = [1, 1]} : vector<18x4xbf16> to vector<16x4xbf16>
    %637 = vector.extract_strided_slice %633 {offsets = [1, 0], sizes = [16, 4], strides = [1, 1]} : vector<18x4xbf16> to vector<16x4xbf16>
    %638 = vector.extract_strided_slice %635 {offsets = [0, 0], sizes = [16, 4], strides = [1, 1]} : vector<18x4xbf16> to vector<16x4xbf16>
    %639 = vector.extract_strided_slice %635 {offsets = [1, 0], sizes = [16, 4], strides = [1, 1]} : vector<18x4xbf16> to vector<16x4xbf16>
    %640 = tpu.concatenate %636, %637, %638, %639 in 1 : vector<16x4xbf16>, vector<16x4xbf16>, vector<16x4xbf16>, vector<16x4xbf16> -> vector<16x16xbf16>
    %c2_451 = arith.constant 2 : index
    %c0_452 = arith.constant 0 : index
    %c0_453 = arith.constant 0 : index
    %641 = vector.load %arg4[%c2_451, %c0_452, %c0_453] : memref<4x16x128xbf16, #tpu.memory_space<vmem>>, vector<1x16x128xbf16>
    %642 = vector.shape_cast %641 : vector<1x16x128xbf16> to vector<16x128xbf16>
    %cst_454 = arith.constant dense<0.000000e+00> : vector<16x128xf32>
    %643 = tpu.matmul %640, %642, %cst_454 {dimension_numbers = #tpu.dot_dimension_numbers<[1], [0], [0], [1], [0, 0, 1, 1], [], []>} : vector<16x16xbf16>, vector<16x128xbf16>, vector<16x128xf32> -> vector<16x128xf32>
    %cst_455 = arith.constant dense<0.000000e+00> : vector<128xf32>
    %644 = vector.multi_reduction <add>, %643, %cst_455 [0] : vector<16x128xf32> to vector<128xf32>
    %645 = vector.shape_cast %644 : vector<128xf32> to vector<1x128xf32>
    %646 = arith.addf %623, %645 : vector<1x128xf32>
    %647 = arith.mulf %643, %643 : vector<16x128xf32>
    %cst_456 = arith.constant dense<0.000000e+00> : vector<128xf32>
    %648 = vector.multi_reduction <add>, %647, %cst_456 [0] : vector<16x128xf32> to vector<128xf32>
    %649 = vector.shape_cast %648 : vector<128xf32> to vector<1x128xf32>
    %650 = arith.addf %627, %649 : vector<1x128xf32>
    %651 = arith.truncf %643 : vector<16x128xf32> to vector<16x128xbf16>
    %c0_457 = arith.constant 0 : index
    %c7_458 = arith.constant 7 : index
    %c2_459 = arith.constant 2 : index
    %c0_460 = arith.constant 0 : index
    %c0_461 = arith.constant 0 : index
    %652 = vector.load %arg5[%c0_457, %c7_458, %c2_459, %c0_460, %c0_461] : memref<1x8x4x16x128xbf16, #tpu.memory_space<vmem>>, vector<1x1x1x16x128xbf16>
    %653 = vector.shape_cast %652 : vector<1x1x1x16x128xbf16> to vector<16x128xbf16>
    %654 = vector.shape_cast %651 : vector<16x128xbf16> to vector<1x1x1x16x128xbf16>
    tpu.vector_store %arg5[%c0_457, %c7_458, %c2_459, %c0_460, %c0_461], %654 {strides = array<i32>} : memref<1x8x4x16x128xbf16, #tpu.memory_space<vmem>>, vector<1x1x1x16x128xbf16>,
    %655 = vector.extract_strided_slice %633 {offsets = [1, 0], sizes = [16, 4], strides = [1, 1]} : vector<18x4xbf16> to vector<16x4xbf16>
    %656 = vector.extract_strided_slice %633 {offsets = [2, 0], sizes = [16, 4], strides = [1, 1]} : vector<18x4xbf16> to vector<16x4xbf16>
    %657 = vector.extract_strided_slice %635 {offsets = [1, 0], sizes = [16, 4], strides = [1, 1]} : vector<18x4xbf16> to vector<16x4xbf16>
    %658 = vector.extract_strided_slice %635 {offsets = [2, 0], sizes = [16, 4], strides = [1, 1]} : vector<18x4xbf16> to vector<16x4xbf16>
    %659 = tpu.concatenate %655, %656, %657, %658 in 1 : vector<16x4xbf16>, vector<16x4xbf16>, vector<16x4xbf16>, vector<16x4xbf16> -> vector<16x16xbf16>
    %c3_462 = arith.constant 3 : index
    %c0_463 = arith.constant 0 : index
    %c0_464 = arith.constant 0 : index
    %660 = vector.load %arg4[%c3_462, %c0_463, %c0_464] : memref<4x16x128xbf16, #tpu.memory_space<vmem>>, vector<1x16x128xbf16>
    %661 = vector.shape_cast %660 : vector<1x16x128xbf16> to vector<16x128xbf16>
    %cst_465 = arith.constant dense<0.000000e+00> : vector<16x128xf32>
    %662 = tpu.matmul %659, %661, %cst_465 {dimension_numbers = #tpu.dot_dimension_numbers<[1], [0], [0], [1], [0, 0, 1, 1], [], []>} : vector<16x16xbf16>, vector<16x128xbf16>, vector<16x128xf32> -> vector<16x128xf32>
    %cst_466 = arith.constant dense<0.000000e+00> : vector<128xf32>
    %663 = vector.multi_reduction <add>, %662, %cst_466 [0] : vector<16x128xf32> to vector<128xf32>
    %664 = vector.shape_cast %663 : vector<128xf32> to vector<1x128xf32>
    %665 = arith.addf %646, %664 : vector<1x128xf32>
    %666 = arith.mulf %662, %662 : vector<16x128xf32>
    %cst_467 = arith.constant dense<0.000000e+00> : vector<128xf32>
    %667 = vector.multi_reduction <add>, %666, %cst_467 [0] : vector<16x128xf32> to vector<128xf32>
    %668 = vector.shape_cast %667 : vector<128xf32> to vector<1x128xf32>
    %669 = arith.addf %650, %668 : vector<1x128xf32>
    %670 = arith.truncf %662 : vector<16x128xf32> to vector<16x128xbf16>
    %c0_468 = arith.constant 0 : index
    %c7_469 = arith.constant 7 : index
    %c3_470 = arith.constant 3 : index
    %c0_471 = arith.constant 0 : index
    %c0_472 = arith.constant 0 : index
    %671 = vector.load %arg5[%c0_468, %c7_469, %c3_470, %c0_471, %c0_472] : memref<1x8x4x16x128xbf16, #tpu.memory_space<vmem>>, vector<1x1x1x16x128xbf16>
    %672 = vector.shape_cast %671 : vector<1x1x1x16x128xbf16> to vector<16x128xbf16>
    %673 = vector.shape_cast %670 : vector<16x128xbf16> to vector<1x1x1x16x128xbf16>
    tpu.vector_store %arg5[%c0_468, %c7_469, %c3_470, %c0_471, %c0_472], %673 {strides = array<i32>} : memref<1x8x4x16x128xbf16, #tpu.memory_space<vmem>>, vector<1x1x1x16x128xbf16>,
    %674 = tpu.concatenate %665, %669 in 0 : vector<1x128xf32>, vector<1x128xf32> -> vector<2x128xf32>
    %c0_473 = arith.constant 0 : index
    %c0_474 = arith.constant 0 : index
    %c0_475 = arith.constant 0 : index
    %c0_476 = arith.constant 0 : index
    %675 = vector.load %arg6[%c0_473, %c0_474, %c0_475, %c0_476] : memref<1x1x2x128xf32, #tpu.memory_space<vmem>>, vector<1x1x2x128xf32>
    %676 = vector.shape_cast %675 : vector<1x1x2x128xf32> to vector<2x128xf32>
    %677 = vector.shape_cast %674 : vector<2x128xf32> to vector<1x1x2x128xf32>
    tpu.vector_store %arg6[%c0_473, %c0_474, %c0_475, %c0_476], %677 {strides = array<i32>} : memref<1x1x2x128xf32, #tpu.memory_space<vmem>>, vector<1x1x2x128xf32>,
    return
  }
  func.func @transform_0(%arg0: i32, %arg1: i32) -> (i32, i32, i32, i32) {
    %c0_i32 = arith.constant 0 : i32
    %c0_i32_0 = arith.constant 0 : i32
    %c0_i32_1 = arith.constant 0 : i32
    return %arg0, %arg1, %c0_i32, %c0_i32_0 : i32, i32, i32, i32
  }
  func.func @transform_1(%arg0: i32, %arg1: i32) -> (i32, i32, i32, i32) {
    %c1_i32 = arith.constant 1 : i32
    %0 = arith.addi %arg1, %c1_i32 : i32
    %c4_i32 = arith.constant 4 : i32
    %1 = arith.muli %0, %c4_i32 : i32
    %c0_i32 = arith.constant 0 : i32
    %c0_i32_0 = arith.constant 0 : i32
    %c0_i32_1 = arith.constant 0 : i32
    return %arg0, %1, %c0_i32, %c0_i32_0 : i32, i32, i32, i32
  }
  func.func @transform_2(%arg0: i32, %arg1: i32) -> (i32, i32, i32) {
    %c0_i32 = arith.constant 0 : i32
    %c0_i32_0 = arith.constant 0 : i32
    %c0_i32_1 = arith.constant 0 : i32
    %c0_i32_2 = arith.constant 0 : i32
    return %c0_i32, %c0_i32_0, %c0_i32_1 : i32, i32, i32
  }
  func.func @transform_3(%arg0: i32, %arg1: i32) -> (i32, i32, i32, i32, i32) {
    %c0_i32 = arith.constant 0 : i32
    %c0_i32_0 = arith.constant 0 : i32
    %c0_i32_1 = arith.constant 0 : i32
    %c0_i32_2 = arith.constant 0 : i32
    return %arg0, %arg1, %c0_i32, %c0_i32_0, %c0_i32_1 : i32, i32, i32, i32, i32
  }
  func.func @transform_4(%arg0: i32, %arg1: i32) -> (i32, i32, i32, i32) {
    %c0_i32 = arith.constant 0 : i32
    %c0_i32_0 = arith.constant 0 : i32
    %c0_i32_1 = arith.constant 0 : i32
    return %arg0, %arg1, %c0_i32, %c0_i32_0 : i32, i32, i32, i32
  }
}

module attributes {stable_mosaic.version = 11 : i64} {
  func.func @_bn_relu_scatter_kernel(%arg0: i32, %arg1: i32, %arg2: memref<1x8x4x16x128xbf16, #tpu.memory_space<vmem>>, %arg3: memref<2x128xf32, #tpu.memory_space<vmem>>, %arg4: memref<1x16x16x16xf32, #tpu.memory_space<vmem>>) attributes {dimension_semantics = [#tpu.dimension_semantics<parallel>, #tpu.dimension_semantics<parallel>], iteration_bounds = array<i64: 2, 2>, scalar_prefetch = 0 : i64, scratch_operands = 0 : i64, tpu.core_type = #tpu.core_type<tc>, window_params = [{transform_indices = @transform_0, window_bounds = array<i64: 1, 8, 4, 16, 128>}, {pipeline_mode = #tpu.pipeline_mode<synchronous>, transform_indices = @transform_1, window_bounds = array<i64: 2, 128>}, {transform_indices = @transform_2, window_bounds = array<i64: 1, 16, 16, 16>}]} {
    %c0 = arith.constant 0 : index
    %c0_0 = arith.constant 0 : index
    %0 = vector.load %arg3[%c0, %c0_0] : memref<2x128xf32, #tpu.memory_space<vmem>>, vector<1x128xf32>
    %c1 = arith.constant 1 : index
    %c0_1 = arith.constant 0 : index
    %1 = vector.load %arg3[%c1, %c0_1] : memref<2x128xf32, #tpu.memory_space<vmem>>, vector<1x128xf32>
    %c0_2 = arith.constant 0 : index
    %c0_3 = arith.constant 0 : index
    %c0_4 = arith.constant 0 : index
    %c0_5 = arith.constant 0 : index
    %c0_6 = arith.constant 0 : index
    %2 = vector.load %arg2[%c0_2, %c0_3, %c0_4, %c0_5, %c0_6] : memref<1x8x4x16x128xbf16, #tpu.memory_space<vmem>>, vector<1x1x1x16x128xbf16>
    %3 = vector.shape_cast %2 : vector<1x1x1x16x128xbf16> to vector<16x128xbf16>
    %4 = arith.extf %3 : vector<16x128xbf16> to vector<16x128xf32>
    %5 = vector.broadcast %0 : vector<1x128xf32> to vector<16x128xf32>
    %6 = arith.mulf %4, %5 : vector<16x128xf32>
    %7 = vector.broadcast %1 : vector<1x128xf32> to vector<16x128xf32>
    %8 = arith.addf %6, %7 : vector<16x128xf32>
    %cst = arith.constant 0.000000e+00 : f32
    %9 = vector.broadcast %cst : f32 to vector<16x128xf32>
    %10 = arith.maximumf %8, %9 : vector<16x128xf32>
    %11 = vector.extract_strided_slice %10 {offsets = [0, 0], sizes = [16, 8], strides = [1, 1]} : vector<16x128xf32> to vector<16x8xf32>
    %c0_7 = arith.constant 0 : index
    %c0_8 = arith.constant 0 : index
    %c1_9 = arith.constant 1 : index
    %c0_10 = arith.constant 0 : index
    %c0_11 = arith.constant 0 : index
    %12 = vector.load %arg2[%c0_7, %c0_8, %c1_9, %c0_10, %c0_11] : memref<1x8x4x16x128xbf16, #tpu.memory_space<vmem>>, vector<1x1x1x16x128xbf16>
    %13 = vector.shape_cast %12 : vector<1x1x1x16x128xbf16> to vector<16x128xbf16>
    %14 = arith.extf %13 : vector<16x128xbf16> to vector<16x128xf32>
    %15 = vector.broadcast %0 : vector<1x128xf32> to vector<16x128xf32>
    %16 = arith.mulf %14, %15 : vector<16x128xf32>
    %17 = vector.broadcast %1 : vector<1x128xf32> to vector<16x128xf32>
    %18 = arith.addf %16, %17 : vector<16x128xf32>
    %cst_12 = arith.constant 0.000000e+00 : f32
    %19 = vector.broadcast %cst_12 : f32 to vector<16x128xf32>
    %20 = arith.maximumf %18, %19 : vector<16x128xf32>
    %21 = vector.extract_strided_slice %20 {offsets = [0, 0], sizes = [16, 8], strides = [1, 1]} : vector<16x128xf32> to vector<16x8xf32>
    %22 = tpu.concatenate %11, %21 in 1 : vector<16x8xf32>, vector<16x8xf32> -> vector<16x16xf32>
    %c0_13 = arith.constant 0 : index
    %c0_14 = arith.constant 0 : index
    %c0_15 = arith.constant 0 : index
    %c0_16 = arith.constant 0 : index
    %23 = vector.load %arg4[%c0_13, %c0_14, %c0_15, %c0_16] : memref<1x16x16x16xf32, #tpu.memory_space<vmem>>, vector<1x1x16x16xf32>
    %24 = vector.shape_cast %23 : vector<1x1x16x16xf32> to vector<16x16xf32>
    %25 = vector.shape_cast %22 : vector<16x16xf32> to vector<1x1x16x16xf32>
    tpu.vector_store %arg4[%c0_13, %c0_14, %c0_15, %c0_16], %25 {strides = array<i32>} : memref<1x16x16x16xf32, #tpu.memory_space<vmem>>, vector<1x1x16x16xf32>,
    %c0_17 = arith.constant 0 : index
    %c0_18 = arith.constant 0 : index
    %c2 = arith.constant 2 : index
    %c0_19 = arith.constant 0 : index
    %c0_20 = arith.constant 0 : index
    %26 = vector.load %arg2[%c0_17, %c0_18, %c2, %c0_19, %c0_20] : memref<1x8x4x16x128xbf16, #tpu.memory_space<vmem>>, vector<1x1x1x16x128xbf16>
    %27 = vector.shape_cast %26 : vector<1x1x1x16x128xbf16> to vector<16x128xbf16>
    %28 = arith.extf %27 : vector<16x128xbf16> to vector<16x128xf32>
    %29 = vector.broadcast %0 : vector<1x128xf32> to vector<16x128xf32>
    %30 = arith.mulf %28, %29 : vector<16x128xf32>
    %31 = vector.broadcast %1 : vector<1x128xf32> to vector<16x128xf32>
    %32 = arith.addf %30, %31 : vector<16x128xf32>
    %cst_21 = arith.constant 0.000000e+00 : f32
    %33 = vector.broadcast %cst_21 : f32 to vector<16x128xf32>
    %34 = arith.maximumf %32, %33 : vector<16x128xf32>
    %35 = vector.extract_strided_slice %34 {offsets = [0, 0], sizes = [16, 8], strides = [1, 1]} : vector<16x128xf32> to vector<16x8xf32>
    %c0_22 = arith.constant 0 : index
    %c0_23 = arith.constant 0 : index
    %c3 = arith.constant 3 : index
    %c0_24 = arith.constant 0 : index
    %c0_25 = arith.constant 0 : index
    %36 = vector.load %arg2[%c0_22, %c0_23, %c3, %c0_24, %c0_25] : memref<1x8x4x16x128xbf16, #tpu.memory_space<vmem>>, vector<1x1x1x16x128xbf16>
    %37 = vector.shape_cast %36 : vector<1x1x1x16x128xbf16> to vector<16x128xbf16>
    %38 = arith.extf %37 : vector<16x128xbf16> to vector<16x128xf32>
    %39 = vector.broadcast %0 : vector<1x128xf32> to vector<16x128xf32>
    %40 = arith.mulf %38, %39 : vector<16x128xf32>
    %41 = vector.broadcast %1 : vector<1x128xf32> to vector<16x128xf32>
    %42 = arith.addf %40, %41 : vector<16x128xf32>
    %cst_26 = arith.constant 0.000000e+00 : f32
    %43 = vector.broadcast %cst_26 : f32 to vector<16x128xf32>
    %44 = arith.maximumf %42, %43 : vector<16x128xf32>
    %45 = vector.extract_strided_slice %44 {offsets = [0, 0], sizes = [16, 8], strides = [1, 1]} : vector<16x128xf32> to vector<16x8xf32>
    %46 = tpu.concatenate %35, %45 in 1 : vector<16x8xf32>, vector<16x8xf32> -> vector<16x16xf32>
    %c0_27 = arith.constant 0 : index
    %c1_28 = arith.constant 1 : index
    %c0_29 = arith.constant 0 : index
    %c0_30 = arith.constant 0 : index
    %47 = vector.load %arg4[%c0_27, %c1_28, %c0_29, %c0_30] : memref<1x16x16x16xf32, #tpu.memory_space<vmem>>, vector<1x1x16x16xf32>
    %48 = vector.shape_cast %47 : vector<1x1x16x16xf32> to vector<16x16xf32>
    %49 = vector.shape_cast %46 : vector<16x16xf32> to vector<1x1x16x16xf32>
    tpu.vector_store %arg4[%c0_27, %c1_28, %c0_29, %c0_30], %49 {strides = array<i32>} : memref<1x16x16x16xf32, #tpu.memory_space<vmem>>, vector<1x1x16x16xf32>,
    %c0_31 = arith.constant 0 : index
    %c1_32 = arith.constant 1 : index
    %c0_33 = arith.constant 0 : index
    %c0_34 = arith.constant 0 : index
    %c0_35 = arith.constant 0 : index
    %50 = vector.load %arg2[%c0_31, %c1_32, %c0_33, %c0_34, %c0_35] : memref<1x8x4x16x128xbf16, #tpu.memory_space<vmem>>, vector<1x1x1x16x128xbf16>
    %51 = vector.shape_cast %50 : vector<1x1x1x16x128xbf16> to vector<16x128xbf16>
    %52 = arith.extf %51 : vector<16x128xbf16> to vector<16x128xf32>
    %53 = vector.broadcast %0 : vector<1x128xf32> to vector<16x128xf32>
    %54 = arith.mulf %52, %53 : vector<16x128xf32>
    %55 = vector.broadcast %1 : vector<1x128xf32> to vector<16x128xf32>
    %56 = arith.addf %54, %55 : vector<16x128xf32>
    %cst_36 = arith.constant 0.000000e+00 : f32
    %57 = vector.broadcast %cst_36 : f32 to vector<16x128xf32>
    %58 = arith.maximumf %56, %57 : vector<16x128xf32>
    %59 = vector.extract_strided_slice %58 {offsets = [0, 0], sizes = [16, 8], strides = [1, 1]} : vector<16x128xf32> to vector<16x8xf32>
    %c0_37 = arith.constant 0 : index
    %c1_38 = arith.constant 1 : index
    %c1_39 = arith.constant 1 : index
    %c0_40 = arith.constant 0 : index
    %c0_41 = arith.constant 0 : index
    %60 = vector.load %arg2[%c0_37, %c1_38, %c1_39, %c0_40, %c0_41] : memref<1x8x4x16x128xbf16, #tpu.memory_space<vmem>>, vector<1x1x1x16x128xbf16>
    %61 = vector.shape_cast %60 : vector<1x1x1x16x128xbf16> to vector<16x128xbf16>
    %62 = arith.extf %61 : vector<16x128xbf16> to vector<16x128xf32>
    %63 = vector.broadcast %0 : vector<1x128xf32> to vector<16x128xf32>
    %64 = arith.mulf %62, %63 : vector<16x128xf32>
    %65 = vector.broadcast %1 : vector<1x128xf32> to vector<16x128xf32>
    %66 = arith.addf %64, %65 : vector<16x128xf32>
    %cst_42 = arith.constant 0.000000e+00 : f32
    %67 = vector.broadcast %cst_42 : f32 to vector<16x128xf32>
    %68 = arith.maximumf %66, %67 : vector<16x128xf32>
    %69 = vector.extract_strided_slice %68 {offsets = [0, 0], sizes = [16, 8], strides = [1, 1]} : vector<16x128xf32> to vector<16x8xf32>
    %70 = tpu.concatenate %59, %69 in 1 : vector<16x8xf32>, vector<16x8xf32> -> vector<16x16xf32>
    %c0_43 = arith.constant 0 : index
    %c2_44 = arith.constant 2 : index
    %c0_45 = arith.constant 0 : index
    %c0_46 = arith.constant 0 : index
    %71 = vector.load %arg4[%c0_43, %c2_44, %c0_45, %c0_46] : memref<1x16x16x16xf32, #tpu.memory_space<vmem>>, vector<1x1x16x16xf32>
    %72 = vector.shape_cast %71 : vector<1x1x16x16xf32> to vector<16x16xf32>
    %73 = vector.shape_cast %70 : vector<16x16xf32> to vector<1x1x16x16xf32>
    tpu.vector_store %arg4[%c0_43, %c2_44, %c0_45, %c0_46], %73 {strides = array<i32>} : memref<1x16x16x16xf32, #tpu.memory_space<vmem>>, vector<1x1x16x16xf32>,
    %c0_47 = arith.constant 0 : index
    %c1_48 = arith.constant 1 : index
    %c2_49 = arith.constant 2 : index
    %c0_50 = arith.constant 0 : index
    %c0_51 = arith.constant 0 : index
    %74 = vector.load %arg2[%c0_47, %c1_48, %c2_49, %c0_50, %c0_51] : memref<1x8x4x16x128xbf16, #tpu.memory_space<vmem>>, vector<1x1x1x16x128xbf16>
    %75 = vector.shape_cast %74 : vector<1x1x1x16x128xbf16> to vector<16x128xbf16>
    %76 = arith.extf %75 : vector<16x128xbf16> to vector<16x128xf32>
    %77 = vector.broadcast %0 : vector<1x128xf32> to vector<16x128xf32>
    %78 = arith.mulf %76, %77 : vector<16x128xf32>
    %79 = vector.broadcast %1 : vector<1x128xf32> to vector<16x128xf32>
    %80 = arith.addf %78, %79 : vector<16x128xf32>
    %cst_52 = arith.constant 0.000000e+00 : f32
    %81 = vector.broadcast %cst_52 : f32 to vector<16x128xf32>
    %82 = arith.maximumf %80, %81 : vector<16x128xf32>
    %83 = vector.extract_strided_slice %82 {offsets = [0, 0], sizes = [16, 8], strides = [1, 1]} : vector<16x128xf32> to vector<16x8xf32>
    %c0_53 = arith.constant 0 : index
    %c1_54 = arith.constant 1 : index
    %c3_55 = arith.constant 3 : index
    %c0_56 = arith.constant 0 : index
    %c0_57 = arith.constant 0 : index
    %84 = vector.load %arg2[%c0_53, %c1_54, %c3_55, %c0_56, %c0_57] : memref<1x8x4x16x128xbf16, #tpu.memory_space<vmem>>, vector<1x1x1x16x128xbf16>
    %85 = vector.shape_cast %84 : vector<1x1x1x16x128xbf16> to vector<16x128xbf16>
    %86 = arith.extf %85 : vector<16x128xbf16> to vector<16x128xf32>
    %87 = vector.broadcast %0 : vector<1x128xf32> to vector<16x128xf32>
    %88 = arith.mulf %86, %87 : vector<16x128xf32>
    %89 = vector.broadcast %1 : vector<1x128xf32> to vector<16x128xf32>
    %90 = arith.addf %88, %89 : vector<16x128xf32>
    %cst_58 = arith.constant 0.000000e+00 : f32
    %91 = vector.broadcast %cst_58 : f32 to vector<16x128xf32>
    %92 = arith.maximumf %90, %91 : vector<16x128xf32>
    %93 = vector.extract_strided_slice %92 {offsets = [0, 0], sizes = [16, 8], strides = [1, 1]} : vector<16x128xf32> to vector<16x8xf32>
    %94 = tpu.concatenate %83, %93 in 1 : vector<16x8xf32>, vector<16x8xf32> -> vector<16x16xf32>
    %c0_59 = arith.constant 0 : index
    %c3_60 = arith.constant 3 : index
    %c0_61 = arith.constant 0 : index
    %c0_62 = arith.constant 0 : index
    %95 = vector.load %arg4[%c0_59, %c3_60, %c0_61, %c0_62] : memref<1x16x16x16xf32, #tpu.memory_space<vmem>>, vector<1x1x16x16xf32>
    %96 = vector.shape_cast %95 : vector<1x1x16x16xf32> to vector<16x16xf32>
    %97 = vector.shape_cast %94 : vector<16x16xf32> to vector<1x1x16x16xf32>
    tpu.vector_store %arg4[%c0_59, %c3_60, %c0_61, %c0_62], %97 {strides = array<i32>} : memref<1x16x16x16xf32, #tpu.memory_space<vmem>>, vector<1x1x16x16xf32>,
    %c0_63 = arith.constant 0 : index
    %c2_64 = arith.constant 2 : index
    %c0_65 = arith.constant 0 : index
    %c0_66 = arith.constant 0 : index
    %c0_67 = arith.constant 0 : index
    %98 = vector.load %arg2[%c0_63, %c2_64, %c0_65, %c0_66, %c0_67] : memref<1x8x4x16x128xbf16, #tpu.memory_space<vmem>>, vector<1x1x1x16x128xbf16>
    %99 = vector.shape_cast %98 : vector<1x1x1x16x128xbf16> to vector<16x128xbf16>
    %100 = arith.extf %99 : vector<16x128xbf16> to vector<16x128xf32>
    %101 = vector.broadcast %0 : vector<1x128xf32> to vector<16x128xf32>
    %102 = arith.mulf %100, %101 : vector<16x128xf32>
    %103 = vector.broadcast %1 : vector<1x128xf32> to vector<16x128xf32>
    %104 = arith.addf %102, %103 : vector<16x128xf32>
    %cst_68 = arith.constant 0.000000e+00 : f32
    %105 = vector.broadcast %cst_68 : f32 to vector<16x128xf32>
    %106 = arith.maximumf %104, %105 : vector<16x128xf32>
    %107 = vector.extract_strided_slice %106 {offsets = [0, 0], sizes = [16, 8], strides = [1, 1]} : vector<16x128xf32> to vector<16x8xf32>
    %c0_69 = arith.constant 0 : index
    %c2_70 = arith.constant 2 : index
    %c1_71 = arith.constant 1 : index
    %c0_72 = arith.constant 0 : index
    %c0_73 = arith.constant 0 : index
    %108 = vector.load %arg2[%c0_69, %c2_70, %c1_71, %c0_72, %c0_73] : memref<1x8x4x16x128xbf16, #tpu.memory_space<vmem>>, vector<1x1x1x16x128xbf16>
    %109 = vector.shape_cast %108 : vector<1x1x1x16x128xbf16> to vector<16x128xbf16>
    %110 = arith.extf %109 : vector<16x128xbf16> to vector<16x128xf32>
    %111 = vector.broadcast %0 : vector<1x128xf32> to vector<16x128xf32>
    %112 = arith.mulf %110, %111 : vector<16x128xf32>
    %113 = vector.broadcast %1 : vector<1x128xf32> to vector<16x128xf32>
    %114 = arith.addf %112, %113 : vector<16x128xf32>
    %cst_74 = arith.constant 0.000000e+00 : f32
    %115 = vector.broadcast %cst_74 : f32 to vector<16x128xf32>
    %116 = arith.maximumf %114, %115 : vector<16x128xf32>
    %117 = vector.extract_strided_slice %116 {offsets = [0, 0], sizes = [16, 8], strides = [1, 1]} : vector<16x128xf32> to vector<16x8xf32>
    %118 = tpu.concatenate %107, %117 in 1 : vector<16x8xf32>, vector<16x8xf32> -> vector<16x16xf32>
    %c0_75 = arith.constant 0 : index
    %c4 = arith.constant 4 : index
    %c0_76 = arith.constant 0 : index
    %c0_77 = arith.constant 0 : index
    %119 = vector.load %arg4[%c0_75, %c4, %c0_76, %c0_77] : memref<1x16x16x16xf32, #tpu.memory_space<vmem>>, vector<1x1x16x16xf32>
    %120 = vector.shape_cast %119 : vector<1x1x16x16xf32> to vector<16x16xf32>
    %121 = vector.shape_cast %118 : vector<16x16xf32> to vector<1x1x16x16xf32>
    tpu.vector_store %arg4[%c0_75, %c4, %c0_76, %c0_77], %121 {strides = array<i32>} : memref<1x16x16x16xf32, #tpu.memory_space<vmem>>, vector<1x1x16x16xf32>,
    %c0_78 = arith.constant 0 : index
    %c2_79 = arith.constant 2 : index
    %c2_80 = arith.constant 2 : index
    %c0_81 = arith.constant 0 : index
    %c0_82 = arith.constant 0 : index
    %122 = vector.load %arg2[%c0_78, %c2_79, %c2_80, %c0_81, %c0_82] : memref<1x8x4x16x128xbf16, #tpu.memory_space<vmem>>, vector<1x1x1x16x128xbf16>
    %123 = vector.shape_cast %122 : vector<1x1x1x16x128xbf16> to vector<16x128xbf16>
    %124 = arith.extf %123 : vector<16x128xbf16> to vector<16x128xf32>
    %125 = vector.broadcast %0 : vector<1x128xf32> to vector<16x128xf32>
    %126 = arith.mulf %124, %125 : vector<16x128xf32>
    %127 = vector.broadcast %1 : vector<1x128xf32> to vector<16x128xf32>
    %128 = arith.addf %126, %127 : vector<16x128xf32>
    %cst_83 = arith.constant 0.000000e+00 : f32
    %129 = vector.broadcast %cst_83 : f32 to vector<16x128xf32>
    %130 = arith.maximumf %128, %129 : vector<16x128xf32>
    %131 = vector.extract_strided_slice %130 {offsets = [0, 0], sizes = [16, 8], strides = [1, 1]} : vector<16x128xf32> to vector<16x8xf32>
    %c0_84 = arith.constant 0 : index
    %c2_85 = arith.constant 2 : index
    %c3_86 = arith.constant 3 : index
    %c0_87 = arith.constant 0 : index
    %c0_88 = arith.constant 0 : index
    %132 = vector.load %arg2[%c0_84, %c2_85, %c3_86, %c0_87, %c0_88] : memref<1x8x4x16x128xbf16, #tpu.memory_space<vmem>>, vector<1x1x1x16x128xbf16>
    %133 = vector.shape_cast %132 : vector<1x1x1x16x128xbf16> to vector<16x128xbf16>
    %134 = arith.extf %133 : vector<16x128xbf16> to vector<16x128xf32>
    %135 = vector.broadcast %0 : vector<1x128xf32> to vector<16x128xf32>
    %136 = arith.mulf %134, %135 : vector<16x128xf32>
    %137 = vector.broadcast %1 : vector<1x128xf32> to vector<16x128xf32>
    %138 = arith.addf %136, %137 : vector<16x128xf32>
    %cst_89 = arith.constant 0.000000e+00 : f32
    %139 = vector.broadcast %cst_89 : f32 to vector<16x128xf32>
    %140 = arith.maximumf %138, %139 : vector<16x128xf32>
    %141 = vector.extract_strided_slice %140 {offsets = [0, 0], sizes = [16, 8], strides = [1, 1]} : vector<16x128xf32> to vector<16x8xf32>
    %142 = tpu.concatenate %131, %141 in 1 : vector<16x8xf32>, vector<16x8xf32> -> vector<16x16xf32>
    %c0_90 = arith.constant 0 : index
    %c5 = arith.constant 5 : index
    %c0_91 = arith.constant 0 : index
    %c0_92 = arith.constant 0 : index
    %143 = vector.load %arg4[%c0_90, %c5, %c0_91, %c0_92] : memref<1x16x16x16xf32, #tpu.memory_space<vmem>>, vector<1x1x16x16xf32>
    %144 = vector.shape_cast %143 : vector<1x1x16x16xf32> to vector<16x16xf32>
    %145 = vector.shape_cast %142 : vector<16x16xf32> to vector<1x1x16x16xf32>
    tpu.vector_store %arg4[%c0_90, %c5, %c0_91, %c0_92], %145 {strides = array<i32>} : memref<1x16x16x16xf32, #tpu.memory_space<vmem>>, vector<1x1x16x16xf32>,
    %c0_93 = arith.constant 0 : index
    %c3_94 = arith.constant 3 : index
    %c0_95 = arith.constant 0 : index
    %c0_96 = arith.constant 0 : index
    %c0_97 = arith.constant 0 : index
    %146 = vector.load %arg2[%c0_93, %c3_94, %c0_95, %c0_96, %c0_97] : memref<1x8x4x16x128xbf16, #tpu.memory_space<vmem>>, vector<1x1x1x16x128xbf16>
    %147 = vector.shape_cast %146 : vector<1x1x1x16x128xbf16> to vector<16x128xbf16>
    %148 = arith.extf %147 : vector<16x128xbf16> to vector<16x128xf32>
    %149 = vector.broadcast %0 : vector<1x128xf32> to vector<16x128xf32>
    %150 = arith.mulf %148, %149 : vector<16x128xf32>
    %151 = vector.broadcast %1 : vector<1x128xf32> to vector<16x128xf32>
    %152 = arith.addf %150, %151 : vector<16x128xf32>
    %cst_98 = arith.constant 0.000000e+00 : f32
    %153 = vector.broadcast %cst_98 : f32 to vector<16x128xf32>
    %154 = arith.maximumf %152, %153 : vector<16x128xf32>
    %155 = vector.extract_strided_slice %154 {offsets = [0, 0], sizes = [16, 8], strides = [1, 1]} : vector<16x128xf32> to vector<16x8xf32>
    %c0_99 = arith.constant 0 : index
    %c3_100 = arith.constant 3 : index
    %c1_101 = arith.constant 1 : index
    %c0_102 = arith.constant 0 : index
    %c0_103 = arith.constant 0 : index
    %156 = vector.load %arg2[%c0_99, %c3_100, %c1_101, %c0_102, %c0_103] : memref<1x8x4x16x128xbf16, #tpu.memory_space<vmem>>, vector<1x1x1x16x128xbf16>
    %157 = vector.shape_cast %156 : vector<1x1x1x16x128xbf16> to vector<16x128xbf16>
    %158 = arith.extf %157 : vector<16x128xbf16> to vector<16x128xf32>
    %159 = vector.broadcast %0 : vector<1x128xf32> to vector<16x128xf32>
    %160 = arith.mulf %158, %159 : vector<16x128xf32>
    %161 = vector.broadcast %1 : vector<1x128xf32> to vector<16x128xf32>
    %162 = arith.addf %160, %161 : vector<16x128xf32>
    %cst_104 = arith.constant 0.000000e+00 : f32
    %163 = vector.broadcast %cst_104 : f32 to vector<16x128xf32>
    %164 = arith.maximumf %162, %163 : vector<16x128xf32>
    %165 = vector.extract_strided_slice %164 {offsets = [0, 0], sizes = [16, 8], strides = [1, 1]} : vector<16x128xf32> to vector<16x8xf32>
    %166 = tpu.concatenate %155, %165 in 1 : vector<16x8xf32>, vector<16x8xf32> -> vector<16x16xf32>
    %c0_105 = arith.constant 0 : index
    %c6 = arith.constant 6 : index
    %c0_106 = arith.constant 0 : index
    %c0_107 = arith.constant 0 : index
    %167 = vector.load %arg4[%c0_105, %c6, %c0_106, %c0_107] : memref<1x16x16x16xf32, #tpu.memory_space<vmem>>, vector<1x1x16x16xf32>
    %168 = vector.shape_cast %167 : vector<1x1x16x16xf32> to vector<16x16xf32>
    %169 = vector.shape_cast %166 : vector<16x16xf32> to vector<1x1x16x16xf32>
    tpu.vector_store %arg4[%c0_105, %c6, %c0_106, %c0_107], %169 {strides = array<i32>} : memref<1x16x16x16xf32, #tpu.memory_space<vmem>>, vector<1x1x16x16xf32>,
    %c0_108 = arith.constant 0 : index
    %c3_109 = arith.constant 3 : index
    %c2_110 = arith.constant 2 : index
    %c0_111 = arith.constant 0 : index
    %c0_112 = arith.constant 0 : index
    %170 = vector.load %arg2[%c0_108, %c3_109, %c2_110, %c0_111, %c0_112] : memref<1x8x4x16x128xbf16, #tpu.memory_space<vmem>>, vector<1x1x1x16x128xbf16>
    %171 = vector.shape_cast %170 : vector<1x1x1x16x128xbf16> to vector<16x128xbf16>
    %172 = arith.extf %171 : vector<16x128xbf16> to vector<16x128xf32>
    %173 = vector.broadcast %0 : vector<1x128xf32> to vector<16x128xf32>
    %174 = arith.mulf %172, %173 : vector<16x128xf32>
    %175 = vector.broadcast %1 : vector<1x128xf32> to vector<16x128xf32>
    %176 = arith.addf %174, %175 : vector<16x128xf32>
    %cst_113 = arith.constant 0.000000e+00 : f32
    %177 = vector.broadcast %cst_113 : f32 to vector<16x128xf32>
    %178 = arith.maximumf %176, %177 : vector<16x128xf32>
    %179 = vector.extract_strided_slice %178 {offsets = [0, 0], sizes = [16, 8], strides = [1, 1]} : vector<16x128xf32> to vector<16x8xf32>
    %c0_114 = arith.constant 0 : index
    %c3_115 = arith.constant 3 : index
    %c3_116 = arith.constant 3 : index
    %c0_117 = arith.constant 0 : index
    %c0_118 = arith.constant 0 : index
    %180 = vector.load %arg2[%c0_114, %c3_115, %c3_116, %c0_117, %c0_118] : memref<1x8x4x16x128xbf16, #tpu.memory_space<vmem>>, vector<1x1x1x16x128xbf16>
    %181 = vector.shape_cast %180 : vector<1x1x1x16x128xbf16> to vector<16x128xbf16>
    %182 = arith.extf %181 : vector<16x128xbf16> to vector<16x128xf32>
    %183 = vector.broadcast %0 : vector<1x128xf32> to vector<16x128xf32>
    %184 = arith.mulf %182, %183 : vector<16x128xf32>
    %185 = vector.broadcast %1 : vector<1x128xf32> to vector<16x128xf32>
    %186 = arith.addf %184, %185 : vector<16x128xf32>
    %cst_119 = arith.constant 0.000000e+00 : f32
    %187 = vector.broadcast %cst_119 : f32 to vector<16x128xf32>
    %188 = arith.maximumf %186, %187 : vector<16x128xf32>
    %189 = vector.extract_strided_slice %188 {offsets = [0, 0], sizes = [16, 8], strides = [1, 1]} : vector<16x128xf32> to vector<16x8xf32>
    %190 = tpu.concatenate %179, %189 in 1 : vector<16x8xf32>, vector<16x8xf32> -> vector<16x16xf32>
    %c0_120 = arith.constant 0 : index
    %c7 = arith.constant 7 : index
    %c0_121 = arith.constant 0 : index
    %c0_122 = arith.constant 0 : index
    %191 = vector.load %arg4[%c0_120, %c7, %c0_121, %c0_122] : memref<1x16x16x16xf32, #tpu.memory_space<vmem>>, vector<1x1x16x16xf32>
    %192 = vector.shape_cast %191 : vector<1x1x16x16xf32> to vector<16x16xf32>
    %193 = vector.shape_cast %190 : vector<16x16xf32> to vector<1x1x16x16xf32>
    tpu.vector_store %arg4[%c0_120, %c7, %c0_121, %c0_122], %193 {strides = array<i32>} : memref<1x16x16x16xf32, #tpu.memory_space<vmem>>, vector<1x1x16x16xf32>,
    %c0_123 = arith.constant 0 : index
    %c4_124 = arith.constant 4 : index
    %c0_125 = arith.constant 0 : index
    %c0_126 = arith.constant 0 : index
    %c0_127 = arith.constant 0 : index
    %194 = vector.load %arg2[%c0_123, %c4_124, %c0_125, %c0_126, %c0_127] : memref<1x8x4x16x128xbf16, #tpu.memory_space<vmem>>, vector<1x1x1x16x128xbf16>
    %195 = vector.shape_cast %194 : vector<1x1x1x16x128xbf16> to vector<16x128xbf16>
    %196 = arith.extf %195 : vector<16x128xbf16> to vector<16x128xf32>
    %197 = vector.broadcast %0 : vector<1x128xf32> to vector<16x128xf32>
    %198 = arith.mulf %196, %197 : vector<16x128xf32>
    %199 = vector.broadcast %1 : vector<1x128xf32> to vector<16x128xf32>
    %200 = arith.addf %198, %199 : vector<16x128xf32>
    %cst_128 = arith.constant 0.000000e+00 : f32
    %201 = vector.broadcast %cst_128 : f32 to vector<16x128xf32>
    %202 = arith.maximumf %200, %201 : vector<16x128xf32>
    %203 = vector.extract_strided_slice %202 {offsets = [0, 0], sizes = [16, 8], strides = [1, 1]} : vector<16x128xf32> to vector<16x8xf32>
    %c0_129 = arith.constant 0 : index
    %c4_130 = arith.constant 4 : index
    %c1_131 = arith.constant 1 : index
    %c0_132 = arith.constant 0 : index
    %c0_133 = arith.constant 0 : index
    %204 = vector.load %arg2[%c0_129, %c4_130, %c1_131, %c0_132, %c0_133] : memref<1x8x4x16x128xbf16, #tpu.memory_space<vmem>>, vector<1x1x1x16x128xbf16>
    %205 = vector.shape_cast %204 : vector<1x1x1x16x128xbf16> to vector<16x128xbf16>
    %206 = arith.extf %205 : vector<16x128xbf16> to vector<16x128xf32>
    %207 = vector.broadcast %0 : vector<1x128xf32> to vector<16x128xf32>
    %208 = arith.mulf %206, %207 : vector<16x128xf32>
    %209 = vector.broadcast %1 : vector<1x128xf32> to vector<16x128xf32>
    %210 = arith.addf %208, %209 : vector<16x128xf32>
    %cst_134 = arith.constant 0.000000e+00 : f32
    %211 = vector.broadcast %cst_134 : f32 to vector<16x128xf32>
    %212 = arith.maximumf %210, %211 : vector<16x128xf32>
    %213 = vector.extract_strided_slice %212 {offsets = [0, 0], sizes = [16, 8], strides = [1, 1]} : vector<16x128xf32> to vector<16x8xf32>
    %214 = tpu.concatenate %203, %213 in 1 : vector<16x8xf32>, vector<16x8xf32> -> vector<16x16xf32>
    %c0_135 = arith.constant 0 : index
    %c8 = arith.constant 8 : index
    %c0_136 = arith.constant 0 : index
    %c0_137 = arith.constant 0 : index
    %215 = vector.load %arg4[%c0_135, %c8, %c0_136, %c0_137] : memref<1x16x16x16xf32, #tpu.memory_space<vmem>>, vector<1x1x16x16xf32>
    %216 = vector.shape_cast %215 : vector<1x1x16x16xf32> to vector<16x16xf32>
    %217 = vector.shape_cast %214 : vector<16x16xf32> to vector<1x1x16x16xf32>
    tpu.vector_store %arg4[%c0_135, %c8, %c0_136, %c0_137], %217 {strides = array<i32>} : memref<1x16x16x16xf32, #tpu.memory_space<vmem>>, vector<1x1x16x16xf32>,
    %c0_138 = arith.constant 0 : index
    %c4_139 = arith.constant 4 : index
    %c2_140 = arith.constant 2 : index
    %c0_141 = arith.constant 0 : index
    %c0_142 = arith.constant 0 : index
    %218 = vector.load %arg2[%c0_138, %c4_139, %c2_140, %c0_141, %c0_142] : memref<1x8x4x16x128xbf16, #tpu.memory_space<vmem>>, vector<1x1x1x16x128xbf16>
    %219 = vector.shape_cast %218 : vector<1x1x1x16x128xbf16> to vector<16x128xbf16>
    %220 = arith.extf %219 : vector<16x128xbf16> to vector<16x128xf32>
    %221 = vector.broadcast %0 : vector<1x128xf32> to vector<16x128xf32>
    %222 = arith.mulf %220, %221 : vector<16x128xf32>
    %223 = vector.broadcast %1 : vector<1x128xf32> to vector<16x128xf32>
    %224 = arith.addf %222, %223 : vector<16x128xf32>
    %cst_143 = arith.constant 0.000000e+00 : f32
    %225 = vector.broadcast %cst_143 : f32 to vector<16x128xf32>
    %226 = arith.maximumf %224, %225 : vector<16x128xf32>
    %227 = vector.extract_strided_slice %226 {offsets = [0, 0], sizes = [16, 8], strides = [1, 1]} : vector<16x128xf32> to vector<16x8xf32>
    %c0_144 = arith.constant 0 : index
    %c4_145 = arith.constant 4 : index
    %c3_146 = arith.constant 3 : index
    %c0_147 = arith.constant 0 : index
    %c0_148 = arith.constant 0 : index
    %228 = vector.load %arg2[%c0_144, %c4_145, %c3_146, %c0_147, %c0_148] : memref<1x8x4x16x128xbf16, #tpu.memory_space<vmem>>, vector<1x1x1x16x128xbf16>
    %229 = vector.shape_cast %228 : vector<1x1x1x16x128xbf16> to vector<16x128xbf16>
    %230 = arith.extf %229 : vector<16x128xbf16> to vector<16x128xf32>
    %231 = vector.broadcast %0 : vector<1x128xf32> to vector<16x128xf32>
    %232 = arith.mulf %230, %231 : vector<16x128xf32>
    %233 = vector.broadcast %1 : vector<1x128xf32> to vector<16x128xf32>
    %234 = arith.addf %232, %233 : vector<16x128xf32>
    %cst_149 = arith.constant 0.000000e+00 : f32
    %235 = vector.broadcast %cst_149 : f32 to vector<16x128xf32>
    %236 = arith.maximumf %234, %235 : vector<16x128xf32>
    %237 = vector.extract_strided_slice %236 {offsets = [0, 0], sizes = [16, 8], strides = [1, 1]} : vector<16x128xf32> to vector<16x8xf32>
    %238 = tpu.concatenate %227, %237 in 1 : vector<16x8xf32>, vector<16x8xf32> -> vector<16x16xf32>
    %c0_150 = arith.constant 0 : index
    %c9 = arith.constant 9 : index
    %c0_151 = arith.constant 0 : index
    %c0_152 = arith.constant 0 : index
    %239 = vector.load %arg4[%c0_150, %c9, %c0_151, %c0_152] : memref<1x16x16x16xf32, #tpu.memory_space<vmem>>, vector<1x1x16x16xf32>
    %240 = vector.shape_cast %239 : vector<1x1x16x16xf32> to vector<16x16xf32>
    %241 = vector.shape_cast %238 : vector<16x16xf32> to vector<1x1x16x16xf32>
    tpu.vector_store %arg4[%c0_150, %c9, %c0_151, %c0_152], %241 {strides = array<i32>} : memref<1x16x16x16xf32, #tpu.memory_space<vmem>>, vector<1x1x16x16xf32>,
    %c0_153 = arith.constant 0 : index
    %c5_154 = arith.constant 5 : index
    %c0_155 = arith.constant 0 : index
    %c0_156 = arith.constant 0 : index
    %c0_157 = arith.constant 0 : index
    %242 = vector.load %arg2[%c0_153, %c5_154, %c0_155, %c0_156, %c0_157] : memref<1x8x4x16x128xbf16, #tpu.memory_space<vmem>>, vector<1x1x1x16x128xbf16>
    %243 = vector.shape_cast %242 : vector<1x1x1x16x128xbf16> to vector<16x128xbf16>
    %244 = arith.extf %243 : vector<16x128xbf16> to vector<16x128xf32>
    %245 = vector.broadcast %0 : vector<1x128xf32> to vector<16x128xf32>
    %246 = arith.mulf %244, %245 : vector<16x128xf32>
    %247 = vector.broadcast %1 : vector<1x128xf32> to vector<16x128xf32>
    %248 = arith.addf %246, %247 : vector<16x128xf32>
    %cst_158 = arith.constant 0.000000e+00 : f32
    %249 = vector.broadcast %cst_158 : f32 to vector<16x128xf32>
    %250 = arith.maximumf %248, %249 : vector<16x128xf32>
    %251 = vector.extract_strided_slice %250 {offsets = [0, 0], sizes = [16, 8], strides = [1, 1]} : vector<16x128xf32> to vector<16x8xf32>
    %c0_159 = arith.constant 0 : index
    %c5_160 = arith.constant 5 : index
    %c1_161 = arith.constant 1 : index
    %c0_162 = arith.constant 0 : index
    %c0_163 = arith.constant 0 : index
    %252 = vector.load %arg2[%c0_159, %c5_160, %c1_161, %c0_162, %c0_163] : memref<1x8x4x16x128xbf16, #tpu.memory_space<vmem>>, vector<1x1x1x16x128xbf16>
    %253 = vector.shape_cast %252 : vector<1x1x1x16x128xbf16> to vector<16x128xbf16>
    %254 = arith.extf %253 : vector<16x128xbf16> to vector<16x128xf32>
    %255 = vector.broadcast %0 : vector<1x128xf32> to vector<16x128xf32>
    %256 = arith.mulf %254, %255 : vector<16x128xf32>
    %257 = vector.broadcast %1 : vector<1x128xf32> to vector<16x128xf32>
    %258 = arith.addf %256, %257 : vector<16x128xf32>
    %cst_164 = arith.constant 0.000000e+00 : f32
    %259 = vector.broadcast %cst_164 : f32 to vector<16x128xf32>
    %260 = arith.maximumf %258, %259 : vector<16x128xf32>
    %261 = vector.extract_strided_slice %260 {offsets = [0, 0], sizes = [16, 8], strides = [1, 1]} : vector<16x128xf32> to vector<16x8xf32>
    %262 = tpu.concatenate %251, %261 in 1 : vector<16x8xf32>, vector<16x8xf32> -> vector<16x16xf32>
    %c0_165 = arith.constant 0 : index
    %c10 = arith.constant 10 : index
    %c0_166 = arith.constant 0 : index
    %c0_167 = arith.constant 0 : index
    %263 = vector.load %arg4[%c0_165, %c10, %c0_166, %c0_167] : memref<1x16x16x16xf32, #tpu.memory_space<vmem>>, vector<1x1x16x16xf32>
    %264 = vector.shape_cast %263 : vector<1x1x16x16xf32> to vector<16x16xf32>
    %265 = vector.shape_cast %262 : vector<16x16xf32> to vector<1x1x16x16xf32>
    tpu.vector_store %arg4[%c0_165, %c10, %c0_166, %c0_167], %265 {strides = array<i32>} : memref<1x16x16x16xf32, #tpu.memory_space<vmem>>, vector<1x1x16x16xf32>,
    %c0_168 = arith.constant 0 : index
    %c5_169 = arith.constant 5 : index
    %c2_170 = arith.constant 2 : index
    %c0_171 = arith.constant 0 : index
    %c0_172 = arith.constant 0 : index
    %266 = vector.load %arg2[%c0_168, %c5_169, %c2_170, %c0_171, %c0_172] : memref<1x8x4x16x128xbf16, #tpu.memory_space<vmem>>, vector<1x1x1x16x128xbf16>
    %267 = vector.shape_cast %266 : vector<1x1x1x16x128xbf16> to vector<16x128xbf16>
    %268 = arith.extf %267 : vector<16x128xbf16> to vector<16x128xf32>
    %269 = vector.broadcast %0 : vector<1x128xf32> to vector<16x128xf32>
    %270 = arith.mulf %268, %269 : vector<16x128xf32>
    %271 = vector.broadcast %1 : vector<1x128xf32> to vector<16x128xf32>
    %272 = arith.addf %270, %271 : vector<16x128xf32>
    %cst_173 = arith.constant 0.000000e+00 : f32
    %273 = vector.broadcast %cst_173 : f32 to vector<16x128xf32>
    %274 = arith.maximumf %272, %273 : vector<16x128xf32>
    %275 = vector.extract_strided_slice %274 {offsets = [0, 0], sizes = [16, 8], strides = [1, 1]} : vector<16x128xf32> to vector<16x8xf32>
    %c0_174 = arith.constant 0 : index
    %c5_175 = arith.constant 5 : index
    %c3_176 = arith.constant 3 : index
    %c0_177 = arith.constant 0 : index
    %c0_178 = arith.constant 0 : index
    %276 = vector.load %arg2[%c0_174, %c5_175, %c3_176, %c0_177, %c0_178] : memref<1x8x4x16x128xbf16, #tpu.memory_space<vmem>>, vector<1x1x1x16x128xbf16>
    %277 = vector.shape_cast %276 : vector<1x1x1x16x128xbf16> to vector<16x128xbf16>
    %278 = arith.extf %277 : vector<16x128xbf16> to vector<16x128xf32>
    %279 = vector.broadcast %0 : vector<1x128xf32> to vector<16x128xf32>
    %280 = arith.mulf %278, %279 : vector<16x128xf32>
    %281 = vector.broadcast %1 : vector<1x128xf32> to vector<16x128xf32>
    %282 = arith.addf %280, %281 : vector<16x128xf32>
    %cst_179 = arith.constant 0.000000e+00 : f32
    %283 = vector.broadcast %cst_179 : f32 to vector<16x128xf32>
    %284 = arith.maximumf %282, %283 : vector<16x128xf32>
    %285 = vector.extract_strided_slice %284 {offsets = [0, 0], sizes = [16, 8], strides = [1, 1]} : vector<16x128xf32> to vector<16x8xf32>
    %286 = tpu.concatenate %275, %285 in 1 : vector<16x8xf32>, vector<16x8xf32> -> vector<16x16xf32>
    %c0_180 = arith.constant 0 : index
    %c11 = arith.constant 11 : index
    %c0_181 = arith.constant 0 : index
    %c0_182 = arith.constant 0 : index
    %287 = vector.load %arg4[%c0_180, %c11, %c0_181, %c0_182] : memref<1x16x16x16xf32, #tpu.memory_space<vmem>>, vector<1x1x16x16xf32>
    %288 = vector.shape_cast %287 : vector<1x1x16x16xf32> to vector<16x16xf32>
    %289 = vector.shape_cast %286 : vector<16x16xf32> to vector<1x1x16x16xf32>
    tpu.vector_store %arg4[%c0_180, %c11, %c0_181, %c0_182], %289 {strides = array<i32>} : memref<1x16x16x16xf32, #tpu.memory_space<vmem>>, vector<1x1x16x16xf32>,
    %c0_183 = arith.constant 0 : index
    %c6_184 = arith.constant 6 : index
    %c0_185 = arith.constant 0 : index
    %c0_186 = arith.constant 0 : index
    %c0_187 = arith.constant 0 : index
    %290 = vector.load %arg2[%c0_183, %c6_184, %c0_185, %c0_186, %c0_187] : memref<1x8x4x16x128xbf16, #tpu.memory_space<vmem>>, vector<1x1x1x16x128xbf16>
    %291 = vector.shape_cast %290 : vector<1x1x1x16x128xbf16> to vector<16x128xbf16>
    %292 = arith.extf %291 : vector<16x128xbf16> to vector<16x128xf32>
    %293 = vector.broadcast %0 : vector<1x128xf32> to vector<16x128xf32>
    %294 = arith.mulf %292, %293 : vector<16x128xf32>
    %295 = vector.broadcast %1 : vector<1x128xf32> to vector<16x128xf32>
    %296 = arith.addf %294, %295 : vector<16x128xf32>
    %cst_188 = arith.constant 0.000000e+00 : f32
    %297 = vector.broadcast %cst_188 : f32 to vector<16x128xf32>
    %298 = arith.maximumf %296, %297 : vector<16x128xf32>
    %299 = vector.extract_strided_slice %298 {offsets = [0, 0], sizes = [16, 8], strides = [1, 1]} : vector<16x128xf32> to vector<16x8xf32>
    %c0_189 = arith.constant 0 : index
    %c6_190 = arith.constant 6 : index
    %c1_191 = arith.constant 1 : index
    %c0_192 = arith.constant 0 : index
    %c0_193 = arith.constant 0 : index
    %300 = vector.load %arg2[%c0_189, %c6_190, %c1_191, %c0_192, %c0_193] : memref<1x8x4x16x128xbf16, #tpu.memory_space<vmem>>, vector<1x1x1x16x128xbf16>
    %301 = vector.shape_cast %300 : vector<1x1x1x16x128xbf16> to vector<16x128xbf16>
    %302 = arith.extf %301 : vector<16x128xbf16> to vector<16x128xf32>
    %303 = vector.broadcast %0 : vector<1x128xf32> to vector<16x128xf32>
    %304 = arith.mulf %302, %303 : vector<16x128xf32>
    %305 = vector.broadcast %1 : vector<1x128xf32> to vector<16x128xf32>
    %306 = arith.addf %304, %305 : vector<16x128xf32>
    %cst_194 = arith.constant 0.000000e+00 : f32
    %307 = vector.broadcast %cst_194 : f32 to vector<16x128xf32>
    %308 = arith.maximumf %306, %307 : vector<16x128xf32>
    %309 = vector.extract_strided_slice %308 {offsets = [0, 0], sizes = [16, 8], strides = [1, 1]} : vector<16x128xf32> to vector<16x8xf32>
    %310 = tpu.concatenate %299, %309 in 1 : vector<16x8xf32>, vector<16x8xf32> -> vector<16x16xf32>
    %c0_195 = arith.constant 0 : index
    %c12 = arith.constant 12 : index
    %c0_196 = arith.constant 0 : index
    %c0_197 = arith.constant 0 : index
    %311 = vector.load %arg4[%c0_195, %c12, %c0_196, %c0_197] : memref<1x16x16x16xf32, #tpu.memory_space<vmem>>, vector<1x1x16x16xf32>
    %312 = vector.shape_cast %311 : vector<1x1x16x16xf32> to vector<16x16xf32>
    %313 = vector.shape_cast %310 : vector<16x16xf32> to vector<1x1x16x16xf32>
    tpu.vector_store %arg4[%c0_195, %c12, %c0_196, %c0_197], %313 {strides = array<i32>} : memref<1x16x16x16xf32, #tpu.memory_space<vmem>>, vector<1x1x16x16xf32>,
    %c0_198 = arith.constant 0 : index
    %c6_199 = arith.constant 6 : index
    %c2_200 = arith.constant 2 : index
    %c0_201 = arith.constant 0 : index
    %c0_202 = arith.constant 0 : index
    %314 = vector.load %arg2[%c0_198, %c6_199, %c2_200, %c0_201, %c0_202] : memref<1x8x4x16x128xbf16, #tpu.memory_space<vmem>>, vector<1x1x1x16x128xbf16>
    %315 = vector.shape_cast %314 : vector<1x1x1x16x128xbf16> to vector<16x128xbf16>
    %316 = arith.extf %315 : vector<16x128xbf16> to vector<16x128xf32>
    %317 = vector.broadcast %0 : vector<1x128xf32> to vector<16x128xf32>
    %318 = arith.mulf %316, %317 : vector<16x128xf32>
    %319 = vector.broadcast %1 : vector<1x128xf32> to vector<16x128xf32>
    %320 = arith.addf %318, %319 : vector<16x128xf32>
    %cst_203 = arith.constant 0.000000e+00 : f32
    %321 = vector.broadcast %cst_203 : f32 to vector<16x128xf32>
    %322 = arith.maximumf %320, %321 : vector<16x128xf32>
    %323 = vector.extract_strided_slice %322 {offsets = [0, 0], sizes = [16, 8], strides = [1, 1]} : vector<16x128xf32> to vector<16x8xf32>
    %c0_204 = arith.constant 0 : index
    %c6_205 = arith.constant 6 : index
    %c3_206 = arith.constant 3 : index
    %c0_207 = arith.constant 0 : index
    %c0_208 = arith.constant 0 : index
    %324 = vector.load %arg2[%c0_204, %c6_205, %c3_206, %c0_207, %c0_208] : memref<1x8x4x16x128xbf16, #tpu.memory_space<vmem>>, vector<1x1x1x16x128xbf16>
    %325 = vector.shape_cast %324 : vector<1x1x1x16x128xbf16> to vector<16x128xbf16>
    %326 = arith.extf %325 : vector<16x128xbf16> to vector<16x128xf32>
    %327 = vector.broadcast %0 : vector<1x128xf32> to vector<16x128xf32>
    %328 = arith.mulf %326, %327 : vector<16x128xf32>
    %329 = vector.broadcast %1 : vector<1x128xf32> to vector<16x128xf32>
    %330 = arith.addf %328, %329 : vector<16x128xf32>
    %cst_209 = arith.constant 0.000000e+00 : f32
    %331 = vector.broadcast %cst_209 : f32 to vector<16x128xf32>
    %332 = arith.maximumf %330, %331 : vector<16x128xf32>
    %333 = vector.extract_strided_slice %332 {offsets = [0, 0], sizes = [16, 8], strides = [1, 1]} : vector<16x128xf32> to vector<16x8xf32>
    %334 = tpu.concatenate %323, %333 in 1 : vector<16x8xf32>, vector<16x8xf32> -> vector<16x16xf32>
    %c0_210 = arith.constant 0 : index
    %c13 = arith.constant 13 : index
    %c0_211 = arith.constant 0 : index
    %c0_212 = arith.constant 0 : index
    %335 = vector.load %arg4[%c0_210, %c13, %c0_211, %c0_212] : memref<1x16x16x16xf32, #tpu.memory_space<vmem>>, vector<1x1x16x16xf32>
    %336 = vector.shape_cast %335 : vector<1x1x16x16xf32> to vector<16x16xf32>
    %337 = vector.shape_cast %334 : vector<16x16xf32> to vector<1x1x16x16xf32>
    tpu.vector_store %arg4[%c0_210, %c13, %c0_211, %c0_212], %337 {strides = array<i32>} : memref<1x16x16x16xf32, #tpu.memory_space<vmem>>, vector<1x1x16x16xf32>,
    %c0_213 = arith.constant 0 : index
    %c7_214 = arith.constant 7 : index
    %c0_215 = arith.constant 0 : index
    %c0_216 = arith.constant 0 : index
    %c0_217 = arith.constant 0 : index
    %338 = vector.load %arg2[%c0_213, %c7_214, %c0_215, %c0_216, %c0_217] : memref<1x8x4x16x128xbf16, #tpu.memory_space<vmem>>, vector<1x1x1x16x128xbf16>
    %339 = vector.shape_cast %338 : vector<1x1x1x16x128xbf16> to vector<16x128xbf16>
    %340 = arith.extf %339 : vector<16x128xbf16> to vector<16x128xf32>
    %341 = vector.broadcast %0 : vector<1x128xf32> to vector<16x128xf32>
    %342 = arith.mulf %340, %341 : vector<16x128xf32>
    %343 = vector.broadcast %1 : vector<1x128xf32> to vector<16x128xf32>
    %344 = arith.addf %342, %343 : vector<16x128xf32>
    %cst_218 = arith.constant 0.000000e+00 : f32
    %345 = vector.broadcast %cst_218 : f32 to vector<16x128xf32>
    %346 = arith.maximumf %344, %345 : vector<16x128xf32>
    %347 = vector.extract_strided_slice %346 {offsets = [0, 0], sizes = [16, 8], strides = [1, 1]} : vector<16x128xf32> to vector<16x8xf32>
    %c0_219 = arith.constant 0 : index
    %c7_220 = arith.constant 7 : index
    %c1_221 = arith.constant 1 : index
    %c0_222 = arith.constant 0 : index
    %c0_223 = arith.constant 0 : index
    %348 = vector.load %arg2[%c0_219, %c7_220, %c1_221, %c0_222, %c0_223] : memref<1x8x4x16x128xbf16, #tpu.memory_space<vmem>>, vector<1x1x1x16x128xbf16>
    %349 = vector.shape_cast %348 : vector<1x1x1x16x128xbf16> to vector<16x128xbf16>
    %350 = arith.extf %349 : vector<16x128xbf16> to vector<16x128xf32>
    %351 = vector.broadcast %0 : vector<1x128xf32> to vector<16x128xf32>
    %352 = arith.mulf %350, %351 : vector<16x128xf32>
    %353 = vector.broadcast %1 : vector<1x128xf32> to vector<16x128xf32>
    %354 = arith.addf %352, %353 : vector<16x128xf32>
    %cst_224 = arith.constant 0.000000e+00 : f32
    %355 = vector.broadcast %cst_224 : f32 to vector<16x128xf32>
    %356 = arith.maximumf %354, %355 : vector<16x128xf32>
    %357 = vector.extract_strided_slice %356 {offsets = [0, 0], sizes = [16, 8], strides = [1, 1]} : vector<16x128xf32> to vector<16x8xf32>
    %358 = tpu.concatenate %347, %357 in 1 : vector<16x8xf32>, vector<16x8xf32> -> vector<16x16xf32>
    %c0_225 = arith.constant 0 : index
    %c14 = arith.constant 14 : index
    %c0_226 = arith.constant 0 : index
    %c0_227 = arith.constant 0 : index
    %359 = vector.load %arg4[%c0_225, %c14, %c0_226, %c0_227] : memref<1x16x16x16xf32, #tpu.memory_space<vmem>>, vector<1x1x16x16xf32>
    %360 = vector.shape_cast %359 : vector<1x1x16x16xf32> to vector<16x16xf32>
    %361 = vector.shape_cast %358 : vector<16x16xf32> to vector<1x1x16x16xf32>
    tpu.vector_store %arg4[%c0_225, %c14, %c0_226, %c0_227], %361 {strides = array<i32>} : memref<1x16x16x16xf32, #tpu.memory_space<vmem>>, vector<1x1x16x16xf32>,
    %c0_228 = arith.constant 0 : index
    %c7_229 = arith.constant 7 : index
    %c2_230 = arith.constant 2 : index
    %c0_231 = arith.constant 0 : index
    %c0_232 = arith.constant 0 : index
    %362 = vector.load %arg2[%c0_228, %c7_229, %c2_230, %c0_231, %c0_232] : memref<1x8x4x16x128xbf16, #tpu.memory_space<vmem>>, vector<1x1x1x16x128xbf16>
    %363 = vector.shape_cast %362 : vector<1x1x1x16x128xbf16> to vector<16x128xbf16>
    %364 = arith.extf %363 : vector<16x128xbf16> to vector<16x128xf32>
    %365 = vector.broadcast %0 : vector<1x128xf32> to vector<16x128xf32>
    %366 = arith.mulf %364, %365 : vector<16x128xf32>
    %367 = vector.broadcast %1 : vector<1x128xf32> to vector<16x128xf32>
    %368 = arith.addf %366, %367 : vector<16x128xf32>
    %cst_233 = arith.constant 0.000000e+00 : f32
    %369 = vector.broadcast %cst_233 : f32 to vector<16x128xf32>
    %370 = arith.maximumf %368, %369 : vector<16x128xf32>
    %371 = vector.extract_strided_slice %370 {offsets = [0, 0], sizes = [16, 8], strides = [1, 1]} : vector<16x128xf32> to vector<16x8xf32>
    %c0_234 = arith.constant 0 : index
    %c7_235 = arith.constant 7 : index
    %c3_236 = arith.constant 3 : index
    %c0_237 = arith.constant 0 : index
    %c0_238 = arith.constant 0 : index
    %372 = vector.load %arg2[%c0_234, %c7_235, %c3_236, %c0_237, %c0_238] : memref<1x8x4x16x128xbf16, #tpu.memory_space<vmem>>, vector<1x1x1x16x128xbf16>
    %373 = vector.shape_cast %372 : vector<1x1x1x16x128xbf16> to vector<16x128xbf16>
    %374 = arith.extf %373 : vector<16x128xbf16> to vector<16x128xf32>
    %375 = vector.broadcast %0 : vector<1x128xf32> to vector<16x128xf32>
    %376 = arith.mulf %374, %375 : vector<16x128xf32>
    %377 = vector.broadcast %1 : vector<1x128xf32> to vector<16x128xf32>
    %378 = arith.addf %376, %377 : vector<16x128xf32>
    %cst_239 = arith.constant 0.000000e+00 : f32
    %379 = vector.broadcast %cst_239 : f32 to vector<16x128xf32>
    %380 = arith.maximumf %378, %379 : vector<16x128xf32>
    %381 = vector.extract_strided_slice %380 {offsets = [0, 0], sizes = [16, 8], strides = [1, 1]} : vector<16x128xf32> to vector<16x8xf32>
    %382 = tpu.concatenate %371, %381 in 1 : vector<16x8xf32>, vector<16x8xf32> -> vector<16x16xf32>
    %c0_240 = arith.constant 0 : index
    %c15 = arith.constant 15 : index
    %c0_241 = arith.constant 0 : index
    %c0_242 = arith.constant 0 : index
    %383 = vector.load %arg4[%c0_240, %c15, %c0_241, %c0_242] : memref<1x16x16x16xf32, #tpu.memory_space<vmem>>, vector<1x1x16x16xf32>
    %384 = vector.shape_cast %383 : vector<1x1x16x16xf32> to vector<16x16xf32>
    %385 = vector.shape_cast %382 : vector<16x16xf32> to vector<1x1x16x16xf32>
    tpu.vector_store %arg4[%c0_240, %c15, %c0_241, %c0_242], %385 {strides = array<i32>} : memref<1x16x16x16xf32, #tpu.memory_space<vmem>>, vector<1x1x16x16xf32>,
    return
  }
  func.func @transform_0(%arg0: i32, %arg1: i32) -> (i32, i32, i32, i32, i32) {
    %c0_i32 = arith.constant 0 : i32
    %c0_i32_0 = arith.constant 0 : i32
    %c0_i32_1 = arith.constant 0 : i32
    %c0_i32_2 = arith.constant 0 : i32
    return %arg0, %arg1, %c0_i32, %c0_i32_0, %c0_i32_1 : i32, i32, i32, i32, i32
  }
  func.func @transform_1(%arg0: i32, %arg1: i32) -> (i32, i32) {
    %c0_i32 = arith.constant 0 : i32
    %c0_i32_0 = arith.constant 0 : i32
    %c0_i32_1 = arith.constant 0 : i32
    return %c0_i32, %c0_i32_0 : i32, i32
  }
  func.func @transform_2(%arg0: i32, %arg1: i32) -> (i32, i32, i32, i32) {
    %c0_i32 = arith.constant 0 : i32
    %c0_i32_0 = arith.constant 0 : i32
    %c0_i32_1 = arith.constant 0 : i32
    return %arg0, %arg1, %c0_i32, %c0_i32_0 : i32, i32, i32, i32
  }
}

</mosaic_0001>

<llo_original>
// kernel: deconv_bn_relu.3
$region0: #{deconv_bn_relu.3}
  #allocation0 [shape = 'u32[]', space=smem, size = 0x4, offset = 0x4, fixed_abs, tag = 'smem constant byte address 0x4 - core index']
  #allocation1 [shape = 'u32[72,128]{1,0:T(1,128)}', space=vmem, size = 0x9000, scoped, tag = 'internal scratch']
  %s0 = inlined_call_operand.vmem [shape: bf16[2,16,4,16,128], index: 0, kind: input, shape index: {}]
  %s1 = inlined_call_operand.vmem [shape: f32[2,128], index: 1, kind: input, shape index: {}]
  %s2 = inlined_call_operand.vmem [shape: f32[2,32,16,16], index: 2, kind: output, shape index: {}]
  %s3 = sld [smem:[#allocation0]]
  $region41: #{deconv_bn_relu.3} parent=0
    _
  %s5 = ssub.s32 1, %s3
  %s6 = scalar_select 0, %s5, %s3
  loop: start=0, step=1, limit=6
  $region2: #{deconv_bn_relu.3} parent=0 // loop_pre_header
    _
  $region3: #{deconv_bn_relu.3} parent=0 // loop_header
    %s8 = sphi 0, %s12
    %p9 = scmp.ge.s32.totalorder %s8, 6
    %s15 = sphi 0, %s27
    %s16 = sphi 0, %s23
    %s17 = sphi 0, %s15
    %s18 = sphi 0, %s16
    %s19 = sphi 0, %s17
    %s20 = sphi 0, %s18
    %s32 = sphi 0, %s34
    %s35 = sphi 0, %s32
    %s36 = sphi 0, %s35
    %s52 = sphi 0, %s36
    %s56 = sphi 0, %s56
    %s58 = sphi 0, %s56
    %s59 = sphi 0, %s58
    %s73 = sphi 0, %s59
    %s81 = sphi 0, %s83
    %s84 = sphi 0, %s81
    %s85 = sphi 0, %s84
    %s101 = sphi 0, %s85
  $region4: #{deconv_bn_relu.3} parent=0 // loop_header_branch
    %11 = sbr.rel (%p9) target = $region8
  $region5: #{deconv_bn_relu.3} parent=0 // loop_body
    %s13 = ssub.s32 %s8, 1
    %s14 = ssub.s32 %s8, 2
    %s21 = sadd.s32 1, %s16
    %p22 = scmp.ge.s32.totalorder %s21, 2
    %s23 = scalar_select %p22, 0, %s21
    %s24 = sadd.s32 1, %s15
    %s25 = scalar_select %p22, %s24, %s15
    %p26 = scmp.ge.s32.totalorder %s25, 2
    %s27 = scalar_select %p26, 0, %s25
    %s28 = ssub.s32 %s15, %s27
    %s29 = ssub.s32 %s16, %s23
    %s30 = sor.u32 %s28, %s29
    %p31 = scmp.eq.s32.totalorder %s30, 0
    %s33 = sadd.s32 %s32, 1
    %s34 = scalar_select %p31, %s32, %s33
    %p37 = pneg %p31
    %p38 = scmp.eq.s32.totalorder %s8, 3
    %p39 = por %p37, %p38
    %p40 = scmp.ne.s32.totalorder %s32, %s35
    %p41 = scmp.eq.s32.totalorder %s8, 0
    %p42 = por %p40, %p41
    %p43 = scmp.ne.s32.totalorder %s32, %s35
    %p44 = scmp.eq.s32.totalorder %s13, 3
    %p45 = por %p43, %p44
    %p46 = scmp.ne.s32.totalorder %s35, %s36
    %p47 = scmp.eq.s32.totalorder %s13, 0
    %p48 = por %p46, %p47
    %p49 = scmp.ne.s32.totalorder %s35, %s36
    %p50 = scmp.eq.s32.totalorder %s14, 3
    %p51 = por %p49, %p50
    %p53 = scmp.ne.s32.totalorder %s36, %s52
    %p54 = scmp.eq.s32.totalorder %s14, 0
    %p55 = por %p53, %p54
    %s57 = sadd.s32 %s56, 1
    %p60 = scmp.eq.s32.totalorder %s8, 3
    %p61 = scmp.ne.s32.totalorder %s56, %s58
    %p62 = scmp.eq.s32.totalorder %s8, 0
    %p63 = por %p61, %p62
    %p64 = scmp.ne.s32.totalorder %s56, %s58
    %p65 = scmp.eq.s32.totalorder %s13, 3
    %p66 = por %p64, %p65
    %p67 = scmp.ne.s32.totalorder %s58, %s59
    %p68 = scmp.eq.s32.totalorder %s13, 0
    %p69 = por %p67, %p68
    %p70 = scmp.ne.s32.totalorder %s58, %s59
    %p71 = scmp.eq.s32.totalorder %s14, 3
    %p72 = por %p70, %p71
    %p74 = scmp.ne.s32.totalorder %s59, %s73
    %p75 = scmp.eq.s32.totalorder %s14, 0
    %p76 = por %p74, %p75
    %s77 = ssub.s32 %s15, %s27
    %s78 = ssub.s32 %s16, %s23
    %s79 = sor.u32 %s77, %s78
    %p80 = scmp.eq.s32.totalorder %s79, 0
    %s82 = sadd.s32 %s81, 1
    %s83 = scalar_select %p80, %s81, %s82
    %p86 = pneg %p80
    %p87 = scmp.eq.s32.totalorder %s8, 3
    %p88 = por %p86, %p87
    %p89 = scmp.ne.s32.totalorder %s81, %s84
    %p90 = scmp.eq.s32.totalorder %s8, 0
    %p91 = por %p89, %p90
    %p92 = scmp.ne.s32.totalorder %s81, %s84
    %p93 = scmp.eq.s32.totalorder %s13, 3
    %p94 = por %p92, %p93
    %p95 = scmp.ne.s32.totalorder %s84, %s85
    %p96 = scmp.eq.s32.totalorder %s13, 0
    %p97 = por %p95, %p96
    %p98 = scmp.ne.s32.totalorder %s84, %s85
    %p99 = scmp.eq.s32.totalorder %s14, 3
    %p100 = por %p98, %p99
    %p102 = scmp.ne.s32.totalorder %s85, %s101
    %p103 = scmp.eq.s32.totalorder %s14, 0
    %p104 = por %p102, %p103
    %p105 = scmp.le.s32.totalorder 1, %s8
    %p106 = scmp.lt.s32.totalorder %s8, 5
    %p107 = pnand %p105, %p106
    %p108 = pneg %p107
    // Predicated region
    $region9: #{deconv_bn_relu.3} parent=5 // pred_check
      _
    $region10: #{deconv_bn_relu.3} parent=5 // pred_check_branch
      %110 = sbr.rel (%p107) target = $region12
    $region11: #{deconv_bn_relu.3} parent=5 // pred_region
      %s111 = ssub.s32 %s8, 1
      // Predicated region
      $region13: #{deconv_bn_relu.3} parent=11 // pred_check
        %p112 = pneg %p69
      $region14: #{deconv_bn_relu.3} parent=11 // pred_check_branch
        %114 = sbr.rel (%p112) target = $region16
      $region15: #{deconv_bn_relu.3} parent=11 // pred_region
        _
      $region16: #{deconv_bn_relu.3} parent=11 // pred_fallthru
        _
    $region12: #{deconv_bn_relu.3} parent=5 // pred_fallthru
      _
    %p115 = scmp.lt.s32.totalorder %s8, 4
    // Predicated region
    $region17: #{deconv_bn_relu.3} parent=5 // pred_check
      %p116 = pneg %p115
    $region18: #{deconv_bn_relu.3} parent=5 // pred_check_branch
      %118 = sbr.rel (%p116) target = $region20
    $region19: #{deconv_bn_relu.3} parent=5 // pred_region
      // Predicated region
      $region21: #{deconv_bn_relu.3} parent=19 // pred_check
        %p119 = pneg %p42
      $region22: #{deconv_bn_relu.3} parent=19 // pred_check_branch
        %121 = sbr.rel (%p119) target = $region24
      $region23: #{deconv_bn_relu.3} parent=19 // pred_region
        %s122 = smul.u32 8, %s16
        %p123 = scmp.lt.s32.totalorder %s15, 1
        %s124 = scalar_select %p123, %s15, 1
        %p125 = scmp.lt.s32.totalorder %s122, 15
        %s126 = scalar_select %p125, %s122, 15
        %s127 = smul.addr %s126, 8
        %s128 = smul.addr %s124, 128
        %s129 = sadd.s32 %s127, %s128
        %s130 = smul.addr %s129, 4
        %s131 = scalar_lea.vmem %s0, %s130
        %s132 = smul.u32 8, %s16
      $region24: #{deconv_bn_relu.3} parent=19 // pred_fallthru
        _
    $region20: #{deconv_bn_relu.3} parent=5 // pred_fallthru
      _
    %p133 = scmp.le.s32.totalorder 1, %s8
    %p134 = scmp.lt.s32.totalorder %s8, 5
    %p135 = pnand %p133, %p134
    %p136 = pneg %p135
    // Predicated region
    $region25: #{deconv_bn_relu.3} parent=5 // pred_check
      _
    $region26: #{deconv_bn_relu.3} parent=5 // pred_check_branch
      %138 = sbr.rel (%p135) target = $region28
    $region27: #{deconv_bn_relu.3} parent=5 // pred_region
      %s139 = ssub.s32 %s8, 1
      %s140 = smul.u32 8, %s18
      %p141 = scmp.lt.s32.totalorder %s17, 1
      %s142 = scalar_select %p141, %s17, 1
      %p143 = scmp.lt.s32.totalorder %s140, 15
      %s144 = scalar_select %p143, %s140, 15
      %s145 = smul.addr %s144, 8
      %s146 = smul.addr %s142, 128
      %s147 = sadd.s32 %s145, %s146
      %s148 = smul.addr %s147, 4
      %s149 = scalar_lea.vmem %s0, %s148
      %p150 = pneg %p48
      %p151 = pneg %p45
      %p152 = pneg %p69
      %p153 = pneg %p66
      %p154 = pneg %p97
      %p155 = pneg %p94
      %s156 = smul.u32 16, %s18
      %p157 = scmp.lt.s32.totalorder %s17, 1
      %s158 = scalar_select %p157, %s17, 1
      %p159 = scmp.lt.s32.totalorder %s156, 31
      %s160 = scalar_select %p159, %s156, 31
      %s161 = smul.addr %s160, 2
      %s162 = smul.addr %s158, 64
      %s163 = sadd.s32 %s161, %s162
      %s164 = smul.addr %s163, 8
      %s165 = scalar_lea.vmem %s2, %s164
      %s166 = smul.u32 8, %s18
      %p167 = scmp.lt.s32.totalorder %s17, 1
      %s168 = scalar_select %p167, %s17, 1
      %p169 = scmp.lt.s32.totalorder %s166, 15
      %s170 = scalar_select %p169, %s166, 15
      %s171 = smul.addr %s170, 8
      %s172 = smul.addr %s168, 128
      %s173 = sadd.s32 %s171, %s172
      %s174 = smul.addr %s173, 4
      %s175 = scalar_lea.vmem %s0, %s174
      %s176 = smul.u32 8, %s18
      %s177 = smul.u32 16, %s18
      %p178 = scmp.lt.s32.totalorder %s17, 1
      %s179 = scalar_select %p178, %s17, 1
      %p180 = scmp.lt.s32.totalorder %s177, 31
      %s181 = scalar_select %p180, %s177, 31
      %s182 = smul.addr %s181, 2
      %s183 = smul.addr %s179, 64
      %s184 = sadd.s32 %s182, %s183
      %s185 = smul.addr %s184, 8
      %s186 = scalar_lea.vmem %s2, %s185
      %s187 = smul.u32 16, %s18
      %v188 = vld [vmem:[%s1] sm:$0x1]
      %v189 = vld [vmem:[%s1 + $0x1] sm:$0x1]
      %v190 = vld [vmem:[%s175] sm:$0xf]
      %v191 = vld [vmem:[%s175 + $0x4] sm:$0xf]
      %v192 = vunpack.c.l.bf16 %v190
      %v193 = vunpack.c.l.bf16 %v191
      %v194 = vperm.slane %v188, 0
      %v195 = vmul.f32 %v192, %v194
      %v196 = vmul.f32 %v193, %v194
      %v197 = vperm.slane %v189, 0
      %v198 = vadd.f32 %v195, %v197
      %v199 = vadd.f32 %v196, %v197
      %v200 = vmax.f32 %v198, 0.0
      %v201 = vmax.f32 %v199, 0.0
      %s202 = scalar_lea.vmem %s175, 8
      %v203 = vld [vmem:[%s202] sm:$0xf]
      %v204 = vld [vmem:[%s202 + $0x4] sm:$0xf]
      %v205 = vunpack.c.l.bf16 %v203
      %v206 = vunpack.c.l.bf16 %v204
      %v207 = vmul.f32 %v205, %v194
      %v208 = vmul.f32 %v206, %v194
      %v209 = vadd.f32 %v207, %v197
      %v210 = vadd.f32 %v208, %v197
      %v211 = vmax.f32 %v209, 0.0
      %v212 = vmax.f32 %v210, 0.0
      %215 = vrot.lane.b32.xlu0 %v211, 8
      %v216 = vpop.permute.xlu0 %215
      %217 = vrot.lane.b32.xlu0 %v212, 8
      %v218 = vpop.permute.xlu0 %217
      %vm221 = vcmask 64512
      %v222 = vsel %vm221, %v200, %v216
      %v223 = vsel %vm221, %v201, %v218
      %vm224 = vcmask 130048
      %225 = vst.msk [vmem:[%s186] sm:$0xff] %vm224, %v222
      %226 = vst.msk [vmem:[%s186 + $0x8] sm:$0xff] %vm224, %v223
      %s227 = scalar_lea.vmem %s175, 16
      %v228 = vld [vmem:[%s227] sm:$0xf]
      %v229 = vld [vmem:[%s227 + $0x4] sm:$0xf]
      %v230 = vunpack.c.l.bf16 %v228
      %v231 = vunpack.c.l.bf16 %v229
      %v232 = vmul.f32 %v230, %v194
      %v233 = vmul.f32 %v231, %v194
      %v234 = vadd.f32 %v232, %v197
      %v235 = vadd.f32 %v233, %v197
      %v236 = vmax.f32 %v234, 0.0
      %v237 = vmax.f32 %v235, 0.0
      %s238 = scalar_lea.vmem %s175, 24
      %v239 = vld [vmem:[%s238] sm:$0xf]
      %v240 = vld [vmem:[%s238 + $0x4] sm:$0xf]
      %v241 = vunpack.c.l.bf16 %v239
      %v242 = vunpack.c.l.bf16 %v240
      %v243 = vmul.f32 %v241, %v194
      %v244 = vmul.f32 %v242, %v194
      %v245 = vadd.f32 %v243, %v197
      %v246 = vadd.f32 %v244, %v197
      %v247 = vmax.f32 %v245, 0.0
      %v248 = vmax.f32 %v246, 0.0
      %251 = vrot.lane.b32.xlu0 %v247, 8
      %v252 = vpop.permute.xlu0 %251
      %253 = vrot.lane.b32.xlu0 %v248, 8
      %v254 = vpop.permute.xlu0 %253
      %v257 = vsel %vm221, %v236, %v252
      %v258 = vsel %vm221, %v237, %v254
      %s259 = scalar_lea.vmem %s186, 16
      %260 = vst.msk [vmem:[%s259] sm:$0xff] %vm224, %v257
      %261 = vst.msk [vmem:[%s259 + $0x8] sm:$0xff] %vm224, %v258
      %s262 = scalar_lea.vmem %s175, 32
      %v263 = vld [vmem:[%s262] sm:$0xf]
      %v264 = vld [vmem:[%s262 + $0x4] sm:$0xf]
      %v265 = vunpack.c.l.bf16 %v263
      %v266 = vunpack.c.l.bf16 %v264
      %v267 = vmul.f32 %v265, %v194
      %v268 = vmul.f32 %v266, %v194
      %v269 = vadd.f32 %v267, %v197
      %v270 = vadd.f32 %v268, %v197
      %v271 = vmax.f32 %v269, 0.0
      %v272 = vmax.f32 %v270, 0.0
      %s273 = scalar_lea.vmem %s175, 40
      %v274 = vld [vmem:[%s273] sm:$0xf]
      %v275 = vld [vmem:[%s273 + $0x4] sm:$0xf]
      %v276 = vunpack.c.l.bf16 %v274
      %v277 = vunpack.c.l.bf16 %v275
      %v278 = vmul.f32 %v276, %v194
      %v279 = vmul.f32 %v277, %v194
      %v280 = vadd.f32 %v278, %v197
      %v281 = vadd.f32 %v279, %v197
      %v282 = vmax.f32 %v280, 0.0
      %v283 = vmax.f32 %v281, 0.0
      %286 = vrot.lane.b32.xlu0 %v282, 8
      %v287 = vpop.permute.xlu0 %286
      %288 = vrot.lane.b32.xlu0 %v283, 8
      %v289 = vpop.permute.xlu0 %288
      %v292 = vsel %vm221, %v271, %v287
      %v293 = vsel %vm221, %v272, %v289
      %s294 = scalar_lea.vmem %s186, 32
      %295 = vst.msk [vmem:[%s294] sm:$0xff] %vm224, %v292
      %296 = vst.msk [vmem:[%s294 + $0x8] sm:$0xff] %vm224, %v293
      %s297 = scalar_lea.vmem %s175, 48
      %v298 = vld [vmem:[%s297] sm:$0xf]
      %v299 = vld [vmem:[%s297 + $0x4] sm:$0xf]
      %v300 = vunpack.c.l.bf16 %v298
      %v301 = vunpack.c.l.bf16 %v299
      %v302 = vmul.f32 %v300, %v194
      %v303 = vmul.f32 %v301, %v194
      %v304 = vadd.f32 %v302, %v197
      %v305 = vadd.f32 %v303, %v197
      %v306 = vmax.f32 %v304, 0.0
      %v307 = vmax.f32 %v305, 0.0
      %s308 = scalar_lea.vmem %s175, 56
      %v309 = vld [vmem:[%s308] sm:$0xf]
      %v310 = vld [vmem:[%s308 + $0x4] sm:$0xf]
      %v311 = vunpack.c.l.bf16 %v309
      %v312 = vunpack.c.l.bf16 %v310
      %v313 = vmul.f32 %v311, %v194
      %v314 = vmul.f32 %v312, %v194
      %v315 = vadd.f32 %v313, %v197
      %v316 = vadd.f32 %v314, %v197
      %v317 = vmax.f32 %v315, 0.0
      %v318 = vmax.f32 %v316, 0.0
      %321 = vrot.lane.b32.xlu0 %v317, 8
      %v322 = vpop.permute.xlu0 %321
      %323 = vrot.lane.b32.xlu0 %v318, 8
      %v324 = vpop.permute.xlu0 %323
      %v327 = vsel %vm221, %v306, %v322
      %v328 = vsel %vm221, %v307, %v324
      %s329 = scalar_lea.vmem %s186, 48
      %330 = vst.msk [vmem:[%s329] sm:$0xff] %vm224, %v327
      %331 = vst.msk [vmem:[%s329 + $0x8] sm:$0xff] %vm224, %v328
      %s332 = scalar_lea.vmem %s175, 64
      %v333 = vld [vmem:[%s332] sm:$0xf]
      %v334 = vld [vmem:[%s332 + $0x4] sm:$0xf]
      %v335 = vunpack.c.l.bf16 %v333
      %v336 = vunpack.c.l.bf16 %v334
      %v337 = vmul.f32 %v335, %v194
      %v338 = vmul.f32 %v336, %v194
      %v339 = vadd.f32 %v337, %v197
      %v340 = vadd.f32 %v338, %v197
      %v341 = vmax.f32 %v339, 0.0
      %v342 = vmax.f32 %v340, 0.0
      %s343 = scalar_lea.vmem %s175, 72
      %v344 = vld [vmem:[%s343] sm:$0xf]
      %v345 = vld [vmem:[%s343 + $0x4] sm:$0xf]
      %v346 = vunpack.c.l.bf16 %v344
      %v347 = vunpack.c.l.bf16 %v345
      %v348 = vmul.f32 %v346, %v194
      %v349 = vmul.f32 %v347, %v194
      %v350 = vadd.f32 %v348, %v197
      %v351 = vadd.f32 %v349, %v197
      %v352 = vmax.f32 %v350, 0.0
      %v353 = vmax.f32 %v351, 0.0
      %356 = vrot.lane.b32.xlu0 %v352, 8
      %v357 = vpop.permute.xlu0 %356
      %358 = vrot.lane.b32.xlu0 %v353, 8
      %v359 = vpop.permute.xlu0 %358
      %v362 = vsel %vm221, %v341, %v357
      %v363 = vsel %vm221, %v342, %v359
      %s364 = scalar_lea.vmem %s186, 64
      %365 = vst.msk [vmem:[%s364] sm:$0xff] %vm224, %v362
      %366 = vst.msk [vmem:[%s364 + $0x8] sm:$0xff] %vm224, %v363
      %s367 = scalar_lea.vmem %s175, 80
      %v368 = vld [vmem:[%s367] sm:$0xf]
      %v369 = vld [vmem:[%s367 + $0x4] sm:$0xf]
      %v370 = vunpack.c.l.bf16 %v368
      %v371 = vunpack.c.l.bf16 %v369
      %v372 = vmul.f32 %v370, %v194
      %v373 = vmul.f32 %v371, %v194
      %v374 = vadd.f32 %v372, %v197
      %v375 = vadd.f32 %v373, %v197
      %v376 = vmax.f32 %v374, 0.0
      %v377 = vmax.f32 %v375, 0.0
      %s378 = scalar_lea.vmem %s175, 88
      %v379 = vld [vmem:[%s378] sm:$0xf]
      %v380 = vld [vmem:[%s378 + $0x4] sm:$0xf]
      %v381 = vunpack.c.l.bf16 %v379
      %v382 = vunpack.c.l.bf16 %v380
      %v383 = vmul.f32 %v381, %v194
      %v384 = vmul.f32 %v382, %v194
      %v385 = vadd.f32 %v383, %v197
      %v386 = vadd.f32 %v384, %v197
      %v387 = vmax.f32 %v385, 0.0
      %v388 = vmax.f32 %v386, 0.0
      %391 = vrot.lane.b32.xlu0 %v387, 8
      %v392 = vpop.permute.xlu0 %391
      %393 = vrot.lane.b32.xlu0 %v388, 8
      %v394 = vpop.permute.xlu0 %393
      %v397 = vsel %vm221, %v376, %v392
      %v398 = vsel %vm221, %v377, %v394
      %s399 = scalar_lea.vmem %s186, 80
      %400 = vst.msk [vmem:[%s399] sm:$0xff] %vm224, %v397
      %401 = vst.msk [vmem:[%s399 + $0x8] sm:$0xff] %vm224, %v398
      %s402 = scalar_lea.vmem %s175, 96
      %v403 = vld [vmem:[%s402] sm:$0xf]
      %v404 = vld [vmem:[%s402 + $0x4] sm:$0xf]
      %v405 = vunpack.c.l.bf16 %v403
      %v406 = vunpack.c.l.bf16 %v404
      %v407 = vmul.f32 %v405, %v194
      %v408 = vmul.f32 %v406, %v194
      %v409 = vadd.f32 %v407, %v197
      %v410 = vadd.f32 %v408, %v197
      %v411 = vmax.f32 %v409, 0.0
      %v412 = vmax.f32 %v410, 0.0
      %s413 = scalar_lea.vmem %s175, 104
      %v414 = vld [vmem:[%s413] sm:$0xf]
      %v415 = vld [vmem:[%s413 + $0x4] sm:$0xf]
      %v416 = vunpack.c.l.bf16 %v414
      %v417 = vunpack.c.l.bf16 %v415
      %v418 = vmul.f32 %v416, %v194
      %v419 = vmul.f32 %v417, %v194
      %v420 = vadd.f32 %v418, %v197
      %v421 = vadd.f32 %v419, %v197
      %v422 = vmax.f32 %v420, 0.0
      %v423 = vmax.f32 %v421, 0.0
      %426 = vrot.lane.b32.xlu0 %v422, 8
      %v427 = vpop.permute.xlu0 %426
      %428 = vrot.lane.b32.xlu0 %v423, 8
      %v429 = vpop.permute.xlu0 %428
      %v432 = vsel %vm221, %v411, %v427
      %v433 = vsel %vm221, %v412, %v429
      %s434 = scalar_lea.vmem %s186, 96
      %435 = vst.msk [vmem:[%s434] sm:$0xff] %vm224, %v432
      %436 = vst.msk [vmem:[%s434 + $0x8] sm:$0xff] %vm224, %v433
      %s437 = scalar_lea.vmem %s175, 112
      %v438 = vld [vmem:[%s437] sm:$0xf]
      %v439 = vld [vmem:[%s437 + $0x4] sm:$0xf]
      %v440 = vunpack.c.l.bf16 %v438
      %v441 = vunpack.c.l.bf16 %v439
      %v442 = vmul.f32 %v440, %v194
      %v443 = vmul.f32 %v441, %v194
      %v444 = vadd.f32 %v442, %v197
      %v445 = vadd.f32 %v443, %v197
      %v446 = vmax.f32 %v444, 0.0
      %v447 = vmax.f32 %v445, 0.0
      %s448 = scalar_lea.vmem %s175, 120
      %v449 = vld [vmem:[%s448] sm:$0xf]
      %v450 = vld [vmem:[%s448 + $0x4] sm:$0xf]
      %v451 = vunpack.c.l.bf16 %v449
      %v452 = vunpack.c.l.bf16 %v450
      %v453 = vmul.f32 %v451, %v194
      %v454 = vmul.f32 %v452, %v194
      %v455 = vadd.f32 %v453, %v197
      %v456 = vadd.f32 %v454, %v197
      %v457 = vmax.f32 %v455, 0.0
      %v458 = vmax.f32 %v456, 0.0
      %461 = vrot.lane.b32.xlu0 %v457, 8
      %v462 = vpop.permute.xlu0 %461
      %463 = vrot.lane.b32.xlu0 %v458, 8
      %v464 = vpop.permute.xlu0 %463
      %v467 = vsel %vm221, %v446, %v462
      %v468 = vsel %vm221, %v447, %v464
      %s469 = scalar_lea.vmem %s186, 112
      %470 = vst.msk [vmem:[%s469] sm:$0xff] %vm224, %v467
      %471 = vst.msk [vmem:[%s469 + $0x8] sm:$0xff] %vm224, %v468
      %s472 = scalar_lea.vmem %s175, 128
      %v473 = vld [vmem:[%s472] sm:$0xf]
      %v474 = vld [vmem:[%s472 + $0x4] sm:$0xf]
      %v475 = vunpack.c.l.bf16 %v473
      %v476 = vunpack.c.l.bf16 %v474
      %v477 = vmul.f32 %v475, %v194
      %v478 = vmul.f32 %v476, %v194
      %v479 = vadd.f32 %v477, %v197
      %v480 = vadd.f32 %v478, %v197
      %v481 = vmax.f32 %v479, 0.0
      %v482 = vmax.f32 %v480, 0.0
      %s483 = scalar_lea.vmem %s175, 136
      %v484 = vld [vmem:[%s483] sm:$0xf]
      %v485 = vld [vmem:[%s483 + $0x4] sm:$0xf]
      %v486 = vunpack.c.l.bf16 %v484
      %v487 = vunpack.c.l.bf16 %v485
      %v488 = vmul.f32 %v486, %v194
      %v489 = vmul.f32 %v487, %v194
      %v490 = vadd.f32 %v488, %v197
      %v491 = vadd.f32 %v489, %v197
      %v492 = vmax.f32 %v490, 0.0
      %v493 = vmax.f32 %v491, 0.0
      %496 = vrot.lane.b32.xlu0 %v492, 8
      %v497 = vpop.permute.xlu0 %496
      %498 = vrot.lane.b32.xlu0 %v493, 8
      %v499 = vpop.permute.xlu0 %498
      %v502 = vsel %vm221, %v481, %v497
      %v503 = vsel %vm221, %v482, %v499
      %s504 = scalar_lea.vmem %s186, 128
      %505 = vst.msk [vmem:[%s504] sm:$0xff] %vm224, %v502
      %506 = vst.msk [vmem:[%s504 + $0x8] sm:$0xff] %vm224, %v503
      %s507 = scalar_lea.vmem %s175, 144
      %v508 = vld [vmem:[%s507] sm:$0xf]
      %v509 = vld [vmem:[%s507 + $0x4] sm:$0xf]
      %v510 = vunpack.c.l.bf16 %v508
      %v511 = vunpack.c.l.bf16 %v509
      %v512 = vmul.f32 %v510, %v194
      %v513 = vmul.f32 %v511, %v194
      %v514 = vadd.f32 %v512, %v197
      %v515 = vadd.f32 %v513, %v197
      %v516 = vmax.f32 %v514, 0.0
      %v517 = vmax.f32 %v515, 0.0
      %s518 = scalar_lea.vmem %s175, 152
      %v519 = vld [vmem:[%s518] sm:$0xf]
      %v520 = vld [vmem:[%s518 + $0x4] sm:$0xf]
      %v521 = vunpack.c.l.bf16 %v519
      %v522 = vunpack.c.l.bf16 %v520
      %v523 = vmul.f32 %v521, %v194
      %v524 = vmul.f32 %v522, %v194
      %v525 = vadd.f32 %v523, %v197
      %v526 = vadd.f32 %v524, %v197
      %v527 = vmax.f32 %v525, 0.0
      %v528 = vmax.f32 %v526, 0.0
      %531 = vrot.lane.b32.xlu0 %v527, 8
      %v532 = vpop.permute.xlu0 %531
      %533 = vrot.lane.b32.xlu0 %v528, 8
      %v534 = vpop.permute.xlu0 %533
      %v537 = vsel %vm221, %v516, %v532
      %v538 = vsel %vm221, %v517, %v534
      %s539 = scalar_lea.vmem %s186, 144
      %540 = vst.msk [vmem:[%s539] sm:$0xff] %vm224, %v537
      %541 = vst.msk [vmem:[%s539 + $0x8] sm:$0xff] %vm224, %v538
      %s542 = scalar_lea.vmem %s175, 160
      %v543 = vld [vmem:[%s542] sm:$0xf]
      %v544 = vld [vmem:[%s542 + $0x4] sm:$0xf]
      %v545 = vunpack.c.l.bf16 %v543
      %v546 = vunpack.c.l.bf16 %v544
      %v547 = vmul.f32 %v545, %v194
      %v548 = vmul.f32 %v546, %v194
      %v549 = vadd.f32 %v547, %v197
      %v550 = vadd.f32 %v548, %v197
      %v551 = vmax.f32 %v549, 0.0
      %v552 = vmax.f32 %v550, 0.0
      %s553 = scalar_lea.vmem %s175, 168
      %v554 = vld [vmem:[%s553] sm:$0xf]
      %v555 = vld [vmem:[%s553 + $0x4] sm:$0xf]
      %v556 = vunpack.c.l.bf16 %v554
      %v557 = vunpack.c.l.bf16 %v555
      %v558 = vmul.f32 %v556, %v194
      %v559 = vmul.f32 %v557, %v194
      %v560 = vadd.f32 %v558, %v197
      %v561 = vadd.f32 %v559, %v197
      %v562 = vmax.f32 %v560, 0.0
      %v563 = vmax.f32 %v561, 0.0
      %566 = vrot.lane.b32.xlu0 %v562, 8
      %v567 = vpop.permute.xlu0 %566
      %568 = vrot.lane.b32.xlu0 %v563, 8
      %v569 = vpop.permute.xlu0 %568
      %v572 = vsel %vm221, %v551, %v567
      %v573 = vsel %vm221, %v552, %v569
      %s574 = scalar_lea.vmem %s186, 160
      %575 = vst.msk [vmem:[%s574] sm:$0xff] %vm224, %v572
      %576 = vst.msk [vmem:[%s574 + $0x8] sm:$0xff] %vm224, %v573
      %s577 = scalar_lea.vmem %s175, 176
      %v578 = vld [vmem:[%s577] sm:$0xf]
      %v579 = vld [vmem:[%s577 + $0x4] sm:$0xf]
      %v580 = vunpack.c.l.bf16 %v578
      %v581 = vunpack.c.l.bf16 %v579
      %v582 = vmul.f32 %v580, %v194
      %v583 = vmul.f32 %v581, %v194
      %v584 = vadd.f32 %v582, %v197
      %v585 = vadd.f32 %v583, %v197
      %v586 = vmax.f32 %v584, 0.0
      %v587 = vmax.f32 %v585, 0.0
      %s588 = scalar_lea.vmem %s175, 184
      %v589 = vld [vmem:[%s588] sm:$0xf]
      %v590 = vld [vmem:[%s588 + $0x4] sm:$0xf]
      %v591 = vunpack.c.l.bf16 %v589
      %v592 = vunpack.c.l.bf16 %v590
      %v593 = vmul.f32 %v591, %v194
      %v594 = vmul.f32 %v592, %v194
      %v595 = vadd.f32 %v593, %v197
      %v596 = vadd.f32 %v594, %v197
      %v597 = vmax.f32 %v595, 0.0
      %v598 = vmax.f32 %v596, 0.0
      %601 = vrot.lane.b32.xlu0 %v597, 8
      %v602 = vpop.permute.xlu0 %601
      %603 = vrot.lane.b32.xlu0 %v598, 8
      %v604 = vpop.permute.xlu0 %603
      %v607 = vsel %vm221, %v586, %v602
      %v608 = vsel %vm221, %v587, %v604
      %s609 = scalar_lea.vmem %s186, 176
      %610 = vst.msk [vmem:[%s609] sm:$0xff] %vm224, %v607
      %611 = vst.msk [vmem:[%s609 + $0x8] sm:$0xff] %vm224, %v608
      %s612 = scalar_lea.vmem %s175, 192
      %v613 = vld [vmem:[%s612] sm:$0xf]
      %v614 = vld [vmem:[%s612 + $0x4] sm:$0xf]
      %v615 = vunpack.c.l.bf16 %v613
      %v616 = vunpack.c.l.bf16 %v614
      %v617 = vmul.f32 %v615, %v194
      %v618 = vmul.f32 %v616, %v194
      %v619 = vadd.f32 %v617, %v197
      %v620 = vadd.f32 %v618, %v197
      %v621 = vmax.f32 %v619, 0.0
      %v622 = vmax.f32 %v620, 0.0
      %s623 = scalar_lea.vmem %s175, 200
      %v624 = vld [vmem:[%s623] sm:$0xf]
      %v625 = vld [vmem:[%s623 + $0x4] sm:$0xf]
      %v626 = vunpack.c.l.bf16 %v624
      %v627 = vunpack.c.l.bf16 %v625
      %v628 = vmul.f32 %v626, %v194
      %v629 = vmul.f32 %v627, %v194
      %v630 = vadd.f32 %v628, %v197
      %v631 = vadd.f32 %v629, %v197
      %v632 = vmax.f32 %v630, 0.0
      %v633 = vmax.f32 %v631, 0.0
      %636 = vrot.lane.b32.xlu0 %v632, 8
      %v637 = vpop.permute.xlu0 %636
      %638 = vrot.lane.b32.xlu0 %v633, 8
      %v639 = vpop.permute.xlu0 %638
      %v642 = vsel %vm221, %v621, %v637
      %v643 = vsel %vm221, %v622, %v639
      %s644 = scalar_lea.vmem %s186, 192
      %645 = vst.msk [vmem:[%s644] sm:$0xff] %vm224, %v642
      %646 = vst.msk [vmem:[%s644 + $0x8] sm:$0xff] %vm224, %v643
      %s647 = scalar_lea.vmem %s175, 208
      %v648 = vld [vmem:[%s647] sm:$0xf]
      %v649 = vld [vmem:[%s647 + $0x4] sm:$0xf]
      %v650 = vunpack.c.l.bf16 %v648
      %v651 = vunpack.c.l.bf16 %v649
      %v652 = vmul.f32 %v650, %v194
      %v653 = vmul.f32 %v651, %v194
      %v654 = vadd.f32 %v652, %v197
      %v655 = vadd.f32 %v653, %v197
      %v656 = vmax.f32 %v654, 0.0
      %v657 = vmax.f32 %v655, 0.0
      %s658 = scalar_lea.vmem %s175, 216
      %v659 = vld [vmem:[%s658] sm:$0xf]
      %v660 = vld [vmem:[%s658 + $0x4] sm:$0xf]
      %v661 = vunpack.c.l.bf16 %v659
      %v662 = vunpack.c.l.bf16 %v660
      %v663 = vmul.f32 %v661, %v194
      %v664 = vmul.f32 %v662, %v194
      %v665 = vadd.f32 %v663, %v197
      %v666 = vadd.f32 %v664, %v197
      %v667 = vmax.f32 %v665, 0.0
      %v668 = vmax.f32 %v666, 0.0
      %671 = vrot.lane.b32.xlu0 %v667, 8
      %v672 = vpop.permute.xlu0 %671
      %673 = vrot.lane.b32.xlu0 %v668, 8
      %v674 = vpop.permute.xlu0 %673
      %v677 = vsel %vm221, %v656, %v672
      %v678 = vsel %vm221, %v657, %v674
      %s679 = scalar_lea.vmem %s186, 208
      %680 = vst.msk [vmem:[%s679] sm:$0xff] %vm224, %v677
      %681 = vst.msk [vmem:[%s679 + $0x8] sm:$0xff] %vm224, %v678
      %s682 = scalar_lea.vmem %s175, 224
      %v683 = vld [vmem:[%s682] sm:$0xf]
      %v684 = vld [vmem:[%s682 + $0x4] sm:$0xf]
      %v685 = vunpack.c.l.bf16 %v683
      %v686 = vunpack.c.l.bf16 %v684
      %v687 = vmul.f32 %v685, %v194
      %v688 = vmul.f32 %v686, %v194
      %v689 = vadd.f32 %v687, %v197
      %v690 = vadd.f32 %v688, %v197
      %v691 = vmax.f32 %v689, 0.0
      %v692 = vmax.f32 %v690, 0.0
      %s693 = scalar_lea.vmem %s175, 232
      %v694 = vld [vmem:[%s693] sm:$0xf]
      %v695 = vld [vmem:[%s693 + $0x4] sm:$0xf]
      %v696 = vunpack.c.l.bf16 %v694
      %v697 = vunpack.c.l.bf16 %v695
      %v698 = vmul.f32 %v696, %v194
      %v699 = vmul.f32 %v697, %v194
      %v700 = vadd.f32 %v698, %v197
      %v701 = vadd.f32 %v699, %v197
      %v702 = vmax.f32 %v700, 0.0
      %v703 = vmax.f32 %v701, 0.0
      %706 = vrot.lane.b32.xlu0 %v702, 8
      %v707 = vpop.permute.xlu0 %706
      %708 = vrot.lane.b32.xlu0 %v703, 8
      %v709 = vpop.permute.xlu0 %708
      %v712 = vsel %vm221, %v691, %v707
      %v713 = vsel %vm221, %v692, %v709
      %s714 = scalar_lea.vmem %s186, 224
      %715 = vst.msk [vmem:[%s714] sm:$0xff] %vm224, %v712
      %716 = vst.msk [vmem:[%s714 + $0x8] sm:$0xff] %vm224, %v713
      %s717 = scalar_lea.vmem %s175, 240
      %v718 = vld [vmem:[%s717] sm:$0xf]
      %v719 = vld [vmem:[%s717 + $0x4] sm:$0xf]
      %v720 = vunpack.c.l.bf16 %v718
      %v721 = vunpack.c.l.bf16 %v719
      %v722 = vmul.f32 %v720, %v194
      %v723 = vmul.f32 %v721, %v194
      %v724 = vadd.f32 %v722, %v197
      %v725 = vadd.f32 %v723, %v197
      %v726 = vmax.f32 %v724, 0.0
      %v727 = vmax.f32 %v725, 0.0
      %s728 = scalar_lea.vmem %s175, 248
      %v729 = vld [vmem:[%s728] sm:$0xf]
      %v730 = vld [vmem:[%s728 + $0x4] sm:$0xf]
      %v731 = vunpack.c.l.bf16 %v729
      %v732 = vunpack.c.l.bf16 %v730
      %v733 = vmul.f32 %v731, %v194
      %v734 = vmul.f32 %v732, %v194
      %v735 = vadd.f32 %v733, %v197
      %v736 = vadd.f32 %v734, %v197
      %v737 = vmax.f32 %v735, 0.0
      %v738 = vmax.f32 %v736, 0.0
      %741 = vrot.lane.b32.xlu0 %v737, 8
      %v742 = vpop.permute.xlu0 %741
      %743 = vrot.lane.b32.xlu0 %v738, 8
      %v744 = vpop.permute.xlu0 %743
      %v747 = vsel %vm221, %v726, %v742
      %v748 = vsel %vm221, %v727, %v744
      %s749 = scalar_lea.vmem %s186, 240
      %750 = vst.msk [vmem:[%s749] sm:$0xff] %vm224, %v747
      %751 = vst.msk [vmem:[%s749 + $0x8] sm:$0xff] %vm224, %v748
      %s752 = smul.u32 16, %s18
      %p753 = scmp.lt.s32.totalorder %s17, 1
      %s754 = scalar_select %p753, %s17, 1
      %p755 = scmp.lt.s32.totalorder %s752, 31
      %s756 = scalar_select %p755, %s752, 31
      %s757 = smul.addr %s756, 2
      %s758 = smul.addr %s754, 64
      %s759 = sadd.s32 %s757, %s758
      %s760 = smul.addr %s759, 8
      %s761 = scalar_lea.vmem %s2, %s760
      // Predicated region
      $region29: #{deconv_bn_relu.3} parent=27 // pred_check
        %p762 = pneg %p94
      $region30: #{deconv_bn_relu.3} parent=27 // pred_check_branch
        %764 = sbr.rel (%p762) target = $region32
      $region31: #{deconv_bn_relu.3} parent=27 // pred_region
        %s765 = smul.u32 16, %s18
      $region32: #{deconv_bn_relu.3} parent=27 // pred_fallthru
        _
    $region28: #{deconv_bn_relu.3} parent=5 // pred_fallthru
      _
    %p766 = scmp.le.s32.totalorder 2, %s8
    // Predicated region
    $region33: #{deconv_bn_relu.3} parent=5 // pred_check
      %p767 = pneg %p766
    $region34: #{deconv_bn_relu.3} parent=5 // pred_check_branch
      %769 = sbr.rel (%p767) target = $region36
    $region35: #{deconv_bn_relu.3} parent=5 // pred_region
      %s770 = ssub.s32 %s8, 2
      // Predicated region
      $region37: #{deconv_bn_relu.3} parent=35 // pred_check
        %p771 = pneg %p100
      $region38: #{deconv_bn_relu.3} parent=35 // pred_check_branch
        %773 = sbr.rel (%p771) target = $region40
      $region39: #{deconv_bn_relu.3} parent=35 // pred_region
        %s774 = smul.u32 16, %s20
        %p775 = scmp.lt.s32.totalorder %s19, 1
        %s776 = scalar_select %p775, %s19, 1
        %p777 = scmp.lt.s32.totalorder %s774, 31
        %s778 = scalar_select %p777, %s774, 31
        %s779 = smul.addr %s778, 2
        %s780 = smul.addr %s776, 64
        %s781 = sadd.s32 %s779, %s780
        %s782 = smul.addr %s781, 8
        %s783 = scalar_lea.vmem %s2, %s782
      $region40: #{deconv_bn_relu.3} parent=35 // pred_fallthru
        _
    $region36: #{deconv_bn_relu.3} parent=5 // pred_fallthru
      _
  $region6: #{deconv_bn_relu.3} parent=0 // loop_footer
    %s12 = sadd.s32 1, %s8
  $region7: #{deconv_bn_relu.3} parent=0 // loop_footer_branch
    %7 = sbr.rel target = $region3
  $region8: #{deconv_bn_relu.3} parent=0 // loop_exit
    _

// kernel: deconv_bn_relu.2
$region0: #{deconv_bn_relu.2}
  #allocation0 [shape = 'u32[]', space=smem, size = 0x4, offset = 0x4, fixed_abs, tag = 'smem constant byte address 0x4 - core index']
  #allocation1 [shape = 'u32[72,128]{1,0:T(1,128)}', space=vmem, size = 0x9000, scoped, tag = 'internal scratch']
  %s0 = inlined_call_operand.vmem [shape: bf16[2,18,18,4], index: 0, kind: input, shape index: {}, may-alias: {0,1}]
  %s1 = inlined_call_operand.vmem [shape: bf16[2,18,18,4], index: 1, kind: input, shape index: {}, may-alias: {0,1}]
  %s2 = inlined_call_operand.vmem [shape: bf16[4,16,128], index: 2, kind: input, shape index: {}]
  %s3 = inlined_call_operand.vmem [shape: bf16[2,16,4,16,128], index: 3, kind: output, shape index: {0}]
  %s4 = inlined_call_operand.vmem [shape: f32[2,2,2,128], index: 4, kind: output, shape index: {1}]
  %5 = xla_tuple %s3, %s4
  %s6 = sld [smem:[#allocation0]]
  $region53: #{deconv_bn_relu.2} parent=0
    _
  %s8 = ssub.s32 1, %s6
  %s9 = scalar_select 0, %s8, %s6
  loop: start=0, step=1, limit=6
  $region2: #{deconv_bn_relu.2} parent=0 // loop_pre_header
    _
  $region3: #{deconv_bn_relu.2} parent=0 // loop_header
    %s11 = sphi 0, %s15
    %p12 = scmp.ge.s32.totalorder %s11, 6
    %s18 = sphi 0, %s30
    %s19 = sphi 0, %s26
    %s20 = sphi 0, %s18
    %s21 = sphi 0, %s19
    %s22 = sphi 0, %s20
    %s23 = sphi 0, %s21
    %s35 = sphi 0, %s37
    %s38 = sphi 0, %s35
    %s39 = sphi 0, %s38
    %s55 = sphi 0, %s39
    %s67 = sphi 0, %s69
    %s70 = sphi 0, %s67
    %s71 = sphi 0, %s70
    %s87 = sphi 0, %s71
    %s91 = sphi 0, %s91
    %s93 = sphi 0, %s91
    %s94 = sphi 0, %s93
    %s108 = sphi 0, %s94
    %s116 = sphi 0, %s118
    %s119 = sphi 0, %s116
    %s120 = sphi 0, %s119
    %s136 = sphi 0, %s120
    %s144 = sphi 0, %s146
    %s147 = sphi 0, %s144
    %s148 = sphi 0, %s147
    %s164 = sphi 0, %s148
  $region4: #{deconv_bn_relu.2} parent=0 // loop_header_branch
    %14 = sbr.rel (%p12) target = $region8
  $region5: #{deconv_bn_relu.2} parent=0 // loop_body
    %s16 = ssub.s32 %s11, 1
    %s17 = ssub.s32 %s11, 2
    %s24 = sadd.s32 1, %s19
    %p25 = scmp.ge.s32.totalorder %s24, 2
    %s26 = scalar_select %p25, 0, %s24
    %s27 = sadd.s32 1, %s18
    %s28 = scalar_select %p25, %s27, %s18
    %p29 = scmp.ge.s32.totalorder %s28, 2
    %s30 = scalar_select %p29, 0, %s28
    %s31 = ssub.s32 %s18, %s30
    %s32 = ssub.s32 %s19, %s26
    %s33 = sor.u32 %s31, %s32
    %p34 = scmp.eq.s32.totalorder %s33, 0
    %s36 = sadd.s32 %s35, 1
    %s37 = scalar_select %p34, %s35, %s36
    %p40 = pneg %p34
    %p41 = scmp.eq.s32.totalorder %s11, 3
    %p42 = por %p40, %p41
    %p43 = scmp.ne.s32.totalorder %s35, %s38
    %p44 = scmp.eq.s32.totalorder %s11, 0
    %p45 = por %p43, %p44
    %p46 = scmp.ne.s32.totalorder %s35, %s38
    %p47 = scmp.eq.s32.totalorder %s16, 3
    %p48 = por %p46, %p47
    %p49 = scmp.ne.s32.totalorder %s38, %s39
    %p50 = scmp.eq.s32.totalorder %s16, 0
    %p51 = por %p49, %p50
    %p52 = scmp.ne.s32.totalorder %s38, %s39
    %p53 = scmp.eq.s32.totalorder %s17, 3
    %p54 = por %p52, %p53
    %p56 = scmp.ne.s32.totalorder %s39, %s55
    %p57 = scmp.eq.s32.totalorder %s17, 0
    %p58 = por %p56, %p57
    %s59 = sadd.s32 %s19, 1
    %s60 = smul.u32 %s59, 4
    %s61 = sadd.s32 %s26, 1
    %s62 = smul.u32 %s61, 4
    %s63 = ssub.s32 %s18, %s30
    %s64 = ssub.s32 %s60, %s62
    %s65 = sor.u32 %s63, %s64
    %p66 = scmp.eq.s32.totalorder %s65, 0
    %s68 = sadd.s32 %s67, 1
    %s69 = scalar_select %p66, %s67, %s68
    %p72 = pneg %p66
    %p73 = scmp.eq.s32.totalorder %s11, 3
    %p74 = por %p72, %p73
    %p75 = scmp.ne.s32.totalorder %s67, %s70
    %p76 = scmp.eq.s32.totalorder %s11, 0
    %p77 = por %p75, %p76
    %p78 = scmp.ne.s32.totalorder %s67, %s70
    %p79 = scmp.eq.s32.totalorder %s16, 3
    %p80 = por %p78, %p79
    %p81 = scmp.ne.s32.totalorder %s70, %s71
    %p82 = scmp.eq.s32.totalorder %s16, 0
    %p83 = por %p81, %p82
    %p84 = scmp.ne.s32.totalorder %s70, %s71
    %p85 = scmp.eq.s32.totalorder %s17, 3
    %p86 = por %p84, %p85
    %p88 = scmp.ne.s32.totalorder %s71, %s87
    %p89 = scmp.eq.s32.totalorder %s17, 0
    %p90 = por %p88, %p89
    %s92 = sadd.s32 %s91, 1
    %p95 = scmp.eq.s32.totalorder %s11, 3
    %p96 = scmp.ne.s32.totalorder %s91, %s93
    %p97 = scmp.eq.s32.totalorder %s11, 0
    %p98 = por %p96, %p97
    %p99 = scmp.ne.s32.totalorder %s91, %s93
    %p100 = scmp.eq.s32.totalorder %s16, 3
    %p101 = por %p99, %p100
    %p102 = scmp.ne.s32.totalorder %s93, %s94
    %p103 = scmp.eq.s32.totalorder %s16, 0
    %p104 = por %p102, %p103
    %p105 = scmp.ne.s32.totalorder %s93, %s94
    %p106 = scmp.eq.s32.totalorder %s17, 3
    %p107 = por %p105, %p106
    %p109 = scmp.ne.s32.totalorder %s94, %s108
    %p110 = scmp.eq.s32.totalorder %s17, 0
    %p111 = por %p109, %p110
    %s112 = ssub.s32 %s18, %s30
    %s113 = ssub.s32 %s19, %s26
    %s114 = sor.u32 %s112, %s113
    %p115 = scmp.eq.s32.totalorder %s114, 0
    %s117 = sadd.s32 %s116, 1
    %s118 = scalar_select %p115, %s116, %s117
    %p121 = pneg %p115
    %p122 = scmp.eq.s32.totalorder %s11, 3
    %p123 = por %p121, %p122
    %p124 = scmp.ne.s32.totalorder %s116, %s119
    %p125 = scmp.eq.s32.totalorder %s11, 0
    %p126 = por %p124, %p125
    %p127 = scmp.ne.s32.totalorder %s116, %s119
    %p128 = scmp.eq.s32.totalorder %s16, 3
    %p129 = por %p127, %p128
    %p130 = scmp.ne.s32.totalorder %s119, %s120
    %p131 = scmp.eq.s32.totalorder %s16, 0
    %p132 = por %p130, %p131
    %p133 = scmp.ne.s32.totalorder %s119, %s120
    %p134 = scmp.eq.s32.totalorder %s17, 3
    %p135 = por %p133, %p134
    %p137 = scmp.ne.s32.totalorder %s120, %s136
    %p138 = scmp.eq.s32.totalorder %s17, 0
    %p139 = por %p137, %p138
    %s140 = ssub.s32 %s18, %s30
    %s141 = ssub.s32 %s19, %s26
    %s142 = sor.u32 %s140, %s141
    %p143 = scmp.eq.s32.totalorder %s142, 0
    %s145 = sadd.s32 %s144, 1
    %s146 = scalar_select %p143, %s144, %s145
    %p149 = pneg %p143
    %p150 = scmp.eq.s32.totalorder %s11, 3
    %p151 = por %p149, %p150
    %p152 = scmp.ne.s32.totalorder %s144, %s147
    %p153 = scmp.eq.s32.totalorder %s11, 0
    %p154 = por %p152, %p153
    %p155 = scmp.ne.s32.totalorder %s144, %s147
    %p156 = scmp.eq.s32.totalorder %s16, 3
    %p157 = por %p155, %p156
    %p158 = scmp.ne.s32.totalorder %s147, %s148
    %p159 = scmp.eq.s32.totalorder %s16, 0
    %p160 = por %p158, %p159
    %p161 = scmp.ne.s32.totalorder %s147, %s148
    %p162 = scmp.eq.s32.totalorder %s17, 3
    %p163 = por %p161, %p162
    %p165 = scmp.ne.s32.totalorder %s148, %s164
    %p166 = scmp.eq.s32.totalorder %s17, 0
    %p167 = por %p165, %p166
    %p168 = scmp.le.s32.totalorder 1, %s11
    %p169 = scmp.lt.s32.totalorder %s11, 5
    %p170 = pnand %p168, %p169
    %p171 = pneg %p170
    // Predicated region
    $region9: #{deconv_bn_relu.2} parent=5 // pred_check
      _
    $region10: #{deconv_bn_relu.2} parent=5 // pred_check_branch
      %173 = sbr.rel (%p170) target = $region12
    $region11: #{deconv_bn_relu.2} parent=5 // pred_region
      %s174 = ssub.s32 %s11, 1
      // Predicated region
      $region13: #{deconv_bn_relu.2} parent=11 // pred_check
        %p175 = pneg %p104
      $region14: #{deconv_bn_relu.2} parent=11 // pred_check_branch
        %177 = sbr.rel (%p175) target = $region16
      $region15: #{deconv_bn_relu.2} parent=11 // pred_region
        _
      $region16: #{deconv_bn_relu.2} parent=11 // pred_fallthru
        _
    $region12: #{deconv_bn_relu.2} parent=5 // pred_fallthru
      _
    %p178 = scmp.lt.s32.totalorder %s11, 4
    // Predicated region
    $region17: #{deconv_bn_relu.2} parent=5 // pred_check
      %p179 = pneg %p178
    $region18: #{deconv_bn_relu.2} parent=5 // pred_check_branch
      %181 = sbr.rel (%p179) target = $region20
    $region19: #{deconv_bn_relu.2} parent=5 // pred_region
      // Predicated region
      $region21: #{deconv_bn_relu.2} parent=19 // pred_check
        %p182 = pneg %p45
      $region22: #{deconv_bn_relu.2} parent=19 // pred_check_branch
        %184 = sbr.rel (%p182) target = $region24
      $region23: #{deconv_bn_relu.2} parent=19 // pred_region
        %s185 = smul.u32 8, %s19
        %s186 = ssub.s32 18, %s185
        %p187 = scmp.lt.s32.totalorder %s186, 8
        %s188 = scalar_select %p187, %s186, 8
        %s189 = smul.u32 4, %s188
        %s190 = smul.u32 %s189, 3
        %p191 = scmp.lt.s32.totalorder %s18, 1
        %s192 = scalar_select %p191, %s18, 1
        %p193 = scmp.lt.s32.totalorder %s185, 17
        %s194 = scalar_select %p193, %s185, 17
        %s195 = smul.addr %s194, 3
        %s196 = smul.addr %s192, 54
        %s197 = sadd.s32 %s195, %s196
        %s198 = smul.addr %s197, 4
        %s199 = scalar_lea.vmem %s0, %s198
        %s200 = smul.u32 8, %s19
        %s201 = ssub.s32 18, %s200
        %p202 = scmp.lt.s32.totalorder %s201, 8
        %s203 = scalar_select %p202, %s201, 8
        %s204 = smul.u32 4, %s203
        %s205 = smul.u32 %s204, 3
      $region24: #{deconv_bn_relu.2} parent=19 // pred_fallthru
        _
      // Predicated region
      $region25: #{deconv_bn_relu.2} parent=19 // pred_check
        %p206 = pneg %p77
      $region26: #{deconv_bn_relu.2} parent=19 // pred_check_branch
        %208 = sbr.rel (%p206) target = $region28
      $region27: #{deconv_bn_relu.2} parent=19 // pred_region
        %s209 = sadd.s32 %s19, 1
        %s210 = smul.u32 %s209, 4
        %s211 = smul.u32 2, %s210
        %p212 = scmp.lt.s32.totalorder %s18, 1
        %s213 = scalar_select %p212, %s18, 1
        %p214 = scmp.lt.s32.totalorder %s211, 17
        %s215 = scalar_select %p214, %s211, 17
        %s216 = smul.addr %s215, 3
        %s217 = smul.addr %s213, 54
        %s218 = sadd.s32 %s216, %s217
        %s219 = smul.addr %s218, 4
        %s220 = scalar_lea.vmem %s1, %s219
        %s221 = sadd.s32 %s19, 1
        %s222 = smul.u32 %s221, 4
        %s223 = smul.u32 2, %s222
      $region28: #{deconv_bn_relu.2} parent=19 // pred_fallthru
        _
    $region20: #{deconv_bn_relu.2} parent=5 // pred_fallthru
      _
    %p224 = scmp.le.s32.totalorder 1, %s11
    %p225 = scmp.lt.s32.totalorder %s11, 5
    %p226 = pnand %p224, %p225
    %p227 = pneg %p226
    // Predicated region
    $region29: #{deconv_bn_relu.2} parent=5 // pred_check
      _
    $region30: #{deconv_bn_relu.2} parent=5 // pred_check_branch
      %229 = sbr.rel (%p226) target = $region32
    $region31: #{deconv_bn_relu.2} parent=5 // pred_region
      %s230 = ssub.s32 %s11, 1
      %s231 = smul.u32 8, %s21
      %s232 = ssub.s32 18, %s231
      %p233 = scmp.lt.s32.totalorder %s232, 8
      %s234 = scalar_select %p233, %s232, 8
      %s235 = smul.u32 4, %s234
      %s236 = smul.u32 %s235, 3
      %p237 = scmp.lt.s32.totalorder %s20, 1
      %s238 = scalar_select %p237, %s20, 1
      %p239 = scmp.lt.s32.totalorder %s231, 17
      %s240 = scalar_select %p239, %s231, 17
      %s241 = smul.addr %s240, 3
      %s242 = smul.addr %s238, 54
      %s243 = sadd.s32 %s241, %s242
      %s244 = smul.addr %s243, 4
      %s245 = scalar_lea.vmem %s0, %s244
      %p246 = pneg %p51
      %p247 = pneg %p48
      %s248 = sadd.s32 %s21, 1
      %s249 = smul.u32 %s248, 4
      %s250 = smul.u32 2, %s249
      %p251 = scmp.lt.s32.totalorder %s20, 1
      %s252 = scalar_select %p251, %s20, 1
      %p253 = scmp.lt.s32.totalorder %s250, 17
      %s254 = scalar_select %p253, %s250, 17
      %s255 = smul.addr %s254, 3
      %s256 = smul.addr %s252, 54
      %s257 = sadd.s32 %s255, %s256
      %s258 = smul.addr %s257, 4
      %s259 = scalar_lea.vmem %s1, %s258
      %p260 = pneg %p83
      %p261 = pneg %p80
      %p262 = pneg %p104
      %p263 = pneg %p101
      %p264 = pneg %p132
      %p265 = pneg %p129
      %s266 = smul.u32 8, %s21
      %p267 = scmp.lt.s32.totalorder %s20, 1
      %s268 = scalar_select %p267, %s20, 1
      %p269 = scmp.lt.s32.totalorder %s266, 15
      %s270 = scalar_select %p269, %s266, 15
      %s271 = smul.addr %s270, 8
      %s272 = smul.addr %s268, 128
      %s273 = sadd.s32 %s271, %s272
      %s274 = smul.addr %s273, 4
      %s275 = scalar_lea.vmem %s3, %s274
      %p276 = pneg %p160
      %p277 = pneg %p157
      %p278 = scmp.lt.s32.totalorder %s20, 1
      %s279 = scalar_select %p278, %s20, 1
      %p280 = scmp.lt.s32.totalorder %s21, 1
      %s281 = scalar_select %p280, %s21, 1
      %s282 = smul.addr %s279, 2
      %s283 = sadd.s32 %s281, %s282
      %s284 = smul.addr %s283, 2
      %s285 = scalar_lea.vmem %s4, %s284
      %s286 = smul.u32 8, %s21
      %s287 = ssub.s32 18, %s286
      %p288 = scmp.lt.s32.totalorder %s287, 8
      %s289 = scalar_select %p288, %s287, 8
      %s290 = smul.u32 4, %s289
      %s291 = smul.u32 %s290, 3
      %p292 = scmp.lt.s32.totalorder %s20, 1
      %s293 = scalar_select %p292, %s20, 1
      %p294 = scmp.lt.s32.totalorder %s286, 17
      %s295 = scalar_select %p294, %s286, 17
      %s296 = smul.addr %s295, 3
      %s297 = smul.addr %s293, 54
      %s298 = sadd.s32 %s296, %s297
      %s299 = smul.addr %s298, 4
      %s300 = scalar_lea.vmem %s0, %s299
      %s301 = smul.u32 8, %s21
      %s302 = ssub.s32 18, %s301
      %p303 = scmp.lt.s32.totalorder %s302, 8
      %s304 = scalar_select %p303, %s302, 8
      %s305 = smul.u32 4, %s304
      %s306 = smul.u32 %s305, 3
      %s307 = sadd.s32 %s21, 1
      %s308 = smul.u32 %s307, 4
      %s309 = smul.u32 2, %s308
      %p310 = scmp.lt.s32.totalorder %s20, 1
      %s311 = scalar_select %p310, %s20, 1
      %p312 = scmp.lt.s32.totalorder %s309, 17
      %s313 = scalar_select %p312, %s309, 17
      %s314 = smul.addr %s313, 3
      %s315 = smul.addr %s311, 54
      %s316 = sadd.s32 %s314, %s315
      %s317 = smul.addr %s316, 4
      %s318 = scalar_lea.vmem %s1, %s317
      %s319 = sadd.s32 %s21, 1
      %s320 = smul.u32 %s319, 4
      %s321 = smul.u32 2, %s320
      %s322 = smul.u32 8, %s21
      %p323 = scmp.lt.s32.totalorder %s20, 1
      %s324 = scalar_select %p323, %s20, 1
      %p325 = scmp.lt.s32.totalorder %s322, 15
      %s326 = scalar_select %p325, %s322, 15
      %s327 = smul.addr %s326, 8
      %s328 = smul.addr %s324, 128
      %s329 = sadd.s32 %s327, %s328
      %s330 = smul.addr %s329, 4
      %s331 = scalar_lea.vmem %s3, %s330
      %s332 = smul.u32 8, %s21
      %p333 = scmp.lt.s32.totalorder %s20, 1
      %s334 = scalar_select %p333, %s20, 1
      %p335 = scmp.lt.s32.totalorder %s21, 1
      %s336 = scalar_select %p335, %s21, 1
      %s337 = smul.addr %s334, 2
      %s338 = sadd.s32 %s336, %s337
      %s339 = smul.addr %s338, 2
      %s340 = scalar_lea.vmem %s4, %s339
      %v342 = vld [vmem:[%s300] sm:$0xf]
      %v343 = vld [vmem:[%s300 + $0x4] sm:$0xf]
      %v344 = vld [vmem:[%s300 + $0x8] sm:$0x1]
      %s345 = scalar_lea.vmem %s300, 12
      %v346 = vld [vmem:[%s345] sm:$0xf]
      %v347 = vld [vmem:[%s345 + $0x4] sm:$0xf]
      %v348 = vld [vmem:[%s345 + $0x8] sm:$0x1]
      %v351 = vunpack.c.l.b16 %v342
      %v352 = vunpack.c.l.b16 %v343
      %v353 = vpack.c.b16 %v352, %v351
      %v355 = vunpack.c.l.b16 %v344
      %v356 = vpack.c.b16 %v355, %v355
      %vm357 = vsmask.f32 7424
      %v359 = vshrl.u32 %v353, 16
      %v361 = vshll.u32 %v353, 16
      %v363 = vrot.slane %v361, 1
      %v364 = vor.u32 %v359, %v363
      %v366 = vshll.u32 %v356, 16
      %v368 = vrot.slane %v366, 1
      %v369 = vsel %vm357, %v364, %v368
      %370 = vrot.lane.b32.xlu0 %v369, 4
      %v371 = vpop.permute.xlu0 %370
      %v374 = vunpack.c.l.b16 %v346
      %v375 = vunpack.c.l.b16 %v347
      %v376 = vpack.c.b16 %v375, %v374
      %377 = vrot.lane.b32.xlu0 %v376, 8
      %v378 = vpop.permute.xlu0 %377
      %v380 = vunpack.c.l.b16 %v348
      %v381 = vpack.c.b16 %v380, %v380
      %v383 = vshrl.u32 %v376, 16
      %v385 = vshll.u32 %v376, 16
      %v387 = vrot.slane %v385, 1
      %v388 = vor.u32 %v383, %v387
      %v390 = vshll.u32 %v381, 16
      %v392 = vrot.slane %v390, 1
      %v393 = vsel %vm357, %v388, %v392
      %394 = vrot.lane.b32.xlu0 %v393, 12
      %v395 = vpop.permute.xlu0 %394
      %vm396 = vcmask 31744
      %v398 = vsel %vm396, %v353, %v371
      %vm399 = vcmask 64512
      %v401 = vsel %vm399, %v398, %v378
      %vm402 = vcmask 97280
      %v404 = vsel %vm402, %v401, %v395
      %v405 = vld [vmem:[%s2] sm:$0xf]
      %v406 = vld [vmem:[%s2 + $0x4] sm:$0xf]
      %v409 = vunpack.c.l.b16 %v405
      %v410 = vunpack.c.l.b16 %v406
      %v411 = vpack.c.b16 %v410, %v409
      %vm413 = vcmask 130048
      %v414 = vsel %vm413, %v404, 0
      %416 = vmatpush.bf16.msra.mxu0 0
      %417 = vmatpush.bf16.msra.mxu0 0
      %418 = vmatpush.bf16.msra.mxu0 0
      %419 = vmatpush.bf16.msra.mxu0 0
      %420 = vmatpush.bf16.msra.mxu0 0
      %421 = vmatpush.bf16.msra.mxu0 0
      %422 = vmatpush.bf16.msra.mxu0 0
      %423 = vmatpush.bf16.msra.mxu0 %v411
      %424 = vmatmul.bf16.gmra.mxu0 %v414
      %v425 = vpop.f32.mrf.mxu0
      %v426 = vadd.f32 0.0, %v425
      %v427 = vpop.f32.mrf.mxu0
      %v428 = vadd.f32 0.0, %v427
      %429 = vdwg.mxu0
      %v430 = vadd.f32 %v426, %v428
      %v431 = vrot.slane %v430, 4
      %v432 = vadd.f32 %v430, %v431
      %v433 = vrot.slane %v432, 2
      %v434 = vadd.f32 %v432, %v433
      %v435 = vrot.slane %v434, 1
      %v436 = vadd.f32 %v434, %v435
      %v437 = vadd.f32 %v436, 0.0
      %v438 = vmul.f32 %v426, %v426
      %v439 = vmul.f32 %v428, %v428
      %v440 = vadd.f32 %v438, %v439
      %v441 = vrot.slane %v440, 4
      %v442 = vadd.f32 %v440, %v441
      %v443 = vrot.slane %v442, 2
      %v444 = vadd.f32 %v442, %v443
      %v445 = vrot.slane %v444, 1
      %v446 = vadd.f32 %v444, %v445
      %v447 = vadd.f32 %v446, 0.0
      %v448 = vpack.c.bf16 %v426, %v426
      %v449 = vpack.c.bf16 %v428, %v428
      %450 = vst [vmem:[%s331] sm:$0xf] %v448
      %451 = vst [vmem:[%s331 + $0x4] sm:$0xf] %v449
      %v452 = vshrl.u32 %v356, 16
      %454 = vrot.lane.b32.xlu0 %v452, 4
      %v455 = vpop.permute.xlu0 %454
      %456 = vrot.lane.b32.xlu0 %v381, 8
      %v457 = vpop.permute.xlu0 %456
      %v458 = vshrl.u32 %v381, 16
      %460 = vrot.lane.b32.xlu0 %v458, 12
      %v461 = vpop.permute.xlu0 %460
      %v463 = vsel %vm396, %v356, %v455
      %v465 = vsel %vm399, %v463, %v457
      %v467 = vsel %vm402, %v465, %v461
      %s468 = scalar_lea.vmem %s2, 8
      %v469 = vld [vmem:[%s468] sm:$0xf]
      %v470 = vld [vmem:[%s468 + $0x4] sm:$0xf]
      %v471 = vshrl.u32 %v404, 16
      %v473 = vshll.u32 %v404, 16
      %v475 = vrot.slane %v473, 1
      %v476 = vor.u32 %v471, %v475
      %v477 = vshll.u32 %v467, 16
      %v479 = vrot.slane %v477, 1
      %v480 = vsel %vm357, %v476, %v479
      %v483 = vunpack.c.l.b16 %v469
      %v484 = vunpack.c.l.b16 %v470
      %v485 = vpack.c.b16 %v484, %v483
      %v488 = vsel %vm413, %v480, 0
      %490 = vmatpush.bf16.msra.mxu0 0
      %491 = vmatpush.bf16.msra.mxu0 0
      %492 = vmatpush.bf16.msra.mxu0 0
      %493 = vmatpush.bf16.msra.mxu0 0
      %494 = vmatpush.bf16.msra.mxu0 0
      %495 = vmatpush.bf16.msra.mxu0 0
      %496 = vmatpush.bf16.msra.mxu0 0
      %497 = vmatpush.bf16.msra.mxu0 %v485
      %498 = vmatmul.bf16.gmra.mxu0 %v488
      %v499 = vpop.f32.mrf.mxu0
      %v500 = vadd.f32 0.0, %v499
      %v501 = vpop.f32.mrf.mxu0
      %v502 = vadd.f32 0.0, %v501
      %503 = vdwg.mxu0
      %v504 = vadd.f32 %v500, %v502
      %v505 = vrot.slane %v504, 4
      %v506 = vadd.f32 %v504, %v505
      %v507 = vrot.slane %v506, 2
      %v508 = vadd.f32 %v506, %v507
      %v509 = vrot.slane %v508, 1
      %v510 = vadd.f32 %v508, %v509
      %v511 = vadd.f32 %v437, %v510
      %v512 = vmul.f32 %v500, %v500
      %v513 = vmul.f32 %v502, %v502
      %v514 = vadd.f32 %v512, %v513
      %v515 = vrot.slane %v514, 4
      %v516 = vadd.f32 %v514, %v515
      %v517 = vrot.slane %v516, 2
      %v518 = vadd.f32 %v516, %v517
      %v519 = vrot.slane %v518, 1
      %v520 = vadd.f32 %v518, %v519
      %v521 = vadd.f32 %v447, %v520
      %v522 = vpack.c.bf16 %v500, %v500
      %v523 = vpack.c.bf16 %v502, %v502
      %s524 = scalar_lea.vmem %s331, 8
      %525 = vst [vmem:[%s524] sm:$0xf] %v522
      %526 = vst [vmem:[%s524 + $0x4] sm:$0xf] %v523
      %v527 = vld [vmem:[%s345] sm:$0xf]
      %v528 = vld [vmem:[%s345 + $0x4] sm:$0xf]
      %v529 = vld [vmem:[%s345 + $0x8] sm:$0x1]
      %s530 = scalar_lea.vmem %s300, 24
      %v531 = vld [vmem:[%s530] sm:$0xf]
      %v532 = vld [vmem:[%s530 + $0x4] sm:$0xf]
      %v533 = vld [vmem:[%s530 + $0x8] sm:$0x1]
      %v536 = vunpack.c.l.b16 %v527
      %v537 = vunpack.c.l.b16 %v528
      %v538 = vpack.c.b16 %v537, %v536
      %v540 = vunpack.c.l.b16 %v529
      %v541 = vpack.c.b16 %v540, %v540
      %v543 = vshrl.u32 %v538, 16
      %v545 = vshll.u32 %v538, 16
      %v547 = vrot.slane %v545, 1
      %v548 = vor.u32 %v543, %v547
      %v550 = vshll.u32 %v541, 16
      %v552 = vrot.slane %v550, 1
      %v553 = vsel %vm357, %v548, %v552
      %554 = vrot.lane.b32.xlu0 %v553, 4
      %v555 = vpop.permute.xlu0 %554
      %v558 = vunpack.c.l.b16 %v531
      %v559 = vunpack.c.l.b16 %v532
      %v560 = vpack.c.b16 %v559, %v558
      %561 = vrot.lane.b32.xlu0 %v560, 8
      %v562 = vpop.permute.xlu0 %561
      %v564 = vunpack.c.l.b16 %v533
      %v565 = vpack.c.b16 %v564, %v564
      %v567 = vshrl.u32 %v560, 16
      %v569 = vshll.u32 %v560, 16
      %v571 = vrot.slane %v569, 1
      %v572 = vor.u32 %v567, %v571
      %v574 = vshll.u32 %v565, 16
      %v576 = vrot.slane %v574, 1
      %v577 = vsel %vm357, %v572, %v576
      %578 = vrot.lane.b32.xlu0 %v577, 12
      %v579 = vpop.permute.xlu0 %578
      %v581 = vsel %vm396, %v538, %v555
      %v583 = vsel %vm399, %v581, %v562
      %v585 = vsel %vm402, %v583, %v579
      %s586 = scalar_lea.vmem %s2, 16
      %v587 = vld [vmem:[%s586] sm:$0xf]
      %v588 = vld [vmem:[%s586 + $0x4] sm:$0xf]
      %v591 = vunpack.c.l.b16 %v587
      %v592 = vunpack.c.l.b16 %v588
      %v593 = vpack.c.b16 %v592, %v591
      %v595 = vsel %vm413, %v585, 0
      %597 = vmatpush.bf16.msra.mxu0 0
      %598 = vmatpush.bf16.msra.mxu0 0
      %599 = vmatpush.bf16.msra.mxu0 0
      %600 = vmatpush.bf16.msra.mxu0 0
      %601 = vmatpush.bf16.msra.mxu0 0
      %602 = vmatpush.bf16.msra.mxu0 0
      %603 = vmatpush.bf16.msra.mxu0 0
      %604 = vmatpush.bf16.msra.mxu0 %v593
      %605 = vmatmul.bf16.gmra.mxu0 %v595
      %v606 = vpop.f32.mrf.mxu0
      %v607 = vadd.f32 0.0, %v606
      %v608 = vpop.f32.mrf.mxu0
      %v609 = vadd.f32 0.0, %v608
      %610 = vdwg.mxu0
      %v611 = vadd.f32 %v607, %v609
      %v612 = vrot.slane %v611, 4
      %v613 = vadd.f32 %v611, %v612
      %v614 = vrot.slane %v613, 2
      %v615 = vadd.f32 %v613, %v614
      %v616 = vrot.slane %v615, 1
      %v617 = vadd.f32 %v615, %v616
      %v618 = vadd.f32 %v511, %v617
      %v619 = vmul.f32 %v607, %v607
      %v620 = vmul.f32 %v609, %v609
      %v621 = vadd.f32 %v619, %v620
      %v622 = vrot.slane %v621, 4
      %v623 = vadd.f32 %v621, %v622
      %v624 = vrot.slane %v623, 2
      %v625 = vadd.f32 %v623, %v624
      %v626 = vrot.slane %v625, 1
      %v627 = vadd.f32 %v625, %v626
      %v628 = vadd.f32 %v521, %v627
      %v629 = vpack.c.bf16 %v607, %v607
      %v630 = vpack.c.bf16 %v609, %v609
      %s631 = scalar_lea.vmem %s331, 16
      %632 = vst [vmem:[%s631] sm:$0xf] %v629
      %633 = vst [vmem:[%s631 + $0x4] sm:$0xf] %v630
      %v634 = vshrl.u32 %v541, 16
      %636 = vrot.lane.b32.xlu0 %v634, 4
      %v637 = vpop.permute.xlu0 %636
      %638 = vrot.lane.b32.xlu0 %v565, 8
      %v639 = vpop.permute.xlu0 %638
      %v640 = vshrl.u32 %v565, 16
      %642 = vrot.lane.b32.xlu0 %v640, 12
      %v643 = vpop.permute.xlu0 %642
      %v645 = vsel %vm396, %v541, %v637
      %v647 = vsel %vm399, %v645, %v639
      %v649 = vsel %vm402, %v647, %v643
      %s650 = scalar_lea.vmem %s2, 24
      %v651 = vld [vmem:[%s650] sm:$0xf]
      %v652 = vld [vmem:[%s650 + $0x4] sm:$0xf]
      %v653 = vshrl.u32 %v585, 16
      %v655 = vshll.u32 %v585, 16
      %v657 = vrot.slane %v655, 1
      %v658 = vor.u32 %v653, %v657
      %v659 = vshll.u32 %v649, 16
      %v661 = vrot.slane %v659, 1
      %v662 = vsel %vm357, %v658, %v661
      %v665 = vunpack.c.l.b16 %v651
      %v666 = vunpack.c.l.b16 %v652
      %v667 = vpack.c.b16 %v666, %v665
      %v670 = vsel %vm413, %v662, 0
      %672 = vmatpush.bf16.msra.mxu0 0
      %673 = vmatpush.bf16.msra.mxu0 0
      %674 = vmatpush.bf16.msra.mxu0 0
      %675 = vmatpush.bf16.msra.mxu0 0
      %676 = vmatpush.bf16.msra.mxu0 0
      %677 = vmatpush.bf16.msra.mxu0 0
      %678 = vmatpush.bf16.msra.mxu0 0
      %679 = vmatpush.bf16.msra.mxu0 %v667
      %680 = vmatmul.bf16.gmra.mxu0 %v670
      %v681 = vpop.f32.mrf.mxu0
      %v682 = vadd.f32 0.0, %v681
      %v683 = vpop.f32.mrf.mxu0
      %v684 = vadd.f32 0.0, %v683
      %685 = vdwg.mxu0
      %v686 = vadd.f32 %v682, %v684
      %v687 = vrot.slane %v686, 4
      %v688 = vadd.f32 %v686, %v687
      %v689 = vrot.slane %v688, 2
      %v690 = vadd.f32 %v688, %v689
      %v691 = vrot.slane %v690, 1
      %v692 = vadd.f32 %v690, %v691
      %v693 = vadd.f32 %v618, %v692
      %v694 = vmul.f32 %v682, %v682
      %v695 = vmul.f32 %v684, %v684
      %v696 = vadd.f32 %v694, %v695
      %v697 = vrot.slane %v696, 4
      %v698 = vadd.f32 %v696, %v697
      %v699 = vrot.slane %v698, 2
      %v700 = vadd.f32 %v698, %v699
      %v701 = vrot.slane %v700, 1
      %v702 = vadd.f32 %v700, %v701
      %v703 = vadd.f32 %v628, %v702
      %v704 = vpack.c.bf16 %v682, %v682
      %v705 = vpack.c.bf16 %v684, %v684
      %s706 = scalar_lea.vmem %s331, 24
      %707 = vst [vmem:[%s706] sm:$0xf] %v704
      %708 = vst [vmem:[%s706 + $0x4] sm:$0xf] %v705
      %v709 = vld [vmem:[%s345] sm:$0xf]
      %v710 = vld [vmem:[%s345 + $0x4] sm:$0xf]
      %v711 = vld [vmem:[%s345 + $0x8] sm:$0x1]
      %v712 = vld [vmem:[%s530] sm:$0xf]
      %v713 = vld [vmem:[%s530 + $0x4] sm:$0xf]
      %v714 = vld [vmem:[%s530 + $0x8] sm:$0x1]
      %v717 = vunpack.c.l.b16 %v709
      %v718 = vunpack.c.l.b16 %v710
      %v719 = vpack.c.b16 %v718, %v717
      %v721 = vunpack.c.l.b16 %v711
      %v722 = vpack.c.b16 %v721, %v721
      %v724 = vshrl.u32 %v719, 16
      %v726 = vshll.u32 %v719, 16
      %v728 = vrot.slane %v726, 1
      %v729 = vor.u32 %v724, %v728
      %v731 = vshll.u32 %v722, 16
      %v733 = vrot.slane %v731, 1
      %v734 = vsel %vm357, %v729, %v733
      %735 = vrot.lane.b32.xlu0 %v734, 4
      %v736 = vpop.permute.xlu0 %735
      %v739 = vunpack.c.l.b16 %v712
      %v740 = vunpack.c.l.b16 %v713
      %v741 = vpack.c.b16 %v740, %v739
      %742 = vrot.lane.b32.xlu0 %v741, 8
      %v743 = vpop.permute.xlu0 %742
      %v745 = vunpack.c.l.b16 %v714
      %v746 = vpack.c.b16 %v745, %v745
      %v748 = vshrl.u32 %v741, 16
      %v750 = vshll.u32 %v741, 16
      %v752 = vrot.slane %v750, 1
      %v753 = vor.u32 %v748, %v752
      %v755 = vshll.u32 %v746, 16
      %v757 = vrot.slane %v755, 1
      %v758 = vsel %vm357, %v753, %v757
      %759 = vrot.lane.b32.xlu0 %v758, 12
      %v760 = vpop.permute.xlu0 %759
      %v762 = vsel %vm396, %v719, %v736
      %v764 = vsel %vm399, %v762, %v743
      %v766 = vsel %vm402, %v764, %v760
      %v767 = vld [vmem:[%s2] sm:$0xf]
      %v768 = vld [vmem:[%s2 + $0x4] sm:$0xf]
      %v771 = vunpack.c.l.b16 %v767
      %v772 = vunpack.c.l.b16 %v768
      %v773 = vpack.c.b16 %v772, %v771
      %v775 = vsel %vm413, %v766, 0
      %777 = vmatpush.bf16.msra.mxu0 0
      %778 = vmatpush.bf16.msra.mxu0 0
      %779 = vmatpush.bf16.msra.mxu0 0
      %780 = vmatpush.bf16.msra.mxu0 0
      %781 = vmatpush.bf16.msra.mxu0 0
      %782 = vmatpush.bf16.msra.mxu0 0
      %783 = vmatpush.bf16.msra.mxu0 0
      %784 = vmatpush.bf16.msra.mxu0 %v773
      %785 = vmatmul.bf16.gmra.mxu0 %v775
      %v786 = vpop.f32.mrf.mxu0
      %v787 = vadd.f32 0.0, %v786
      %v788 = vpop.f32.mrf.mxu0
      %v789 = vadd.f32 0.0, %v788
      %790 = vdwg.mxu0
      %v791 = vadd.f32 %v787, %v789
      %v792 = vrot.slane %v791, 4
      %v793 = vadd.f32 %v791, %v792
      %v794 = vrot.slane %v793, 2
      %v795 = vadd.f32 %v793, %v794
      %v796 = vrot.slane %v795, 1
      %v797 = vadd.f32 %v795, %v796
      %v798 = vadd.f32 %v693, %v797
      %v799 = vmul.f32 %v787, %v787
      %v800 = vmul.f32 %v789, %v789
      %v801 = vadd.f32 %v799, %v800
      %v802 = vrot.slane %v801, 4
      %v803 = vadd.f32 %v801, %v802
      %v804 = vrot.slane %v803, 2
      %v805 = vadd.f32 %v803, %v804
      %v806 = vrot.slane %v805, 1
      %v807 = vadd.f32 %v805, %v806
      %v808 = vadd.f32 %v703, %v807
      %v809 = vpack.c.bf16 %v787, %v787
      %v810 = vpack.c.bf16 %v789, %v789
      %s811 = scalar_lea.vmem %s331, 32
      %812 = vst [vmem:[%s811] sm:$0xf] %v809
      %813 = vst [vmem:[%s811 + $0x4] sm:$0xf] %v810
      %v814 = vshrl.u32 %v722, 16
      %816 = vrot.lane.b32.xlu0 %v814, 4
      %v817 = vpop.permute.xlu0 %816
      %818 = vrot.lane.b32.xlu0 %v746, 8
      %v819 = vpop.permute.xlu0 %818
      %v820 = vshrl.u32 %v746, 16
      %822 = vrot.lane.b32.xlu0 %v820, 12
      %v823 = vpop.permute.xlu0 %822
      %v825 = vsel %vm396, %v722, %v817
      %v827 = vsel %vm399, %v825, %v819
      %v829 = vsel %vm402, %v827, %v823
      %v830 = vld [vmem:[%s468] sm:$0xf]
      %v831 = vld [vmem:[%s468 + $0x4] sm:$0xf]
      %v832 = vshrl.u32 %v766, 16
      %v834 = vshll.u32 %v766, 16
      %v836 = vrot.slane %v834, 1
      %v837 = vor.u32 %v832, %v836
      %v838 = vshll.u32 %v829, 16
      %v840 = vrot.slane %v838, 1
      %v841 = vsel %vm357, %v837, %v840
      %v844 = vunpack.c.l.b16 %v830
      %v845 = vunpack.c.l.b16 %v831
      %v846 = vpack.c.b16 %v845, %v844
      %v849 = vsel %vm413, %v841, 0
      %851 = vmatpush.bf16.msra.mxu0 0
      %852 = vmatpush.bf16.msra.mxu0 0
      %853 = vmatpush.bf16.msra.mxu0 0
      %854 = vmatpush.bf16.msra.mxu0 0
      %855 = vmatpush.bf16.msra.mxu0 0
      %856 = vmatpush.bf16.msra.mxu0 0
      %857 = vmatpush.bf16.msra.mxu0 0
      %858 = vmatpush.bf16.msra.mxu0 %v846
      %859 = vmatmul.bf16.gmra.mxu0 %v849
      %v860 = vpop.f32.mrf.mxu0
      %v861 = vadd.f32 0.0, %v860
      %v862 = vpop.f32.mrf.mxu0
      %v863 = vadd.f32 0.0, %v862
      %864 = vdwg.mxu0
      %v865 = vadd.f32 %v861, %v863
      %v866 = vrot.slane %v865, 4
      %v867 = vadd.f32 %v865, %v866
      %v868 = vrot.slane %v867, 2
      %v869 = vadd.f32 %v867, %v868
      %v870 = vrot.slane %v869, 1
      %v871 = vadd.f32 %v869, %v870
      %v872 = vadd.f32 %v798, %v871
      %v873 = vmul.f32 %v861, %v861
      %v874 = vmul.f32 %v863, %v863
      %v875 = vadd.f32 %v873, %v874
      %v876 = vrot.slane %v875, 4
      %v877 = vadd.f32 %v875, %v876
      %v878 = vrot.slane %v877, 2
      %v879 = vadd.f32 %v877, %v878
      %v880 = vrot.slane %v879, 1
      %v881 = vadd.f32 %v879, %v880
      %v882 = vadd.f32 %v808, %v881
      %v883 = vpack.c.bf16 %v861, %v861
      %v884 = vpack.c.bf16 %v863, %v863
      %s885 = scalar_lea.vmem %s331, 40
      %886 = vst [vmem:[%s885] sm:$0xf] %v883
      %887 = vst [vmem:[%s885 + $0x4] sm:$0xf] %v884
      %v888 = vld [vmem:[%s530] sm:$0xf]
      %v889 = vld [vmem:[%s530 + $0x4] sm:$0xf]
      %v890 = vld [vmem:[%s530 + $0x8] sm:$0x1]
      %s891 = scalar_lea.vmem %s300, 36
      %v892 = vld [vmem:[%s891] sm:$0xf]
      %v893 = vld [vmem:[%s891 + $0x4] sm:$0xf]
      %v894 = vld [vmem:[%s891 + $0x8] sm:$0x1]
      %v897 = vunpack.c.l.b16 %v888
      %v898 = vunpack.c.l.b16 %v889
      %v899 = vpack.c.b16 %v898, %v897
      %v901 = vunpack.c.l.b16 %v890
      %v902 = vpack.c.b16 %v901, %v901
      %v904 = vshrl.u32 %v899, 16
      %v906 = vshll.u32 %v899, 16
      %v908 = vrot.slane %v906, 1
      %v909 = vor.u32 %v904, %v908
      %v911 = vshll.u32 %v902, 16
      %v913 = vrot.slane %v911, 1
      %v914 = vsel %vm357, %v909, %v913
      %915 = vrot.lane.b32.xlu0 %v914, 4
      %v916 = vpop.permute.xlu0 %915
      %v919 = vunpack.c.l.b16 %v892
      %v920 = vunpack.c.l.b16 %v893
      %v921 = vpack.c.b16 %v920, %v919
      %922 = vrot.lane.b32.xlu0 %v921, 8
      %v923 = vpop.permute.xlu0 %922
      %v925 = vunpack.c.l.b16 %v894
      %v926 = vpack.c.b16 %v925, %v925
      %v928 = vshrl.u32 %v921, 16
      %v930 = vshll.u32 %v921, 16
      %v932 = vrot.slane %v930, 1
      %v933 = vor.u32 %v928, %v932
      %v935 = vshll.u32 %v926, 16
      %v937 = vrot.slane %v935, 1
      %v938 = vsel %vm357, %v933, %v937
      %939 = vrot.lane.b32.xlu0 %v938, 12
      %v940 = vpop.permute.xlu0 %939
      %v942 = vsel %vm396, %v899, %v916
      %v944 = vsel %vm399, %v942, %v923
      %v946 = vsel %vm402, %v944, %v940
      %v947 = vld [vmem:[%s586] sm:$0xf]
      %v948 = vld [vmem:[%s586 + $0x4] sm:$0xf]
      %v951 = vunpack.c.l.b16 %v947
      %v952 = vunpack.c.l.b16 %v948
      %v953 = vpack.c.b16 %v952, %v951
      %v955 = vsel %vm413, %v946, 0
      %957 = vmatpush.bf16.msra.mxu0 0
      %958 = vmatpush.bf16.msra.mxu0 0
      %959 = vmatpush.bf16.msra.mxu0 0
      %960 = vmatpush.bf16.msra.mxu0 0
      %961 = vmatpush.bf16.msra.mxu0 0
      %962 = vmatpush.bf16.msra.mxu0 0
      %963 = vmatpush.bf16.msra.mxu0 0
      %964 = vmatpush.bf16.msra.mxu0 %v953
      %965 = vmatmul.bf16.gmra.mxu0 %v955
      %v966 = vpop.f32.mrf.mxu0
      %v967 = vadd.f32 0.0, %v966
      %v968 = vpop.f32.mrf.mxu0
      %v969 = vadd.f32 0.0, %v968
      %970 = vdwg.mxu0
      %v971 = vadd.f32 %v967, %v969
      %v972 = vrot.slane %v971, 4
      %v973 = vadd.f32 %v971, %v972
      %v974 = vrot.slane %v973, 2
      %v975 = vadd.f32 %v973, %v974
      %v976 = vrot.slane %v975, 1
      %v977 = vadd.f32 %v975, %v976
      %v978 = vadd.f32 %v872, %v977
      %v979 = vmul.f32 %v967, %v967
      %v980 = vmul.f32 %v969, %v969
      %v981 = vadd.f32 %v979, %v980
      %v982 = vrot.slane %v981, 4
      %v983 = vadd.f32 %v981, %v982
      %v984 = vrot.slane %v983, 2
      %v985 = vadd.f32 %v983, %v984
      %v986 = vrot.slane %v985, 1
      %v987 = vadd.f32 %v985, %v986
      %v988 = vadd.f32 %v882, %v987
      %v989 = vpack.c.bf16 %v967, %v967
      %v990 = vpack.c.bf16 %v969, %v969
      %s991 = scalar_lea.vmem %s331, 48
      %992 = vst [vmem:[%s991] sm:$0xf] %v989
      %993 = vst [vmem:[%s991 + $0x4] sm:$0xf] %v990
      %v994 = vshrl.u32 %v902, 16
      %996 = vrot.lane.b32.xlu0 %v994, 4
      %v997 = vpop.permute.xlu0 %996
      %998 = vrot.lane.b32.xlu0 %v926, 8
      %v999 = vpop.permute.xlu0 %998
      %v1000 = vshrl.u32 %v926, 16
      %1002 = vrot.lane.b32.xlu0 %v1000, 12
      %v1003 = vpop.permute.xlu0 %1002
      %v1005 = vsel %vm396, %v902, %v997
      %v1007 = vsel %vm399, %v1005, %v999
      %v1009 = vsel %vm402, %v1007, %v1003
      %v1010 = vld [vmem:[%s650] sm:$0xf]
      %v1011 = vld [vmem:[%s650 + $0x4] sm:$0xf]
      %v1012 = vshrl.u32 %v946, 16
      %v1014 = vshll.u32 %v946, 16
      %v1016 = vrot.slane %v1014, 1
      %v1017 = vor.u32 %v1012, %v1016
      %v1018 = vshll.u32 %v1009, 16
      %v1020 = vrot.slane %v1018, 1
      %v1021 = vsel %vm357, %v1017, %v1020
      %v1024 = vunpack.c.l.b16 %v1010
      %v1025 = vunpack.c.l.b16 %v1011
      %v1026 = vpack.c.b16 %v1025, %v1024
      %v1029 = vsel %vm413, %v1021, 0
      %1031 = vmatpush.bf16.msra.mxu0 0
      %1032 = vmatpush.bf16.msra.mxu0 0
      %1033 = vmatpush.bf16.msra.mxu0 0
      %1034 = vmatpush.bf16.msra.mxu0 0
      %1035 = vmatpush.bf16.msra.mxu0 0
      %1036 = vmatpush.bf16.msra.mxu0 0
      %1037 = vmatpush.bf16.msra.mxu0 0
      %1038 = vmatpush.bf16.msra.mxu0 %v1026
      %1039 = vmatmul.bf16.gmra.mxu0 %v1029
      %v1040 = vpop.f32.mrf.mxu0
      %v1041 = vadd.f32 0.0, %v1040
      %v1042 = vpop.f32.mrf.mxu0
      %v1043 = vadd.f32 0.0, %v1042
      %1044 = vdwg.mxu0
      %v1045 = vadd.f32 %v1041, %v1043
      %v1046 = vrot.slane %v1045, 4
      %v1047 = vadd.f32 %v1045, %v1046
      %v1048 = vrot.slane %v1047, 2
      %v1049 = vadd.f32 %v1047, %v1048
      %v1050 = vrot.slane %v1049, 1
      %v1051 = vadd.f32 %v1049, %v1050
      %v1052 = vadd.f32 %v978, %v1051
      %v1053 = vmul.f32 %v1041, %v1041
      %v1054 = vmul.f32 %v1043, %v1043
      %v1055 = vadd.f32 %v1053, %v1054
      %v1056 = vrot.slane %v1055, 4
      %v1057 = vadd.f32 %v1055, %v1056
      %v1058 = vrot.slane %v1057, 2
      %v1059 = vadd.f32 %v1057, %v1058
      %v1060 = vrot.slane %v1059, 1
      %v1061 = vadd.f32 %v1059, %v1060
      %v1062 = vadd.f32 %v988, %v1061
      %v1063 = vpack.c.bf16 %v1041, %v1041
      %v1064 = vpack.c.bf16 %v1043, %v1043
      %s1065 = scalar_lea.vmem %s331, 56
      %1066 = vst [vmem:[%s1065] sm:$0xf] %v1063
      %1067 = vst [vmem:[%s1065 + $0x4] sm:$0xf] %v1064
      %v1068 = vld [vmem:[%s530] sm:$0xf]
      %v1069 = vld [vmem:[%s530 + $0x4] sm:$0xf]
      %v1070 = vld [vmem:[%s530 + $0x8] sm:$0x1]
      %v1071 = vld [vmem:[%s891] sm:$0xf]
      %v1072 = vld [vmem:[%s891 + $0x4] sm:$0xf]
      %v1073 = vld [vmem:[%s891 + $0x8] sm:$0x1]
      %v1076 = vunpack.c.l.b16 %v1068
      %v1077 = vunpack.c.l.b16 %v1069
      %v1078 = vpack.c.b16 %v1077, %v1076
      %v1080 = vunpack.c.l.b16 %v1070
      %v1081 = vpack.c.b16 %v1080, %v1080
      %v1083 = vshrl.u32 %v1078, 16
      %v1085 = vshll.u32 %v1078, 16
      %v1087 = vrot.slane %v1085, 1
      %v1088 = vor.u32 %v1083, %v1087
      %v1090 = vshll.u32 %v1081, 16
      %v1092 = vrot.slane %v1090, 1
      %v1093 = vsel %vm357, %v1088, %v1092
      %1094 = vrot.lane.b32.xlu0 %v1093, 4
      %v1095 = vpop.permute.xlu0 %1094
      %v1098 = vunpack.c.l.b16 %v1071
      %v1099 = vunpack.c.l.b16 %v1072
      %v1100 = vpack.c.b16 %v1099, %v1098
      %1101 = vrot.lane.b32.xlu0 %v1100, 8
      %v1102 = vpop.permute.xlu0 %1101
      %v1104 = vunpack.c.l.b16 %v1073
      %v1105 = vpack.c.b16 %v1104, %v1104
      %v1107 = vshrl.u32 %v1100, 16
      %v1109 = vshll.u32 %v1100, 16
      %v1111 = vrot.slane %v1109, 1
      %v1112 = vor.u32 %v1107, %v1111
      %v1114 = vshll.u32 %v1105, 16
      %v1116 = vrot.slane %v1114, 1
      %v1117 = vsel %vm357, %v1112, %v1116
      %1118 = vrot.lane.b32.xlu0 %v1117, 12
      %v1119 = vpop.permute.xlu0 %1118
      %v1121 = vsel %vm396, %v1078, %v1095
      %v1123 = vsel %vm399, %v1121, %v1102
      %v1125 = vsel %vm402, %v1123, %v1119
      %v1126 = vld [vmem:[%s2] sm:$0xf]
      %v1127 = vld [vmem:[%s2 + $0x4] sm:$0xf]
      %v1130 = vunpack.c.l.b16 %v1126
      %v1131 = vunpack.c.l.b16 %v1127
      %v1132 = vpack.c.b16 %v1131, %v1130
      %v1134 = vsel %vm413, %v1125, 0
      %1136 = vmatpush.bf16.msra.mxu0 0
      %1137 = vmatpush.bf16.msra.mxu0 0
      %1138 = vmatpush.bf16.msra.mxu0 0
      %1139 = vmatpush.bf16.msra.mxu0 0
      %1140 = vmatpush.bf16.msra.mxu0 0
      %1141 = vmatpush.bf16.msra.mxu0 0
      %1142 = vmatpush.bf16.msra.mxu0 0
      %1143 = vmatpush.bf16.msra.mxu0 %v1132
      %1144 = vmatmul.bf16.gmra.mxu0 %v1134
      %v1145 = vpop.f32.mrf.mxu0
      %v1146 = vadd.f32 0.0, %v1145
      %v1147 = vpop.f32.mrf.mxu0
      %v1148 = vadd.f32 0.0, %v1147
      %1149 = vdwg.mxu0
      %v1150 = vadd.f32 %v1146, %v1148
      %v1151 = vrot.slane %v1150, 4
      %v1152 = vadd.f32 %v1150, %v1151
      %v1153 = vrot.slane %v1152, 2
      %v1154 = vadd.f32 %v1152, %v1153
      %v1155 = vrot.slane %v1154, 1
      %v1156 = vadd.f32 %v1154, %v1155
      %v1157 = vadd.f32 %v1052, %v1156
      %v1158 = vmul.f32 %v1146, %v1146
      %v1159 = vmul.f32 %v1148, %v1148
      %v1160 = vadd.f32 %v1158, %v1159
      %v1161 = vrot.slane %v1160, 4
      %v1162 = vadd.f32 %v1160, %v1161
      %v1163 = vrot.slane %v1162, 2
      %v1164 = vadd.f32 %v1162, %v1163
      %v1165 = vrot.slane %v1164, 1
      %v1166 = vadd.f32 %v1164, %v1165
      %v1167 = vadd.f32 %v1062, %v1166
      %v1168 = vpack.c.bf16 %v1146, %v1146
      %v1169 = vpack.c.bf16 %v1148, %v1148
      %s1170 = scalar_lea.vmem %s331, 64
      %1171 = vst [vmem:[%s1170] sm:$0xf] %v1168
      %1172 = vst [vmem:[%s1170 + $0x4] sm:$0xf] %v1169
      %v1173 = vshrl.u32 %v1081, 16
      %1175 = vrot.lane.b32.xlu0 %v1173, 4
      %v1176 = vpop.permute.xlu0 %1175
      %1177 = vrot.lane.b32.xlu0 %v1105, 8
      %v1178 = vpop.permute.xlu0 %1177
      %v1179 = vshrl.u32 %v1105, 16
      %1181 = vrot.lane.b32.xlu0 %v1179, 12
      %v1182 = vpop.permute.xlu0 %1181
      %v1184 = vsel %vm396, %v1081, %v1176
      %v1186 = vsel %vm399, %v1184, %v1178
      %v1188 = vsel %vm402, %v1186, %v1182
      %v1189 = vld [vmem:[%s468] sm:$0xf]
      %v1190 = vld [vmem:[%s468 + $0x4] sm:$0xf]
      %v1191 = vshrl.u32 %v1125, 16
      %v1193 = vshll.u32 %v1125, 16
      %v1195 = vrot.slane %v1193, 1
      %v1196 = vor.u32 %v1191, %v1195
      %v1197 = vshll.u32 %v1188, 16
      %v1199 = vrot.slane %v1197, 1
      %v1200 = vsel %vm357, %v1196, %v1199
      %v1203 = vunpack.c.l.b16 %v1189
      %v1204 = vunpack.c.l.b16 %v1190
      %v1205 = vpack.c.b16 %v1204, %v1203
      %v1208 = vsel %vm413, %v1200, 0
      %1210 = vmatpush.bf16.msra.mxu0 0
      %1211 = vmatpush.bf16.msra.mxu0 0
      %1212 = vmatpush.bf16.msra.mxu0 0
      %1213 = vmatpush.bf16.msra.mxu0 0
      %1214 = vmatpush.bf16.msra.mxu0 0
      %1215 = vmatpush.bf16.msra.mxu0 0
      %1216 = vmatpush.bf16.msra.mxu0 0
      %1217 = vmatpush.bf16.msra.mxu0 %v1205
      %1218 = vmatmul.bf16.gmra.mxu0 %v1208
      %v1219 = vpop.f32.mrf.mxu0
      %v1220 = vadd.f32 0.0, %v1219
      %v1221 = vpop.f32.mrf.mxu0
      %v1222 = vadd.f32 0.0, %v1221
      %1223 = vdwg.mxu0
      %v1224 = vadd.f32 %v1220, %v1222
      %v1225 = vrot.slane %v1224, 4
      %v1226 = vadd.f32 %v1224, %v1225
      %v1227 = vrot.slane %v1226, 2
      %v1228 = vadd.f32 %v1226, %v1227
      %v1229 = vrot.slane %v1228, 1
      %v1230 = vadd.f32 %v1228, %v1229
      %v1231 = vadd.f32 %v1157, %v1230
      %v1232 = vmul.f32 %v1220, %v1220
      %v1233 = vmul.f32 %v1222, %v1222
      %v1234 = vadd.f32 %v1232, %v1233
      %v1235 = vrot.slane %v1234, 4
      %v1236 = vadd.f32 %v1234, %v1235
      %v1237 = vrot.slane %v1236, 2
      %v1238 = vadd.f32 %v1236, %v1237
      %v1239 = vrot.slane %v1238, 1
      %v1240 = vadd.f32 %v1238, %v1239
      %v1241 = vadd.f32 %v1167, %v1240
      %v1242 = vpack.c.bf16 %v1220, %v1220
      %v1243 = vpack.c.bf16 %v1222, %v1222
      %s1244 = scalar_lea.vmem %s331, 72
      %1245 = vst [vmem:[%s1244] sm:$0xf] %v1242
      %1246 = vst [vmem:[%s1244 + $0x4] sm:$0xf] %v1243
      %v1247 = vld [vmem:[%s891] sm:$0xf]
      %v1248 = vld [vmem:[%s891 + $0x4] sm:$0xf]
      %v1249 = vld [vmem:[%s891 + $0x8] sm:$0x1]
      %s1250 = scalar_lea.vmem %s300, 48
      %v1251 = vld [vmem:[%s1250] sm:$0xf]
      %v1252 = vld [vmem:[%s1250 + $0x4] sm:$0xf]
      %v1253 = vld [vmem:[%s1250 + $0x8] sm:$0x1]
      %v1256 = vunpack.c.l.b16 %v1247
      %v1257 = vunpack.c.l.b16 %v1248
      %v1258 = vpack.c.b16 %v1257, %v1256
      %v1260 = vunpack.c.l.b16 %v1249
      %v1261 = vpack.c.b16 %v1260, %v1260
      %v1263 = vshrl.u32 %v1258, 16
      %v1265 = vshll.u32 %v1258, 16
      %v1267 = vrot.slane %v1265, 1
      %v1268 = vor.u32 %v1263, %v1267
      %v1270 = vshll.u32 %v1261, 16
      %v1272 = vrot.slane %v1270, 1
      %v1273 = vsel %vm357, %v1268, %v1272
      %1274 = vrot.lane.b32.xlu0 %v1273, 4
      %v1275 = vpop.permute.xlu0 %1274
      %v1278 = vunpack.c.l.b16 %v1251
      %v1279 = vunpack.c.l.b16 %v1252
      %v1280 = vpack.c.b16 %v1279, %v1278
      %1281 = vrot.lane.b32.xlu0 %v1280, 8
      %v1282 = vpop.permute.xlu0 %1281
      %v1284 = vunpack.c.l.b16 %v1253
      %v1285 = vpack.c.b16 %v1284, %v1284
      %v1287 = vshrl.u32 %v1280, 16
      %v1289 = vshll.u32 %v1280, 16
      %v1291 = vrot.slane %v1289, 1
      %v1292 = vor.u32 %v1287, %v1291
      %v1294 = vshll.u32 %v1285, 16
      %v1296 = vrot.slane %v1294, 1
      %v1297 = vsel %vm357, %v1292, %v1296
      %1298 = vrot.lane.b32.xlu0 %v1297, 12
      %v1299 = vpop.permute.xlu0 %1298
      %v1301 = vsel %vm396, %v1258, %v1275
      %v1303 = vsel %vm399, %v1301, %v1282
      %v1305 = vsel %vm402, %v1303, %v1299
      %v1306 = vld [vmem:[%s586] sm:$0xf]
      %v1307 = vld [vmem:[%s586 + $0x4] sm:$0xf]
      %v1310 = vunpack.c.l.b16 %v1306
      %v1311 = vunpack.c.l.b16 %v1307
      %v1312 = vpack.c.b16 %v1311, %v1310
      %v1314 = vsel %vm413, %v1305, 0
      %1316 = vmatpush.bf16.msra.mxu0 0
      %1317 = vmatpush.bf16.msra.mxu0 0
      %1318 = vmatpush.bf16.msra.mxu0 0
      %1319 = vmatpush.bf16.msra.mxu0 0
      %1320 = vmatpush.bf16.msra.mxu0 0
      %1321 = vmatpush.bf16.msra.mxu0 0
      %1322 = vmatpush.bf16.msra.mxu0 0
      %1323 = vmatpush.bf16.msra.mxu0 %v1312
      %1324 = vmatmul.bf16.gmra.mxu0 %v1314
      %v1325 = vpop.f32.mrf.mxu0
      %v1326 = vadd.f32 0.0, %v1325
      %v1327 = vpop.f32.mrf.mxu0
      %v1328 = vadd.f32 0.0, %v1327
      %1329 = vdwg.mxu0
      %v1330 = vadd.f32 %v1326, %v1328
      %v1331 = vrot.slane %v1330, 4
      %v1332 = vadd.f32 %v1330, %v1331
      %v1333 = vrot.slane %v1332, 2
      %v1334 = vadd.f32 %v1332, %v1333
      %v1335 = vrot.slane %v1334, 1
      %v1336 = vadd.f32 %v1334, %v1335
      %v1337 = vadd.f32 %v1231, %v1336
      %v1338 = vmul.f32 %v1326, %v1326
      %v1339 = vmul.f32 %v1328, %v1328
      %v1340 = vadd.f32 %v1338, %v1339
      %v1341 = vrot.slane %v1340, 4
      %v1342 = vadd.f32 %v1340, %v1341
      %v1343 = vrot.slane %v1342, 2
      %v1344 = vadd.f32 %v1342, %v1343
      %v1345 = vrot.slane %v1344, 1
      %v1346 = vadd.f32 %v1344, %v1345
      %v1347 = vadd.f32 %v1241, %v1346
      %v1348 = vpack.c.bf16 %v1326, %v1326
      %v1349 = vpack.c.bf16 %v1328, %v1328
      %s1350 = scalar_lea.vmem %s331, 80
      %1351 = vst [vmem:[%s1350] sm:$0xf] %v1348
      %1352 = vst [vmem:[%s1350 + $0x4] sm:$0xf] %v1349
      %v1353 = vshrl.u32 %v1261, 16
      %1355 = vrot.lane.b32.xlu0 %v1353, 4
      %v1356 = vpop.permute.xlu0 %1355
      %1357 = vrot.lane.b32.xlu0 %v1285, 8
      %v1358 = vpop.permute.xlu0 %1357
      %v1359 = vshrl.u32 %v1285, 16
      %1361 = vrot.lane.b32.xlu0 %v1359, 12
      %v1362 = vpop.permute.xlu0 %1361
      %v1364 = vsel %vm396, %v1261, %v1356
      %v1366 = vsel %vm399, %v1364, %v1358
      %v1368 = vsel %vm402, %v1366, %v1362
      %v1369 = vld [vmem:[%s650] sm:$0xf]
      %v1370 = vld [vmem:[%s650 + $0x4] sm:$0xf]
      %v1371 = vshrl.u32 %v1305, 16
      %v1373 = vshll.u32 %v1305, 16
      %v1375 = vrot.slane %v1373, 1
      %v1376 = vor.u32 %v1371, %v1375
      %v1377 = vshll.u32 %v1368, 16
      %v1379 = vrot.slane %v1377, 1
      %v1380 = vsel %vm357, %v1376, %v1379
      %v1383 = vunpack.c.l.b16 %v1369
      %v1384 = vunpack.c.l.b16 %v1370
      %v1385 = vpack.c.b16 %v1384, %v1383
      %v1388 = vsel %vm413, %v1380, 0
      %1390 = vmatpush.bf16.msra.mxu0 0
      %1391 = vmatpush.bf16.msra.mxu0 0
      %1392 = vmatpush.bf16.msra.mxu0 0
      %1393 = vmatpush.bf16.msra.mxu0 0
      %1394 = vmatpush.bf16.msra.mxu0 0
      %1395 = vmatpush.bf16.msra.mxu0 0
      %1396 = vmatpush.bf16.msra.mxu0 0
      %1397 = vmatpush.bf16.msra.mxu0 %v1385
      %1398 = vmatmul.bf16.gmra.mxu0 %v1388
      %v1399 = vpop.f32.mrf.mxu0
      %v1400 = vadd.f32 0.0, %v1399
      %v1401 = vpop.f32.mrf.mxu0
      %v1402 = vadd.f32 0.0, %v1401
      %1403 = vdwg.mxu0
      %v1404 = vadd.f32 %v1400, %v1402
      %v1405 = vrot.slane %v1404, 4
      %v1406 = vadd.f32 %v1404, %v1405
      %v1407 = vrot.slane %v1406, 2
      %v1408 = vadd.f32 %v1406, %v1407
      %v1409 = vrot.slane %v1408, 1
      %v1410 = vadd.f32 %v1408, %v1409
      %v1411 = vadd.f32 %v1337, %v1410
      %v1412 = vmul.f32 %v1400, %v1400
      %v1413 = vmul.f32 %v1402, %v1402
      %v1414 = vadd.f32 %v1412, %v1413
      %v1415 = vrot.slane %v1414, 4
      %v1416 = vadd.f32 %v1414, %v1415
      %v1417 = vrot.slane %v1416, 2
      %v1418 = vadd.f32 %v1416, %v1417
      %v1419 = vrot.slane %v1418, 1
      %v1420 = vadd.f32 %v1418, %v1419
      %v1421 = vadd.f32 %v1347, %v1420
      %v1422 = vpack.c.bf16 %v1400, %v1400
      %v1423 = vpack.c.bf16 %v1402, %v1402
      %s1424 = scalar_lea.vmem %s331, 88
      %1425 = vst [vmem:[%s1424] sm:$0xf] %v1422
      %1426 = vst [vmem:[%s1424 + $0x4] sm:$0xf] %v1423
      %v1427 = vld [vmem:[%s891] sm:$0xf]
      %v1428 = vld [vmem:[%s891 + $0x4] sm:$0xf]
      %v1429 = vld [vmem:[%s891 + $0x8] sm:$0x1]
      %v1430 = vld [vmem:[%s1250] sm:$0xf]
      %v1431 = vld [vmem:[%s1250 + $0x4] sm:$0xf]
      %v1432 = vld [vmem:[%s1250 + $0x8] sm:$0x1]
      %v1435 = vunpack.c.l.b16 %v1427
      %v1436 = vunpack.c.l.b16 %v1428
      %v1437 = vpack.c.b16 %v1436, %v1435
      %v1439 = vunpack.c.l.b16 %v1429
      %v1440 = vpack.c.b16 %v1439, %v1439
      %v1442 = vshrl.u32 %v1437, 16
      %v1444 = vshll.u32 %v1437, 16
      %v1446 = vrot.slane %v1444, 1
      %v1447 = vor.u32 %v1442, %v1446
      %v1449 = vshll.u32 %v1440, 16
      %v1451 = vrot.slane %v1449, 1
      %v1452 = vsel %vm357, %v1447, %v1451
      %1453 = vrot.lane.b32.xlu0 %v1452, 4
      %v1454 = vpop.permute.xlu0 %1453
      %v1457 = vunpack.c.l.b16 %v1430
      %v1458 = vunpack.c.l.b16 %v1431
      %v1459 = vpack.c.b16 %v1458, %v1457
      %1460 = vrot.lane.b32.xlu0 %v1459, 8
      %v1461 = vpop.permute.xlu0 %1460
      %v1463 = vunpack.c.l.b16 %v1432
      %v1464 = vpack.c.b16 %v1463, %v1463
      %v1466 = vshrl.u32 %v1459, 16
      %v1468 = vshll.u32 %v1459, 16
      %v1470 = vrot.slane %v1468, 1
      %v1471 = vor.u32 %v1466, %v1470
      %v1473 = vshll.u32 %v1464, 16
      %v1475 = vrot.slane %v1473, 1
      %v1476 = vsel %vm357, %v1471, %v1475
      %1477 = vrot.lane.b32.xlu0 %v1476, 12
      %v1478 = vpop.permute.xlu0 %1477
      %v1480 = vsel %vm396, %v1437, %v1454
      %v1482 = vsel %vm399, %v1480, %v1461
      %v1484 = vsel %vm402, %v1482, %v1478
      %v1485 = vld [vmem:[%s2] sm:$0xf]
      %v1486 = vld [vmem:[%s2 + $0x4] sm:$0xf]
      %v1489 = vunpack.c.l.b16 %v1485
      %v1490 = vunpack.c.l.b16 %v1486
      %v1491 = vpack.c.b16 %v1490, %v1489
      %v1493 = vsel %vm413, %v1484, 0
      %1495 = vmatpush.bf16.msra.mxu0 0
      %1496 = vmatpush.bf16.msra.mxu0 0
      %1497 = vmatpush.bf16.msra.mxu0 0
      %1498 = vmatpush.bf16.msra.mxu0 0
      %1499 = vmatpush.bf16.msra.mxu0 0
      %1500 = vmatpush.bf16.msra.mxu0 0
      %1501 = vmatpush.bf16.msra.mxu0 0
      %1502 = vmatpush.bf16.msra.mxu0 %v1491
      %1503 = vmatmul.bf16.gmra.mxu0 %v1493
      %v1504 = vpop.f32.mrf.mxu0
      %v1505 = vadd.f32 0.0, %v1504
      %v1506 = vpop.f32.mrf.mxu0
      %v1507 = vadd.f32 0.0, %v1506
      %1508 = vdwg.mxu0
      %v1509 = vadd.f32 %v1505, %v1507
      %v1510 = vrot.slane %v1509, 4
      %v1511 = vadd.f32 %v1509, %v1510
      %v1512 = vrot.slane %v1511, 2
      %v1513 = vadd.f32 %v1511, %v1512
      %v1514 = vrot.slane %v1513, 1
      %v1515 = vadd.f32 %v1513, %v1514
      %v1516 = vadd.f32 %v1411, %v1515
      %v1517 = vmul.f32 %v1505, %v1505
      %v1518 = vmul.f32 %v1507, %v1507
      %v1519 = vadd.f32 %v1517, %v1518
      %v1520 = vrot.slane %v1519, 4
      %v1521 = vadd.f32 %v1519, %v1520
      %v1522 = vrot.slane %v1521, 2
      %v1523 = vadd.f32 %v1521, %v1522
      %v1524 = vrot.slane %v1523, 1
      %v1525 = vadd.f32 %v1523, %v1524
      %v1526 = vadd.f32 %v1421, %v1525
      %v1527 = vpack.c.bf16 %v1505, %v1505
      %v1528 = vpack.c.bf16 %v1507, %v1507
      %s1529 = scalar_lea.vmem %s331, 96
      %1530 = vst [vmem:[%s1529] sm:$0xf] %v1527
      %1531 = vst [vmem:[%s1529 + $0x4] sm:$0xf] %v1528
      %v1532 = vshrl.u32 %v1440, 16
      %1534 = vrot.lane.b32.xlu0 %v1532, 4
      %v1535 = vpop.permute.xlu0 %1534
      %1536 = vrot.lane.b32.xlu0 %v1464, 8
      %v1537 = vpop.permute.xlu0 %1536
      %v1538 = vshrl.u32 %v1464, 16
      %1540 = vrot.lane.b32.xlu0 %v1538, 12
      %v1541 = vpop.permute.xlu0 %1540
      %v1543 = vsel %vm396, %v1440, %v1535
      %v1545 = vsel %vm399, %v1543, %v1537
      %v1547 = vsel %vm402, %v1545, %v1541
      %v1548 = vld [vmem:[%s468] sm:$0xf]
      %v1549 = vld [vmem:[%s468 + $0x4] sm:$0xf]
      %v1550 = vshrl.u32 %v1484, 16
      %v1552 = vshll.u32 %v1484, 16
      %v1554 = vrot.slane %v1552, 1
      %v1555 = vor.u32 %v1550, %v1554
      %v1556 = vshll.u32 %v1547, 16
      %v1558 = vrot.slane %v1556, 1
      %v1559 = vsel %vm357, %v1555, %v1558
      %v1562 = vunpack.c.l.b16 %v1548
      %v1563 = vunpack.c.l.b16 %v1549
      %v1564 = vpack.c.b16 %v1563, %v1562
      %v1567 = vsel %vm413, %v1559, 0
      %1569 = vmatpush.bf16.msra.mxu0 0
      %1570 = vmatpush.bf16.msra.mxu0 0
      %1571 = vmatpush.bf16.msra.mxu0 0
      %1572 = vmatpush.bf16.msra.mxu0 0
      %1573 = vmatpush.bf16.msra.mxu0 0
      %1574 = vmatpush.bf16.msra.mxu0 0
      %1575 = vmatpush.bf16.msra.mxu0 0
      %1576 = vmatpush.bf16.msra.mxu0 %v1564
      %1577 = vmatmul.bf16.gmra.mxu0 %v1567
      %v1578 = vpop.f32.mrf.mxu0
      %v1579 = vadd.f32 0.0, %v1578
      %v1580 = vpop.f32.mrf.mxu0
      %v1581 = vadd.f32 0.0, %v1580
      %1582 = vdwg.mxu0
      %v1583 = vadd.f32 %v1579, %v1581
      %v1584 = vrot.slane %v1583, 4
      %v1585 = vadd.f32 %v1583, %v1584
      %v1586 = vrot.slane %v1585, 2
      %v1587 = vadd.f32 %v1585, %v1586
      %v1588 = vrot.slane %v1587, 1
      %v1589 = vadd.f32 %v1587, %v1588
      %v1590 = vadd.f32 %v1516, %v1589
      %v1591 = vmul.f32 %v1579, %v1579
      %v1592 = vmul.f32 %v1581, %v1581
      %v1593 = vadd.f32 %v1591, %v1592
      %v1594 = vrot.slane %v1593, 4
      %v1595 = vadd.f32 %v1593, %v1594
      %v1596 = vrot.slane %v1595, 2
      %v1597 = vadd.f32 %v1595, %v1596
      %v1598 = vrot.slane %v1597, 1
      %v1599 = vadd.f32 %v1597, %v1598
      %v1600 = vadd.f32 %v1526, %v1599
      %v1601 = vpack.c.bf16 %v1579, %v1579
      %v1602 = vpack.c.bf16 %v1581, %v1581
      %s1603 = scalar_lea.vmem %s331, 104
      %1604 = vst [vmem:[%s1603] sm:$0xf] %v1601
      %1605 = vst [vmem:[%s1603 + $0x4] sm:$0xf] %v1602
      %v1606 = vld [vmem:[%s1250] sm:$0xf]
      %v1607 = vld [vmem:[%s1250 + $0x4] sm:$0xf]
      %v1608 = vld [vmem:[%s1250 + $0x8] sm:$0x1]
      %s1609 = scalar_lea.vmem %s300, 60
      %v1610 = vld [vmem:[%s1609] sm:$0xf]
      %v1611 = vld [vmem:[%s1609 + $0x4] sm:$0xf]
      %v1612 = vld [vmem:[%s1609 + $0x8] sm:$0x1]
      %v1615 = vunpack.c.l.b16 %v1606
      %v1616 = vunpack.c.l.b16 %v1607
      %v1617 = vpack.c.b16 %v1616, %v1615
      %v1619 = vunpack.c.l.b16 %v1608
      %v1620 = vpack.c.b16 %v1619, %v1619
      %v1622 = vshrl.u32 %v1617, 16
      %v1624 = vshll.u32 %v1617, 16
      %v1626 = vrot.slane %v1624, 1
      %v1627 = vor.u32 %v1622, %v1626
      %v1629 = vshll.u32 %v1620, 16
      %v1631 = vrot.slane %v1629, 1
      %v1632 = vsel %vm357, %v1627, %v1631
      %1633 = vrot.lane.b32.xlu0 %v1632, 4
      %v1634 = vpop.permute.xlu0 %1633
      %v1637 = vunpack.c.l.b16 %v1610
      %v1638 = vunpack.c.l.b16 %v1611
      %v1639 = vpack.c.b16 %v1638, %v1637
      %1640 = vrot.lane.b32.xlu0 %v1639, 8
      %v1641 = vpop.permute.xlu0 %1640
      %v1643 = vunpack.c.l.b16 %v1612
      %v1644 = vpack.c.b16 %v1643, %v1643
      %v1646 = vshrl.u32 %v1639, 16
      %v1648 = vshll.u32 %v1639, 16
      %v1650 = vrot.slane %v1648, 1
      %v1651 = vor.u32 %v1646, %v1650
      %v1653 = vshll.u32 %v1644, 16
      %v1655 = vrot.slane %v1653, 1
      %v1656 = vsel %vm357, %v1651, %v1655
      %1657 = vrot.lane.b32.xlu0 %v1656, 12
      %v1658 = vpop.permute.xlu0 %1657
      %v1660 = vsel %vm396, %v1617, %v1634
      %v1662 = vsel %vm399, %v1660, %v1641
      %v1664 = vsel %vm402, %v1662, %v1658
      %v1665 = vld [vmem:[%s586] sm:$0xf]
      %v1666 = vld [vmem:[%s586 + $0x4] sm:$0xf]
      %v1669 = vunpack.c.l.b16 %v1665
      %v1670 = vunpack.c.l.b16 %v1666
      %v1671 = vpack.c.b16 %v1670, %v1669
      %v1673 = vsel %vm413, %v1664, 0
      %1675 = vmatpush.bf16.msra.mxu0 0
      %1676 = vmatpush.bf16.msra.mxu0 0
      %1677 = vmatpush.bf16.msra.mxu0 0
      %1678 = vmatpush.bf16.msra.mxu0 0
      %1679 = vmatpush.bf16.msra.mxu0 0
      %1680 = vmatpush.bf16.msra.mxu0 0
      %1681 = vmatpush.bf16.msra.mxu0 0
      %1682 = vmatpush.bf16.msra.mxu0 %v1671
      %1683 = vmatmul.bf16.gmra.mxu0 %v1673
      %v1684 = vpop.f32.mrf.mxu0
      %v1685 = vadd.f32 0.0, %v1684
      %v1686 = vpop.f32.mrf.mxu0
      %v1687 = vadd.f32 0.0, %v1686
      %1688 = vdwg.mxu0
      %v1689 = vadd.f32 %v1685, %v1687
      %v1690 = vrot.slane %v1689, 4
      %v1691 = vadd.f32 %v1689, %v1690
      %v1692 = vrot.slane %v1691, 2
      %v1693 = vadd.f32 %v1691, %v1692
      %v1694 = vrot.slane %v1693, 1
      %v1695 = vadd.f32 %v1693, %v1694
      %v1696 = vadd.f32 %v1590, %v1695
      %v1697 = vmul.f32 %v1685, %v1685
      %v1698 = vmul.f32 %v1687, %v1687
      %v1699 = vadd.f32 %v1697, %v1698
      %v1700 = vrot.slane %v1699, 4
      %v1701 = vadd.f32 %v1699, %v1700
      %v1702 = vrot.slane %v1701, 2
      %v1703 = vadd.f32 %v1701, %v1702
      %v1704 = vrot.slane %v1703, 1
      %v1705 = vadd.f32 %v1703, %v1704
      %v1706 = vadd.f32 %v1600, %v1705
      %v1707 = vpack.c.bf16 %v1685, %v1685
      %v1708 = vpack.c.bf16 %v1687, %v1687
      %s1709 = scalar_lea.vmem %s331, 112
      %1710 = vst [vmem:[%s1709] sm:$0xf] %v1707
      %1711 = vst [vmem:[%s1709 + $0x4] sm:$0xf] %v1708
      %v1712 = vshrl.u32 %v1620, 16
      %1714 = vrot.lane.b32.xlu0 %v1712, 4
      %v1715 = vpop.permute.xlu0 %1714
      %1716 = vrot.lane.b32.xlu0 %v1644, 8
      %v1717 = vpop.permute.xlu0 %1716
      %v1718 = vshrl.u32 %v1644, 16
      %1720 = vrot.lane.b32.xlu0 %v1718, 12
      %v1721 = vpop.permute.xlu0 %1720
      %v1723 = vsel %vm396, %v1620, %v1715
      %v1725 = vsel %vm399, %v1723, %v1717
      %v1727 = vsel %vm402, %v1725, %v1721
      %v1728 = vld [vmem:[%s650] sm:$0xf]
      %v1729 = vld [vmem:[%s650 + $0x4] sm:$0xf]
      %v1730 = vshrl.u32 %v1664, 16
      %v1732 = vshll.u32 %v1664, 16
      %v1734 = vrot.slane %v1732, 1
      %v1735 = vor.u32 %v1730, %v1734
      %v1736 = vshll.u32 %v1727, 16
      %v1738 = vrot.slane %v1736, 1
      %v1739 = vsel %vm357, %v1735, %v1738
      %v1742 = vunpack.c.l.b16 %v1728
      %v1743 = vunpack.c.l.b16 %v1729
      %v1744 = vpack.c.b16 %v1743, %v1742
      %v1747 = vsel %vm413, %v1739, 0
      %1749 = vmatpush.bf16.msra.mxu0 0
      %1750 = vmatpush.bf16.msra.mxu0 0
      %1751 = vmatpush.bf16.msra.mxu0 0
      %1752 = vmatpush.bf16.msra.mxu0 0
      %1753 = vmatpush.bf16.msra.mxu0 0
      %1754 = vmatpush.bf16.msra.mxu0 0
      %1755 = vmatpush.bf16.msra.mxu0 0
      %1756 = vmatpush.bf16.msra.mxu0 %v1744
      %1757 = vmatmul.bf16.gmra.mxu0 %v1747
      %v1758 = vpop.f32.mrf.mxu0
      %v1759 = vadd.f32 0.0, %v1758
      %v1760 = vpop.f32.mrf.mxu0
      %v1761 = vadd.f32 0.0, %v1760
      %1762 = vdwg.mxu0
      %v1763 = vadd.f32 %v1759, %v1761
      %v1764 = vrot.slane %v1763, 4
      %v1765 = vadd.f32 %v1763, %v1764
      %v1766 = vrot.slane %v1765, 2
      %v1767 = vadd.f32 %v1765, %v1766
      %v1768 = vrot.slane %v1767, 1
      %v1769 = vadd.f32 %v1767, %v1768
      %v1770 = vadd.f32 %v1696, %v1769
      %v1771 = vmul.f32 %v1759, %v1759
      %v1772 = vmul.f32 %v1761, %v1761
      %v1773 = vadd.f32 %v1771, %v1772
      %v1774 = vrot.slane %v1773, 4
      %v1775 = vadd.f32 %v1773, %v1774
      %v1776 = vrot.slane %v1775, 2
      %v1777 = vadd.f32 %v1775, %v1776
      %v1778 = vrot.slane %v1777, 1
      %v1779 = vadd.f32 %v1777, %v1778
      %v1780 = vadd.f32 %v1706, %v1779
      %v1781 = vpack.c.bf16 %v1759, %v1759
      %v1782 = vpack.c.bf16 %v1761, %v1761
      %s1783 = scalar_lea.vmem %s331, 120
      %1784 = vst [vmem:[%s1783] sm:$0xf] %v1781
      %1785 = vst [vmem:[%s1783 + $0x4] sm:$0xf] %v1782
      %v1786 = vld [vmem:[%s1250] sm:$0xf]
      %v1787 = vld [vmem:[%s1250 + $0x4] sm:$0xf]
      %v1788 = vld [vmem:[%s1250 + $0x8] sm:$0x1]
      %v1789 = vld [vmem:[%s1609] sm:$0xf]
      %v1790 = vld [vmem:[%s1609 + $0x4] sm:$0xf]
      %v1791 = vld [vmem:[%s1609 + $0x8] sm:$0x1]
      %v1794 = vunpack.c.l.b16 %v1786
      %v1795 = vunpack.c.l.b16 %v1787
      %v1796 = vpack.c.b16 %v1795, %v1794
      %v1798 = vunpack.c.l.b16 %v1788
      %v1799 = vpack.c.b16 %v1798, %v1798
      %v1801 = vshrl.u32 %v1796, 16
      %v1803 = vshll.u32 %v1796, 16
      %v1805 = vrot.slane %v1803, 1
      %v1806 = vor.u32 %v1801, %v1805
      %v1808 = vshll.u32 %v1799, 16
      %v1810 = vrot.slane %v1808, 1
      %v1811 = vsel %vm357, %v1806, %v1810
      %1812 = vrot.lane.b32.xlu0 %v1811, 4
      %v1813 = vpop.permute.xlu0 %1812
      %v1816 = vunpack.c.l.b16 %v1789
      %v1817 = vunpack.c.l.b16 %v1790
      %v1818 = vpack.c.b16 %v1817, %v1816
      %1819 = vrot.lane.b32.xlu0 %v1818, 8
      %v1820 = vpop.permute.xlu0 %1819
      %v1822 = vunpack.c.l.b16 %v1791
      %v1823 = vpack.c.b16 %v1822, %v1822
      %v1825 = vshrl.u32 %v1818, 16
      %v1827 = vshll.u32 %v1818, 16
      %v1829 = vrot.slane %v1827, 1
      %v1830 = vor.u32 %v1825, %v1829
      %v1832 = vshll.u32 %v1823, 16
      %v1834 = vrot.slane %v1832, 1
      %v1835 = vsel %vm357, %v1830, %v1834
      %1836 = vrot.lane.b32.xlu0 %v1835, 12
      %v1837 = vpop.permute.xlu0 %1836
      %v1839 = vsel %vm396, %v1796, %v1813
      %v1841 = vsel %vm399, %v1839, %v1820
      %v1843 = vsel %vm402, %v1841, %v1837
      %v1844 = vld [vmem:[%s2] sm:$0xf]
      %v1845 = vld [vmem:[%s2 + $0x4] sm:$0xf]
      %v1848 = vunpack.c.l.b16 %v1844
      %v1849 = vunpack.c.l.b16 %v1845
      %v1850 = vpack.c.b16 %v1849, %v1848
      %v1852 = vsel %vm413, %v1843, 0
      %1854 = vmatpush.bf16.msra.mxu0 0
      %1855 = vmatpush.bf16.msra.mxu0 0
      %1856 = vmatpush.bf16.msra.mxu0 0
      %1857 = vmatpush.bf16.msra.mxu0 0
      %1858 = vmatpush.bf16.msra.mxu0 0
      %1859 = vmatpush.bf16.msra.mxu0 0
      %1860 = vmatpush.bf16.msra.mxu0 0
      %1861 = vmatpush.bf16.msra.mxu0 %v1850
      %1862 = vmatmul.bf16.gmra.mxu0 %v1852
      %v1863 = vpop.f32.mrf.mxu0
      %v1864 = vadd.f32 0.0, %v1863
      %v1865 = vpop.f32.mrf.mxu0
      %v1866 = vadd.f32 0.0, %v1865
      %1867 = vdwg.mxu0
      %v1868 = vadd.f32 %v1864, %v1866
      %v1869 = vrot.slane %v1868, 4
      %v1870 = vadd.f32 %v1868, %v1869
      %v1871 = vrot.slane %v1870, 2
      %v1872 = vadd.f32 %v1870, %v1871
      %v1873 = vrot.slane %v1872, 1
      %v1874 = vadd.f32 %v1872, %v1873
      %v1875 = vadd.f32 %v1770, %v1874
      %v1876 = vmul.f32 %v1864, %v1864
      %v1877 = vmul.f32 %v1866, %v1866
      %v1878 = vadd.f32 %v1876, %v1877
      %v1879 = vrot.slane %v1878, 4
      %v1880 = vadd.f32 %v1878, %v1879
      %v1881 = vrot.slane %v1880, 2
      %v1882 = vadd.f32 %v1880, %v1881
      %v1883 = vrot.slane %v1882, 1
      %v1884 = vadd.f32 %v1882, %v1883
      %v1885 = vadd.f32 %v1780, %v1884
      %v1886 = vpack.c.bf16 %v1864, %v1864
      %v1887 = vpack.c.bf16 %v1866, %v1866
      %s1888 = scalar_lea.vmem %s331, 128
      %1889 = vst [vmem:[%s1888] sm:$0xf] %v1886
      %1890 = vst [vmem:[%s1888 + $0x4] sm:$0xf] %v1887
      %v1891 = vshrl.u32 %v1799, 16
      %1893 = vrot.lane.b32.xlu0 %v1891, 4
      %v1894 = vpop.permute.xlu0 %1893
      %1895 = vrot.lane.b32.xlu0 %v1823, 8
      %v1896 = vpop.permute.xlu0 %1895
      %v1897 = vshrl.u32 %v1823, 16
      %1899 = vrot.lane.b32.xlu0 %v1897, 12
      %v1900 = vpop.permute.xlu0 %1899
      %v1902 = vsel %vm396, %v1799, %v1894
      %v1904 = vsel %vm399, %v1902, %v1896
      %v1906 = vsel %vm402, %v1904, %v1900
      %v1907 = vld [vmem:[%s468] sm:$0xf]
      %v1908 = vld [vmem:[%s468 + $0x4] sm:$0xf]
      %v1909 = vshrl.u32 %v1843, 16
      %v1911 = vshll.u32 %v1843, 16
      %v1913 = vrot.slane %v1911, 1
      %v1914 = vor.u32 %v1909, %v1913
      %v1915 = vshll.u32 %v1906, 16
      %v1917 = vrot.slane %v1915, 1
      %v1918 = vsel %vm357, %v1914, %v1917
      %v1921 = vunpack.c.l.b16 %v1907
      %v1922 = vunpack.c.l.b16 %v1908
      %v1923 = vpack.c.b16 %v1922, %v1921
      %v1926 = vsel %vm413, %v1918, 0
      %1928 = vmatpush.bf16.msra.mxu0 0
      %1929 = vmatpush.bf16.msra.mxu0 0
      %1930 = vmatpush.bf16.msra.mxu0 0
      %1931 = vmatpush.bf16.msra.mxu0 0
      %1932 = vmatpush.bf16.msra.mxu0 0
      %1933 = vmatpush.bf16.msra.mxu0 0
      %1934 = vmatpush.bf16.msra.mxu0 0
      %1935 = vmatpush.bf16.msra.mxu0 %v1923
      %1936 = vmatmul.bf16.gmra.mxu0 %v1926
      %v1937 = vpop.f32.mrf.mxu0
      %v1938 = vadd.f32 0.0, %v1937
      %v1939 = vpop.f32.mrf.mxu0
      %v1940 = vadd.f32 0.0, %v1939
      %1941 = vdwg.mxu0
      %v1942 = vadd.f32 %v1938, %v1940
      %v1943 = vrot.slane %v1942, 4
      %v1944 = vadd.f32 %v1942, %v1943
      %v1945 = vrot.slane %v1944, 2
      %v1946 = vadd.f32 %v1944, %v1945
      %v1947 = vrot.slane %v1946, 1
      %v1948 = vadd.f32 %v1946, %v1947
      %v1949 = vadd.f32 %v1875, %v1948
      %v1950 = vmul.f32 %v1938, %v1938
      %v1951 = vmul.f32 %v1940, %v1940
      %v1952 = vadd.f32 %v1950, %v1951
      %v1953 = vrot.slane %v1952, 4
      %v1954 = vadd.f32 %v1952, %v1953
      %v1955 = vrot.slane %v1954, 2
      %v1956 = vadd.f32 %v1954, %v1955
      %v1957 = vrot.slane %v1956, 1
      %v1958 = vadd.f32 %v1956, %v1957
      %v1959 = vadd.f32 %v1885, %v1958
      %v1960 = vpack.c.bf16 %v1938, %v1938
      %v1961 = vpack.c.bf16 %v1940, %v1940
      %s1962 = scalar_lea.vmem %s331, 136
      %1963 = vst [vmem:[%s1962] sm:$0xf] %v1960
      %1964 = vst [vmem:[%s1962 + $0x4] sm:$0xf] %v1961
      %v1965 = vld [vmem:[%s1609] sm:$0xf]
      %v1966 = vld [vmem:[%s1609 + $0x4] sm:$0xf]
      %v1967 = vld [vmem:[%s1609 + $0x8] sm:$0x1]
      %s1968 = scalar_lea.vmem %s300, 72
      %v1969 = vld [vmem:[%s1968] sm:$0xf]
      %v1970 = vld [vmem:[%s1968 + $0x4] sm:$0xf]
      %v1971 = vld [vmem:[%s1968 + $0x8] sm:$0x1]
      %v1974 = vunpack.c.l.b16 %v1965
      %v1975 = vunpack.c.l.b16 %v1966
      %v1976 = vpack.c.b16 %v1975, %v1974
      %v1978 = vunpack.c.l.b16 %v1967
      %v1979 = vpack.c.b16 %v1978, %v1978
      %v1981 = vshrl.u32 %v1976, 16
      %v1983 = vshll.u32 %v1976, 16
      %v1985 = vrot.slane %v1983, 1
      %v1986 = vor.u32 %v1981, %v1985
      %v1988 = vshll.u32 %v1979, 16
      %v1990 = vrot.slane %v1988, 1
      %v1991 = vsel %vm357, %v1986, %v1990
      %1992 = vrot.lane.b32.xlu0 %v1991, 4
      %v1993 = vpop.permute.xlu0 %1992
      %v1996 = vunpack.c.l.b16 %v1969
      %v1997 = vunpack.c.l.b16 %v1970
      %v1998 = vpack.c.b16 %v1997, %v1996
      %1999 = vrot.lane.b32.xlu0 %v1998, 8
      %v2000 = vpop.permute.xlu0 %1999
      %v2002 = vunpack.c.l.b16 %v1971
      %v2003 = vpack.c.b16 %v2002, %v2002
      %v2005 = vshrl.u32 %v1998, 16
      %v2007 = vshll.u32 %v1998, 16
      %v2009 = vrot.slane %v2007, 1
      %v2010 = vor.u32 %v2005, %v2009
      %v2012 = vshll.u32 %v2003, 16
      %v2014 = vrot.slane %v2012, 1
      %v2015 = vsel %vm357, %v2010, %v2014
      %2016 = vrot.lane.b32.xlu0 %v2015, 12
      %v2017 = vpop.permute.xlu0 %2016
      %v2019 = vsel %vm396, %v1976, %v1993
      %v2021 = vsel %vm399, %v2019, %v2000
      %v2023 = vsel %vm402, %v2021, %v2017
      %v2024 = vld [vmem:[%s586] sm:$0xf]
      %v2025 = vld [vmem:[%s586 + $0x4] sm:$0xf]
      %v2028 = vunpack.c.l.b16 %v2024
      %v2029 = vunpack.c.l.b16 %v2025
      %v2030 = vpack.c.b16 %v2029, %v2028
      %v2032 = vsel %vm413, %v2023, 0
      %2034 = vmatpush.bf16.msra.mxu0 0
      %2035 = vmatpush.bf16.msra.mxu0 0
      %2036 = vmatpush.bf16.msra.mxu0 0
      %2037 = vmatpush.bf16.msra.mxu0 0
      %2038 = vmatpush.bf16.msra.mxu0 0
      %2039 = vmatpush.bf16.msra.mxu0 0
      %2040 = vmatpush.bf16.msra.mxu0 0
      %2041 = vmatpush.bf16.msra.mxu0 %v2030
      %2042 = vmatmul.bf16.gmra.mxu0 %v2032
      %v2043 = vpop.f32.mrf.mxu0
      %v2044 = vadd.f32 0.0, %v2043
      %v2045 = vpop.f32.mrf.mxu0
      %v2046 = vadd.f32 0.0, %v2045
      %2047 = vdwg.mxu0
      %v2048 = vadd.f32 %v2044, %v2046
      %v2049 = vrot.slane %v2048, 4
      %v2050 = vadd.f32 %v2048, %v2049
      %v2051 = vrot.slane %v2050, 2
      %v2052 = vadd.f32 %v2050, %v2051
      %v2053 = vrot.slane %v2052, 1
      %v2054 = vadd.f32 %v2052, %v2053
      %v2055 = vadd.f32 %v1949, %v2054
      %v2056 = vmul.f32 %v2044, %v2044
      %v2057 = vmul.f32 %v2046, %v2046
      %v2058 = vadd.f32 %v2056, %v2057
      %v2059 = vrot.slane %v2058, 4
      %v2060 = vadd.f32 %v2058, %v2059
      %v2061 = vrot.slane %v2060, 2
      %v2062 = vadd.f32 %v2060, %v2061
      %v2063 = vrot.slane %v2062, 1
      %v2064 = vadd.f32 %v2062, %v2063
      %v2065 = vadd.f32 %v1959, %v2064
      %v2066 = vpack.c.bf16 %v2044, %v2044
      %v2067 = vpack.c.bf16 %v2046, %v2046
      %s2068 = scalar_lea.vmem %s331, 144
      %2069 = vst [vmem:[%s2068] sm:$0xf] %v2066
      %2070 = vst [vmem:[%s2068 + $0x4] sm:$0xf] %v2067
      %v2071 = vshrl.u32 %v1979, 16
      %2073 = vrot.lane.b32.xlu0 %v2071, 4
      %v2074 = vpop.permute.xlu0 %2073
      %2075 = vrot.lane.b32.xlu0 %v2003, 8
      %v2076 = vpop.permute.xlu0 %2075
      %v2077 = vshrl.u32 %v2003, 16
      %2079 = vrot.lane.b32.xlu0 %v2077, 12
      %v2080 = vpop.permute.xlu0 %2079
      %v2082 = vsel %vm396, %v1979, %v2074
      %v2084 = vsel %vm399, %v2082, %v2076
      %v2086 = vsel %vm402, %v2084, %v2080
      %v2087 = vld [vmem:[%s650] sm:$0xf]
      %v2088 = vld [vmem:[%s650 + $0x4] sm:$0xf]
      %v2089 = vshrl.u32 %v2023, 16
      %v2091 = vshll.u32 %v2023, 16
      %v2093 = vrot.slane %v2091, 1
      %v2094 = vor.u32 %v2089, %v2093
      %v2095 = vshll.u32 %v2086, 16
      %v2097 = vrot.slane %v2095, 1
      %v2098 = vsel %vm357, %v2094, %v2097
      %v2101 = vunpack.c.l.b16 %v2087
      %v2102 = vunpack.c.l.b16 %v2088
      %v2103 = vpack.c.b16 %v2102, %v2101
      %v2106 = vsel %vm413, %v2098, 0
      %2108 = vmatpush.bf16.msra.mxu0 0
      %2109 = vmatpush.bf16.msra.mxu0 0
      %2110 = vmatpush.bf16.msra.mxu0 0
      %2111 = vmatpush.bf16.msra.mxu0 0
      %2112 = vmatpush.bf16.msra.mxu0 0
      %2113 = vmatpush.bf16.msra.mxu0 0
      %2114 = vmatpush.bf16.msra.mxu0 0
      %2115 = vmatpush.bf16.msra.mxu0 %v2103
      %2116 = vmatmul.bf16.gmra.mxu0 %v2106
      %v2117 = vpop.f32.mrf.mxu0
      %v2118 = vadd.f32 0.0, %v2117
      %v2119 = vpop.f32.mrf.mxu0
      %v2120 = vadd.f32 0.0, %v2119
      %2121 = vdwg.mxu0
      %v2122 = vadd.f32 %v2118, %v2120
      %v2123 = vrot.slane %v2122, 4
      %v2124 = vadd.f32 %v2122, %v2123
      %v2125 = vrot.slane %v2124, 2
      %v2126 = vadd.f32 %v2124, %v2125
      %v2127 = vrot.slane %v2126, 1
      %v2128 = vadd.f32 %v2126, %v2127
      %v2129 = vadd.f32 %v2055, %v2128
      %v2130 = vmul.f32 %v2118, %v2118
      %v2131 = vmul.f32 %v2120, %v2120
      %v2132 = vadd.f32 %v2130, %v2131
      %v2133 = vrot.slane %v2132, 4
      %v2134 = vadd.f32 %v2132, %v2133
      %v2135 = vrot.slane %v2134, 2
      %v2136 = vadd.f32 %v2134, %v2135
      %v2137 = vrot.slane %v2136, 1
      %v2138 = vadd.f32 %v2136, %v2137
      %v2139 = vadd.f32 %v2065, %v2138
      %v2140 = vpack.c.bf16 %v2118, %v2118
      %v2141 = vpack.c.bf16 %v2120, %v2120
      %s2142 = scalar_lea.vmem %s331, 152
      %2143 = vst [vmem:[%s2142] sm:$0xf] %v2140
      %2144 = vst [vmem:[%s2142 + $0x4] sm:$0xf] %v2141
      %v2145 = vld [vmem:[%s1609] sm:$0xf]
      %v2146 = vld [vmem:[%s1609 + $0x4] sm:$0xf]
      %v2147 = vld [vmem:[%s1609 + $0x8] sm:$0x1]
      %v2148 = vld [vmem:[%s1968] sm:$0xf]
      %v2149 = vld [vmem:[%s1968 + $0x4] sm:$0xf]
      %v2150 = vld [vmem:[%s1968 + $0x8] sm:$0x1]
      %v2153 = vunpack.c.l.b16 %v2145
      %v2154 = vunpack.c.l.b16 %v2146
      %v2155 = vpack.c.b16 %v2154, %v2153
      %v2157 = vunpack.c.l.b16 %v2147
      %v2158 = vpack.c.b16 %v2157, %v2157
      %v2160 = vshrl.u32 %v2155, 16
      %v2162 = vshll.u32 %v2155, 16
      %v2164 = vrot.slane %v2162, 1
      %v2165 = vor.u32 %v2160, %v2164
      %v2167 = vshll.u32 %v2158, 16
      %v2169 = vrot.slane %v2167, 1
      %v2170 = vsel %vm357, %v2165, %v2169
      %2171 = vrot.lane.b32.xlu0 %v2170, 4
      %v2172 = vpop.permute.xlu0 %2171
      %v2175 = vunpack.c.l.b16 %v2148
      %v2176 = vunpack.c.l.b16 %v2149
      %v2177 = vpack.c.b16 %v2176, %v2175
      %2178 = vrot.lane.b32.xlu0 %v2177, 8
      %v2179 = vpop.permute.xlu0 %2178
      %v2181 = vunpack.c.l.b16 %v2150
      %v2182 = vpack.c.b16 %v2181, %v2181
      %v2184 = vshrl.u32 %v2177, 16
      %v2186 = vshll.u32 %v2177, 16
      %v2188 = vrot.slane %v2186, 1
      %v2189 = vor.u32 %v2184, %v2188
      %v2191 = vshll.u32 %v2182, 16
      %v2193 = vrot.slane %v2191, 1
      %v2194 = vsel %vm357, %v2189, %v2193
      %2195 = vrot.lane.b32.xlu0 %v2194, 12
      %v2196 = vpop.permute.xlu0 %2195
      %v2198 = vsel %vm396, %v2155, %v2172
      %v2200 = vsel %vm399, %v2198, %v2179
      %v2202 = vsel %vm402, %v2200, %v2196
      %v2203 = vld [vmem:[%s2] sm:$0xf]
      %v2204 = vld [vmem:[%s2 + $0x4] sm:$0xf]
      %v2207 = vunpack.c.l.b16 %v2203
      %v2208 = vunpack.c.l.b16 %v2204
      %v2209 = vpack.c.b16 %v2208, %v2207
      %v2211 = vsel %vm413, %v2202, 0
      %2213 = vmatpush.bf16.msra.mxu0 0
      %2214 = vmatpush.bf16.msra.mxu0 0
      %2215 = vmatpush.bf16.msra.mxu0 0
      %2216 = vmatpush.bf16.msra.mxu0 0
      %2217 = vmatpush.bf16.msra.mxu0 0
      %2218 = vmatpush.bf16.msra.mxu0 0
      %2219 = vmatpush.bf16.msra.mxu0 0
      %2220 = vmatpush.bf16.msra.mxu0 %v2209
      %2221 = vmatmul.bf16.gmra.mxu0 %v2211
      %v2222 = vpop.f32.mrf.mxu0
      %v2223 = vadd.f32 0.0, %v2222
      %v2224 = vpop.f32.mrf.mxu0
      %v2225 = vadd.f32 0.0, %v2224
      %2226 = vdwg.mxu0
      %v2227 = vadd.f32 %v2223, %v2225
      %v2228 = vrot.slane %v2227, 4
      %v2229 = vadd.f32 %v2227, %v2228
      %v2230 = vrot.slane %v2229, 2
      %v2231 = vadd.f32 %v2229, %v2230
      %v2232 = vrot.slane %v2231, 1
      %v2233 = vadd.f32 %v2231, %v2232
      %v2234 = vadd.f32 %v2129, %v2233
      %v2235 = vmul.f32 %v2223, %v2223
      %v2236 = vmul.f32 %v2225, %v2225
      %v2237 = vadd.f32 %v2235, %v2236
      %v2238 = vrot.slane %v2237, 4
      %v2239 = vadd.f32 %v2237, %v2238
      %v2240 = vrot.slane %v2239, 2
      %v2241 = vadd.f32 %v2239, %v2240
      %v2242 = vrot.slane %v2241, 1
      %v2243 = vadd.f32 %v2241, %v2242
      %v2244 = vadd.f32 %v2139, %v2243
      %v2245 = vpack.c.bf16 %v2223, %v2223
      %v2246 = vpack.c.bf16 %v2225, %v2225
      %s2247 = scalar_lea.vmem %s331, 160
      %2248 = vst [vmem:[%s2247] sm:$0xf] %v2245
      %2249 = vst [vmem:[%s2247 + $0x4] sm:$0xf] %v2246
      %v2250 = vshrl.u32 %v2158, 16
      %2252 = vrot.lane.b32.xlu0 %v2250, 4
      %v2253 = vpop.permute.xlu0 %2252
      %2254 = vrot.lane.b32.xlu0 %v2182, 8
      %v2255 = vpop.permute.xlu0 %2254
      %v2256 = vshrl.u32 %v2182, 16
      %2258 = vrot.lane.b32.xlu0 %v2256, 12
      %v2259 = vpop.permute.xlu0 %2258
      %v2261 = vsel %vm396, %v2158, %v2253
      %v2263 = vsel %vm399, %v2261, %v2255
      %v2265 = vsel %vm402, %v2263, %v2259
      %v2266 = vld [vmem:[%s468] sm:$0xf]
      %v2267 = vld [vmem:[%s468 + $0x4] sm:$0xf]
      %v2268 = vshrl.u32 %v2202, 16
      %v2270 = vshll.u32 %v2202, 16
      %v2272 = vrot.slane %v2270, 1
      %v2273 = vor.u32 %v2268, %v2272
      %v2274 = vshll.u32 %v2265, 16
      %v2276 = vrot.slane %v2274, 1
      %v2277 = vsel %vm357, %v2273, %v2276
      %v2280 = vunpack.c.l.b16 %v2266
      %v2281 = vunpack.c.l.b16 %v2267
      %v2282 = vpack.c.b16 %v2281, %v2280
      %v2285 = vsel %vm413, %v2277, 0
      %2287 = vmatpush.bf16.msra.mxu0 0
      %2288 = vmatpush.bf16.msra.mxu0 0
      %2289 = vmatpush.bf16.msra.mxu0 0
      %2290 = vmatpush.bf16.msra.mxu0 0
      %2291 = vmatpush.bf16.msra.mxu0 0
      %2292 = vmatpush.bf16.msra.mxu0 0
      %2293 = vmatpush.bf16.msra.mxu0 0
      %2294 = vmatpush.bf16.msra.mxu0 %v2282
      %2295 = vmatmul.bf16.gmra.mxu0 %v2285
      %v2296 = vpop.f32.mrf.mxu0
      %v2297 = vadd.f32 0.0, %v2296
      %v2298 = vpop.f32.mrf.mxu0
      %v2299 = vadd.f32 0.0, %v2298
      %2300 = vdwg.mxu0
      %v2301 = vadd.f32 %v2297, %v2299
      %v2302 = vrot.slane %v2301, 4
      %v2303 = vadd.f32 %v2301, %v2302
      %v2304 = vrot.slane %v2303, 2
      %v2305 = vadd.f32 %v2303, %v2304
      %v2306 = vrot.slane %v2305, 1
      %v2307 = vadd.f32 %v2305, %v2306
      %v2308 = vadd.f32 %v2234, %v2307
      %v2309 = vmul.f32 %v2297, %v2297
      %v2310 = vmul.f32 %v2299, %v2299
      %v2311 = vadd.f32 %v2309, %v2310
      %v2312 = vrot.slane %v2311, 4
      %v2313 = vadd.f32 %v2311, %v2312
      %v2314 = vrot.slane %v2313, 2
      %v2315 = vadd.f32 %v2313, %v2314
      %v2316 = vrot.slane %v2315, 1
      %v2317 = vadd.f32 %v2315, %v2316
      %v2318 = vadd.f32 %v2244, %v2317
      %v2319 = vpack.c.bf16 %v2297, %v2297
      %v2320 = vpack.c.bf16 %v2299, %v2299
      %s2321 = scalar_lea.vmem %s331, 168
      %2322 = vst [vmem:[%s2321] sm:$0xf] %v2319
      %2323 = vst [vmem:[%s2321 + $0x4] sm:$0xf] %v2320
      %v2324 = vld [vmem:[%s1968] sm:$0xf]
      %v2325 = vld [vmem:[%s1968 + $0x4] sm:$0xf]
      %v2326 = vld [vmem:[%s1968 + $0x8] sm:$0x1]
      %s2327 = scalar_lea.vmem %s300, 84
      %v2328 = vld [vmem:[%s2327] sm:$0xf]
      %v2329 = vld [vmem:[%s2327 + $0x4] sm:$0xf]
      %v2330 = vld [vmem:[%s2327 + $0x8] sm:$0x1]
      %v2333 = vunpack.c.l.b16 %v2324
      %v2334 = vunpack.c.l.b16 %v2325
      %v2335 = vpack.c.b16 %v2334, %v2333
      %v2337 = vunpack.c.l.b16 %v2326
      %v2338 = vpack.c.b16 %v2337, %v2337
      %v2340 = vshrl.u32 %v2335, 16
      %v2342 = vshll.u32 %v2335, 16
      %v2344 = vrot.slane %v2342, 1
      %v2345 = vor.u32 %v2340, %v2344
      %v2347 = vshll.u32 %v2338, 16
      %v2349 = vrot.slane %v2347, 1
      %v2350 = vsel %vm357, %v2345, %v2349
      %2351 = vrot.lane.b32.xlu0 %v2350, 4
      %v2352 = vpop.permute.xlu0 %2351
      %v2355 = vunpack.c.l.b16 %v2328
      %v2356 = vunpack.c.l.b16 %v2329
      %v2357 = vpack.c.b16 %v2356, %v2355
      %2358 = vrot.lane.b32.xlu0 %v2357, 8
      %v2359 = vpop.permute.xlu0 %2358
      %v2361 = vunpack.c.l.b16 %v2330
      %v2362 = vpack.c.b16 %v2361, %v2361
      %v2364 = vshrl.u32 %v2357, 16
      %v2366 = vshll.u32 %v2357, 16
      %v2368 = vrot.slane %v2366, 1
      %v2369 = vor.u32 %v2364, %v2368
      %v2371 = vshll.u32 %v2362, 16
      %v2373 = vrot.slane %v2371, 1
      %v2374 = vsel %vm357, %v2369, %v2373
      %2375 = vrot.lane.b32.xlu0 %v2374, 12
      %v2376 = vpop.permute.xlu0 %2375
      %v2378 = vsel %vm396, %v2335, %v2352
      %v2380 = vsel %vm399, %v2378, %v2359
      %v2382 = vsel %vm402, %v2380, %v2376
      %v2383 = vld [vmem:[%s586] sm:$0xf]
      %v2384 = vld [vmem:[%s586 + $0x4] sm:$0xf]
      %v2387 = vunpack.c.l.b16 %v2383
      %v2388 = vunpack.c.l.b16 %v2384
      %v2389 = vpack.c.b16 %v2388, %v2387
      %v2391 = vsel %vm413, %v2382, 0
      %2393 = vmatpush.bf16.msra.mxu0 0
      %2394 = vmatpush.bf16.msra.mxu0 0
      %2395 = vmatpush.bf16.msra.mxu0 0
      %2396 = vmatpush.bf16.msra.mxu0 0
      %2397 = vmatpush.bf16.msra.mxu0 0
      %2398 = vmatpush.bf16.msra.mxu0 0
      %2399 = vmatpush.bf16.msra.mxu0 0
      %2400 = vmatpush.bf16.msra.mxu0 %v2389
      %2401 = vmatmul.bf16.gmra.mxu0 %v2391
      %v2402 = vpop.f32.mrf.mxu0
      %v2403 = vadd.f32 0.0, %v2402
      %v2404 = vpop.f32.mrf.mxu0
      %v2405 = vadd.f32 0.0, %v2404
      %2406 = vdwg.mxu0
      %v2407 = vadd.f32 %v2403, %v2405
      %v2408 = vrot.slane %v2407, 4
      %v2409 = vadd.f32 %v2407, %v2408
      %v2410 = vrot.slane %v2409, 2
      %v2411 = vadd.f32 %v2409, %v2410
      %v2412 = vrot.slane %v2411, 1
      %v2413 = vadd.f32 %v2411, %v2412
      %v2414 = vadd.f32 %v2308, %v2413
      %v2415 = vmul.f32 %v2403, %v2403
      %v2416 = vmul.f32 %v2405, %v2405
      %v2417 = vadd.f32 %v2415, %v2416
      %v2418 = vrot.slane %v2417, 4
      %v2419 = vadd.f32 %v2417, %v2418
      %v2420 = vrot.slane %v2419, 2
      %v2421 = vadd.f32 %v2419, %v2420
      %v2422 = vrot.slane %v2421, 1
      %v2423 = vadd.f32 %v2421, %v2422
      %v2424 = vadd.f32 %v2318, %v2423
      %v2425 = vpack.c.bf16 %v2403, %v2403
      %v2426 = vpack.c.bf16 %v2405, %v2405
      %s2427 = scalar_lea.vmem %s331, 176
      %2428 = vst [vmem:[%s2427] sm:$0xf] %v2425
      %2429 = vst [vmem:[%s2427 + $0x4] sm:$0xf] %v2426
      %v2430 = vshrl.u32 %v2338, 16
      %2432 = vrot.lane.b32.xlu0 %v2430, 4
      %v2433 = vpop.permute.xlu0 %2432
      %2434 = vrot.lane.b32.xlu0 %v2362, 8
      %v2435 = vpop.permute.xlu0 %2434
      %v2436 = vshrl.u32 %v2362, 16
      %2438 = vrot.lane.b32.xlu0 %v2436, 12
      %v2439 = vpop.permute.xlu0 %2438
      %v2441 = vsel %vm396, %v2338, %v2433
      %v2443 = vsel %vm399, %v2441, %v2435
      %v2445 = vsel %vm402, %v2443, %v2439
      %v2446 = vld [vmem:[%s650] sm:$0xf]
      %v2447 = vld [vmem:[%s650 + $0x4] sm:$0xf]
      %v2448 = vshrl.u32 %v2382, 16
      %v2450 = vshll.u32 %v2382, 16
      %v2452 = vrot.slane %v2450, 1
      %v2453 = vor.u32 %v2448, %v2452
      %v2454 = vshll.u32 %v2445, 16
      %v2456 = vrot.slane %v2454, 1
      %v2457 = vsel %vm357, %v2453, %v2456
      %v2460 = vunpack.c.l.b16 %v2446
      %v2461 = vunpack.c.l.b16 %v2447
      %v2462 = vpack.c.b16 %v2461, %v2460
      %v2465 = vsel %vm413, %v2457, 0
      %2467 = vmatpush.bf16.msra.mxu0 0
      %2468 = vmatpush.bf16.msra.mxu0 0
      %2469 = vmatpush.bf16.msra.mxu0 0
      %2470 = vmatpush.bf16.msra.mxu0 0
      %2471 = vmatpush.bf16.msra.mxu0 0
      %2472 = vmatpush.bf16.msra.mxu0 0
      %2473 = vmatpush.bf16.msra.mxu0 0
      %2474 = vmatpush.bf16.msra.mxu0 %v2462
      %2475 = vmatmul.bf16.gmra.mxu0 %v2465
      %v2476 = vpop.f32.mrf.mxu0
      %v2477 = vadd.f32 0.0, %v2476
      %v2478 = vpop.f32.mrf.mxu0
      %v2479 = vadd.f32 0.0, %v2478
      %2480 = vdwg.mxu0
      %v2481 = vadd.f32 %v2477, %v2479
      %v2482 = vrot.slane %v2481, 4
      %v2483 = vadd.f32 %v2481, %v2482
      %v2484 = vrot.slane %v2483, 2
      %v2485 = vadd.f32 %v2483, %v2484
      %v2486 = vrot.slane %v2485, 1
      %v2487 = vadd.f32 %v2485, %v2486
      %v2488 = vadd.f32 %v2414, %v2487
      %v2489 = vmul.f32 %v2477, %v2477
      %v2490 = vmul.f32 %v2479, %v2479
      %v2491 = vadd.f32 %v2489, %v2490
      %v2492 = vrot.slane %v2491, 4
      %v2493 = vadd.f32 %v2491, %v2492
      %v2494 = vrot.slane %v2493, 2
      %v2495 = vadd.f32 %v2493, %v2494
      %v2496 = vrot.slane %v2495, 1
      %v2497 = vadd.f32 %v2495, %v2496
      %v2498 = vadd.f32 %v2424, %v2497
      %v2499 = vpack.c.bf16 %v2477, %v2477
      %v2500 = vpack.c.bf16 %v2479, %v2479
      %s2501 = scalar_lea.vmem %s331, 184
      %2502 = vst [vmem:[%s2501] sm:$0xf] %v2499
      %2503 = vst [vmem:[%s2501 + $0x4] sm:$0xf] %v2500
      %v2504 = vld [vmem:[%s1968] sm:$0xf]
      %v2505 = vld [vmem:[%s1968 + $0x4] sm:$0xf]
      %v2506 = vld [vmem:[%s1968 + $0x8] sm:$0x1]
      %v2507 = vld [vmem:[%s2327] sm:$0xf]
      %v2508 = vld [vmem:[%s2327 + $0x4] sm:$0xf]
      %v2509 = vld [vmem:[%s2327 + $0x8] sm:$0x1]
      %v2512 = vunpack.c.l.b16 %v2504
      %v2513 = vunpack.c.l.b16 %v2505
      %v2514 = vpack.c.b16 %v2513, %v2512
      %v2516 = vunpack.c.l.b16 %v2506
      %v2517 = vpack.c.b16 %v2516, %v2516
      %v2519 = vshrl.u32 %v2514, 16
      %v2521 = vshll.u32 %v2514, 16
      %v2523 = vrot.slane %v2521, 1
      %v2524 = vor.u32 %v2519, %v2523
      %v2526 = vshll.u32 %v2517, 16
      %v2528 = vrot.slane %v2526, 1
      %v2529 = vsel %vm357, %v2524, %v2528
      %2530 = vrot.lane.b32.xlu0 %v2529, 4
      %v2531 = vpop.permute.xlu0 %2530
      %v2534 = vunpack.c.l.b16 %v2507
      %v2535 = vunpack.c.l.b16 %v2508
      %v2536 = vpack.c.b16 %v2535, %v2534
      %2537 = vrot.lane.b32.xlu0 %v2536, 8
      %v2538 = vpop.permute.xlu0 %2537
      %v2540 = vunpack.c.l.b16 %v2509
      %v2541 = vpack.c.b16 %v2540, %v2540
      %v2543 = vshrl.u32 %v2536, 16
      %v2545 = vshll.u32 %v2536, 16
      %v2547 = vrot.slane %v2545, 1
      %v2548 = vor.u32 %v2543, %v2547
      %v2550 = vshll.u32 %v2541, 16
      %v2552 = vrot.slane %v2550, 1
      %v2553 = vsel %vm357, %v2548, %v2552
      %2554 = vrot.lane.b32.xlu0 %v2553, 12
      %v2555 = vpop.permute.xlu0 %2554
      %v2557 = vsel %vm396, %v2514, %v2531
      %v2559 = vsel %vm399, %v2557, %v2538
      %v2561 = vsel %vm402, %v2559, %v2555
      %v2562 = vld [vmem:[%s2] sm:$0xf]
      %v2563 = vld [vmem:[%s2 + $0x4] sm:$0xf]
      %v2566 = vunpack.c.l.b16 %v2562
      %v2567 = vunpack.c.l.b16 %v2563
      %v2568 = vpack.c.b16 %v2567, %v2566
      %v2570 = vsel %vm413, %v2561, 0
      %2572 = vmatpush.bf16.msra.mxu0 0
      %2573 = vmatpush.bf16.msra.mxu0 0
      %2574 = vmatpush.bf16.msra.mxu0 0
      %2575 = vmatpush.bf16.msra.mxu0 0
      %2576 = vmatpush.bf16.msra.mxu0 0
      %2577 = vmatpush.bf16.msra.mxu0 0
      %2578 = vmatpush.bf16.msra.mxu0 0
      %2579 = vmatpush.bf16.msra.mxu0 %v2568
      %2580 = vmatmul.bf16.gmra.mxu0 %v2570
      %v2581 = vpop.f32.mrf.mxu0
      %v2582 = vadd.f32 0.0, %v2581
      %v2583 = vpop.f32.mrf.mxu0
      %v2584 = vadd.f32 0.0, %v2583
      %2585 = vdwg.mxu0
      %v2586 = vadd.f32 %v2582, %v2584
      %v2587 = vrot.slane %v2586, 4
      %v2588 = vadd.f32 %v2586, %v2587
      %v2589 = vrot.slane %v2588, 2
      %v2590 = vadd.f32 %v2588, %v2589
      %v2591 = vrot.slane %v2590, 1
      %v2592 = vadd.f32 %v2590, %v2591
      %v2593 = vadd.f32 %v2488, %v2592
      %v2594 = vmul.f32 %v2582, %v2582
      %v2595 = vmul.f32 %v2584, %v2584
      %v2596 = vadd.f32 %v2594, %v2595
      %v2597 = vrot.slane %v2596, 4
      %v2598 = vadd.f32 %v2596, %v2597
      %v2599 = vrot.slane %v2598, 2
      %v2600 = vadd.f32 %v2598, %v2599
      %v2601 = vrot.slane %v2600, 1
      %v2602 = vadd.f32 %v2600, %v2601
      %v2603 = vadd.f32 %v2498, %v2602
      %v2604 = vpack.c.bf16 %v2582, %v2582
      %v2605 = vpack.c.bf16 %v2584, %v2584
      %s2606 = scalar_lea.vmem %s331, 192
      %2607 = vst [vmem:[%s2606] sm:$0xf] %v2604
      %2608 = vst [vmem:[%s2606 + $0x4] sm:$0xf] %v2605
      %v2609 = vshrl.u32 %v2517, 16
      %2611 = vrot.lane.b32.xlu0 %v2609, 4
      %v2612 = vpop.permute.xlu0 %2611
      %2613 = vrot.lane.b32.xlu0 %v2541, 8
      %v2614 = vpop.permute.xlu0 %2613
      %v2615 = vshrl.u32 %v2541, 16
      %2617 = vrot.lane.b32.xlu0 %v2615, 12
      %v2618 = vpop.permute.xlu0 %2617
      %v2620 = vsel %vm396, %v2517, %v2612
      %v2622 = vsel %vm399, %v2620, %v2614
      %v2624 = vsel %vm402, %v2622, %v2618
      %v2625 = vld [vmem:[%s468] sm:$0xf]
      %v2626 = vld [vmem:[%s468 + $0x4] sm:$0xf]
      %v2627 = vshrl.u32 %v2561, 16
      %v2629 = vshll.u32 %v2561, 16
      %v2631 = vrot.slane %v2629, 1
      %v2632 = vor.u32 %v2627, %v2631
      %v2633 = vshll.u32 %v2624, 16
      %v2635 = vrot.slane %v2633, 1
      %v2636 = vsel %vm357, %v2632, %v2635
      %v2639 = vunpack.c.l.b16 %v2625
      %v2640 = vunpack.c.l.b16 %v2626
      %v2641 = vpack.c.b16 %v2640, %v2639
      %v2644 = vsel %vm413, %v2636, 0
      %2646 = vmatpush.bf16.msra.mxu0 0
      %2647 = vmatpush.bf16.msra.mxu0 0
      %2648 = vmatpush.bf16.msra.mxu0 0
      %2649 = vmatpush.bf16.msra.mxu0 0
      %2650 = vmatpush.bf16.msra.mxu0 0
      %2651 = vmatpush.bf16.msra.mxu0 0
      %2652 = vmatpush.bf16.msra.mxu0 0
      %2653 = vmatpush.bf16.msra.mxu0 %v2641
      %2654 = vmatmul.bf16.gmra.mxu0 %v2644
      %v2655 = vpop.f32.mrf.mxu0
      %v2656 = vadd.f32 0.0, %v2655
      %v2657 = vpop.f32.mrf.mxu0
      %v2658 = vadd.f32 0.0, %v2657
      %2659 = vdwg.mxu0
      %v2660 = vadd.f32 %v2656, %v2658
      %v2661 = vrot.slane %v2660, 4
      %v2662 = vadd.f32 %v2660, %v2661
      %v2663 = vrot.slane %v2662, 2
      %v2664 = vadd.f32 %v2662, %v2663
      %v2665 = vrot.slane %v2664, 1
      %v2666 = vadd.f32 %v2664, %v2665
      %v2667 = vadd.f32 %v2593, %v2666
      %v2668 = vmul.f32 %v2656, %v2656
      %v2669 = vmul.f32 %v2658, %v2658
      %v2670 = vadd.f32 %v2668, %v2669
      %v2671 = vrot.slane %v2670, 4
      %v2672 = vadd.f32 %v2670, %v2671
      %v2673 = vrot.slane %v2672, 2
      %v2674 = vadd.f32 %v2672, %v2673
      %v2675 = vrot.slane %v2674, 1
      %v2676 = vadd.f32 %v2674, %v2675
      %v2677 = vadd.f32 %v2603, %v2676
      %v2678 = vpack.c.bf16 %v2656, %v2656
      %v2679 = vpack.c.bf16 %v2658, %v2658
      %s2680 = scalar_lea.vmem %s331, 200
      %2681 = vst [vmem:[%s2680] sm:$0xf] %v2678
      %2682 = vst [vmem:[%s2680 + $0x4] sm:$0xf] %v2679
      %v2683 = vld [vmem:[%s2327] sm:$0xf]
      %v2684 = vld [vmem:[%s2327 + $0x4] sm:$0xf]
      %v2685 = vld [vmem:[%s2327 + $0x8] sm:$0x1]
      %v2686 = vld [vmem:[%s318] sm:$0xf]
      %v2687 = vld [vmem:[%s318 + $0x4] sm:$0xf]
      %v2688 = vld [vmem:[%s318 + $0x8] sm:$0x1]
      %v2691 = vunpack.c.l.b16 %v2683
      %v2692 = vunpack.c.l.b16 %v2684
      %v2693 = vpack.c.b16 %v2692, %v2691
      %v2695 = vunpack.c.l.b16 %v2685
      %v2696 = vpack.c.b16 %v2695, %v2695
      %v2698 = vshrl.u32 %v2693, 16
      %v2700 = vshll.u32 %v2693, 16
      %v2702 = vrot.slane %v2700, 1
      %v2703 = vor.u32 %v2698, %v2702
      %v2705 = vshll.u32 %v2696, 16
      %v2707 = vrot.slane %v2705, 1
      %v2708 = vsel %vm357, %v2703, %v2707
      %2709 = vrot.lane.b32.xlu0 %v2708, 4
      %v2710 = vpop.permute.xlu0 %2709
      %v2713 = vunpack.c.l.b16 %v2686
      %v2714 = vunpack.c.l.b16 %v2687
      %v2715 = vpack.c.b16 %v2714, %v2713
      %2716 = vrot.lane.b32.xlu0 %v2715, 8
      %v2717 = vpop.permute.xlu0 %2716
      %v2719 = vunpack.c.l.b16 %v2688
      %v2720 = vpack.c.b16 %v2719, %v2719
      %v2722 = vshrl.u32 %v2715, 16
      %v2724 = vshll.u32 %v2715, 16
      %v2726 = vrot.slane %v2724, 1
      %v2727 = vor.u32 %v2722, %v2726
      %v2729 = vshll.u32 %v2720, 16
      %v2731 = vrot.slane %v2729, 1
      %v2732 = vsel %vm357, %v2727, %v2731
      %2733 = vrot.lane.b32.xlu0 %v2732, 12
      %v2734 = vpop.permute.xlu0 %2733
      %v2736 = vsel %vm396, %v2693, %v2710
      %v2738 = vsel %vm399, %v2736, %v2717
      %v2740 = vsel %vm402, %v2738, %v2734
      %v2741 = vld [vmem:[%s586] sm:$0xf]
      %v2742 = vld [vmem:[%s586 + $0x4] sm:$0xf]
      %v2745 = vunpack.c.l.b16 %v2741
      %v2746 = vunpack.c.l.b16 %v2742
      %v2747 = vpack.c.b16 %v2746, %v2745
      %v2749 = vsel %vm413, %v2740, 0
      %2751 = vmatpush.bf16.msra.mxu0 0
      %2752 = vmatpush.bf16.msra.mxu0 0
      %2753 = vmatpush.bf16.msra.mxu0 0
      %2754 = vmatpush.bf16.msra.mxu0 0
      %2755 = vmatpush.bf16.msra.mxu0 0
      %2756 = vmatpush.bf16.msra.mxu0 0
      %2757 = vmatpush.bf16.msra.mxu0 0
      %2758 = vmatpush.bf16.msra.mxu0 %v2747
      %2759 = vmatmul.bf16.gmra.mxu0 %v2749
      %v2760 = vpop.f32.mrf.mxu0
      %v2761 = vadd.f32 0.0, %v2760
      %v2762 = vpop.f32.mrf.mxu0
      %v2763 = vadd.f32 0.0, %v2762
      %2764 = vdwg.mxu0
      %v2765 = vadd.f32 %v2761, %v2763
      %v2766 = vrot.slane %v2765, 4
      %v2767 = vadd.f32 %v2765, %v2766
      %v2768 = vrot.slane %v2767, 2
      %v2769 = vadd.f32 %v2767, %v2768
      %v2770 = vrot.slane %v2769, 1
      %v2771 = vadd.f32 %v2769, %v2770
      %v2772 = vadd.f32 %v2667, %v2771
      %v2773 = vmul.f32 %v2761, %v2761
      %v2774 = vmul.f32 %v2763, %v2763
      %v2775 = vadd.f32 %v2773, %v2774
      %v2776 = vrot.slane %v2775, 4
      %v2777 = vadd.f32 %v2775, %v2776
      %v2778 = vrot.slane %v2777, 2
      %v2779 = vadd.f32 %v2777, %v2778
      %v2780 = vrot.slane %v2779, 1
      %v2781 = vadd.f32 %v2779, %v2780
      %v2782 = vadd.f32 %v2677, %v2781
      %v2783 = vpack.c.bf16 %v2761, %v2761
      %v2784 = vpack.c.bf16 %v2763, %v2763
      %s2785 = scalar_lea.vmem %s331, 208
      %2786 = vst [vmem:[%s2785] sm:$0xf] %v2783
      %2787 = vst [vmem:[%s2785 + $0x4] sm:$0xf] %v2784
      %v2788 = vshrl.u32 %v2696, 16
      %2790 = vrot.lane.b32.xlu0 %v2788, 4
      %v2791 = vpop.permute.xlu0 %2790
      %2792 = vrot.lane.b32.xlu0 %v2720, 8
      %v2793 = vpop.permute.xlu0 %2792
      %v2794 = vshrl.u32 %v2720, 16
      %2796 = vrot.lane.b32.xlu0 %v2794, 12
      %v2797 = vpop.permute.xlu0 %2796
      %v2799 = vsel %vm396, %v2696, %v2791
      %v2801 = vsel %vm399, %v2799, %v2793
      %v2803 = vsel %vm402, %v2801, %v2797
      %v2804 = vld [vmem:[%s650] sm:$0xf]
      %v2805 = vld [vmem:[%s650 + $0x4] sm:$0xf]
      %v2806 = vshrl.u32 %v2740, 16
      %v2808 = vshll.u32 %v2740, 16
      %v2810 = vrot.slane %v2808, 1
      %v2811 = vor.u32 %v2806, %v2810
      %v2812 = vshll.u32 %v2803, 16
      %v2814 = vrot.slane %v2812, 1
      %v2815 = vsel %vm357, %v2811, %v2814
      %v2818 = vunpack.c.l.b16 %v2804
      %v2819 = vunpack.c.l.b16 %v2805
      %v2820 = vpack.c.b16 %v2819, %v2818
      %v2823 = vsel %vm413, %v2815, 0
      %2825 = vmatpush.bf16.msra.mxu0 0
      %2826 = vmatpush.bf16.msra.mxu0 0
      %2827 = vmatpush.bf16.msra.mxu0 0
      %2828 = vmatpush.bf16.msra.mxu0 0
      %2829 = vmatpush.bf16.msra.mxu0 0
      %2830 = vmatpush.bf16.msra.mxu0 0
      %2831 = vmatpush.bf16.msra.mxu0 0
      %2832 = vmatpush.bf16.msra.mxu0 %v2820
      %2833 = vmatmul.bf16.gmra.mxu0 %v2823
      %v2834 = vpop.f32.mrf.mxu0
      %v2835 = vadd.f32 0.0, %v2834
      %v2836 = vpop.f32.mrf.mxu0
      %v2837 = vadd.f32 0.0, %v2836
      %2838 = vdwg.mxu0
      %v2839 = vadd.f32 %v2835, %v2837
      %v2840 = vrot.slane %v2839, 4
      %v2841 = vadd.f32 %v2839, %v2840
      %v2842 = vrot.slane %v2841, 2
      %v2843 = vadd.f32 %v2841, %v2842
      %v2844 = vrot.slane %v2843, 1
      %v2845 = vadd.f32 %v2843, %v2844
      %v2846 = vadd.f32 %v2772, %v2845
      %v2847 = vmul.f32 %v2835, %v2835
      %v2848 = vmul.f32 %v2837, %v2837
      %v2849 = vadd.f32 %v2847, %v2848
      %v2850 = vrot.slane %v2849, 4
      %v2851 = vadd.f32 %v2849, %v2850
      %v2852 = vrot.slane %v2851, 2
      %v2853 = vadd.f32 %v2851, %v2852
      %v2854 = vrot.slane %v2853, 1
      %v2855 = vadd.f32 %v2853, %v2854
      %v2856 = vadd.f32 %v2782, %v2855
      %v2857 = vpack.c.bf16 %v2835, %v2835
      %v2858 = vpack.c.bf16 %v2837, %v2837
      %s2859 = scalar_lea.vmem %s331, 216
      %2860 = vst [vmem:[%s2859] sm:$0xf] %v2857
      %2861 = vst [vmem:[%s2859 + $0x4] sm:$0xf] %v2858
      %v2862 = vld [vmem:[%s2327] sm:$0xf]
      %v2863 = vld [vmem:[%s2327 + $0x4] sm:$0xf]
      %v2864 = vld [vmem:[%s2327 + $0x8] sm:$0x1]
      %v2865 = vld [vmem:[%s318] sm:$0xf]
      %v2866 = vld [vmem:[%s318 + $0x4] sm:$0xf]
      %v2867 = vld [vmem:[%s318 + $0x8] sm:$0x1]
      %v2870 = vunpack.c.l.b16 %v2862
      %v2871 = vunpack.c.l.b16 %v2863
      %v2872 = vpack.c.b16 %v2871, %v2870
      %v2874 = vunpack.c.l.b16 %v2864
      %v2875 = vpack.c.b16 %v2874, %v2874
      %v2877 = vshrl.u32 %v2872, 16
      %v2879 = vshll.u32 %v2872, 16
      %v2881 = vrot.slane %v2879, 1
      %v2882 = vor.u32 %v2877, %v2881
      %v2884 = vshll.u32 %v2875, 16
      %v2886 = vrot.slane %v2884, 1
      %v2887 = vsel %vm357, %v2882, %v2886
      %2888 = vrot.lane.b32.xlu0 %v2887, 4
      %v2889 = vpop.permute.xlu0 %2888
      %v2892 = vunpack.c.l.b16 %v2865
      %v2893 = vunpack.c.l.b16 %v2866
      %v2894 = vpack.c.b16 %v2893, %v2892
      %2895 = vrot.lane.b32.xlu0 %v2894, 8
      %v2896 = vpop.permute.xlu0 %2895
      %v2898 = vunpack.c.l.b16 %v2867
      %v2899 = vpack.c.b16 %v2898, %v2898
      %v2901 = vshrl.u32 %v2894, 16
      %v2903 = vshll.u32 %v2894, 16
      %v2905 = vrot.slane %v2903, 1
      %v2906 = vor.u32 %v2901, %v2905
      %v2908 = vshll.u32 %v2899, 16
      %v2910 = vrot.slane %v2908, 1
      %v2911 = vsel %vm357, %v2906, %v2910
      %2912 = vrot.lane.b32.xlu0 %v2911, 12
      %v2913 = vpop.permute.xlu0 %2912
      %v2915 = vsel %vm396, %v2872, %v2889
      %v2917 = vsel %vm399, %v2915, %v2896
      %v2919 = vsel %vm402, %v2917, %v2913
      %v2920 = vld [vmem:[%s2] sm:$0xf]
      %v2921 = vld [vmem:[%s2 + $0x4] sm:$0xf]
      %v2924 = vunpack.c.l.b16 %v2920
      %v2925 = vunpack.c.l.b16 %v2921
      %v2926 = vpack.c.b16 %v2925, %v2924
      %v2928 = vsel %vm413, %v2919, 0
      %2930 = vmatpush.bf16.msra.mxu0 0
      %2931 = vmatpush.bf16.msra.mxu0 0
      %2932 = vmatpush.bf16.msra.mxu0 0
      %2933 = vmatpush.bf16.msra.mxu0 0
      %2934 = vmatpush.bf16.msra.mxu0 0
      %2935 = vmatpush.bf16.msra.mxu0 0
      %2936 = vmatpush.bf16.msra.mxu0 0
      %2937 = vmatpush.bf16.msra.mxu0 %v2926
      %2938 = vmatmul.bf16.gmra.mxu0 %v2928
      %v2939 = vpop.f32.mrf.mxu0
      %v2940 = vadd.f32 0.0, %v2939
      %v2941 = vpop.f32.mrf.mxu0
      %v2942 = vadd.f32 0.0, %v2941
      %2943 = vdwg.mxu0
      %v2944 = vadd.f32 %v2940, %v2942
      %v2945 = vrot.slane %v2944, 4
      %v2946 = vadd.f32 %v2944, %v2945
      %v2947 = vrot.slane %v2946, 2
      %v2948 = vadd.f32 %v2946, %v2947
      %v2949 = vrot.slane %v2948, 1
      %v2950 = vadd.f32 %v2948, %v2949
      %v2951 = vadd.f32 %v2846, %v2950
      %v2952 = vmul.f32 %v2940, %v2940
      %v2953 = vmul.f32 %v2942, %v2942
      %v2954 = vadd.f32 %v2952, %v2953
      %v2955 = vrot.slane %v2954, 4
      %v2956 = vadd.f32 %v2954, %v2955
      %v2957 = vrot.slane %v2956, 2
      %v2958 = vadd.f32 %v2956, %v2957
      %v2959 = vrot.slane %v2958, 1
      %v2960 = vadd.f32 %v2958, %v2959
      %v2961 = vadd.f32 %v2856, %v2960
      %v2962 = vpack.c.bf16 %v2940, %v2940
      %v2963 = vpack.c.bf16 %v2942, %v2942
      %s2964 = scalar_lea.vmem %s331, 224
      %2965 = vst [vmem:[%s2964] sm:$0xf] %v2962
      %2966 = vst [vmem:[%s2964 + $0x4] sm:$0xf] %v2963
      %v2967 = vshrl.u32 %v2875, 16
      %2969 = vrot.lane.b32.xlu0 %v2967, 4
      %v2970 = vpop.permute.xlu0 %2969
      %2971 = vrot.lane.b32.xlu0 %v2899, 8
      %v2972 = vpop.permute.xlu0 %2971
      %v2973 = vshrl.u32 %v2899, 16
      %2975 = vrot.lane.b32.xlu0 %v2973, 12
      %v2976 = vpop.permute.xlu0 %2975
      %v2978 = vsel %vm396, %v2875, %v2970
      %v2980 = vsel %vm399, %v2978, %v2972
      %v2982 = vsel %vm402, %v2980, %v2976
      %v2983 = vld [vmem:[%s468] sm:$0xf]
      %v2984 = vld [vmem:[%s468 + $0x4] sm:$0xf]
      %v2985 = vshrl.u32 %v2919, 16
      %v2987 = vshll.u32 %v2919, 16
      %v2989 = vrot.slane %v2987, 1
      %v2990 = vor.u32 %v2985, %v2989
      %v2991 = vshll.u32 %v2982, 16
      %v2993 = vrot.slane %v2991, 1
      %v2994 = vsel %vm357, %v2990, %v2993
      %v2997 = vunpack.c.l.b16 %v2983
      %v2998 = vunpack.c.l.b16 %v2984
      %v2999 = vpack.c.b16 %v2998, %v2997
      %v3002 = vsel %vm413, %v2994, 0
      %3004 = vmatpush.bf16.msra.mxu0 0
      %3005 = vmatpush.bf16.msra.mxu0 0
      %3006 = vmatpush.bf16.msra.mxu0 0
      %3007 = vmatpush.bf16.msra.mxu0 0
      %3008 = vmatpush.bf16.msra.mxu0 0
      %3009 = vmatpush.bf16.msra.mxu0 0
      %3010 = vmatpush.bf16.msra.mxu0 0
      %3011 = vmatpush.bf16.msra.mxu0 %v2999
      %3012 = vmatmul.bf16.gmra.mxu0 %v3002
      %v3013 = vpop.f32.mrf.mxu0
      %v3014 = vadd.f32 0.0, %v3013
      %v3015 = vpop.f32.mrf.mxu0
      %v3016 = vadd.f32 0.0, %v3015
      %3017 = vdwg.mxu0
      %v3018 = vadd.f32 %v3014, %v3016
      %v3019 = vrot.slane %v3018, 4
      %v3020 = vadd.f32 %v3018, %v3019
      %v3021 = vrot.slane %v3020, 2
      %v3022 = vadd.f32 %v3020, %v3021
      %v3023 = vrot.slane %v3022, 1
      %v3024 = vadd.f32 %v3022, %v3023
      %v3025 = vadd.f32 %v2951, %v3024
      %v3026 = vmul.f32 %v3014, %v3014
      %v3027 = vmul.f32 %v3016, %v3016
      %v3028 = vadd.f32 %v3026, %v3027
      %v3029 = vrot.slane %v3028, 4
      %v3030 = vadd.f32 %v3028, %v3029
      %v3031 = vrot.slane %v3030, 2
      %v3032 = vadd.f32 %v3030, %v3031
      %v3033 = vrot.slane %v3032, 1
      %v3034 = vadd.f32 %v3032, %v3033
      %v3035 = vadd.f32 %v2961, %v3034
      %v3036 = vpack.c.bf16 %v3014, %v3014
      %v3037 = vpack.c.bf16 %v3016, %v3016
      %s3038 = scalar_lea.vmem %s331, 232
      %3039 = vst [vmem:[%s3038] sm:$0xf] %v3036
      %3040 = vst [vmem:[%s3038 + $0x4] sm:$0xf] %v3037
      %v3041 = vld [vmem:[%s318] sm:$0xf]
      %v3042 = vld [vmem:[%s318 + $0x4] sm:$0xf]
      %v3043 = vld [vmem:[%s318 + $0x8] sm:$0x1]
      %s3044 = scalar_lea.vmem %s318, 12
      %v3045 = vld [vmem:[%s3044] sm:$0xf]
      %v3046 = vld [vmem:[%s3044 + $0x4] sm:$0xf]
      %v3047 = vld [vmem:[%s3044 + $0x8] sm:$0x1]
      %v3050 = vunpack.c.l.b16 %v3041
      %v3051 = vunpack.c.l.b16 %v3042
      %v3052 = vpack.c.b16 %v3051, %v3050
      %v3054 = vunpack.c.l.b16 %v3043
      %v3055 = vpack.c.b16 %v3054, %v3054
      %v3057 = vshrl.u32 %v3052, 16
      %v3059 = vshll.u32 %v3052, 16
      %v3061 = vrot.slane %v3059, 1
      %v3062 = vor.u32 %v3057, %v3061
      %v3064 = vshll.u32 %v3055, 16
      %v3066 = vrot.slane %v3064, 1
      %v3067 = vsel %vm357, %v3062, %v3066
      %3068 = vrot.lane.b32.xlu0 %v3067, 4
      %v3069 = vpop.permute.xlu0 %3068
      %v3072 = vunpack.c.l.b16 %v3045
      %v3073 = vunpack.c.l.b16 %v3046
      %v3074 = vpack.c.b16 %v3073, %v3072
      %3075 = vrot.lane.b32.xlu0 %v3074, 8
      %v3076 = vpop.permute.xlu0 %3075
      %v3078 = vunpack.c.l.b16 %v3047
      %v3079 = vpack.c.b16 %v3078, %v3078
      %v3081 = vshrl.u32 %v3074, 16
      %v3083 = vshll.u32 %v3074, 16
      %v3085 = vrot.slane %v3083, 1
      %v3086 = vor.u32 %v3081, %v3085
      %v3088 = vshll.u32 %v3079, 16
      %v3090 = vrot.slane %v3088, 1
      %v3091 = vsel %vm357, %v3086, %v3090
      %3092 = vrot.lane.b32.xlu0 %v3091, 12
      %v3093 = vpop.permute.xlu0 %3092
      %v3095 = vsel %vm396, %v3052, %v3069
      %v3097 = vsel %vm399, %v3095, %v3076
      %v3099 = vsel %vm402, %v3097, %v3093
      %v3100 = vld [vmem:[%s586] sm:$0xf]
      %v3101 = vld [vmem:[%s586 + $0x4] sm:$0xf]
      %v3104 = vunpack.c.l.b16 %v3100
      %v3105 = vunpack.c.l.b16 %v3101
      %v3106 = vpack.c.b16 %v3105, %v3104
      %v3108 = vsel %vm413, %v3099, 0
      %3110 = vmatpush.bf16.msra.mxu0 0
      %3111 = vmatpush.bf16.msra.mxu0 0
      %3112 = vmatpush.bf16.msra.mxu0 0
      %3113 = vmatpush.bf16.msra.mxu0 0
      %3114 = vmatpush.bf16.msra.mxu0 0
      %3115 = vmatpush.bf16.msra.mxu0 0
      %3116 = vmatpush.bf16.msra.mxu0 0
      %3117 = vmatpush.bf16.msra.mxu0 %v3106
      %3118 = vmatmul.bf16.gmra.mxu0 %v3108
      %v3119 = vpop.f32.mrf.mxu0
      %v3120 = vadd.f32 0.0, %v3119
      %v3121 = vpop.f32.mrf.mxu0
      %v3122 = vadd.f32 0.0, %v3121
      %3123 = vdwg.mxu0
      %v3124 = vadd.f32 %v3120, %v3122
      %v3125 = vrot.slane %v3124, 4
      %v3126 = vadd.f32 %v3124, %v3125
      %v3127 = vrot.slane %v3126, 2
      %v3128 = vadd.f32 %v3126, %v3127
      %v3129 = vrot.slane %v3128, 1
      %v3130 = vadd.f32 %v3128, %v3129
      %v3131 = vadd.f32 %v3025, %v3130
      %v3132 = vmul.f32 %v3120, %v3120
      %v3133 = vmul.f32 %v3122, %v3122
      %v3134 = vadd.f32 %v3132, %v3133
      %v3135 = vrot.slane %v3134, 4
      %v3136 = vadd.f32 %v3134, %v3135
      %v3137 = vrot.slane %v3136, 2
      %v3138 = vadd.f32 %v3136, %v3137
      %v3139 = vrot.slane %v3138, 1
      %v3140 = vadd.f32 %v3138, %v3139
      %v3141 = vadd.f32 %v3035, %v3140
      %v3142 = vpack.c.bf16 %v3120, %v3120
      %v3143 = vpack.c.bf16 %v3122, %v3122
      %s3144 = scalar_lea.vmem %s331, 240
      %3145 = vst [vmem:[%s3144] sm:$0xf] %v3142
      %3146 = vst [vmem:[%s3144 + $0x4] sm:$0xf] %v3143
      %v3147 = vshrl.u32 %v3055, 16
      %3149 = vrot.lane.b32.xlu0 %v3147, 4
      %v3150 = vpop.permute.xlu0 %3149
      %3151 = vrot.lane.b32.xlu0 %v3079, 8
      %v3152 = vpop.permute.xlu0 %3151
      %v3153 = vshrl.u32 %v3079, 16
      %3155 = vrot.lane.b32.xlu0 %v3153, 12
      %v3156 = vpop.permute.xlu0 %3155
      %v3158 = vsel %vm396, %v3055, %v3150
      %v3160 = vsel %vm399, %v3158, %v3152
      %v3162 = vsel %vm402, %v3160, %v3156
      %v3163 = vld [vmem:[%s650] sm:$0xf]
      %v3164 = vld [vmem:[%s650 + $0x4] sm:$0xf]
      %v3165 = vshrl.u32 %v3099, 16
      %v3167 = vshll.u32 %v3099, 16
      %v3169 = vrot.slane %v3167, 1
      %v3170 = vor.u32 %v3165, %v3169
      %v3171 = vshll.u32 %v3162, 16
      %v3173 = vrot.slane %v3171, 1
      %v3174 = vsel %vm357, %v3170, %v3173
      %v3177 = vunpack.c.l.b16 %v3163
      %v3178 = vunpack.c.l.b16 %v3164
      %v3179 = vpack.c.b16 %v3178, %v3177
      %v3182 = vsel %vm413, %v3174, 0
      %3184 = vmatpush.bf16.msra.mxu0 0
      %3185 = vmatpush.bf16.msra.mxu0 0
      %3186 = vmatpush.bf16.msra.mxu0 0
      %3187 = vmatpush.bf16.msra.mxu0 0
      %3188 = vmatpush.bf16.msra.mxu0 0
      %3189 = vmatpush.bf16.msra.mxu0 0
      %3190 = vmatpush.bf16.msra.mxu0 0
      %3191 = vmatpush.bf16.msra.mxu0 %v3179
      %3192 = vmatmul.bf16.gmra.mxu0 %v3182
      %v3193 = vpop.f32.mrf.mxu0
      %v3194 = vadd.f32 0.0, %v3193
      %v3195 = vpop.f32.mrf.mxu0
      %v3196 = vadd.f32 0.0, %v3195
      %3197 = vdwg.mxu0
      %v3198 = vadd.f32 %v3194, %v3196
      %v3199 = vrot.slane %v3198, 4
      %v3200 = vadd.f32 %v3198, %v3199
      %v3201 = vrot.slane %v3200, 2
      %v3202 = vadd.f32 %v3200, %v3201
      %v3203 = vrot.slane %v3202, 1
      %v3204 = vadd.f32 %v3202, %v3203
      %v3205 = vadd.f32 %v3131, %v3204
      %v3206 = vmul.f32 %v3194, %v3194
      %v3207 = vmul.f32 %v3196, %v3196
      %v3208 = vadd.f32 %v3206, %v3207
      %v3209 = vrot.slane %v3208, 4
      %v3210 = vadd.f32 %v3208, %v3209
      %v3211 = vrot.slane %v3210, 2
      %v3212 = vadd.f32 %v3210, %v3211
      %v3213 = vrot.slane %v3212, 1
      %v3214 = vadd.f32 %v3212, %v3213
      %v3215 = vadd.f32 %v3141, %v3214
      %v3216 = vpack.c.bf16 %v3194, %v3194
      %v3217 = vpack.c.bf16 %v3196, %v3196
      %s3218 = scalar_lea.vmem %s331, 248
      %3219 = vst [vmem:[%s3218] sm:$0xf] %v3216
      %3220 = vst [vmem:[%s3218 + $0x4] sm:$0xf] %v3217
      %vm3221 = vcmask 1040384
      %v3222 = vsel %vm3221, %v3205, %v3215
      %3223 = vst [vmem:[%s340] sm:$0x3] %v3222
      %s3224 = smul.u32 8, %s21
      %p3225 = scmp.lt.s32.totalorder %s20, 1
      %s3226 = scalar_select %p3225, %s20, 1
      %p3227 = scmp.lt.s32.totalorder %s3224, 15
      %s3228 = scalar_select %p3227, %s3224, 15
      %s3229 = smul.addr %s3228, 8
      %s3230 = smul.addr %s3226, 128
      %s3231 = sadd.s32 %s3229, %s3230
      %s3232 = smul.addr %s3231, 4
      %s3233 = scalar_lea.vmem %s3, %s3232
      %p3234 = scmp.lt.s32.totalorder %s20, 1
      %s3235 = scalar_select %p3234, %s20, 1
      %p3236 = scmp.lt.s32.totalorder %s21, 1
      %s3237 = scalar_select %p3236, %s21, 1
      %s3238 = smul.addr %s3235, 2
      %s3239 = sadd.s32 %s3237, %s3238
      %s3240 = smul.addr %s3239, 2
      %s3241 = scalar_lea.vmem %s4, %s3240
      // Predicated region
      $region33: #{deconv_bn_relu.2} parent=31 // pred_check
        %p3242 = pneg %p129
      $region34: #{deconv_bn_relu.2} parent=31 // pred_check_branch
        %3244 = sbr.rel (%p3242) target = $region36
      $region35: #{deconv_bn_relu.2} parent=31 // pred_region
        %s3245 = smul.u32 8, %s21
      $region36: #{deconv_bn_relu.2} parent=31 // pred_fallthru
        _
      // Predicated region
      $region37: #{deconv_bn_relu.2} parent=31 // pred_check
        %p3246 = pneg %p157
      $region38: #{deconv_bn_relu.2} parent=31 // pred_check_branch
        %3248 = sbr.rel (%p3246) target = $region40
      $region39: #{deconv_bn_relu.2} parent=31 // pred_region
        _
      $region40: #{deconv_bn_relu.2} parent=31 // pred_fallthru
        _
    $region32: #{deconv_bn_relu.2} parent=5 // pred_fallthru
      _
    %p3249 = scmp.le.s32.totalorder 2, %s11
    // Predicated region
    $region41: #{deconv_bn_relu.2} parent=5 // pred_check
      %p3250 = pneg %p3249
    $region42: #{deconv_bn_relu.2} parent=5 // pred_check_branch
      %3252 = sbr.rel (%p3250) target = $region44
    $region43: #{deconv_bn_relu.2} parent=5 // pred_region
      %s3253 = ssub.s32 %s11, 2
      // Predicated region
      $region45: #{deconv_bn_relu.2} parent=43 // pred_check
        %p3254 = pneg %p135
      $region46: #{deconv_bn_relu.2} parent=43 // pred_check_branch
        %3256 = sbr.rel (%p3254) target = $region48
      $region47: #{deconv_bn_relu.2} parent=43 // pred_region
        %s3257 = smul.u32 8, %s23
        %p3258 = scmp.lt.s32.totalorder %s22, 1
        %s3259 = scalar_select %p3258, %s22, 1
        %p3260 = scmp.lt.s32.totalorder %s3257, 15
        %s3261 = scalar_select %p3260, %s3257, 15
        %s3262 = smul.addr %s3261, 8
        %s3263 = smul.addr %s3259, 128
        %s3264 = sadd.s32 %s3262, %s3263
        %s3265 = smul.addr %s3264, 4
        %s3266 = scalar_lea.vmem %s3, %s3265
      $region48: #{deconv_bn_relu.2} parent=43 // pred_fallthru
        _
      // Predicated region
      $region49: #{deconv_bn_relu.2} parent=43 // pred_check
        %p3267 = pneg %p163
      $region50: #{deconv_bn_relu.2} parent=43 // pred_check_branch
        %3269 = sbr.rel (%p3267) target = $region52
      $region51: #{deconv_bn_relu.2} parent=43 // pred_region
        %p3270 = scmp.lt.s32.totalorder %s22, 1
        %s3271 = scalar_select %p3270, %s22, 1
        %p3272 = scmp.lt.s32.totalorder %s23, 1
        %s3273 = scalar_select %p3272, %s23, 1
        %s3274 = smul.addr %s3271, 2
        %s3275 = sadd.s32 %s3273, %s3274
        %s3276 = smul.addr %s3275, 2
        %s3277 = scalar_lea.vmem %s4, %s3276
      $region52: #{deconv_bn_relu.2} parent=43 // pred_fallthru
        _
    $region44: #{deconv_bn_relu.2} parent=5 // pred_fallthru
      _
  $region6: #{deconv_bn_relu.2} parent=0 // loop_footer
    %s15 = sadd.s32 1, %s11
  $region7: #{deconv_bn_relu.2} parent=0 // loop_footer_branch
    %10 = sbr.rel target = $region3
  $region8: #{deconv_bn_relu.2} parent=0 // loop_exit
    _

</llo_original>
